<compile_context>
chip_gen: v7x
topology: tpu7x:2x2x1
jax: 0.10.0
libtpu: 0.0.40
codegen_flags: <defaults>
</compile_context>

<pallas_src>
import functools

import numpy as np

import jax
import jax.numpy as jnp
from jax.experimental import pallas as pl
from jax.experimental.pallas import tpu as pltpu


C1, C2, C3, FC1, OUT_PAD = 8, 16, 32, 256, 128


# ----------------------------------------------------------------------------
# Fused kernel
# ----------------------------------------------------------------------------
def _stanford_dqn_kernel(
    x_ref,                      # (Cin, batch*H*W + pad)            f32
    w1_ref, b1_ref,             # (9*8,  Cin), (8, 1)               f32
    w2_ref, b2_ref,             # (9*16, 8),   (16, 1)              f32
    w3_ref, b3_ref,             # (9*32, 16),  (32, 1)              f32
    wf1_hbm,                    # (32*H*W, 256) bf16, stays in HBM (pl.ANY)
    bf1_ref,                    # (1, 256)                          f32
    wf2_ref, bf2_ref,           # (256, 128), (1, 128)              f32
    out_ref,                    # (batch, 128)                      f32
    a1_ref, a2_ref, a3_ref,     # VMEM scratch: conv activations
    lhs_ref,                    # VMEM scratch: (batch, 32*H*W) fc1 input
    wf1_vmem,                   # VMEM scratch: bf16 copy of the fc1 weight
    dma_sem,                    # DMA semaphore (1,)
    *, width,
):
    # Kick off the big fc1-weight DMA immediately; it is hidden behind the convs.
    wf1_copy = pltpu.make_async_copy(wf1_hbm, wf1_vmem, dma_sem.at[0])
    wf1_copy.start()

    def conv3x3_relu(src_ref, w_ref, b_ref, dst_ref):
        # Channels in sublanes, flattened (full-stride) spatial in lanes.
        # conv == sum over the 9 taps of a shifted (Cout, Cin) @ (Cin, R) matmul.
        cout, r_out = dst_ref.shape
        acc = jnp.zeros((cout, r_out), jnp.float32)
        for di in range(3):
            for dj in range(3):
                tap = di * 3 + dj
                shift = di * width + dj
                w_blk = w_ref[tap * cout:(tap + 1) * cout, :]        # (Cout, Cin)
                a_blk = src_ref[:, shift:shift + r_out]              # (Cin, R)
                acc = acc + jnp.dot(w_blk, a_blk,
                                    preferred_element_type=jnp.float32)
        dst_ref[...] = jnp.maximum(acc + b_ref[...], 0.0)

    conv3x3_relu(x_ref, w1_ref, b1_ref, a1_ref)
    conv3x3_relu(a1_ref, w2_ref, b2_ref, a2_ref)
    conv3x3_relu(a2_ref, w3_ref, b3_ref, a3_ref)

    # Repack conv3 activations into one lane-dense row per sample:
    #   lhs[n, c*HW + p] = a3[c, n*HW + p]
    # (the fc1 weight was permuted at init to this ordering, with zero rows for
    #  positions outside the valid (H-6)x(W-6) window, so garbage columns vanish).
    n_ch, total = a3_ref.shape
    batch = out_ref.shape[0]
    hw = total // batch
    for n in range(batch):
        for c in range(n_ch):
            lhs_ref[n:n + 1, c * hw:(c + 1) * hw] = (
                a3_ref[c:c + 1, n * hw:(n + 1) * hw])

    # fc1 (bf16 weight, f32 accumulate, f32 epilogue) + ReLU, then fc2 into the
    # 128-wide padded action slab.
    wf1_copy.wait()
    h = lhs_ref[...].astype(jnp.bfloat16)
    h1 = jnp.dot(h, wf1_vmem[...], preferred_element_type=jnp.float32)
    h1 = jnp.maximum(h1 + bf1_ref[...], 0.0)
    out = jnp.dot(h1, wf2_ref[...], preferred_element_type=jnp.float32) + bf2_ref[...]
    out_ref[...] = out.astype(out_ref.dtype)


# ----------------------------------------------------------------------------
# Wrapper (single pallas_call) builder
# ----------------------------------------------------------------------------
def build_forward(width, height, in_channels, nb_actions, batch):
    hw = height * width
    tap_span = 2 * width + 2                  # flat-index span of one 3x3 window
    pad_cols = 3 * tap_span                   # slack so conv3 keeps batch*hw columns
    tot0 = batch * hw + pad_cols
    r1 = tot0 - tap_span
    r2 = r1 - tap_span
    r3 = r2 - tap_span
    assert r3 == batch * hw

    flops = 2 * (9 * in_channels * C1 * r1 + 9 * C1 * C2 * r2 + 9 * C2 * C3 * r3
                 + batch * (C3 * hw) * FC1 + batch * FC1 * OUT_PAD)
    bytes_accessed = 4 * (in_channels * tot0
                          + 9 * C1 * in_channels + C1
                          + 9 * C2 * C1 + C2
                          + 9 * C3 * C2 + C3
                          + FC1 + FC1 * OUT_PAD + OUT_PAD
                          + batch * OUT_PAD) + 2 * (C3 * hw * FC1)

    def vmem_spec(shape):
        return pl.BlockSpec(shape, lambda i: (0, 0))

    fused = pl.pallas_call(
        functools.partial(_stanford_dqn_kernel, width=width),
        out_shape=jax.ShapeDtypeStruct((batch, OUT_PAD), jnp.float32),
        grid=(1,),
        in_specs=[
            vmem_spec((in_channels, tot0)),           # x (flattened, padded)
            vmem_spec((9 * C1, in_channels)), vmem_spec((C1, 1)),
            vmem_spec((9 * C2, C1)), vmem_spec((C2, 1)),
            vmem_spec((9 * C3, C2)), vmem_spec((C3, 1)),
            pl.BlockSpec(memory_space=pl.ANY),        # wf1: big, manually DMA'd
            vmem_spec((1, FC1)),
            vmem_spec((FC1, OUT_PAD)), vmem_spec((1, OUT_PAD)),
        ],
        out_specs=vmem_spec((batch, OUT_PAD)),
        scratch_shapes=[
            pltpu.VMEM((C1, r1), jnp.float32),
            pltpu.VMEM((C2, r2), jnp.float32),
            pltpu.VMEM((C3, r3), jnp.float32),
            pltpu.VMEM((batch, C3 * hw), jnp.float32),
            pltpu.VMEM((C3 * hw, FC1), jnp.bfloat16),
            pltpu.SemaphoreType.DMA((1,)),
        ],
        compiler_params=pltpu.CompilerParams(
            dimension_semantics=("arbitrary",),
            vmem_limit_bytes=32 * 1024 * 1024),
        cost_estimate=pl.CostEstimate(flops=int(flops), transcendentals=0,
                                      bytes_accessed=int(bytes_accessed)),
    )

    def forward(packed, x_nchw):
        n, cin, hh, ww = x_nchw.shape
        # NCHW -> (Cin, N*H*W) channels-in-sublanes flat layout (+ zero slack cols).
        xt = jnp.transpose(x_nchw, (1, 0, 2, 3)).reshape(cin, n * hh * ww)
        xt = jnp.pad(xt, ((0, 0), (0, pad_cols)))
        out = fused(xt,
                    packed["w1"], packed["b1"],
                    packed["w2"], packed["b2"],
                    packed["w3"], packed["b3"],
                    packed["wf1"], packed["bf1"],
                    packed["wf2"], packed["bf2"])
        return out[:, :nb_actions]

    return forward


# ----------------------------------------------------------------------------
# Parameters: PyTorch-layout init + one-time repack into kernel layouts
# ----------------------------------------------------------------------------
def init_raw_params(key, width, height, in_channels, nb_actions):
    def u(k, shape, fan_in):
        bound = 1.0 / np.sqrt(float(fan_in))
        return jax.random.uniform(k, shape, jnp.float32, -bound, bound)

    ks = jax.random.split(key, 10)
    h3, w3s = height - 6, width - 6
    flat = C3 * h3 * w3s
    return dict(
        w1=u(ks[0], (C1, in_channels, 3, 3), in_channels * 9),
        b1=u(ks[1], (C1,), in_channels * 9),
        w2=u(ks[2], (C2, C1, 3, 3), C1 * 9),
        b2=u(ks[3], (C2,), C1 * 9),
        w3=u(ks[4], (C3, C2, 3, 3), C2 * 9),
        b3=u(ks[5], (C3,), C2 * 9),
        wf1=u(ks[6], (FC1, flat), flat),
        bf1=u(ks[7], (FC1,), flat),
        wf2=u(ks[8], (nb_actions, FC1), FC1),
        bf2=u(ks[9], (nb_actions,), FC1),
    )


def pack_params(raw, width, height, nb_actions):
    def conv_pack(w):              # (Cout, Cin, 3, 3) -> (9*Cout, Cin)
        cout, cin, kh, kw = w.shape
        return jnp.transpose(w, (2, 3, 0, 1)).reshape(kh * kw * cout, cin)

    hw = height * width
    h3, w3s = height - 6, width - 6
    c = np.arange(C3)[:, None, None]
    y = np.arange(h3)[None, :, None]
    x = np.arange(w3s)[None, None, :]
    # lhs column used by the kernel for feature (c, y, x); NCHW-flatten ordering
    # of the PyTorch fc1 weight is folded into this one-time permutation.
    q = (c * hw + y * width + x).reshape(-1)
    wf1_big = jnp.zeros((C3 * hw, FC1), jnp.float32).at[q, :].set(raw["wf1"].T)

    wf2_big = jnp.zeros((FC1, OUT_PAD), jnp.float32).at[:, :nb_actions].set(raw["wf2"].T)
    bf2_big = jnp.zeros((1, OUT_PAD), jnp.float32).at[0, :nb_actions].set(raw["bf2"])

    return dict(
        w1=conv_pack(raw["w1"]), b1=raw["b1"].reshape(-1, 1),
        w2=conv_pack(raw["w2"]), b2=raw["b2"].reshape(-1, 1),
        w3=conv_pack(raw["w3"]), b3=raw["b3"].reshape(-1, 1),
        wf1=wf1_big.astype(jnp.bfloat16),
        bf1=raw["bf1"].reshape(1, -1),
        wf2=wf2_big, bf2=bf2_big,
    )


# ----------------------------------------------------------------------------
# Pure-JAX reference (PyTorch semantics) for a sanity check
# ----------------------------------------------------------------------------
def reference_forward(raw, x):
    def conv(a, w, b):
        y = jax.lax.conv(a, w, (1, 1), "VALID") + b.reshape(1, -1, 1, 1)
        return jnp.maximum(y, 0.0)

    h = conv(x, raw["w1"], raw["b1"])
    h = conv(h, raw["w2"], raw["b2"])
    h = conv(h, raw["w3"], raw["b3"])
    h = h.reshape(h.shape[0], -1)                     # NCHW flatten
    h = jnp.maximum(h @ raw["wf1"].T + raw["bf1"], 0.0)
    return h @ raw["wf2"].T + raw["bf2"]


if __name__ == "__main__":
    batch, in_channels, height, width, nb_actions = 2, 4, 16, 16, 4

    key = jax.random.PRNGKey(0)
    k_params, k_x = jax.random.split(key)
    raw = init_raw_params(k_params, width, height, in_channels, nb_actions)
    packed = pack_params(raw, width, height, nb_actions)
    x = jax.random.normal(k_x, (batch, in_channels, height, width), jnp.float32)

    forward = build_forward(width, height, in_channels, nb_actions, batch)
    fwd = jax.jit(forward)
    out = fwd(packed, x)
    jax.block_until_ready(out)

    assert out.shape == (batch, nb_actions), out.shape
    assert out.dtype == jnp.float32

    ref = reference_forward(raw, x)
    np.testing.assert_allclose(np.asarray(out), np.asarray(ref), rtol=2e-2, atol=2e-2)
    print("KERNEL_OK")
</pallas_src>

<mosaic_0001>
module attributes {stable_mosaic.version = 11 : i64} {
  func.func @_stanford_dqn_kernel(%arg0: i32, %arg1: memref<4x614xf32, #tpu.memory_space<vmem>>, %arg2: memref<72x4xf32, #tpu.memory_space<vmem>>, %arg3: memref<8x1xf32, #tpu.memory_space<vmem>>, %arg4: memref<144x8xf32, #tpu.memory_space<vmem>>, %arg5: memref<16x1xf32, #tpu.memory_space<vmem>>, %arg6: memref<288x16xf32, #tpu.memory_space<vmem>>, %arg7: memref<32x1xf32, #tpu.memory_space<vmem>>, %arg8: memref<8192x256xbf16, #tpu.memory_space<any>>, %arg9: memref<1x256xf32, #tpu.memory_space<vmem>>, %arg10: memref<256x128xf32, #tpu.memory_space<vmem>>, %arg11: memref<1x128xf32, #tpu.memory_space<vmem>>, %arg12: memref<2x128xf32, #tpu.memory_space<vmem>>, %arg13: memref<8x580xf32, #tpu.memory_space<vmem>>, %arg14: memref<16x546xf32, #tpu.memory_space<vmem>>, %arg15: memref<32x512xf32, #tpu.memory_space<vmem>>, %arg16: memref<2x8192xf32, #tpu.memory_space<vmem>>, %arg17: memref<8192x256xbf16, #tpu.memory_space<vmem>>, %arg18: memref<1x!tpu.dma_semaphore, #tpu.memory_space<semaphore_mem>>) attributes {dimension_semantics = [#tpu.dimension_semantics<arbitrary>], iteration_bounds = array<i64: 1>, scalar_prefetch = 0 : i64, scratch_operands = 6 : i64, tpu.core_type = #tpu.core_type<tc>, window_params = [{pipeline_mode = #tpu.pipeline_mode<synchronous>, transform_indices = @transform_0, window_bounds = array<i64: 4, 614>}, {pipeline_mode = #tpu.pipeline_mode<synchronous>, transform_indices = @transform_1, window_bounds = array<i64: 72, 4>}, {pipeline_mode = #tpu.pipeline_mode<synchronous>, transform_indices = @transform_2, window_bounds = array<i64: 8, 1>}, {pipeline_mode = #tpu.pipeline_mode<synchronous>, transform_indices = @transform_3, window_bounds = array<i64: 144, 8>}, {pipeline_mode = #tpu.pipeline_mode<synchronous>, transform_indices = @transform_4, window_bounds = array<i64: 16, 1>}, {pipeline_mode = #tpu.pipeline_mode<synchronous>, transform_indices = @transform_5, window_bounds = array<i64: 288, 16>}, {pipeline_mode = #tpu.pipeline_mode<synchronous>, transform_indices = @transform_6, window_bounds = array<i64: 32, 1>}, {}, {pipeline_mode = #tpu.pipeline_mode<synchronous>, transform_indices = @transform_8, window_bounds = array<i64: 1, 256>}, {pipeline_mode = #tpu.pipeline_mode<synchronous>, transform_indices = @transform_9, window_bounds = array<i64: 256, 128>}, {pipeline_mode = #tpu.pipeline_mode<synchronous>, transform_indices = @transform_10, window_bounds = array<i64: 1, 128>}, {pipeline_mode = #tpu.pipeline_mode<synchronous>, transform_indices = @transform_11, window_bounds = array<i64: 2, 128>}]} {
    %c0_i32 = arith.constant 0 : i32
    %0 = tpu.memref_slice %arg18[%c0_i32] : memref<1x!tpu.dma_semaphore, #tpu.memory_space<semaphore_mem>> -> memref<1x!tpu.dma_semaphore, #tpu.memory_space<semaphore_mem>>
    %1 = tpu.memref_squeeze %0 : memref<1x!tpu.dma_semaphore, #tpu.memory_space<semaphore_mem>> -> memref<!tpu.dma_semaphore, #tpu.memory_space<semaphore_mem>>
    tpu.enqueue_dma source(%arg8 : memref<8192x256xbf16, #tpu.memory_space<any>>) target(%arg17 : memref<8192x256xbf16, #tpu.memory_space<vmem>>) target_semaphore(%1 : memref<!tpu.dma_semaphore, #tpu.memory_space<semaphore_mem>>)
    %cst = arith.constant 0.000000e+00 : f32
    %2 = vector.broadcast %cst : f32 to vector<8x580xf32>
    %c0 = arith.constant 0 : index
    %c0_0 = arith.constant 0 : index
    %3 = vector.load %arg2[%c0, %c0_0] : memref<72x4xf32, #tpu.memory_space<vmem>>, vector<8x4xf32>
    %c0_1 = arith.constant 0 : index
    %c0_2 = arith.constant 0 : index
    %4 = vector.load %arg1[%c0_1, %c0_2] : memref<4x614xf32, #tpu.memory_space<vmem>>, vector<4x580xf32>
    %cst_3 = arith.constant dense<0.000000e+00> : vector<8x580xf32>
    %5 = tpu.matmul %3, %4, %cst_3 {dimension_numbers = #tpu.dot_dimension_numbers<[1], [0], [0], [1], [0, 0, 1, 1], [], []>} : vector<8x4xf32>, vector<4x580xf32>, vector<8x580xf32> -> vector<8x580xf32>
    %6 = arith.addf %2, %5 : vector<8x580xf32>
    %c8 = arith.constant 8 : index
    %c0_4 = arith.constant 0 : index
    %7 = vector.load %arg2[%c8, %c0_4] : memref<72x4xf32, #tpu.memory_space<vmem>>, vector<8x4xf32>
    %c0_5 = arith.constant 0 : index
    %c1 = arith.constant 1 : index
    %8 = vector.load %arg1[%c0_5, %c1] : memref<4x614xf32, #tpu.memory_space<vmem>>, vector<4x580xf32>
    %cst_6 = arith.constant dense<0.000000e+00> : vector<8x580xf32>
    %9 = tpu.matmul %7, %8, %cst_6 {dimension_numbers = #tpu.dot_dimension_numbers<[1], [0], [0], [1], [0, 0, 1, 1], [], []>} : vector<8x4xf32>, vector<4x580xf32>, vector<8x580xf32> -> vector<8x580xf32>
    %10 = arith.addf %6, %9 : vector<8x580xf32>
    %c16 = arith.constant 16 : index
    %c0_7 = arith.constant 0 : index
    %11 = vector.load %arg2[%c16, %c0_7] : memref<72x4xf32, #tpu.memory_space<vmem>>, vector<8x4xf32>
    %c0_8 = arith.constant 0 : index
    %c2 = arith.constant 2 : index
    %12 = vector.load %arg1[%c0_8, %c2] : memref<4x614xf32, #tpu.memory_space<vmem>>, vector<4x580xf32>
    %cst_9 = arith.constant dense<0.000000e+00> : vector<8x580xf32>
    %13 = tpu.matmul %11, %12, %cst_9 {dimension_numbers = #tpu.dot_dimension_numbers<[1], [0], [0], [1], [0, 0, 1, 1], [], []>} : vector<8x4xf32>, vector<4x580xf32>, vector<8x580xf32> -> vector<8x580xf32>
    %14 = arith.addf %10, %13 : vector<8x580xf32>
    %c24 = arith.constant 24 : index
    %c0_10 = arith.constant 0 : index
    %15 = vector.load %arg2[%c24, %c0_10] : memref<72x4xf32, #tpu.memory_space<vmem>>, vector<8x4xf32>
    %c0_11 = arith.constant 0 : index
    %c16_12 = arith.constant 16 : index
    %16 = vector.load %arg1[%c0_11, %c16_12] : memref<4x614xf32, #tpu.memory_space<vmem>>, vector<4x580xf32>
    %cst_13 = arith.constant dense<0.000000e+00> : vector<8x580xf32>
    %17 = tpu.matmul %15, %16, %cst_13 {dimension_numbers = #tpu.dot_dimension_numbers<[1], [0], [0], [1], [0, 0, 1, 1], [], []>} : vector<8x4xf32>, vector<4x580xf32>, vector<8x580xf32> -> vector<8x580xf32>
    %18 = arith.addf %14, %17 : vector<8x580xf32>
    %c32 = arith.constant 32 : index
    %c0_14 = arith.constant 0 : index
    %19 = vector.load %arg2[%c32, %c0_14] : memref<72x4xf32, #tpu.memory_space<vmem>>, vector<8x4xf32>
    %c0_15 = arith.constant 0 : index
    %c17 = arith.constant 17 : index
    %20 = vector.load %arg1[%c0_15, %c17] : memref<4x614xf32, #tpu.memory_space<vmem>>, vector<4x580xf32>
    %cst_16 = arith.constant dense<0.000000e+00> : vector<8x580xf32>
    %21 = tpu.matmul %19, %20, %cst_16 {dimension_numbers = #tpu.dot_dimension_numbers<[1], [0], [0], [1], [0, 0, 1, 1], [], []>} : vector<8x4xf32>, vector<4x580xf32>, vector<8x580xf32> -> vector<8x580xf32>
    %22 = arith.addf %18, %21 : vector<8x580xf32>
    %c40 = arith.constant 40 : index
    %c0_17 = arith.constant 0 : index
    %23 = vector.load %arg2[%c40, %c0_17] : memref<72x4xf32, #tpu.memory_space<vmem>>, vector<8x4xf32>
    %c0_18 = arith.constant 0 : index
    %c18 = arith.constant 18 : index
    %24 = vector.load %arg1[%c0_18, %c18] : memref<4x614xf32, #tpu.memory_space<vmem>>, vector<4x580xf32>
    %cst_19 = arith.constant dense<0.000000e+00> : vector<8x580xf32>
    %25 = tpu.matmul %23, %24, %cst_19 {dimension_numbers = #tpu.dot_dimension_numbers<[1], [0], [0], [1], [0, 0, 1, 1], [], []>} : vector<8x4xf32>, vector<4x580xf32>, vector<8x580xf32> -> vector<8x580xf32>
    %26 = arith.addf %22, %25 : vector<8x580xf32>
    %c48 = arith.constant 48 : index
    %c0_20 = arith.constant 0 : index
    %27 = vector.load %arg2[%c48, %c0_20] : memref<72x4xf32, #tpu.memory_space<vmem>>, vector<8x4xf32>
    %c0_21 = arith.constant 0 : index
    %c32_22 = arith.constant 32 : index
    %28 = vector.load %arg1[%c0_21, %c32_22] : memref<4x614xf32, #tpu.memory_space<vmem>>, vector<4x580xf32>
    %cst_23 = arith.constant dense<0.000000e+00> : vector<8x580xf32>
    %29 = tpu.matmul %27, %28, %cst_23 {dimension_numbers = #tpu.dot_dimension_numbers<[1], [0], [0], [1], [0, 0, 1, 1], [], []>} : vector<8x4xf32>, vector<4x580xf32>, vector<8x580xf32> -> vector<8x580xf32>
    %30 = arith.addf %26, %29 : vector<8x580xf32>
    %c56 = arith.constant 56 : index
    %c0_24 = arith.constant 0 : index
    %31 = vector.load %arg2[%c56, %c0_24] : memref<72x4xf32, #tpu.memory_space<vmem>>, vector<8x4xf32>
    %c0_25 = arith.constant 0 : index
    %c33 = arith.constant 33 : index
    %32 = vector.load %arg1[%c0_25, %c33] : memref<4x614xf32, #tpu.memory_space<vmem>>, vector<4x580xf32>
    %cst_26 = arith.constant dense<0.000000e+00> : vector<8x580xf32>
    %33 = tpu.matmul %31, %32, %cst_26 {dimension_numbers = #tpu.dot_dimension_numbers<[1], [0], [0], [1], [0, 0, 1, 1], [], []>} : vector<8x4xf32>, vector<4x580xf32>, vector<8x580xf32> -> vector<8x580xf32>
    %34 = arith.addf %30, %33 : vector<8x580xf32>
    %c64 = arith.constant 64 : index
    %c0_27 = arith.constant 0 : index
    %35 = vector.load %arg2[%c64, %c0_27] : memref<72x4xf32, #tpu.memory_space<vmem>>, vector<8x4xf32>
    %c0_28 = arith.constant 0 : index
    %c34 = arith.constant 34 : index
    %36 = vector.load %arg1[%c0_28, %c34] : memref<4x614xf32, #tpu.memory_space<vmem>>, vector<4x580xf32>
    %cst_29 = arith.constant dense<0.000000e+00> : vector<8x580xf32>
    %37 = tpu.matmul %35, %36, %cst_29 {dimension_numbers = #tpu.dot_dimension_numbers<[1], [0], [0], [1], [0, 0, 1, 1], [], []>} : vector<8x4xf32>, vector<4x580xf32>, vector<8x580xf32> -> vector<8x580xf32>
    %38 = arith.addf %34, %37 : vector<8x580xf32>
    %c0_30 = arith.constant 0 : index
    %c0_31 = arith.constant 0 : index
    %39 = vector.load %arg3[%c0_30, %c0_31] : memref<8x1xf32, #tpu.memory_space<vmem>>, vector<8x1xf32>
    %40 = vector.broadcast %39 : vector<8x1xf32> to vector<8x580xf32>
    %41 = arith.addf %38, %40 : vector<8x580xf32>
    %cst_32 = arith.constant 0.000000e+00 : f32
    %42 = vector.broadcast %cst_32 : f32 to vector<8x580xf32>
    %43 = arith.maximumf %41, %42 : vector<8x580xf32>
    %c0_33 = arith.constant 0 : index
    %c0_34 = arith.constant 0 : index
    %44 = vector.load %arg13[%c0_33, %c0_34] : memref<8x580xf32, #tpu.memory_space<vmem>>, vector<8x580xf32>
    tpu.vector_store %arg13[%c0_33, %c0_34], %43 {strides = array<i32>} : memref<8x580xf32, #tpu.memory_space<vmem>>, vector<8x580xf32>,
    %cst_35 = arith.constant 0.000000e+00 : f32
    %45 = vector.broadcast %cst_35 : f32 to vector<16x546xf32>
    %c0_36 = arith.constant 0 : index
    %c0_37 = arith.constant 0 : index
    %46 = vector.load %arg4[%c0_36, %c0_37] : memref<144x8xf32, #tpu.memory_space<vmem>>, vector<16x8xf32>
    %c0_38 = arith.constant 0 : index
    %c0_39 = arith.constant 0 : index
    %47 = vector.load %arg13[%c0_38, %c0_39] : memref<8x580xf32, #tpu.memory_space<vmem>>, vector<8x546xf32>
    %cst_40 = arith.constant dense<0.000000e+00> : vector<16x546xf32>
    %48 = tpu.matmul %46, %47, %cst_40 {dimension_numbers = #tpu.dot_dimension_numbers<[1], [0], [0], [1], [0, 0, 1, 1], [], []>} : vector<16x8xf32>, vector<8x546xf32>, vector<16x546xf32> -> vector<16x546xf32>
    %49 = arith.addf %45, %48 : vector<16x546xf32>
    %c16_41 = arith.constant 16 : index
    %c0_42 = arith.constant 0 : index
    %50 = vector.load %arg4[%c16_41, %c0_42] : memref<144x8xf32, #tpu.memory_space<vmem>>, vector<16x8xf32>
    %c0_43 = arith.constant 0 : index
    %c1_44 = arith.constant 1 : index
    %51 = vector.load %arg13[%c0_43, %c1_44] : memref<8x580xf32, #tpu.memory_space<vmem>>, vector<8x546xf32>
    %cst_45 = arith.constant dense<0.000000e+00> : vector<16x546xf32>
    %52 = tpu.matmul %50, %51, %cst_45 {dimension_numbers = #tpu.dot_dimension_numbers<[1], [0], [0], [1], [0, 0, 1, 1], [], []>} : vector<16x8xf32>, vector<8x546xf32>, vector<16x546xf32> -> vector<16x546xf32>
    %53 = arith.addf %49, %52 : vector<16x546xf32>
    %c32_46 = arith.constant 32 : index
    %c0_47 = arith.constant 0 : index
    %54 = vector.load %arg4[%c32_46, %c0_47] : memref<144x8xf32, #tpu.memory_space<vmem>>, vector<16x8xf32>
    %c0_48 = arith.constant 0 : index
    %c2_49 = arith.constant 2 : index
    %55 = vector.load %arg13[%c0_48, %c2_49] : memref<8x580xf32, #tpu.memory_space<vmem>>, vector<8x546xf32>
    %cst_50 = arith.constant dense<0.000000e+00> : vector<16x546xf32>
    %56 = tpu.matmul %54, %55, %cst_50 {dimension_numbers = #tpu.dot_dimension_numbers<[1], [0], [0], [1], [0, 0, 1, 1], [], []>} : vector<16x8xf32>, vector<8x546xf32>, vector<16x546xf32> -> vector<16x546xf32>
    %57 = arith.addf %53, %56 : vector<16x546xf32>
    %c48_51 = arith.constant 48 : index
    %c0_52 = arith.constant 0 : index
    %58 = vector.load %arg4[%c48_51, %c0_52] : memref<144x8xf32, #tpu.memory_space<vmem>>, vector<16x8xf32>
    %c0_53 = arith.constant 0 : index
    %c16_54 = arith.constant 16 : index
    %59 = vector.load %arg13[%c0_53, %c16_54] : memref<8x580xf32, #tpu.memory_space<vmem>>, vector<8x546xf32>
    %cst_55 = arith.constant dense<0.000000e+00> : vector<16x546xf32>
    %60 = tpu.matmul %58, %59, %cst_55 {dimension_numbers = #tpu.dot_dimension_numbers<[1], [0], [0], [1], [0, 0, 1, 1], [], []>} : vector<16x8xf32>, vector<8x546xf32>, vector<16x546xf32> -> vector<16x546xf32>
    %61 = arith.addf %57, %60 : vector<16x546xf32>
    %c64_56 = arith.constant 64 : index
    %c0_57 = arith.constant 0 : index
    %62 = vector.load %arg4[%c64_56, %c0_57] : memref<144x8xf32, #tpu.memory_space<vmem>>, vector<16x8xf32>
    %c0_58 = arith.constant 0 : index
    %c17_59 = arith.constant 17 : index
    %63 = vector.load %arg13[%c0_58, %c17_59] : memref<8x580xf32, #tpu.memory_space<vmem>>, vector<8x546xf32>
    %cst_60 = arith.constant dense<0.000000e+00> : vector<16x546xf32>
    %64 = tpu.matmul %62, %63, %cst_60 {dimension_numbers = #tpu.dot_dimension_numbers<[1], [0], [0], [1], [0, 0, 1, 1], [], []>} : vector<16x8xf32>, vector<8x546xf32>, vector<16x546xf32> -> vector<16x546xf32>
    %65 = arith.addf %61, %64 : vector<16x546xf32>
    %c80 = arith.constant 80 : index
    %c0_61 = arith.constant 0 : index
    %66 = vector.load %arg4[%c80, %c0_61] : memref<144x8xf32, #tpu.memory_space<vmem>>, vector<16x8xf32>
    %c0_62 = arith.constant 0 : index
    %c18_63 = arith.constant 18 : index
    %67 = vector.load %arg13[%c0_62, %c18_63] : memref<8x580xf32, #tpu.memory_space<vmem>>, vector<8x546xf32>
    %cst_64 = arith.constant dense<0.000000e+00> : vector<16x546xf32>
    %68 = tpu.matmul %66, %67, %cst_64 {dimension_numbers = #tpu.dot_dimension_numbers<[1], [0], [0], [1], [0, 0, 1, 1], [], []>} : vector<16x8xf32>, vector<8x546xf32>, vector<16x546xf32> -> vector<16x546xf32>
    %69 = arith.addf %65, %68 : vector<16x546xf32>
    %c96 = arith.constant 96 : index
    %c0_65 = arith.constant 0 : index
    %70 = vector.load %arg4[%c96, %c0_65] : memref<144x8xf32, #tpu.memory_space<vmem>>, vector<16x8xf32>
    %c0_66 = arith.constant 0 : index
    %c32_67 = arith.constant 32 : index
    %71 = vector.load %arg13[%c0_66, %c32_67] : memref<8x580xf32, #tpu.memory_space<vmem>>, vector<8x546xf32>
    %cst_68 = arith.constant dense<0.000000e+00> : vector<16x546xf32>
    %72 = tpu.matmul %70, %71, %cst_68 {dimension_numbers = #tpu.dot_dimension_numbers<[1], [0], [0], [1], [0, 0, 1, 1], [], []>} : vector<16x8xf32>, vector<8x546xf32>, vector<16x546xf32> -> vector<16x546xf32>
    %73 = arith.addf %69, %72 : vector<16x546xf32>
    %c112 = arith.constant 112 : index
    %c0_69 = arith.constant 0 : index
    %74 = vector.load %arg4[%c112, %c0_69] : memref<144x8xf32, #tpu.memory_space<vmem>>, vector<16x8xf32>
    %c0_70 = arith.constant 0 : index
    %c33_71 = arith.constant 33 : index
    %75 = vector.load %arg13[%c0_70, %c33_71] : memref<8x580xf32, #tpu.memory_space<vmem>>, vector<8x546xf32>
    %cst_72 = arith.constant dense<0.000000e+00> : vector<16x546xf32>
    %76 = tpu.matmul %74, %75, %cst_72 {dimension_numbers = #tpu.dot_dimension_numbers<[1], [0], [0], [1], [0, 0, 1, 1], [], []>} : vector<16x8xf32>, vector<8x546xf32>, vector<16x546xf32> -> vector<16x546xf32>
    %77 = arith.addf %73, %76 : vector<16x546xf32>
    %c128 = arith.constant 128 : index
    %c0_73 = arith.constant 0 : index
    %78 = vector.load %arg4[%c128, %c0_73] : memref<144x8xf32, #tpu.memory_space<vmem>>, vector<16x8xf32>
    %c0_74 = arith.constant 0 : index
    %c34_75 = arith.constant 34 : index
    %79 = vector.load %arg13[%c0_74, %c34_75] : memref<8x580xf32, #tpu.memory_space<vmem>>, vector<8x546xf32>
    %cst_76 = arith.constant dense<0.000000e+00> : vector<16x546xf32>
    %80 = tpu.matmul %78, %79, %cst_76 {dimension_numbers = #tpu.dot_dimension_numbers<[1], [0], [0], [1], [0, 0, 1, 1], [], []>} : vector<16x8xf32>, vector<8x546xf32>, vector<16x546xf32> -> vector<16x546xf32>
    %81 = arith.addf %77, %80 : vector<16x546xf32>
    %c0_77 = arith.constant 0 : index
    %c0_78 = arith.constant 0 : index
    %82 = vector.load %arg5[%c0_77, %c0_78] : memref<16x1xf32, #tpu.memory_space<vmem>>, vector<16x1xf32>
    %83 = vector.broadcast %82 : vector<16x1xf32> to vector<16x546xf32>
    %84 = arith.addf %81, %83 : vector<16x546xf32>
    %cst_79 = arith.constant 0.000000e+00 : f32
    %85 = vector.broadcast %cst_79 : f32 to vector<16x546xf32>
    %86 = arith.maximumf %84, %85 : vector<16x546xf32>
    %c0_80 = arith.constant 0 : index
    %c0_81 = arith.constant 0 : index
    %87 = vector.load %arg14[%c0_80, %c0_81] : memref<16x546xf32, #tpu.memory_space<vmem>>, vector<16x546xf32>
    tpu.vector_store %arg14[%c0_80, %c0_81], %86 {strides = array<i32>} : memref<16x546xf32, #tpu.memory_space<vmem>>, vector<16x546xf32>,
    %cst_82 = arith.constant 0.000000e+00 : f32
    %88 = vector.broadcast %cst_82 : f32 to vector<32x512xf32>
    %c0_83 = arith.constant 0 : index
    %c0_84 = arith.constant 0 : index
    %89 = vector.load %arg6[%c0_83, %c0_84] : memref<288x16xf32, #tpu.memory_space<vmem>>, vector<32x16xf32>
    %c0_85 = arith.constant 0 : index
    %c0_86 = arith.constant 0 : index
    %90 = vector.load %arg14[%c0_85, %c0_86] : memref<16x546xf32, #tpu.memory_space<vmem>>, vector<16x512xf32>
    %cst_87 = arith.constant dense<0.000000e+00> : vector<32x512xf32>
    %91 = tpu.matmul %89, %90, %cst_87 {dimension_numbers = #tpu.dot_dimension_numbers<[1], [0], [0], [1], [0, 0, 1, 1], [], []>} : vector<32x16xf32>, vector<16x512xf32>, vector<32x512xf32> -> vector<32x512xf32>
    %92 = arith.addf %88, %91 : vector<32x512xf32>
    %c32_88 = arith.constant 32 : index
    %c0_89 = arith.constant 0 : index
    %93 = vector.load %arg6[%c32_88, %c0_89] : memref<288x16xf32, #tpu.memory_space<vmem>>, vector<32x16xf32>
    %c0_90 = arith.constant 0 : index
    %c1_91 = arith.constant 1 : index
    %94 = vector.load %arg14[%c0_90, %c1_91] : memref<16x546xf32, #tpu.memory_space<vmem>>, vector<16x512xf32>
    %cst_92 = arith.constant dense<0.000000e+00> : vector<32x512xf32>
    %95 = tpu.matmul %93, %94, %cst_92 {dimension_numbers = #tpu.dot_dimension_numbers<[1], [0], [0], [1], [0, 0, 1, 1], [], []>} : vector<32x16xf32>, vector<16x512xf32>, vector<32x512xf32> -> vector<32x512xf32>
    %96 = arith.addf %92, %95 : vector<32x512xf32>
    %c64_93 = arith.constant 64 : index
    %c0_94 = arith.constant 0 : index
    %97 = vector.load %arg6[%c64_93, %c0_94] : memref<288x16xf32, #tpu.memory_space<vmem>>, vector<32x16xf32>
    %c0_95 = arith.constant 0 : index
    %c2_96 = arith.constant 2 : index
    %98 = vector.load %arg14[%c0_95, %c2_96] : memref<16x546xf32, #tpu.memory_space<vmem>>, vector<16x512xf32>
    %cst_97 = arith.constant dense<0.000000e+00> : vector<32x512xf32>
    %99 = tpu.matmul %97, %98, %cst_97 {dimension_numbers = #tpu.dot_dimension_numbers<[1], [0], [0], [1], [0, 0, 1, 1], [], []>} : vector<32x16xf32>, vector<16x512xf32>, vector<32x512xf32> -> vector<32x512xf32>
    %100 = arith.addf %96, %99 : vector<32x512xf32>
    %c96_98 = arith.constant 96 : index
    %c0_99 = arith.constant 0 : index
    %101 = vector.load %arg6[%c96_98, %c0_99] : memref<288x16xf32, #tpu.memory_space<vmem>>, vector<32x16xf32>
    %c0_100 = arith.constant 0 : index
    %c16_101 = arith.constant 16 : index
    %102 = vector.load %arg14[%c0_100, %c16_101] : memref<16x546xf32, #tpu.memory_space<vmem>>, vector<16x512xf32>
    %cst_102 = arith.constant dense<0.000000e+00> : vector<32x512xf32>
    %103 = tpu.matmul %101, %102, %cst_102 {dimension_numbers = #tpu.dot_dimension_numbers<[1], [0], [0], [1], [0, 0, 1, 1], [], []>} : vector<32x16xf32>, vector<16x512xf32>, vector<32x512xf32> -> vector<32x512xf32>
    %104 = arith.addf %100, %103 : vector<32x512xf32>
    %c128_103 = arith.constant 128 : index
    %c0_104 = arith.constant 0 : index
    %105 = vector.load %arg6[%c128_103, %c0_104] : memref<288x16xf32, #tpu.memory_space<vmem>>, vector<32x16xf32>
    %c0_105 = arith.constant 0 : index
    %c17_106 = arith.constant 17 : index
    %106 = vector.load %arg14[%c0_105, %c17_106] : memref<16x546xf32, #tpu.memory_space<vmem>>, vector<16x512xf32>
    %cst_107 = arith.constant dense<0.000000e+00> : vector<32x512xf32>
    %107 = tpu.matmul %105, %106, %cst_107 {dimension_numbers = #tpu.dot_dimension_numbers<[1], [0], [0], [1], [0, 0, 1, 1], [], []>} : vector<32x16xf32>, vector<16x512xf32>, vector<32x512xf32> -> vector<32x512xf32>
    %108 = arith.addf %104, %107 : vector<32x512xf32>
    %c160 = arith.constant 160 : index
    %c0_108 = arith.constant 0 : index
    %109 = vector.load %arg6[%c160, %c0_108] : memref<288x16xf32, #tpu.memory_space<vmem>>, vector<32x16xf32>
    %c0_109 = arith.constant 0 : index
    %c18_110 = arith.constant 18 : index
    %110 = vector.load %arg14[%c0_109, %c18_110] : memref<16x546xf32, #tpu.memory_space<vmem>>, vector<16x512xf32>
    %cst_111 = arith.constant dense<0.000000e+00> : vector<32x512xf32>
    %111 = tpu.matmul %109, %110, %cst_111 {dimension_numbers = #tpu.dot_dimension_numbers<[1], [0], [0], [1], [0, 0, 1, 1], [], []>} : vector<32x16xf32>, vector<16x512xf32>, vector<32x512xf32> -> vector<32x512xf32>
    %112 = arith.addf %108, %111 : vector<32x512xf32>
    %c192 = arith.constant 192 : index
    %c0_112 = arith.constant 0 : index
    %113 = vector.load %arg6[%c192, %c0_112] : memref<288x16xf32, #tpu.memory_space<vmem>>, vector<32x16xf32>
    %c0_113 = arith.constant 0 : index
    %c32_114 = arith.constant 32 : index
    %114 = vector.load %arg14[%c0_113, %c32_114] : memref<16x546xf32, #tpu.memory_space<vmem>>, vector<16x512xf32>
    %cst_115 = arith.constant dense<0.000000e+00> : vector<32x512xf32>
    %115 = tpu.matmul %113, %114, %cst_115 {dimension_numbers = #tpu.dot_dimension_numbers<[1], [0], [0], [1], [0, 0, 1, 1], [], []>} : vector<32x16xf32>, vector<16x512xf32>, vector<32x512xf32> -> vector<32x512xf32>
    %116 = arith.addf %112, %115 : vector<32x512xf32>
    %c224 = arith.constant 224 : index
    %c0_116 = arith.constant 0 : index
    %117 = vector.load %arg6[%c224, %c0_116] : memref<288x16xf32, #tpu.memory_space<vmem>>, vector<32x16xf32>
    %c0_117 = arith.constant 0 : index
    %c33_118 = arith.constant 33 : index
    %118 = vector.load %arg14[%c0_117, %c33_118] : memref<16x546xf32, #tpu.memory_space<vmem>>, vector<16x512xf32>
    %cst_119 = arith.constant dense<0.000000e+00> : vector<32x512xf32>
    %119 = tpu.matmul %117, %118, %cst_119 {dimension_numbers = #tpu.dot_dimension_numbers<[1], [0], [0], [1], [0, 0, 1, 1], [], []>} : vector<32x16xf32>, vector<16x512xf32>, vector<32x512xf32> -> vector<32x512xf32>
    %120 = arith.addf %116, %119 : vector<32x512xf32>
    %c256 = arith.constant 256 : index
    %c0_120 = arith.constant 0 : index
    %121 = vector.load %arg6[%c256, %c0_120] : memref<288x16xf32, #tpu.memory_space<vmem>>, vector<32x16xf32>
    %c0_121 = arith.constant 0 : index
    %c34_122 = arith.constant 34 : index
    %122 = vector.load %arg14[%c0_121, %c34_122] : memref<16x546xf32, #tpu.memory_space<vmem>>, vector<16x512xf32>
    %cst_123 = arith.constant dense<0.000000e+00> : vector<32x512xf32>
    %123 = tpu.matmul %121, %122, %cst_123 {dimension_numbers = #tpu.dot_dimension_numbers<[1], [0], [0], [1], [0, 0, 1, 1], [], []>} : vector<32x16xf32>, vector<16x512xf32>, vector<32x512xf32> -> vector<32x512xf32>
    %124 = arith.addf %120, %123 : vector<32x512xf32>
    %c0_124 = arith.constant 0 : index
    %c0_125 = arith.constant 0 : index
    %125 = vector.load %arg7[%c0_124, %c0_125] : memref<32x1xf32, #tpu.memory_space<vmem>>, vector<32x1xf32>
    %126 = vector.broadcast %125 : vector<32x1xf32> to vector<32x512xf32>
    %127 = arith.addf %124, %126 : vector<32x512xf32>
    %cst_126 = arith.constant 0.000000e+00 : f32
    %128 = vector.broadcast %cst_126 : f32 to vector<32x512xf32>
    %129 = arith.maximumf %127, %128 : vector<32x512xf32>
    %c0_127 = arith.constant 0 : index
    %c0_128 = arith.constant 0 : index
    %130 = vector.load %arg15[%c0_127, %c0_128] : memref<32x512xf32, #tpu.memory_space<vmem>>, vector<32x512xf32>
    tpu.vector_store %arg15[%c0_127, %c0_128], %129 {strides = array<i32>} : memref<32x512xf32, #tpu.memory_space<vmem>>, vector<32x512xf32>,
    %c0_129 = arith.constant 0 : index
    %c0_130 = arith.constant 0 : index
    %131 = vector.load %arg15[%c0_129, %c0_130] : memref<32x512xf32, #tpu.memory_space<vmem>>, vector<1x256xf32>
    %c0_131 = arith.constant 0 : index
    %c0_132 = arith.constant 0 : index
    %132 = vector.load %arg16[%c0_131, %c0_132] : memref<2x8192xf32, #tpu.memory_space<vmem>>, vector<1x256xf32>
    tpu.vector_store %arg16[%c0_131, %c0_132], %131 {strides = array<i32>} : memref<2x8192xf32, #tpu.memory_space<vmem>>, vector<1x256xf32>,
    %c1_133 = arith.constant 1 : index
    %c0_134 = arith.constant 0 : index
    %133 = vector.load %arg15[%c1_133, %c0_134] : memref<32x512xf32, #tpu.memory_space<vmem>>, vector<1x256xf32>
    %c0_135 = arith.constant 0 : index
    %c256_136 = arith.constant 256 : index
    %134 = vector.load %arg16[%c0_135, %c256_136] : memref<2x8192xf32, #tpu.memory_space<vmem>>, vector<1x256xf32>
    tpu.vector_store %arg16[%c0_135, %c256_136], %133 {strides = array<i32>} : memref<2x8192xf32, #tpu.memory_space<vmem>>, vector<1x256xf32>,
    %c2_137 = arith.constant 2 : index
    %c0_138 = arith.constant 0 : index
    %135 = vector.load %arg15[%c2_137, %c0_138] : memref<32x512xf32, #tpu.memory_space<vmem>>, vector<1x256xf32>
    %c0_139 = arith.constant 0 : index
    %c512 = arith.constant 512 : index
    %136 = vector.load %arg16[%c0_139, %c512] : memref<2x8192xf32, #tpu.memory_space<vmem>>, vector<1x256xf32>
    tpu.vector_store %arg16[%c0_139, %c512], %135 {strides = array<i32>} : memref<2x8192xf32, #tpu.memory_space<vmem>>, vector<1x256xf32>,
    %c3 = arith.constant 3 : index
    %c0_140 = arith.constant 0 : index
    %137 = vector.load %arg15[%c3, %c0_140] : memref<32x512xf32, #tpu.memory_space<vmem>>, vector<1x256xf32>
    %c0_141 = arith.constant 0 : index
    %c768 = arith.constant 768 : index
    %138 = vector.load %arg16[%c0_141, %c768] : memref<2x8192xf32, #tpu.memory_space<vmem>>, vector<1x256xf32>
    tpu.vector_store %arg16[%c0_141, %c768], %137 {strides = array<i32>} : memref<2x8192xf32, #tpu.memory_space<vmem>>, vector<1x256xf32>,
    %c4 = arith.constant 4 : index
    %c0_142 = arith.constant 0 : index
    %139 = vector.load %arg15[%c4, %c0_142] : memref<32x512xf32, #tpu.memory_space<vmem>>, vector<1x256xf32>
    %c0_143 = arith.constant 0 : index
    %c1024 = arith.constant 1024 : index
    %140 = vector.load %arg16[%c0_143, %c1024] : memref<2x8192xf32, #tpu.memory_space<vmem>>, vector<1x256xf32>
    tpu.vector_store %arg16[%c0_143, %c1024], %139 {strides = array<i32>} : memref<2x8192xf32, #tpu.memory_space<vmem>>, vector<1x256xf32>,
    %c5 = arith.constant 5 : index
    %c0_144 = arith.constant 0 : index
    %141 = vector.load %arg15[%c5, %c0_144] : memref<32x512xf32, #tpu.memory_space<vmem>>, vector<1x256xf32>
    %c0_145 = arith.constant 0 : index
    %c1280 = arith.constant 1280 : index
    %142 = vector.load %arg16[%c0_145, %c1280] : memref<2x8192xf32, #tpu.memory_space<vmem>>, vector<1x256xf32>
    tpu.vector_store %arg16[%c0_145, %c1280], %141 {strides = array<i32>} : memref<2x8192xf32, #tpu.memory_space<vmem>>, vector<1x256xf32>,
    %c6 = arith.constant 6 : index
    %c0_146 = arith.constant 0 : index
    %143 = vector.load %arg15[%c6, %c0_146] : memref<32x512xf32, #tpu.memory_space<vmem>>, vector<1x256xf32>
    %c0_147 = arith.constant 0 : index
    %c1536 = arith.constant 1536 : index
    %144 = vector.load %arg16[%c0_147, %c1536] : memref<2x8192xf32, #tpu.memory_space<vmem>>, vector<1x256xf32>
    tpu.vector_store %arg16[%c0_147, %c1536], %143 {strides = array<i32>} : memref<2x8192xf32, #tpu.memory_space<vmem>>, vector<1x256xf32>,
    %c7 = arith.constant 7 : index
    %c0_148 = arith.constant 0 : index
    %145 = vector.load %arg15[%c7, %c0_148] : memref<32x512xf32, #tpu.memory_space<vmem>>, vector<1x256xf32>
    %c0_149 = arith.constant 0 : index
    %c1792 = arith.constant 1792 : index
    %146 = vector.load %arg16[%c0_149, %c1792] : memref<2x8192xf32, #tpu.memory_space<vmem>>, vector<1x256xf32>
    tpu.vector_store %arg16[%c0_149, %c1792], %145 {strides = array<i32>} : memref<2x8192xf32, #tpu.memory_space<vmem>>, vector<1x256xf32>,
    %c8_150 = arith.constant 8 : index
    %c0_151 = arith.constant 0 : index
    %147 = vector.load %arg15[%c8_150, %c0_151] : memref<32x512xf32, #tpu.memory_space<vmem>>, vector<1x256xf32>
    %c0_152 = arith.constant 0 : index
    %c2048 = arith.constant 2048 : index
    %148 = vector.load %arg16[%c0_152, %c2048] : memref<2x8192xf32, #tpu.memory_space<vmem>>, vector<1x256xf32>
    tpu.vector_store %arg16[%c0_152, %c2048], %147 {strides = array<i32>} : memref<2x8192xf32, #tpu.memory_space<vmem>>, vector<1x256xf32>,
    %c9 = arith.constant 9 : index
    %c0_153 = arith.constant 0 : index
    %149 = vector.load %arg15[%c9, %c0_153] : memref<32x512xf32, #tpu.memory_space<vmem>>, vector<1x256xf32>
    %c0_154 = arith.constant 0 : index
    %c2304 = arith.constant 2304 : index
    %150 = vector.load %arg16[%c0_154, %c2304] : memref<2x8192xf32, #tpu.memory_space<vmem>>, vector<1x256xf32>
    tpu.vector_store %arg16[%c0_154, %c2304], %149 {strides = array<i32>} : memref<2x8192xf32, #tpu.memory_space<vmem>>, vector<1x256xf32>,
    %c10 = arith.constant 10 : index
    %c0_155 = arith.constant 0 : index
    %151 = vector.load %arg15[%c10, %c0_155] : memref<32x512xf32, #tpu.memory_space<vmem>>, vector<1x256xf32>
    %c0_156 = arith.constant 0 : index
    %c2560 = arith.constant 2560 : index
    %152 = vector.load %arg16[%c0_156, %c2560] : memref<2x8192xf32, #tpu.memory_space<vmem>>, vector<1x256xf32>
    tpu.vector_store %arg16[%c0_156, %c2560], %151 {strides = array<i32>} : memref<2x8192xf32, #tpu.memory_space<vmem>>, vector<1x256xf32>,
    %c11 = arith.constant 11 : index
    %c0_157 = arith.constant 0 : index
    %153 = vector.load %arg15[%c11, %c0_157] : memref<32x512xf32, #tpu.memory_space<vmem>>, vector<1x256xf32>
    %c0_158 = arith.constant 0 : index
    %c2816 = arith.constant 2816 : index
    %154 = vector.load %arg16[%c0_158, %c2816] : memref<2x8192xf32, #tpu.memory_space<vmem>>, vector<1x256xf32>
    tpu.vector_store %arg16[%c0_158, %c2816], %153 {strides = array<i32>} : memref<2x8192xf32, #tpu.memory_space<vmem>>, vector<1x256xf32>,
    %c12 = arith.constant 12 : index
    %c0_159 = arith.constant 0 : index
    %155 = vector.load %arg15[%c12, %c0_159] : memref<32x512xf32, #tpu.memory_space<vmem>>, vector<1x256xf32>
    %c0_160 = arith.constant 0 : index
    %c3072 = arith.constant 3072 : index
    %156 = vector.load %arg16[%c0_160, %c3072] : memref<2x8192xf32, #tpu.memory_space<vmem>>, vector<1x256xf32>
    tpu.vector_store %arg16[%c0_160, %c3072], %155 {strides = array<i32>} : memref<2x8192xf32, #tpu.memory_space<vmem>>, vector<1x256xf32>,
    %c13 = arith.constant 13 : index
    %c0_161 = arith.constant 0 : index
    %157 = vector.load %arg15[%c13, %c0_161] : memref<32x512xf32, #tpu.memory_space<vmem>>, vector<1x256xf32>
    %c0_162 = arith.constant 0 : index
    %c3328 = arith.constant 3328 : index
    %158 = vector.load %arg16[%c0_162, %c3328] : memref<2x8192xf32, #tpu.memory_space<vmem>>, vector<1x256xf32>
    tpu.vector_store %arg16[%c0_162, %c3328], %157 {strides = array<i32>} : memref<2x8192xf32, #tpu.memory_space<vmem>>, vector<1x256xf32>,
    %c14 = arith.constant 14 : index
    %c0_163 = arith.constant 0 : index
    %159 = vector.load %arg15[%c14, %c0_163] : memref<32x512xf32, #tpu.memory_space<vmem>>, vector<1x256xf32>
    %c0_164 = arith.constant 0 : index
    %c3584 = arith.constant 3584 : index
    %160 = vector.load %arg16[%c0_164, %c3584] : memref<2x8192xf32, #tpu.memory_space<vmem>>, vector<1x256xf32>
    tpu.vector_store %arg16[%c0_164, %c3584], %159 {strides = array<i32>} : memref<2x8192xf32, #tpu.memory_space<vmem>>, vector<1x256xf32>,
    %c15 = arith.constant 15 : index
    %c0_165 = arith.constant 0 : index
    %161 = vector.load %arg15[%c15, %c0_165] : memref<32x512xf32, #tpu.memory_space<vmem>>, vector<1x256xf32>
    %c0_166 = arith.constant 0 : index
    %c3840 = arith.constant 3840 : index
    %162 = vector.load %arg16[%c0_166, %c3840] : memref<2x8192xf32, #tpu.memory_space<vmem>>, vector<1x256xf32>
    tpu.vector_store %arg16[%c0_166, %c3840], %161 {strides = array<i32>} : memref<2x8192xf32, #tpu.memory_space<vmem>>, vector<1x256xf32>,
    %c16_167 = arith.constant 16 : index
    %c0_168 = arith.constant 0 : index
    %163 = vector.load %arg15[%c16_167, %c0_168] : memref<32x512xf32, #tpu.memory_space<vmem>>, vector<1x256xf32>
    %c0_169 = arith.constant 0 : index
    %c4096 = arith.constant 4096 : index
    %164 = vector.load %arg16[%c0_169, %c4096] : memref<2x8192xf32, #tpu.memory_space<vmem>>, vector<1x256xf32>
    tpu.vector_store %arg16[%c0_169, %c4096], %163 {strides = array<i32>} : memref<2x8192xf32, #tpu.memory_space<vmem>>, vector<1x256xf32>,
    %c17_170 = arith.constant 17 : index
    %c0_171 = arith.constant 0 : index
    %165 = vector.load %arg15[%c17_170, %c0_171] : memref<32x512xf32, #tpu.memory_space<vmem>>, vector<1x256xf32>
    %c0_172 = arith.constant 0 : index
    %c4352 = arith.constant 4352 : index
    %166 = vector.load %arg16[%c0_172, %c4352] : memref<2x8192xf32, #tpu.memory_space<vmem>>, vector<1x256xf32>
    tpu.vector_store %arg16[%c0_172, %c4352], %165 {strides = array<i32>} : memref<2x8192xf32, #tpu.memory_space<vmem>>, vector<1x256xf32>,
    %c18_173 = arith.constant 18 : index
    %c0_174 = arith.constant 0 : index
    %167 = vector.load %arg15[%c18_173, %c0_174] : memref<32x512xf32, #tpu.memory_space<vmem>>, vector<1x256xf32>
    %c0_175 = arith.constant 0 : index
    %c4608 = arith.constant 4608 : index
    %168 = vector.load %arg16[%c0_175, %c4608] : memref<2x8192xf32, #tpu.memory_space<vmem>>, vector<1x256xf32>
    tpu.vector_store %arg16[%c0_175, %c4608], %167 {strides = array<i32>} : memref<2x8192xf32, #tpu.memory_space<vmem>>, vector<1x256xf32>,
    %c19 = arith.constant 19 : index
    %c0_176 = arith.constant 0 : index
    %169 = vector.load %arg15[%c19, %c0_176] : memref<32x512xf32, #tpu.memory_space<vmem>>, vector<1x256xf32>
    %c0_177 = arith.constant 0 : index
    %c4864 = arith.constant 4864 : index
    %170 = vector.load %arg16[%c0_177, %c4864] : memref<2x8192xf32, #tpu.memory_space<vmem>>, vector<1x256xf32>
    tpu.vector_store %arg16[%c0_177, %c4864], %169 {strides = array<i32>} : memref<2x8192xf32, #tpu.memory_space<vmem>>, vector<1x256xf32>,
    %c20 = arith.constant 20 : index
    %c0_178 = arith.constant 0 : index
    %171 = vector.load %arg15[%c20, %c0_178] : memref<32x512xf32, #tpu.memory_space<vmem>>, vector<1x256xf32>
    %c0_179 = arith.constant 0 : index
    %c5120 = arith.constant 5120 : index
    %172 = vector.load %arg16[%c0_179, %c5120] : memref<2x8192xf32, #tpu.memory_space<vmem>>, vector<1x256xf32>
    tpu.vector_store %arg16[%c0_179, %c5120], %171 {strides = array<i32>} : memref<2x8192xf32, #tpu.memory_space<vmem>>, vector<1x256xf32>,
    %c21 = arith.constant 21 : index
    %c0_180 = arith.constant 0 : index
    %173 = vector.load %arg15[%c21, %c0_180] : memref<32x512xf32, #tpu.memory_space<vmem>>, vector<1x256xf32>
    %c0_181 = arith.constant 0 : index
    %c5376 = arith.constant 5376 : index
    %174 = vector.load %arg16[%c0_181, %c5376] : memref<2x8192xf32, #tpu.memory_space<vmem>>, vector<1x256xf32>
    tpu.vector_store %arg16[%c0_181, %c5376], %173 {strides = array<i32>} : memref<2x8192xf32, #tpu.memory_space<vmem>>, vector<1x256xf32>,
    %c22 = arith.constant 22 : index
    %c0_182 = arith.constant 0 : index
    %175 = vector.load %arg15[%c22, %c0_182] : memref<32x512xf32, #tpu.memory_space<vmem>>, vector<1x256xf32>
    %c0_183 = arith.constant 0 : index
    %c5632 = arith.constant 5632 : index
    %176 = vector.load %arg16[%c0_183, %c5632] : memref<2x8192xf32, #tpu.memory_space<vmem>>, vector<1x256xf32>
    tpu.vector_store %arg16[%c0_183, %c5632], %175 {strides = array<i32>} : memref<2x8192xf32, #tpu.memory_space<vmem>>, vector<1x256xf32>,
    %c23 = arith.constant 23 : index
    %c0_184 = arith.constant 0 : index
    %177 = vector.load %arg15[%c23, %c0_184] : memref<32x512xf32, #tpu.memory_space<vmem>>, vector<1x256xf32>
    %c0_185 = arith.constant 0 : index
    %c5888 = arith.constant 5888 : index
    %178 = vector.load %arg16[%c0_185, %c5888] : memref<2x8192xf32, #tpu.memory_space<vmem>>, vector<1x256xf32>
    tpu.vector_store %arg16[%c0_185, %c5888], %177 {strides = array<i32>} : memref<2x8192xf32, #tpu.memory_space<vmem>>, vector<1x256xf32>,
    %c24_186 = arith.constant 24 : index
    %c0_187 = arith.constant 0 : index
    %179 = vector.load %arg15[%c24_186, %c0_187] : memref<32x512xf32, #tpu.memory_space<vmem>>, vector<1x256xf32>
    %c0_188 = arith.constant 0 : index
    %c6144 = arith.constant 6144 : index
    %180 = vector.load %arg16[%c0_188, %c6144] : memref<2x8192xf32, #tpu.memory_space<vmem>>, vector<1x256xf32>
    tpu.vector_store %arg16[%c0_188, %c6144], %179 {strides = array<i32>} : memref<2x8192xf32, #tpu.memory_space<vmem>>, vector<1x256xf32>,
    %c25 = arith.constant 25 : index
    %c0_189 = arith.constant 0 : index
    %181 = vector.load %arg15[%c25, %c0_189] : memref<32x512xf32, #tpu.memory_space<vmem>>, vector<1x256xf32>
    %c0_190 = arith.constant 0 : index
    %c6400 = arith.constant 6400 : index
    %182 = vector.load %arg16[%c0_190, %c6400] : memref<2x8192xf32, #tpu.memory_space<vmem>>, vector<1x256xf32>
    tpu.vector_store %arg16[%c0_190, %c6400], %181 {strides = array<i32>} : memref<2x8192xf32, #tpu.memory_space<vmem>>, vector<1x256xf32>,
    %c26 = arith.constant 26 : index
    %c0_191 = arith.constant 0 : index
    %183 = vector.load %arg15[%c26, %c0_191] : memref<32x512xf32, #tpu.memory_space<vmem>>, vector<1x256xf32>
    %c0_192 = arith.constant 0 : index
    %c6656 = arith.constant 6656 : index
    %184 = vector.load %arg16[%c0_192, %c6656] : memref<2x8192xf32, #tpu.memory_space<vmem>>, vector<1x256xf32>
    tpu.vector_store %arg16[%c0_192, %c6656], %183 {strides = array<i32>} : memref<2x8192xf32, #tpu.memory_space<vmem>>, vector<1x256xf32>,
    %c27 = arith.constant 27 : index
    %c0_193 = arith.constant 0 : index
    %185 = vector.load %arg15[%c27, %c0_193] : memref<32x512xf32, #tpu.memory_space<vmem>>, vector<1x256xf32>
    %c0_194 = arith.constant 0 : index
    %c6912 = arith.constant 6912 : index
    %186 = vector.load %arg16[%c0_194, %c6912] : memref<2x8192xf32, #tpu.memory_space<vmem>>, vector<1x256xf32>
    tpu.vector_store %arg16[%c0_194, %c6912], %185 {strides = array<i32>} : memref<2x8192xf32, #tpu.memory_space<vmem>>, vector<1x256xf32>,
    %c28 = arith.constant 28 : index
    %c0_195 = arith.constant 0 : index
    %187 = vector.load %arg15[%c28, %c0_195] : memref<32x512xf32, #tpu.memory_space<vmem>>, vector<1x256xf32>
    %c0_196 = arith.constant 0 : index
    %c7168 = arith.constant 7168 : index
    %188 = vector.load %arg16[%c0_196, %c7168] : memref<2x8192xf32, #tpu.memory_space<vmem>>, vector<1x256xf32>
    tpu.vector_store %arg16[%c0_196, %c7168], %187 {strides = array<i32>} : memref<2x8192xf32, #tpu.memory_space<vmem>>, vector<1x256xf32>,
    %c29 = arith.constant 29 : index
    %c0_197 = arith.constant 0 : index
    %189 = vector.load %arg15[%c29, %c0_197] : memref<32x512xf32, #tpu.memory_space<vmem>>, vector<1x256xf32>
    %c0_198 = arith.constant 0 : index
    %c7424 = arith.constant 7424 : index
    %190 = vector.load %arg16[%c0_198, %c7424] : memref<2x8192xf32, #tpu.memory_space<vmem>>, vector<1x256xf32>
    tpu.vector_store %arg16[%c0_198, %c7424], %189 {strides = array<i32>} : memref<2x8192xf32, #tpu.memory_space<vmem>>, vector<1x256xf32>,
    %c30 = arith.constant 30 : index
    %c0_199 = arith.constant 0 : index
    %191 = vector.load %arg15[%c30, %c0_199] : memref<32x512xf32, #tpu.memory_space<vmem>>, vector<1x256xf32>
    %c0_200 = arith.constant 0 : index
    %c7680 = arith.constant 7680 : index
    %192 = vector.load %arg16[%c0_200, %c7680] : memref<2x8192xf32, #tpu.memory_space<vmem>>, vector<1x256xf32>
    tpu.vector_store %arg16[%c0_200, %c7680], %191 {strides = array<i32>} : memref<2x8192xf32, #tpu.memory_space<vmem>>, vector<1x256xf32>,
    %c31 = arith.constant 31 : index
    %c0_201 = arith.constant 0 : index
    %193 = vector.load %arg15[%c31, %c0_201] : memref<32x512xf32, #tpu.memory_space<vmem>>, vector<1x256xf32>
    %c0_202 = arith.constant 0 : index
    %c7936 = arith.constant 7936 : index
    %194 = vector.load %arg16[%c0_202, %c7936] : memref<2x8192xf32, #tpu.memory_space<vmem>>, vector<1x256xf32>
    tpu.vector_store %arg16[%c0_202, %c7936], %193 {strides = array<i32>} : memref<2x8192xf32, #tpu.memory_space<vmem>>, vector<1x256xf32>,
    %c0_203 = arith.constant 0 : index
    %c256_204 = arith.constant 256 : index
    %195 = vector.load %arg15[%c0_203, %c256_204] : memref<32x512xf32, #tpu.memory_space<vmem>>, vector<1x256xf32>
    %c1_205 = arith.constant 1 : index
    %c0_206 = arith.constant 0 : index
    %196 = vector.load %arg16[%c1_205, %c0_206] : memref<2x8192xf32, #tpu.memory_space<vmem>>, vector<1x256xf32>
    tpu.vector_store %arg16[%c1_205, %c0_206], %195 {strides = array<i32>} : memref<2x8192xf32, #tpu.memory_space<vmem>>, vector<1x256xf32>,
    %c1_207 = arith.constant 1 : index
    %c256_208 = arith.constant 256 : index
    %197 = vector.load %arg15[%c1_207, %c256_208] : memref<32x512xf32, #tpu.memory_space<vmem>>, vector<1x256xf32>
    %c1_209 = arith.constant 1 : index
    %c256_210 = arith.constant 256 : index
    %198 = vector.load %arg16[%c1_209, %c256_210] : memref<2x8192xf32, #tpu.memory_space<vmem>>, vector<1x256xf32>
    tpu.vector_store %arg16[%c1_209, %c256_210], %197 {strides = array<i32>} : memref<2x8192xf32, #tpu.memory_space<vmem>>, vector<1x256xf32>,
    %c2_211 = arith.constant 2 : index
    %c256_212 = arith.constant 256 : index
    %199 = vector.load %arg15[%c2_211, %c256_212] : memref<32x512xf32, #tpu.memory_space<vmem>>, vector<1x256xf32>
    %c1_213 = arith.constant 1 : index
    %c512_214 = arith.constant 512 : index
    %200 = vector.load %arg16[%c1_213, %c512_214] : memref<2x8192xf32, #tpu.memory_space<vmem>>, vector<1x256xf32>
    tpu.vector_store %arg16[%c1_213, %c512_214], %199 {strides = array<i32>} : memref<2x8192xf32, #tpu.memory_space<vmem>>, vector<1x256xf32>,
    %c3_215 = arith.constant 3 : index
    %c256_216 = arith.constant 256 : index
    %201 = vector.load %arg15[%c3_215, %c256_216] : memref<32x512xf32, #tpu.memory_space<vmem>>, vector<1x256xf32>
    %c1_217 = arith.constant 1 : index
    %c768_218 = arith.constant 768 : index
    %202 = vector.load %arg16[%c1_217, %c768_218] : memref<2x8192xf32, #tpu.memory_space<vmem>>, vector<1x256xf32>
    tpu.vector_store %arg16[%c1_217, %c768_218], %201 {strides = array<i32>} : memref<2x8192xf32, #tpu.memory_space<vmem>>, vector<1x256xf32>,
    %c4_219 = arith.constant 4 : index
    %c256_220 = arith.constant 256 : index
    %203 = vector.load %arg15[%c4_219, %c256_220] : memref<32x512xf32, #tpu.memory_space<vmem>>, vector<1x256xf32>
    %c1_221 = arith.constant 1 : index
    %c1024_222 = arith.constant 1024 : index
    %204 = vector.load %arg16[%c1_221, %c1024_222] : memref<2x8192xf32, #tpu.memory_space<vmem>>, vector<1x256xf32>
    tpu.vector_store %arg16[%c1_221, %c1024_222], %203 {strides = array<i32>} : memref<2x8192xf32, #tpu.memory_space<vmem>>, vector<1x256xf32>,
    %c5_223 = arith.constant 5 : index
    %c256_224 = arith.constant 256 : index
    %205 = vector.load %arg15[%c5_223, %c256_224] : memref<32x512xf32, #tpu.memory_space<vmem>>, vector<1x256xf32>
    %c1_225 = arith.constant 1 : index
    %c1280_226 = arith.constant 1280 : index
    %206 = vector.load %arg16[%c1_225, %c1280_226] : memref<2x8192xf32, #tpu.memory_space<vmem>>, vector<1x256xf32>
    tpu.vector_store %arg16[%c1_225, %c1280_226], %205 {strides = array<i32>} : memref<2x8192xf32, #tpu.memory_space<vmem>>, vector<1x256xf32>,
    %c6_227 = arith.constant 6 : index
    %c256_228 = arith.constant 256 : index
    %207 = vector.load %arg15[%c6_227, %c256_228] : memref<32x512xf32, #tpu.memory_space<vmem>>, vector<1x256xf32>
    %c1_229 = arith.constant 1 : index
    %c1536_230 = arith.constant 1536 : index
    %208 = vector.load %arg16[%c1_229, %c1536_230] : memref<2x8192xf32, #tpu.memory_space<vmem>>, vector<1x256xf32>
    tpu.vector_store %arg16[%c1_229, %c1536_230], %207 {strides = array<i32>} : memref<2x8192xf32, #tpu.memory_space<vmem>>, vector<1x256xf32>,
    %c7_231 = arith.constant 7 : index
    %c256_232 = arith.constant 256 : index
    %209 = vector.load %arg15[%c7_231, %c256_232] : memref<32x512xf32, #tpu.memory_space<vmem>>, vector<1x256xf32>
    %c1_233 = arith.constant 1 : index
    %c1792_234 = arith.constant 1792 : index
    %210 = vector.load %arg16[%c1_233, %c1792_234] : memref<2x8192xf32, #tpu.memory_space<vmem>>, vector<1x256xf32>
    tpu.vector_store %arg16[%c1_233, %c1792_234], %209 {strides = array<i32>} : memref<2x8192xf32, #tpu.memory_space<vmem>>, vector<1x256xf32>,
    %c8_235 = arith.constant 8 : index
    %c256_236 = arith.constant 256 : index
    %211 = vector.load %arg15[%c8_235, %c256_236] : memref<32x512xf32, #tpu.memory_space<vmem>>, vector<1x256xf32>
    %c1_237 = arith.constant 1 : index
    %c2048_238 = arith.constant 2048 : index
    %212 = vector.load %arg16[%c1_237, %c2048_238] : memref<2x8192xf32, #tpu.memory_space<vmem>>, vector<1x256xf32>
    tpu.vector_store %arg16[%c1_237, %c2048_238], %211 {strides = array<i32>} : memref<2x8192xf32, #tpu.memory_space<vmem>>, vector<1x256xf32>,
    %c9_239 = arith.constant 9 : index
    %c256_240 = arith.constant 256 : index
    %213 = vector.load %arg15[%c9_239, %c256_240] : memref<32x512xf32, #tpu.memory_space<vmem>>, vector<1x256xf32>
    %c1_241 = arith.constant 1 : index
    %c2304_242 = arith.constant 2304 : index
    %214 = vector.load %arg16[%c1_241, %c2304_242] : memref<2x8192xf32, #tpu.memory_space<vmem>>, vector<1x256xf32>
    tpu.vector_store %arg16[%c1_241, %c2304_242], %213 {strides = array<i32>} : memref<2x8192xf32, #tpu.memory_space<vmem>>, vector<1x256xf32>,
    %c10_243 = arith.constant 10 : index
    %c256_244 = arith.constant 256 : index
    %215 = vector.load %arg15[%c10_243, %c256_244] : memref<32x512xf32, #tpu.memory_space<vmem>>, vector<1x256xf32>
    %c1_245 = arith.constant 1 : index
    %c2560_246 = arith.constant 2560 : index
    %216 = vector.load %arg16[%c1_245, %c2560_246] : memref<2x8192xf32, #tpu.memory_space<vmem>>, vector<1x256xf32>
    tpu.vector_store %arg16[%c1_245, %c2560_246], %215 {strides = array<i32>} : memref<2x8192xf32, #tpu.memory_space<vmem>>, vector<1x256xf32>,
    %c11_247 = arith.constant 11 : index
    %c256_248 = arith.constant 256 : index
    %217 = vector.load %arg15[%c11_247, %c256_248] : memref<32x512xf32, #tpu.memory_space<vmem>>, vector<1x256xf32>
    %c1_249 = arith.constant 1 : index
    %c2816_250 = arith.constant 2816 : index
    %218 = vector.load %arg16[%c1_249, %c2816_250] : memref<2x8192xf32, #tpu.memory_space<vmem>>, vector<1x256xf32>
    tpu.vector_store %arg16[%c1_249, %c2816_250], %217 {strides = array<i32>} : memref<2x8192xf32, #tpu.memory_space<vmem>>, vector<1x256xf32>,
    %c12_251 = arith.constant 12 : index
    %c256_252 = arith.constant 256 : index
    %219 = vector.load %arg15[%c12_251, %c256_252] : memref<32x512xf32, #tpu.memory_space<vmem>>, vector<1x256xf32>
    %c1_253 = arith.constant 1 : index
    %c3072_254 = arith.constant 3072 : index
    %220 = vector.load %arg16[%c1_253, %c3072_254] : memref<2x8192xf32, #tpu.memory_space<vmem>>, vector<1x256xf32>
    tpu.vector_store %arg16[%c1_253, %c3072_254], %219 {strides = array<i32>} : memref<2x8192xf32, #tpu.memory_space<vmem>>, vector<1x256xf32>,
    %c13_255 = arith.constant 13 : index
    %c256_256 = arith.constant 256 : index
    %221 = vector.load %arg15[%c13_255, %c256_256] : memref<32x512xf32, #tpu.memory_space<vmem>>, vector<1x256xf32>
    %c1_257 = arith.constant 1 : index
    %c3328_258 = arith.constant 3328 : index
    %222 = vector.load %arg16[%c1_257, %c3328_258] : memref<2x8192xf32, #tpu.memory_space<vmem>>, vector<1x256xf32>
    tpu.vector_store %arg16[%c1_257, %c3328_258], %221 {strides = array<i32>} : memref<2x8192xf32, #tpu.memory_space<vmem>>, vector<1x256xf32>,
    %c14_259 = arith.constant 14 : index
    %c256_260 = arith.constant 256 : index
    %223 = vector.load %arg15[%c14_259, %c256_260] : memref<32x512xf32, #tpu.memory_space<vmem>>, vector<1x256xf32>
    %c1_261 = arith.constant 1 : index
    %c3584_262 = arith.constant 3584 : index
    %224 = vector.load %arg16[%c1_261, %c3584_262] : memref<2x8192xf32, #tpu.memory_space<vmem>>, vector<1x256xf32>
    tpu.vector_store %arg16[%c1_261, %c3584_262], %223 {strides = array<i32>} : memref<2x8192xf32, #tpu.memory_space<vmem>>, vector<1x256xf32>,
    %c15_263 = arith.constant 15 : index
    %c256_264 = arith.constant 256 : index
    %225 = vector.load %arg15[%c15_263, %c256_264] : memref<32x512xf32, #tpu.memory_space<vmem>>, vector<1x256xf32>
    %c1_265 = arith.constant 1 : index
    %c3840_266 = arith.constant 3840 : index
    %226 = vector.load %arg16[%c1_265, %c3840_266] : memref<2x8192xf32, #tpu.memory_space<vmem>>, vector<1x256xf32>
    tpu.vector_store %arg16[%c1_265, %c3840_266], %225 {strides = array<i32>} : memref<2x8192xf32, #tpu.memory_space<vmem>>, vector<1x256xf32>,
    %c16_267 = arith.constant 16 : index
    %c256_268 = arith.constant 256 : index
    %227 = vector.load %arg15[%c16_267, %c256_268] : memref<32x512xf32, #tpu.memory_space<vmem>>, vector<1x256xf32>
    %c1_269 = arith.constant 1 : index
    %c4096_270 = arith.constant 4096 : index
    %228 = vector.load %arg16[%c1_269, %c4096_270] : memref<2x8192xf32, #tpu.memory_space<vmem>>, vector<1x256xf32>
    tpu.vector_store %arg16[%c1_269, %c4096_270], %227 {strides = array<i32>} : memref<2x8192xf32, #tpu.memory_space<vmem>>, vector<1x256xf32>,
    %c17_271 = arith.constant 17 : index
    %c256_272 = arith.constant 256 : index
    %229 = vector.load %arg15[%c17_271, %c256_272] : memref<32x512xf32, #tpu.memory_space<vmem>>, vector<1x256xf32>
    %c1_273 = arith.constant 1 : index
    %c4352_274 = arith.constant 4352 : index
    %230 = vector.load %arg16[%c1_273, %c4352_274] : memref<2x8192xf32, #tpu.memory_space<vmem>>, vector<1x256xf32>
    tpu.vector_store %arg16[%c1_273, %c4352_274], %229 {strides = array<i32>} : memref<2x8192xf32, #tpu.memory_space<vmem>>, vector<1x256xf32>,
    %c18_275 = arith.constant 18 : index
    %c256_276 = arith.constant 256 : index
    %231 = vector.load %arg15[%c18_275, %c256_276] : memref<32x512xf32, #tpu.memory_space<vmem>>, vector<1x256xf32>
    %c1_277 = arith.constant 1 : index
    %c4608_278 = arith.constant 4608 : index
    %232 = vector.load %arg16[%c1_277, %c4608_278] : memref<2x8192xf32, #tpu.memory_space<vmem>>, vector<1x256xf32>
    tpu.vector_store %arg16[%c1_277, %c4608_278], %231 {strides = array<i32>} : memref<2x8192xf32, #tpu.memory_space<vmem>>, vector<1x256xf32>,
    %c19_279 = arith.constant 19 : index
    %c256_280 = arith.constant 256 : index
    %233 = vector.load %arg15[%c19_279, %c256_280] : memref<32x512xf32, #tpu.memory_space<vmem>>, vector<1x256xf32>
    %c1_281 = arith.constant 1 : index
    %c4864_282 = arith.constant 4864 : index
    %234 = vector.load %arg16[%c1_281, %c4864_282] : memref<2x8192xf32, #tpu.memory_space<vmem>>, vector<1x256xf32>
    tpu.vector_store %arg16[%c1_281, %c4864_282], %233 {strides = array<i32>} : memref<2x8192xf32, #tpu.memory_space<vmem>>, vector<1x256xf32>,
    %c20_283 = arith.constant 20 : index
    %c256_284 = arith.constant 256 : index
    %235 = vector.load %arg15[%c20_283, %c256_284] : memref<32x512xf32, #tpu.memory_space<vmem>>, vector<1x256xf32>
    %c1_285 = arith.constant 1 : index
    %c5120_286 = arith.constant 5120 : index
    %236 = vector.load %arg16[%c1_285, %c5120_286] : memref<2x8192xf32, #tpu.memory_space<vmem>>, vector<1x256xf32>
    tpu.vector_store %arg16[%c1_285, %c5120_286], %235 {strides = array<i32>} : memref<2x8192xf32, #tpu.memory_space<vmem>>, vector<1x256xf32>,
    %c21_287 = arith.constant 21 : index
    %c256_288 = arith.constant 256 : index
    %237 = vector.load %arg15[%c21_287, %c256_288] : memref<32x512xf32, #tpu.memory_space<vmem>>, vector<1x256xf32>
    %c1_289 = arith.constant 1 : index
    %c5376_290 = arith.constant 5376 : index
    %238 = vector.load %arg16[%c1_289, %c5376_290] : memref<2x8192xf32, #tpu.memory_space<vmem>>, vector<1x256xf32>
    tpu.vector_store %arg16[%c1_289, %c5376_290], %237 {strides = array<i32>} : memref<2x8192xf32, #tpu.memory_space<vmem>>, vector<1x256xf32>,
    %c22_291 = arith.constant 22 : index
    %c256_292 = arith.constant 256 : index
    %239 = vector.load %arg15[%c22_291, %c256_292] : memref<32x512xf32, #tpu.memory_space<vmem>>, vector<1x256xf32>
    %c1_293 = arith.constant 1 : index
    %c5632_294 = arith.constant 5632 : index
    %240 = vector.load %arg16[%c1_293, %c5632_294] : memref<2x8192xf32, #tpu.memory_space<vmem>>, vector<1x256xf32>
    tpu.vector_store %arg16[%c1_293, %c5632_294], %239 {strides = array<i32>} : memref<2x8192xf32, #tpu.memory_space<vmem>>, vector<1x256xf32>,
    %c23_295 = arith.constant 23 : index
    %c256_296 = arith.constant 256 : index
    %241 = vector.load %arg15[%c23_295, %c256_296] : memref<32x512xf32, #tpu.memory_space<vmem>>, vector<1x256xf32>
    %c1_297 = arith.constant 1 : index
    %c5888_298 = arith.constant 5888 : index
    %242 = vector.load %arg16[%c1_297, %c5888_298] : memref<2x8192xf32, #tpu.memory_space<vmem>>, vector<1x256xf32>
    tpu.vector_store %arg16[%c1_297, %c5888_298], %241 {strides = array<i32>} : memref<2x8192xf32, #tpu.memory_space<vmem>>, vector<1x256xf32>,
    %c24_299 = arith.constant 24 : index
    %c256_300 = arith.constant 256 : index
    %243 = vector.load %arg15[%c24_299, %c256_300] : memref<32x512xf32, #tpu.memory_space<vmem>>, vector<1x256xf32>
    %c1_301 = arith.constant 1 : index
    %c6144_302 = arith.constant 6144 : index
    %244 = vector.load %arg16[%c1_301, %c6144_302] : memref<2x8192xf32, #tpu.memory_space<vmem>>, vector<1x256xf32>
    tpu.vector_store %arg16[%c1_301, %c6144_302], %243 {strides = array<i32>} : memref<2x8192xf32, #tpu.memory_space<vmem>>, vector<1x256xf32>,
    %c25_303 = arith.constant 25 : index
    %c256_304 = arith.constant 256 : index
    %245 = vector.load %arg15[%c25_303, %c256_304] : memref<32x512xf32, #tpu.memory_space<vmem>>, vector<1x256xf32>
    %c1_305 = arith.constant 1 : index
    %c6400_306 = arith.constant 6400 : index
    %246 = vector.load %arg16[%c1_305, %c6400_306] : memref<2x8192xf32, #tpu.memory_space<vmem>>, vector<1x256xf32>
    tpu.vector_store %arg16[%c1_305, %c6400_306], %245 {strides = array<i32>} : memref<2x8192xf32, #tpu.memory_space<vmem>>, vector<1x256xf32>,
    %c26_307 = arith.constant 26 : index
    %c256_308 = arith.constant 256 : index
    %247 = vector.load %arg15[%c26_307, %c256_308] : memref<32x512xf32, #tpu.memory_space<vmem>>, vector<1x256xf32>
    %c1_309 = arith.constant 1 : index
    %c6656_310 = arith.constant 6656 : index
    %248 = vector.load %arg16[%c1_309, %c6656_310] : memref<2x8192xf32, #tpu.memory_space<vmem>>, vector<1x256xf32>
    tpu.vector_store %arg16[%c1_309, %c6656_310], %247 {strides = array<i32>} : memref<2x8192xf32, #tpu.memory_space<vmem>>, vector<1x256xf32>,
    %c27_311 = arith.constant 27 : index
    %c256_312 = arith.constant 256 : index
    %249 = vector.load %arg15[%c27_311, %c256_312] : memref<32x512xf32, #tpu.memory_space<vmem>>, vector<1x256xf32>
    %c1_313 = arith.constant 1 : index
    %c6912_314 = arith.constant 6912 : index
    %250 = vector.load %arg16[%c1_313, %c6912_314] : memref<2x8192xf32, #tpu.memory_space<vmem>>, vector<1x256xf32>
    tpu.vector_store %arg16[%c1_313, %c6912_314], %249 {strides = array<i32>} : memref<2x8192xf32, #tpu.memory_space<vmem>>, vector<1x256xf32>,
    %c28_315 = arith.constant 28 : index
    %c256_316 = arith.constant 256 : index
    %251 = vector.load %arg15[%c28_315, %c256_316] : memref<32x512xf32, #tpu.memory_space<vmem>>, vector<1x256xf32>
    %c1_317 = arith.constant 1 : index
    %c7168_318 = arith.constant 7168 : index
    %252 = vector.load %arg16[%c1_317, %c7168_318] : memref<2x8192xf32, #tpu.memory_space<vmem>>, vector<1x256xf32>
    tpu.vector_store %arg16[%c1_317, %c7168_318], %251 {strides = array<i32>} : memref<2x8192xf32, #tpu.memory_space<vmem>>, vector<1x256xf32>,
    %c29_319 = arith.constant 29 : index
    %c256_320 = arith.constant 256 : index
    %253 = vector.load %arg15[%c29_319, %c256_320] : memref<32x512xf32, #tpu.memory_space<vmem>>, vector<1x256xf32>
    %c1_321 = arith.constant 1 : index
    %c7424_322 = arith.constant 7424 : index
    %254 = vector.load %arg16[%c1_321, %c7424_322] : memref<2x8192xf32, #tpu.memory_space<vmem>>, vector<1x256xf32>
    tpu.vector_store %arg16[%c1_321, %c7424_322], %253 {strides = array<i32>} : memref<2x8192xf32, #tpu.memory_space<vmem>>, vector<1x256xf32>,
    %c30_323 = arith.constant 30 : index
    %c256_324 = arith.constant 256 : index
    %255 = vector.load %arg15[%c30_323, %c256_324] : memref<32x512xf32, #tpu.memory_space<vmem>>, vector<1x256xf32>
    %c1_325 = arith.constant 1 : index
    %c7680_326 = arith.constant 7680 : index
    %256 = vector.load %arg16[%c1_325, %c7680_326] : memref<2x8192xf32, #tpu.memory_space<vmem>>, vector<1x256xf32>
    tpu.vector_store %arg16[%c1_325, %c7680_326], %255 {strides = array<i32>} : memref<2x8192xf32, #tpu.memory_space<vmem>>, vector<1x256xf32>,
    %c31_327 = arith.constant 31 : index
    %c256_328 = arith.constant 256 : index
    %257 = vector.load %arg15[%c31_327, %c256_328] : memref<32x512xf32, #tpu.memory_space<vmem>>, vector<1x256xf32>
    %c1_329 = arith.constant 1 : index
    %c7936_330 = arith.constant 7936 : index
    %258 = vector.load %arg16[%c1_329, %c7936_330] : memref<2x8192xf32, #tpu.memory_space<vmem>>, vector<1x256xf32>
    tpu.vector_store %arg16[%c1_329, %c7936_330], %257 {strides = array<i32>} : memref<2x8192xf32, #tpu.memory_space<vmem>>, vector<1x256xf32>,
    %c0_i32_331 = arith.constant 0 : i32
    %259 = tpu.memref_slice %arg18[%c0_i32_331] : memref<1x!tpu.dma_semaphore, #tpu.memory_space<semaphore_mem>> -> memref<1x!tpu.dma_semaphore, #tpu.memory_space<semaphore_mem>>
    %260 = tpu.memref_squeeze %259 : memref<1x!tpu.dma_semaphore, #tpu.memory_space<semaphore_mem>> -> memref<!tpu.dma_semaphore, #tpu.memory_space<semaphore_mem>>
    tpu.wait_dma2 semaphore(%260 : memref<!tpu.dma_semaphore, #tpu.memory_space<semaphore_mem>>) src(%arg8 : memref<8192x256xbf16, #tpu.memory_space<any>>) dst(%arg17 : memref<8192x256xbf16, #tpu.memory_space<vmem>>)
    %c0_332 = arith.constant 0 : index
    %c0_333 = arith.constant 0 : index
    %261 = vector.load %arg16[%c0_332, %c0_333] : memref<2x8192xf32, #tpu.memory_space<vmem>>, vector<2x8192xf32>
    %262 = arith.truncf %261 : vector<2x8192xf32> to vector<2x8192xbf16>
    %c0_334 = arith.constant 0 : index
    %c0_335 = arith.constant 0 : index
    %263 = vector.load %arg17[%c0_334, %c0_335] : memref<8192x256xbf16, #tpu.memory_space<vmem>>, vector<8192x256xbf16>
    %cst_336 = arith.constant dense<0.000000e+00> : vector<2x256xf32>
    %264 = tpu.matmul %262, %263, %cst_336 {dimension_numbers = #tpu.dot_dimension_numbers<[1], [0], [0], [1], [0, 0, 1, 1], [], []>} : vector<2x8192xbf16>, vector<8192x256xbf16>, vector<2x256xf32> -> vector<2x256xf32>
    %c0_337 = arith.constant 0 : index
    %c0_338 = arith.constant 0 : index
    %265 = vector.load %arg9[%c0_337, %c0_338] : memref<1x256xf32, #tpu.memory_space<vmem>>, vector<1x256xf32>
    %266 = vector.broadcast %265 : vector<1x256xf32> to vector<2x256xf32>
    %267 = arith.addf %264, %266 : vector<2x256xf32>
    %cst_339 = arith.constant 0.000000e+00 : f32
    %268 = vector.broadcast %cst_339 : f32 to vector<2x256xf32>
    %269 = arith.maximumf %267, %268 : vector<2x256xf32>
    %c0_340 = arith.constant 0 : index
    %c0_341 = arith.constant 0 : index
    %270 = vector.load %arg10[%c0_340, %c0_341] : memref<256x128xf32, #tpu.memory_space<vmem>>, vector<256x128xf32>
    %cst_342 = arith.constant dense<0.000000e+00> : vector<2x128xf32>
    %271 = tpu.matmul %269, %270, %cst_342 {dimension_numbers = #tpu.dot_dimension_numbers<[1], [0], [0], [1], [0, 0, 1, 1], [], []>} : vector<2x256xf32>, vector<256x128xf32>, vector<2x128xf32> -> vector<2x128xf32>
    %c0_343 = arith.constant 0 : index
    %c0_344 = arith.constant 0 : index
    %272 = vector.load %arg11[%c0_343, %c0_344] : memref<1x128xf32, #tpu.memory_space<vmem>>, vector<1x128xf32>
    %273 = vector.broadcast %272 : vector<1x128xf32> to vector<2x128xf32>
    %274 = arith.addf %271, %273 : vector<2x128xf32>
    %c0_345 = arith.constant 0 : index
    %c0_346 = arith.constant 0 : index
    %275 = vector.load %arg12[%c0_345, %c0_346] : memref<2x128xf32, #tpu.memory_space<vmem>>, vector<2x128xf32>
    tpu.vector_store %arg12[%c0_345, %c0_346], %274 {strides = array<i32>} : memref<2x128xf32, #tpu.memory_space<vmem>>, vector<2x128xf32>,
    return
  }
  func.func @transform_0(%arg0: i32) -> (i32, i32) {
    %c0_i32 = arith.constant 0 : i32
    %c0_i32_0 = arith.constant 0 : i32
    %c0_i32_1 = arith.constant 0 : i32
    return %c0_i32, %c0_i32_0 : i32, i32
  }
  func.func @transform_1(%arg0: i32) -> (i32, i32) {
    %c0_i32 = arith.constant 0 : i32
    %c0_i32_0 = arith.constant 0 : i32
    %c0_i32_1 = arith.constant 0 : i32
    return %c0_i32, %c0_i32_0 : i32, i32
  }
  func.func @transform_2(%arg0: i32) -> (i32, i32) {
    %c0_i32 = arith.constant 0 : i32
    %c0_i32_0 = arith.constant 0 : i32
    %c0_i32_1 = arith.constant 0 : i32
    return %c0_i32, %c0_i32_0 : i32, i32
  }
  func.func @transform_3(%arg0: i32) -> (i32, i32) {
    %c0_i32 = arith.constant 0 : i32
    %c0_i32_0 = arith.constant 0 : i32
    %c0_i32_1 = arith.constant 0 : i32
    return %c0_i32, %c0_i32_0 : i32, i32
  }
  func.func @transform_4(%arg0: i32) -> (i32, i32) {
    %c0_i32 = arith.constant 0 : i32
    %c0_i32_0 = arith.constant 0 : i32
    %c0_i32_1 = arith.constant 0 : i32
    return %c0_i32, %c0_i32_0 : i32, i32
  }
  func.func @transform_5(%arg0: i32) -> (i32, i32) {
    %c0_i32 = arith.constant 0 : i32
    %c0_i32_0 = arith.constant 0 : i32
    %c0_i32_1 = arith.constant 0 : i32
    return %c0_i32, %c0_i32_0 : i32, i32
  }
  func.func @transform_6(%arg0: i32) -> (i32, i32) {
    %c0_i32 = arith.constant 0 : i32
    %c0_i32_0 = arith.constant 0 : i32
    %c0_i32_1 = arith.constant 0 : i32
    return %c0_i32, %c0_i32_0 : i32, i32
  }
  func.func @transform_8(%arg0: i32) -> (i32, i32) {
    %c0_i32 = arith.constant 0 : i32
    %c0_i32_0 = arith.constant 0 : i32
    %c0_i32_1 = arith.constant 0 : i32
    return %c0_i32, %c0_i32_0 : i32, i32
  }
  func.func @transform_9(%arg0: i32) -> (i32, i32) {
    %c0_i32 = arith.constant 0 : i32
    %c0_i32_0 = arith.constant 0 : i32
    %c0_i32_1 = arith.constant 0 : i32
    return %c0_i32, %c0_i32_0 : i32, i32
  }
  func.func @transform_10(%arg0: i32) -> (i32, i32) {
    %c0_i32 = arith.constant 0 : i32
    %c0_i32_0 = arith.constant 0 : i32
    %c0_i32_1 = arith.constant 0 : i32
    return %c0_i32, %c0_i32_0 : i32, i32
  }
  func.func @transform_11(%arg0: i32) -> (i32, i32) {
    %c0_i32 = arith.constant 0 : i32
    %c0_i32_0 = arith.constant 0 : i32
    %c0_i32_1 = arith.constant 0 : i32
    return %c0_i32, %c0_i32_0 : i32, i32
  }
}

</mosaic_0001>

<llo_original>
// kernel: forward.1
$region0: #{forward.1}
  #allocation0 [shape = 'u32[]', space=smem, size = 0x4, offset = 0x4, fixed_abs, tag = 'smem constant byte address 0x4 - core index']
  #allocation1 [shape = 'u32[144,128]{1,0:T(1,128)}', space=vmem, size = 0x12000, scoped, tag = 'internal scratch']
  #allocation2 [shape = 'f32[8,580]{1,0:T(8,128)}', space=vmem, size = 0x5000, scoped, tag = 'scratch operand']
  #allocation3 [shape = 'f32[16,546]{1,0:T(8,128)}', space=vmem, size = 0xa000, scoped, tag = 'scratch operand']
  #allocation4 [shape = 'f32[32,512]{1,0:T(8,128)}', space=vmem, size = 0x10000, scoped, tag = 'scratch operand']
  #allocation5 [shape = 'f32[2,8192]{1,0:T(2,128)}', space=vmem, size = 0x10000, scoped, tag = 'scratch operand']
  #allocation6 [shape = 'bf16[8192,256]{1,0:T(16,128)(2,1)}', space=vmem, size = 0x400000, scoped, tag = 'scratch operand']
  #allocation7 [shape = 's32[1]{0}', space=sflag, size = 0x4, scoped, tag = 'scratch operand']
  #allocation15 [shape = 's32[]', space=sflag, size = 0x4, offset = 0, fixed_abs, tag = 'sflag constant byte address 0x0 - dummy sync flag']
  %s0 = inlined_call_operand.vmem [shape: f32[4,614], index: 0, kind: input, shape index: {}]
  %s1 = inlined_call_operand.vmem [shape: f32[72,4], index: 1, kind: input, shape index: {}]
  %s2 = inlined_call_operand.vmem [shape: f32[8,1], index: 2, kind: input, shape index: {}]
  %s3 = inlined_call_operand.vmem [shape: f32[144,8], index: 3, kind: input, shape index: {}]
  %s4 = inlined_call_operand.vmem [shape: f32[16,1], index: 4, kind: input, shape index: {}]
  %s5 = inlined_call_operand.vmem [shape: f32[288,16], index: 5, kind: input, shape index: {}]
  %s6 = inlined_call_operand.vmem [shape: f32[32,1], index: 6, kind: input, shape index: {}]
  %s7 = inlined_call_operand.hbm [shape: bf16[8192,256], index: 7, kind: input, shape index: {}]
  %s8 = inlined_call_operand.hbm [shape: f32[1,256], index: 8, kind: input, shape index: {}]
  %s9 = inlined_call_operand.hbm [shape: f32[256,128], index: 9, kind: input, shape index: {}]
  %s10 = inlined_call_operand.hbm [shape: f32[1,128], index: 10, kind: input, shape index: {}]
  %s11 = inlined_call_operand.hbm [shape: f32[2,128], index: 11, kind: output, shape index: {}]
  %s12 = sld [smem:[#allocation0]]
  $region62: #{forward.1} parent=0
    _
  %s14 = ssub.s32 1, %s12
  %s15 = scalar_select 0, %s14, %s12
  $region1: #{forward.1} parent=0
    #allocation8 [shape = 'u8[1024]{0}', space=vmem, size = 0x400, scoped, tag = 'input window, operand 8, single buffered']
    #allocation9 [shape = 's32[1]{0}', space=sflag, size = 0x4, scoped, tag = 'scoped memory for forward.1']
    #allocation10 [shape = 's32[1]{0}', space=sflag, size = 0x4, scoped, tag = 'scoped memory for forward.1']
    #allocation11 [shape = 'u8[131072]{0}', space=vmem, size = 0x20000, scoped, tag = 'input window, operand 9, single buffered']
    #allocation12 [shape = 's32[1]{0}', space=sflag, size = 0x4, scoped, tag = 'scoped memory for forward.1']
    #allocation13 [shape = 'u8[512]{0}', space=vmem, size = 0x400, scoped, tag = 'input window, operand 10, single buffered']
    #allocation14 [shape = 'u8[1024]{0}', space=vmem, size = 0x400, scoped, tag = 'output window, operand 0, single buffered']
    #allocation16 [shape = 'u32[9]{0}', space=smem, size = 0x24, scoped, tag = 'DMA stride descriptor']
    %16 = vsyncpa [#allocation9], 0
    %17 = vsyncpa [#allocation12], 0
    %18 = vsyncpa [#allocation10], 0
    // Predicated region
    $region2: #{forward.1} parent=1 // pred_check
      _
    $region3: #{forward.1} parent=1 // pred_check_branch
      %20 = sbr.rel (0) target = $region5
    $region4: #{forward.1} parent=1 // pred_region
      _
    $region5: #{forward.1} parent=1 // pred_fallthru
      _
    // Predicated region
    $region6: #{forward.1} parent=1 // pred_check
      _
    $region7: #{forward.1} parent=1 // pred_check_branch
      %22 = sbr.rel (0) target = $region9
    $region8: #{forward.1} parent=1 // pred_region
      _
    $region9: #{forward.1} parent=1 // pred_fallthru
      _
    // Predicated region
    $region10: #{forward.1} parent=1 // pred_check
      _
    $region11: #{forward.1} parent=1 // pred_check_branch
      %24 = sbr.rel (0) target = $region13
    $region12: #{forward.1} parent=1 // pred_region
      _
    $region13: #{forward.1} parent=1 // pred_fallthru
      _
    // Predicated region
    $region14: #{forward.1} parent=1 // pred_check
      _
    $region15: #{forward.1} parent=1 // pred_check_branch
      %26 = sbr.rel (0) target = $region17
    $region16: #{forward.1} parent=1 // pred_region
      _
    $region17: #{forward.1} parent=1 // pred_fallthru
      _
    // Predicated region
    $region18: #{forward.1} parent=1 // pred_check
      _
    $region19: #{forward.1} parent=1 // pred_check_branch
      %28 = sbr.rel (0) target = $region21
    $region20: #{forward.1} parent=1 // pred_region
      _
    $region21: #{forward.1} parent=1 // pred_fallthru
      _
    // Predicated region
    $region22: #{forward.1} parent=1 // pred_check
      _
    $region23: #{forward.1} parent=1 // pred_check_branch
      %30 = sbr.rel (0) target = $region25
    $region24: #{forward.1} parent=1 // pred_region
      _
    $region25: #{forward.1} parent=1 // pred_fallthru
      _
    // Predicated region
    $region26: #{forward.1} parent=1 // pred_check
      _
    $region27: #{forward.1} parent=1 // pred_check_branch
      %32 = sbr.rel (0) target = $region29
    $region28: #{forward.1} parent=1 // pred_region
      _
    $region29: #{forward.1} parent=1 // pred_fallthru
      _
    // Predicated region
    $region30: #{forward.1} parent=1 // pred_check
      _
    $region31: #{forward.1} parent=1 // pred_check_branch
      %34 = sbr.rel (0) target = $region33
    $region32: #{forward.1} parent=1 // pred_region
      %s36 = ssub.s32 32, 32
      %37 = vsyncadd [#allocation9], %s36
      %s39 = sshll.u32 [#allocation8], 4
      %s40 = int_to_ptr.vmem [resolvable:$true] %s39
      %42 = dma.hbm_to_vmem [thread:$0]  %s8, 32, %s40, [#allocation9]
    $region33: #{forward.1} parent=1 // pred_fallthru
      _
    // Predicated region
    $region34: #{forward.1} parent=1 // pred_check
      _
    $region35: #{forward.1} parent=1 // pred_check_branch
      %44 = sbr.rel (0) target = $region37
    $region36: #{forward.1} parent=1 // pred_region
      %s46 = ssub.s32 4096, 4096
      %47 = vsyncadd [#allocation12], %s46
      %s48 = sshll.u32 [#allocation11], 4
      %s49 = int_to_ptr.vmem [resolvable:$true] %s48
      %54 = dma.hbm_to_vmem [thread:$0]  %s9, 4096, %s49, [#allocation12], 128, 128, 8
    $region37: #{forward.1} parent=1 // pred_fallthru
      _
    // Predicated region
    $region38: #{forward.1} parent=1 // pred_check
      _
    $region39: #{forward.1} parent=1 // pred_check_branch
      %56 = sbr.rel (0) target = $region41
    $region40: #{forward.1} parent=1 // pred_region
      %s58 = ssub.s32 16, 16
      %59 = vsyncadd [#allocation12], %s58
      %s61 = sshll.u32 [#allocation13], 4
      %s62 = int_to_ptr.vmem [resolvable:$true] %s61
      %64 = dma.hbm_to_vmem [thread:$0]  %s10, 16, %s62, [#allocation12]
    $region41: #{forward.1} parent=1 // pred_fallthru
      _
    // Predicated region
    $region42: #{forward.1} parent=1 // pred_check
      _
    $region43: #{forward.1} parent=1 // pred_check_branch
      %66 = sbr.rel (0) target = $region45
    $region44: #{forward.1} parent=1 // pred_region
      %67 = dma.done [#allocation9], 32
    $region45: #{forward.1} parent=1 // pred_fallthru
      _
    // Predicated region
    $region46: #{forward.1} parent=1 // pred_check
      _
    $region47: #{forward.1} parent=1 // pred_check_branch
      %69 = sbr.rel (0) target = $region49
    $region48: #{forward.1} parent=1 // pred_region
      %70 = dma.done [#allocation12], 4096
    $region49: #{forward.1} parent=1 // pred_fallthru
      _
    // Predicated region
    $region50: #{forward.1} parent=1 // pred_check
      _
    $region51: #{forward.1} parent=1 // pred_check_branch
      %72 = sbr.rel (0) target = $region53
    $region52: #{forward.1} parent=1 // pred_region
      %73 = dma.done [#allocation12], 16
    $region53: #{forward.1} parent=1 // pred_fallthru
      _
    %s75 = sshll.u32 1, 14
    %s76 = sxor.u32 4294967295, %s75
    %s78 = sld [smem:[#allocation0]]
    %s79 = sadd.s32 2, %s78
    %s81 = sshll.u32 7, 26
    %s82 = sxor.u32 4294967295, %s81
    %s83 = sand.u32 0, %s82
    %s84 = sshll.u32 %s79, 26
    %s85 = sor.u32 %s83, %s84
    %s86 = sshll.u32 [#allocation6], 4
    %s87 = int_to_ptr.vmem [resolvable:$true] %s86
    %90 = sst [smem:[#allocation16]] 256
    %s91 = scalar_lea.smem [#allocation16], 1
    %92 = sst [smem:[%s91]] 256
    %s93 = scalar_lea.smem [#allocation16], 2
    %94 = sst [smem:[%s93]] 2
    %s95 = scalar_lea.smem [#allocation16], 3
    %96 = sst [smem:[%s95]] 64
    %s97 = scalar_lea.smem [#allocation16], 4
    %98 = sst [smem:[%s97]] 128
    %s99 = scalar_lea.smem [#allocation16], 5
    %100 = sst [smem:[%s99]] 2
    %s101 = scalar_lea.smem [#allocation16], 6
    %102 = sst [smem:[%s101]] 128
    %s103 = scalar_lea.smem [#allocation16], 7
    %104 = sst [smem:[%s103]] 64
    %s105 = scalar_lea.smem [#allocation16], 8
    %106 = sst [smem:[%s105]] 4
    %108 = dma.general %s7, 131072, %s87, [#allocation7], [#allocation15], [#allocation16], %s85, 0
    %v109 = vld [vmem:[%s1] sm:$0xff]
    %v110 = vld [vmem:[%s0] sm:$0xff]
    %v111 = vld [vmem:[%s0 + $0x8] sm:$0xff]
    %v112 = vld [vmem:[%s0 + $0x10] sm:$0xf]
    %v113 = vld [vmem:[%s1 + $0x8] sm:$0xff]
    %v117 = vcombine.high %v110, %v110
    %v118 = vcombine.high %v111, %v111
    %119 = vrot.lane.b32.xlu0 %v110, 127
    %v120 = vpop.permute.xlu0 %119
    %121 = vrot.lane.b32.xlu0 %v117, 127
    %v122 = vpop.permute.xlu0 %121
    %123 = vrot.lane.b32.xlu0 %v111, 127
    %v124 = vpop.permute.xlu0 %123
    %125 = vrot.lane.b32.xlu0 %v118, 127
    %v126 = vpop.permute.xlu0 %125
    %127 = vrot.lane.b32.xlu0 %v112, 127
    %v128 = vpop.permute.xlu0 %127
    %vm129 = vcmask 1039360
    %v130 = vsel %vm129, %v120, %v122
    %v131 = vsel %vm129, %v122, %v124
    %v132 = vsel %vm129, %v124, %v126
    %v133 = vsel %vm129, %v126, %v128
    %vm134 = vcmask 31744
    %v136 = vsel %vm134, %v113, 0
    %vm138 = vcmask 1043456
    %v139 = vsel %vm138, %v130, 0
    %v141 = vsel %vm138, %v131, 0
    %v143 = vsel %vm138, %v132, 0
    %v145 = vsel %vm138, %v133, 0
    %v147 = vsel %vm138, %v128, 0
    %149 = vmatprep.subr.mxu0 %v141
    %150 = vmatpush1.msra.mxu0 %v139
    %151 = vmatprep.subr.mxu0 0.0
    %152 = vmatpush1.msra.mxu0 0.0
    %153 = vmatprep.subr.mxu0 0.0
    %154 = vmatpush1.msra.mxu0 0.0
    %155 = vmatprep.subr.mxu0 0.0
    %156 = vmatpush1.msra.mxu0 0.0
    %157 = vmatprep.subr.mxu0 0.0
    %158 = vmatpush1.msra.mxu0 0.0
    %159 = vmatprep.subr.mxu0 0.0
    %160 = vmatpush1.msra.mxu0 0.0
    %161 = vmatprep.subr.mxu0 0.0
    %162 = vmatpush1.msra.mxu0 0.0
    %163 = vmatprep.subr.mxu0 0.0
    %164 = vmatpush1.msra.mxu0 0.0
    %165 = vmatprep.subr.mxu0 0.0
    %166 = vmatpush1.msra.mxu0 0.0
    %167 = vmatprep.subr.mxu0 0.0
    %168 = vmatpush1.msra.mxu0 0.0
    %169 = vmatprep.subr.mxu0 0.0
    %170 = vmatpush1.msra.mxu0 0.0
    %171 = vmatprep.subr.mxu0 0.0
    %172 = vmatpush1.msra.mxu0 0.0
    %173 = vmatprep.subr.mxu0 0.0
    %174 = vmatpush1.msra.mxu0 0.0
    %175 = vmatprep.subr.mxu0 0.0
    %176 = vmatpush1.msra.mxu0 0.0
    %177 = vmatprep.subr.mxu0 0.0
    %178 = vmatpush1.msra.mxu0 0.0
    %179 = vmatprep.subr.mxu0 0.0
    %180 = vmatpush1.msra.mxu0 0.0
    %181 = vmatprep.subr.mxu0 0.0
    %182 = vmatpush1.msra.mxu0 0.0
    %183 = vmatprep.subr.mxu0 0.0
    %184 = vmatpush1.msra.mxu0 0.0
    %185 = vmatprep.subr.mxu0 0.0
    %186 = vmatpush1.msra.mxu0 0.0
    %187 = vmatprep.subr.mxu0 0.0
    %188 = vmatpush1.msra.mxu0 0.0
    %189 = vmatprep.subr.mxu0 0.0
    %190 = vmatpush1.msra.mxu0 0.0
    %191 = vmatprep.subr.mxu0 0.0
    %192 = vmatpush1.msra.mxu0 0.0
    %193 = vmatprep.subr.mxu0 0.0
    %194 = vmatpush1.msra.mxu0 0.0
    %195 = vmatprep.subr.mxu0 0.0
    %196 = vmatpush1.msra.mxu0 0.0
    %197 = vmatprep.subr.mxu0 0.0
    %198 = vmatpush1.msra.mxu0 0.0
    %199 = vmatprep.subr.mxu0 0.0
    %200 = vmatpush1.msra.mxu0 0.0
    %201 = vmatprep.subr.mxu0 0.0
    %202 = vmatpush1.msra.mxu0 0.0
    %203 = vmatprep.subr.mxu0 0.0
    %204 = vmatpush1.msra.mxu0 0.0
    %205 = vmatprep.subr.mxu0 0.0
    %206 = vmatpush1.msra.mxu0 0.0
    %207 = vmatprep.subr.mxu0 0.0
    %208 = vmatpush1.msra.mxu0 0.0
    %209 = vmatprep.subr.mxu0 0.0
    %210 = vmatpush1.msra.mxu0 0.0
    %211 = vmatprep.subr.mxu0 0.0
    %212 = vmatpush1.msra.mxu0 0.0
    %213 = vmatprep.mubr.f32.mxu0 0.0
    %214 = vmatmul.mubr.f32.gmra.mrb[0].mxu0 %v136
    %v215 = vpop.f32.mrb[0].mxu0
    %v216 = vadd.f32 0.0, %v215
    %v217 = vpop.f32.mrb[0].mxu0
    %v218 = vadd.f32 0.0, %v217
    %219 = vdwg.mxu0
    %220 = vmatprep.subr.mxu0 %v145
    %221 = vmatpush1.msra.mxu0 %v143
    %222 = vmatprep.subr.mxu0 0.0
    %223 = vmatpush1.msra.mxu0 0.0
    %224 = vmatprep.subr.mxu0 0.0
    %225 = vmatpush1.msra.mxu0 0.0
    %226 = vmatprep.subr.mxu0 0.0
    %227 = vmatpush1.msra.mxu0 0.0
    %228 = vmatprep.subr.mxu0 0.0
    %229 = vmatpush1.msra.mxu0 0.0
    %230 = vmatprep.subr.mxu0 0.0
    %231 = vmatpush1.msra.mxu0 0.0
    %232 = vmatprep.subr.mxu0 0.0
    %233 = vmatpush1.msra.mxu0 0.0
    %234 = vmatprep.subr.mxu0 0.0
    %235 = vmatpush1.msra.mxu0 0.0
    %236 = vmatprep.subr.mxu0 0.0
    %237 = vmatpush1.msra.mxu0 0.0
    %238 = vmatprep.subr.mxu0 0.0
    %239 = vmatpush1.msra.mxu0 0.0
    %240 = vmatprep.subr.mxu0 0.0
    %241 = vmatpush1.msra.mxu0 0.0
    %242 = vmatprep.subr.mxu0 0.0
    %243 = vmatpush1.msra.mxu0 0.0
    %244 = vmatprep.subr.mxu0 0.0
    %245 = vmatpush1.msra.mxu0 0.0
    %246 = vmatprep.subr.mxu0 0.0
    %247 = vmatpush1.msra.mxu0 0.0
    %248 = vmatprep.subr.mxu0 0.0
    %249 = vmatpush1.msra.mxu0 0.0
    %250 = vmatprep.subr.mxu0 0.0
    %251 = vmatpush1.msra.mxu0 0.0
    %252 = vmatprep.subr.mxu0 0.0
    %253 = vmatpush1.msra.mxu0 0.0
    %254 = vmatprep.subr.mxu0 0.0
    %255 = vmatpush1.msra.mxu0 0.0
    %256 = vmatprep.subr.mxu0 0.0
    %257 = vmatpush1.msra.mxu0 0.0
    %258 = vmatprep.subr.mxu0 0.0
    %259 = vmatpush1.msra.mxu0 0.0
    %260 = vmatprep.subr.mxu0 0.0
    %261 = vmatpush1.msra.mxu0 0.0
    %262 = vmatprep.subr.mxu0 0.0
    %263 = vmatpush1.msra.mxu0 0.0
    %264 = vmatprep.subr.mxu0 0.0
    %265 = vmatpush1.msra.mxu0 0.0
    %266 = vmatprep.subr.mxu0 0.0
    %267 = vmatpush1.msra.mxu0 0.0
    %268 = vmatprep.subr.mxu0 0.0
    %269 = vmatpush1.msra.mxu0 0.0
    %270 = vmatprep.subr.mxu0 0.0
    %271 = vmatpush1.msra.mxu0 0.0
    %272 = vmatprep.subr.mxu0 0.0
    %273 = vmatpush1.msra.mxu0 0.0
    %274 = vmatprep.subr.mxu0 0.0
    %275 = vmatpush1.msra.mxu0 0.0
    %276 = vmatprep.subr.mxu0 0.0
    %277 = vmatpush1.msra.mxu0 0.0
    %278 = vmatprep.subr.mxu0 0.0
    %279 = vmatpush1.msra.mxu0 0.0
    %280 = vmatprep.subr.mxu0 0.0
    %281 = vmatpush1.msra.mxu0 0.0
    %282 = vmatprep.subr.mxu0 0.0
    %283 = vmatpush1.msra.mxu0 0.0
    %284 = vmatprep.mubr.f32.mxu0 0.0
    %285 = vmatmul.mubr.f32.gmra.mrb[0].mxu0 %v136
    %v286 = vpop.f32.mrb[0].mxu0
    %v287 = vadd.f32 0.0, %v286
    %v288 = vpop.f32.mrb[0].mxu0
    %v289 = vadd.f32 0.0, %v288
    %290 = vdwg.mxu0
    %291 = vmatprep.subr.mxu0 0.0
    %292 = vmatpush1.msra.mxu0 %v147
    %293 = vmatprep.subr.mxu0 0.0
    %294 = vmatpush1.msra.mxu0 0.0
    %295 = vmatprep.subr.mxu0 0.0
    %296 = vmatpush1.msra.mxu0 0.0
    %297 = vmatprep.subr.mxu0 0.0
    %298 = vmatpush1.msra.mxu0 0.0
    %299 = vmatprep.subr.mxu0 0.0
    %300 = vmatpush1.msra.mxu0 0.0
    %301 = vmatprep.subr.mxu0 0.0
    %302 = vmatpush1.msra.mxu0 0.0
    %303 = vmatprep.subr.mxu0 0.0
    %304 = vmatpush1.msra.mxu0 0.0
    %305 = vmatprep.subr.mxu0 0.0
    %306 = vmatpush1.msra.mxu0 0.0
    %307 = vmatprep.subr.mxu0 0.0
    %308 = vmatpush1.msra.mxu0 0.0
    %309 = vmatprep.subr.mxu0 0.0
    %310 = vmatpush1.msra.mxu0 0.0
    %311 = vmatprep.subr.mxu0 0.0
    %312 = vmatpush1.msra.mxu0 0.0
    %313 = vmatprep.subr.mxu0 0.0
    %314 = vmatpush1.msra.mxu0 0.0
    %315 = vmatprep.subr.mxu0 0.0
    %316 = vmatpush1.msra.mxu0 0.0
    %317 = vmatprep.subr.mxu0 0.0
    %318 = vmatpush1.msra.mxu0 0.0
    %319 = vmatprep.subr.mxu0 0.0
    %320 = vmatpush1.msra.mxu0 0.0
    %321 = vmatprep.subr.mxu0 0.0
    %322 = vmatpush1.msra.mxu0 0.0
    %323 = vmatprep.subr.mxu0 0.0
    %324 = vmatpush1.msra.mxu0 0.0
    %325 = vmatprep.subr.mxu0 0.0
    %326 = vmatpush1.msra.mxu0 0.0
    %327 = vmatprep.subr.mxu0 0.0
    %328 = vmatpush1.msra.mxu0 0.0
    %329 = vmatprep.subr.mxu0 0.0
    %330 = vmatpush1.msra.mxu0 0.0
    %331 = vmatprep.subr.mxu0 0.0
    %332 = vmatpush1.msra.mxu0 0.0
    %333 = vmatprep.subr.mxu0 0.0
    %334 = vmatpush1.msra.mxu0 0.0
    %335 = vmatprep.subr.mxu0 0.0
    %336 = vmatpush1.msra.mxu0 0.0
    %337 = vmatprep.subr.mxu0 0.0
    %338 = vmatpush1.msra.mxu0 0.0
    %339 = vmatprep.subr.mxu0 0.0
    %340 = vmatpush1.msra.mxu0 0.0
    %341 = vmatprep.subr.mxu0 0.0
    %342 = vmatpush1.msra.mxu0 0.0
    %343 = vmatprep.subr.mxu0 0.0
    %344 = vmatpush1.msra.mxu0 0.0
    %345 = vmatprep.subr.mxu0 0.0
    %346 = vmatpush1.msra.mxu0 0.0
    %347 = vmatprep.subr.mxu0 0.0
    %348 = vmatpush1.msra.mxu0 0.0
    %349 = vmatprep.subr.mxu0 0.0
    %350 = vmatpush1.msra.mxu0 0.0
    %351 = vmatprep.subr.mxu0 0.0
    %352 = vmatpush1.msra.mxu0 0.0
    %353 = vmatprep.subr.mxu0 0.0
    %354 = vmatpush1.msra.mxu0 0.0
    %355 = vmatprep.mubr.f32.mxu0 0.0
    %356 = vmatmul.mubr.f32.gmra.mrb[0].mxu0 %v136
    %v357 = vpop.f32.mrb[0].mxu0
    %v358 = vadd.f32 0.0, %v357
    %v359 = vpop.f32.mrb[0].mxu0
    %360 = vdwg.mxu0
    %v362 = vsel %vm134, %v109, 0
    %v364 = vsel %vm138, %v110, 0
    %v366 = vsel %vm138, %v117, 0
    %v368 = vsel %vm138, %v111, 0
    %v370 = vsel %vm138, %v118, 0
    %v372 = vsel %vm138, %v112, 0
    %374 = vmatprep.subr.mxu0 %v366
    %375 = vmatpush1.msra.mxu0 %v364
    %376 = vmatprep.subr.mxu0 0.0
    %377 = vmatpush1.msra.mxu0 0.0
    %378 = vmatprep.subr.mxu0 0.0
    %379 = vmatpush1.msra.mxu0 0.0
    %380 = vmatprep.subr.mxu0 0.0
    %381 = vmatpush1.msra.mxu0 0.0
    %382 = vmatprep.subr.mxu0 0.0
    %383 = vmatpush1.msra.mxu0 0.0
    %384 = vmatprep.subr.mxu0 0.0
    %385 = vmatpush1.msra.mxu0 0.0
    %386 = vmatprep.subr.mxu0 0.0
    %387 = vmatpush1.msra.mxu0 0.0
    %388 = vmatprep.subr.mxu0 0.0
    %389 = vmatpush1.msra.mxu0 0.0
    %390 = vmatprep.subr.mxu0 0.0
    %391 = vmatpush1.msra.mxu0 0.0
    %392 = vmatprep.subr.mxu0 0.0
    %393 = vmatpush1.msra.mxu0 0.0
    %394 = vmatprep.subr.mxu0 0.0
    %395 = vmatpush1.msra.mxu0 0.0
    %396 = vmatprep.subr.mxu0 0.0
    %397 = vmatpush1.msra.mxu0 0.0
    %398 = vmatprep.subr.mxu0 0.0
    %399 = vmatpush1.msra.mxu0 0.0
    %400 = vmatprep.subr.mxu0 0.0
    %401 = vmatpush1.msra.mxu0 0.0
    %402 = vmatprep.subr.mxu0 0.0
    %403 = vmatpush1.msra.mxu0 0.0
    %404 = vmatprep.subr.mxu0 0.0
    %405 = vmatpush1.msra.mxu0 0.0
    %406 = vmatprep.subr.mxu0 0.0
    %407 = vmatpush1.msra.mxu0 0.0
    %408 = vmatprep.subr.mxu0 0.0
    %409 = vmatpush1.msra.mxu0 0.0
    %410 = vmatprep.subr.mxu0 0.0
    %411 = vmatpush1.msra.mxu0 0.0
    %412 = vmatprep.subr.mxu0 0.0
    %413 = vmatpush1.msra.mxu0 0.0
    %414 = vmatprep.subr.mxu0 0.0
    %415 = vmatpush1.msra.mxu0 0.0
    %416 = vmatprep.subr.mxu0 0.0
    %417 = vmatpush1.msra.mxu0 0.0
    %418 = vmatprep.subr.mxu0 0.0
    %419 = vmatpush1.msra.mxu0 0.0
    %420 = vmatprep.subr.mxu0 0.0
    %421 = vmatpush1.msra.mxu0 0.0
    %422 = vmatprep.subr.mxu0 0.0
    %423 = vmatpush1.msra.mxu0 0.0
    %424 = vmatprep.subr.mxu0 0.0
    %425 = vmatpush1.msra.mxu0 0.0
    %426 = vmatprep.subr.mxu0 0.0
    %427 = vmatpush1.msra.mxu0 0.0
    %428 = vmatprep.subr.mxu0 0.0
    %429 = vmatpush1.msra.mxu0 0.0
    %430 = vmatprep.subr.mxu0 0.0
    %431 = vmatpush1.msra.mxu0 0.0
    %432 = vmatprep.subr.mxu0 0.0
    %433 = vmatpush1.msra.mxu0 0.0
    %434 = vmatprep.subr.mxu0 0.0
    %435 = vmatpush1.msra.mxu0 0.0
    %436 = vmatprep.subr.mxu0 0.0
    %437 = vmatpush1.msra.mxu0 0.0
    %438 = vmatprep.mubr.f32.mxu0 0.0
    %439 = vmatmul.mubr.f32.gmra.mrb[0].mxu0 %v362
    %v440 = vpop.f32.mrb[0].mxu0
    %v441 = vadd.f32 %v216, %v440
    %v442 = vpop.f32.mrb[0].mxu0
    %v443 = vadd.f32 %v218, %v442
    %444 = vdwg.mxu0
    %445 = vmatprep.subr.mxu0 %v370
    %446 = vmatpush1.msra.mxu0 %v368
    %447 = vmatprep.subr.mxu0 0.0
    %448 = vmatpush1.msra.mxu0 0.0
    %449 = vmatprep.subr.mxu0 0.0
    %450 = vmatpush1.msra.mxu0 0.0
    %451 = vmatprep.subr.mxu0 0.0
    %452 = vmatpush1.msra.mxu0 0.0
    %453 = vmatprep.subr.mxu0 0.0
    %454 = vmatpush1.msra.mxu0 0.0
    %455 = vmatprep.subr.mxu0 0.0
    %456 = vmatpush1.msra.mxu0 0.0
    %457 = vmatprep.subr.mxu0 0.0
    %458 = vmatpush1.msra.mxu0 0.0
    %459 = vmatprep.subr.mxu0 0.0
    %460 = vmatpush1.msra.mxu0 0.0
    %461 = vmatprep.subr.mxu0 0.0
    %462 = vmatpush1.msra.mxu0 0.0
    %463 = vmatprep.subr.mxu0 0.0
    %464 = vmatpush1.msra.mxu0 0.0
    %465 = vmatprep.subr.mxu0 0.0
    %466 = vmatpush1.msra.mxu0 0.0
    %467 = vmatprep.subr.mxu0 0.0
    %468 = vmatpush1.msra.mxu0 0.0
    %469 = vmatprep.subr.mxu0 0.0
    %470 = vmatpush1.msra.mxu0 0.0
    %471 = vmatprep.subr.mxu0 0.0
    %472 = vmatpush1.msra.mxu0 0.0
    %473 = vmatprep.subr.mxu0 0.0
    %474 = vmatpush1.msra.mxu0 0.0
    %475 = vmatprep.subr.mxu0 0.0
    %476 = vmatpush1.msra.mxu0 0.0
    %477 = vmatprep.subr.mxu0 0.0
    %478 = vmatpush1.msra.mxu0 0.0
    %479 = vmatprep.subr.mxu0 0.0
    %480 = vmatpush1.msra.mxu0 0.0
    %481 = vmatprep.subr.mxu0 0.0
    %482 = vmatpush1.msra.mxu0 0.0
    %483 = vmatprep.subr.mxu0 0.0
    %484 = vmatpush1.msra.mxu0 0.0
    %485 = vmatprep.subr.mxu0 0.0
    %486 = vmatpush1.msra.mxu0 0.0
    %487 = vmatprep.subr.mxu0 0.0
    %488 = vmatpush1.msra.mxu0 0.0
    %489 = vmatprep.subr.mxu0 0.0
    %490 = vmatpush1.msra.mxu0 0.0
    %491 = vmatprep.subr.mxu0 0.0
    %492 = vmatpush1.msra.mxu0 0.0
    %493 = vmatprep.subr.mxu0 0.0
    %494 = vmatpush1.msra.mxu0 0.0
    %495 = vmatprep.subr.mxu0 0.0
    %496 = vmatpush1.msra.mxu0 0.0
    %497 = vmatprep.subr.mxu0 0.0
    %498 = vmatpush1.msra.mxu0 0.0
    %499 = vmatprep.subr.mxu0 0.0
    %500 = vmatpush1.msra.mxu0 0.0
    %501 = vmatprep.subr.mxu0 0.0
    %502 = vmatpush1.msra.mxu0 0.0
    %503 = vmatprep.subr.mxu0 0.0
    %504 = vmatpush1.msra.mxu0 0.0
    %505 = vmatprep.subr.mxu0 0.0
    %506 = vmatpush1.msra.mxu0 0.0
    %507 = vmatprep.subr.mxu0 0.0
    %508 = vmatpush1.msra.mxu0 0.0
    %509 = vmatprep.mubr.f32.mxu0 0.0
    %510 = vmatmul.mubr.f32.gmra.mrb[0].mxu0 %v362
    %v511 = vpop.f32.mrb[0].mxu0
    %v512 = vadd.f32 %v287, %v511
    %v513 = vpop.f32.mrb[0].mxu0
    %v514 = vadd.f32 %v289, %v513
    %515 = vdwg.mxu0
    %516 = vmatprep.subr.mxu0 0.0
    %517 = vmatpush1.msra.mxu0 %v372
    %518 = vmatprep.subr.mxu0 0.0
    %519 = vmatpush1.msra.mxu0 0.0
    %520 = vmatprep.subr.mxu0 0.0
    %521 = vmatpush1.msra.mxu0 0.0
    %522 = vmatprep.subr.mxu0 0.0
    %523 = vmatpush1.msra.mxu0 0.0
    %524 = vmatprep.subr.mxu0 0.0
    %525 = vmatpush1.msra.mxu0 0.0
    %526 = vmatprep.subr.mxu0 0.0
    %527 = vmatpush1.msra.mxu0 0.0
    %528 = vmatprep.subr.mxu0 0.0
    %529 = vmatpush1.msra.mxu0 0.0
    %530 = vmatprep.subr.mxu0 0.0
    %531 = vmatpush1.msra.mxu0 0.0
    %532 = vmatprep.subr.mxu0 0.0
    %533 = vmatpush1.msra.mxu0 0.0
    %534 = vmatprep.subr.mxu0 0.0
    %535 = vmatpush1.msra.mxu0 0.0
    %536 = vmatprep.subr.mxu0 0.0
    %537 = vmatpush1.msra.mxu0 0.0
    %538 = vmatprep.subr.mxu0 0.0
    %539 = vmatpush1.msra.mxu0 0.0
    %540 = vmatprep.subr.mxu0 0.0
    %541 = vmatpush1.msra.mxu0 0.0
    %542 = vmatprep.subr.mxu0 0.0
    %543 = vmatpush1.msra.mxu0 0.0
    %544 = vmatprep.subr.mxu0 0.0
    %545 = vmatpush1.msra.mxu0 0.0
    %546 = vmatprep.subr.mxu0 0.0
    %547 = vmatpush1.msra.mxu0 0.0
    %548 = vmatprep.subr.mxu0 0.0
    %549 = vmatpush1.msra.mxu0 0.0
    %550 = vmatprep.subr.mxu0 0.0
    %551 = vmatpush1.msra.mxu0 0.0
    %552 = vmatprep.subr.mxu0 0.0
    %553 = vmatpush1.msra.mxu0 0.0
    %554 = vmatprep.subr.mxu0 0.0
    %555 = vmatpush1.msra.mxu0 0.0
    %556 = vmatprep.subr.mxu0 0.0
    %557 = vmatpush1.msra.mxu0 0.0
    %558 = vmatprep.subr.mxu0 0.0
    %559 = vmatpush1.msra.mxu0 0.0
    %560 = vmatprep.subr.mxu0 0.0
    %561 = vmatpush1.msra.mxu0 0.0
    %562 = vmatprep.subr.mxu0 0.0
    %563 = vmatpush1.msra.mxu0 0.0
    %564 = vmatprep.subr.mxu0 0.0
    %565 = vmatpush1.msra.mxu0 0.0
    %566 = vmatprep.subr.mxu0 0.0
    %567 = vmatpush1.msra.mxu0 0.0
    %568 = vmatprep.subr.mxu0 0.0
    %569 = vmatpush1.msra.mxu0 0.0
    %570 = vmatprep.subr.mxu0 0.0
    %571 = vmatpush1.msra.mxu0 0.0
    %572 = vmatprep.subr.mxu0 0.0
    %573 = vmatpush1.msra.mxu0 0.0
    %574 = vmatprep.subr.mxu0 0.0
    %575 = vmatpush1.msra.mxu0 0.0
    %576 = vmatprep.subr.mxu0 0.0
    %577 = vmatpush1.msra.mxu0 0.0
    %578 = vmatprep.subr.mxu0 0.0
    %579 = vmatpush1.msra.mxu0 0.0
    %580 = vmatprep.mubr.f32.mxu0 0.0
    %581 = vmatmul.mubr.f32.gmra.mrb[0].mxu0 %v362
    %v582 = vpop.f32.mrb[0].mxu0
    %v583 = vadd.f32 %v358, %v582
    %v584 = vpop.f32.mrb[0].mxu0
    %585 = vdwg.mxu0
    %v586 = vld [vmem:[%s1 + $0x10] sm:$0xff]
    %v587 = vld [vmem:[%s0] sm:$0xff]
    %v588 = vld [vmem:[%s0 + $0x8] sm:$0xff]
    %v589 = vld [vmem:[%s0 + $0x10] sm:$0xf]
    %v593 = vcombine.high %v587, %v587
    %v594 = vcombine.high %v588, %v588
    %595 = vrot.lane.b32.xlu0 %v587, 126
    %v596 = vpop.permute.xlu0 %595
    %597 = vrot.lane.b32.xlu0 %v593, 126
    %v598 = vpop.permute.xlu0 %597
    %599 = vrot.lane.b32.xlu0 %v588, 126
    %v600 = vpop.permute.xlu0 %599
    %601 = vrot.lane.b32.xlu0 %v594, 126
    %v602 = vpop.permute.xlu0 %601
    %603 = vrot.lane.b32.xlu0 %v589, 126
    %v604 = vpop.permute.xlu0 %603
    %vm605 = vcmask 1031168
    %v606 = vsel %vm605, %v596, %v598
    %v607 = vsel %vm605, %v598, %v600
    %v608 = vsel %vm605, %v600, %v602
    %v609 = vsel %vm605, %v602, %v604
    %v611 = vsel %vm134, %v586, 0
    %v613 = vsel %vm138, %v606, 0
    %v615 = vsel %vm138, %v607, 0
    %v617 = vsel %vm138, %v608, 0
    %v619 = vsel %vm138, %v609, 0
    %v621 = vsel %vm138, %v604, 0
    %623 = vmatprep.subr.mxu0 %v615
    %624 = vmatpush1.msra.mxu0 %v613
    %625 = vmatprep.subr.mxu0 0.0
    %626 = vmatpush1.msra.mxu0 0.0
    %627 = vmatprep.subr.mxu0 0.0
    %628 = vmatpush1.msra.mxu0 0.0
    %629 = vmatprep.subr.mxu0 0.0
    %630 = vmatpush1.msra.mxu0 0.0
    %631 = vmatprep.subr.mxu0 0.0
    %632 = vmatpush1.msra.mxu0 0.0
    %633 = vmatprep.subr.mxu0 0.0
    %634 = vmatpush1.msra.mxu0 0.0
    %635 = vmatprep.subr.mxu0 0.0
    %636 = vmatpush1.msra.mxu0 0.0
    %637 = vmatprep.subr.mxu0 0.0
    %638 = vmatpush1.msra.mxu0 0.0
    %639 = vmatprep.subr.mxu0 0.0
    %640 = vmatpush1.msra.mxu0 0.0
    %641 = vmatprep.subr.mxu0 0.0
    %642 = vmatpush1.msra.mxu0 0.0
    %643 = vmatprep.subr.mxu0 0.0
    %644 = vmatpush1.msra.mxu0 0.0
    %645 = vmatprep.subr.mxu0 0.0
    %646 = vmatpush1.msra.mxu0 0.0
    %647 = vmatprep.subr.mxu0 0.0
    %648 = vmatpush1.msra.mxu0 0.0
    %649 = vmatprep.subr.mxu0 0.0
    %650 = vmatpush1.msra.mxu0 0.0
    %651 = vmatprep.subr.mxu0 0.0
    %652 = vmatpush1.msra.mxu0 0.0
    %653 = vmatprep.subr.mxu0 0.0
    %654 = vmatpush1.msra.mxu0 0.0
    %655 = vmatprep.subr.mxu0 0.0
    %656 = vmatpush1.msra.mxu0 0.0
    %657 = vmatprep.subr.mxu0 0.0
    %658 = vmatpush1.msra.mxu0 0.0
    %659 = vmatprep.subr.mxu0 0.0
    %660 = vmatpush1.msra.mxu0 0.0
    %661 = vmatprep.subr.mxu0 0.0
    %662 = vmatpush1.msra.mxu0 0.0
    %663 = vmatprep.subr.mxu0 0.0
    %664 = vmatpush1.msra.mxu0 0.0
    %665 = vmatprep.subr.mxu0 0.0
    %666 = vmatpush1.msra.mxu0 0.0
    %667 = vmatprep.subr.mxu0 0.0
    %668 = vmatpush1.msra.mxu0 0.0
    %669 = vmatprep.subr.mxu0 0.0
    %670 = vmatpush1.msra.mxu0 0.0
    %671 = vmatprep.subr.mxu0 0.0
    %672 = vmatpush1.msra.mxu0 0.0
    %673 = vmatprep.subr.mxu0 0.0
    %674 = vmatpush1.msra.mxu0 0.0
    %675 = vmatprep.subr.mxu0 0.0
    %676 = vmatpush1.msra.mxu0 0.0
    %677 = vmatprep.subr.mxu0 0.0
    %678 = vmatpush1.msra.mxu0 0.0
    %679 = vmatprep.subr.mxu0 0.0
    %680 = vmatpush1.msra.mxu0 0.0
    %681 = vmatprep.subr.mxu0 0.0
    %682 = vmatpush1.msra.mxu0 0.0
    %683 = vmatprep.subr.mxu0 0.0
    %684 = vmatpush1.msra.mxu0 0.0
    %685 = vmatprep.subr.mxu0 0.0
    %686 = vmatpush1.msra.mxu0 0.0
    %687 = vmatprep.mubr.f32.mxu0 0.0
    %688 = vmatmul.mubr.f32.gmra.mrb[0].mxu0 %v611
    %v689 = vpop.f32.mrb[0].mxu0
    %v690 = vadd.f32 0.0, %v689
    %v691 = vpop.f32.mrb[0].mxu0
    %v692 = vadd.f32 0.0, %v691
    %693 = vdwg.mxu0
    %694 = vmatprep.subr.mxu0 %v619
    %695 = vmatpush1.msra.mxu0 %v617
    %696 = vmatprep.subr.mxu0 0.0
    %697 = vmatpush1.msra.mxu0 0.0
    %698 = vmatprep.subr.mxu0 0.0
    %699 = vmatpush1.msra.mxu0 0.0
    %700 = vmatprep.subr.mxu0 0.0
    %701 = vmatpush1.msra.mxu0 0.0
    %702 = vmatprep.subr.mxu0 0.0
    %703 = vmatpush1.msra.mxu0 0.0
    %704 = vmatprep.subr.mxu0 0.0
    %705 = vmatpush1.msra.mxu0 0.0
    %706 = vmatprep.subr.mxu0 0.0
    %707 = vmatpush1.msra.mxu0 0.0
    %708 = vmatprep.subr.mxu0 0.0
    %709 = vmatpush1.msra.mxu0 0.0
    %710 = vmatprep.subr.mxu0 0.0
    %711 = vmatpush1.msra.mxu0 0.0
    %712 = vmatprep.subr.mxu0 0.0
    %713 = vmatpush1.msra.mxu0 0.0
    %714 = vmatprep.subr.mxu0 0.0
    %715 = vmatpush1.msra.mxu0 0.0
    %716 = vmatprep.subr.mxu0 0.0
    %717 = vmatpush1.msra.mxu0 0.0
    %718 = vmatprep.subr.mxu0 0.0
    %719 = vmatpush1.msra.mxu0 0.0
    %720 = vmatprep.subr.mxu0 0.0
    %721 = vmatpush1.msra.mxu0 0.0
    %722 = vmatprep.subr.mxu0 0.0
    %723 = vmatpush1.msra.mxu0 0.0
    %724 = vmatprep.subr.mxu0 0.0
    %725 = vmatpush1.msra.mxu0 0.0
    %726 = vmatprep.subr.mxu0 0.0
    %727 = vmatpush1.msra.mxu0 0.0
    %728 = vmatprep.subr.mxu0 0.0
    %729 = vmatpush1.msra.mxu0 0.0
    %730 = vmatprep.subr.mxu0 0.0
    %731 = vmatpush1.msra.mxu0 0.0
    %732 = vmatprep.subr.mxu0 0.0
    %733 = vmatpush1.msra.mxu0 0.0
    %734 = vmatprep.subr.mxu0 0.0
    %735 = vmatpush1.msra.mxu0 0.0
    %736 = vmatprep.subr.mxu0 0.0
    %737 = vmatpush1.msra.mxu0 0.0
    %738 = vmatprep.subr.mxu0 0.0
    %739 = vmatpush1.msra.mxu0 0.0
    %740 = vmatprep.subr.mxu0 0.0
    %741 = vmatpush1.msra.mxu0 0.0
    %742 = vmatprep.subr.mxu0 0.0
    %743 = vmatpush1.msra.mxu0 0.0
    %744 = vmatprep.subr.mxu0 0.0
    %745 = vmatpush1.msra.mxu0 0.0
    %746 = vmatprep.subr.mxu0 0.0
    %747 = vmatpush1.msra.mxu0 0.0
    %748 = vmatprep.subr.mxu0 0.0
    %749 = vmatpush1.msra.mxu0 0.0
    %750 = vmatprep.subr.mxu0 0.0
    %751 = vmatpush1.msra.mxu0 0.0
    %752 = vmatprep.subr.mxu0 0.0
    %753 = vmatpush1.msra.mxu0 0.0
    %754 = vmatprep.subr.mxu0 0.0
    %755 = vmatpush1.msra.mxu0 0.0
    %756 = vmatprep.subr.mxu0 0.0
    %757 = vmatpush1.msra.mxu0 0.0
    %758 = vmatprep.mubr.f32.mxu0 0.0
    %759 = vmatmul.mubr.f32.gmra.mrb[0].mxu0 %v611
    %v760 = vpop.f32.mrb[0].mxu0
    %v761 = vadd.f32 0.0, %v760
    %v762 = vpop.f32.mrb[0].mxu0
    %v763 = vadd.f32 0.0, %v762
    %764 = vdwg.mxu0
    %765 = vmatprep.subr.mxu0 0.0
    %766 = vmatpush1.msra.mxu0 %v621
    %767 = vmatprep.subr.mxu0 0.0
    %768 = vmatpush1.msra.mxu0 0.0
    %769 = vmatprep.subr.mxu0 0.0
    %770 = vmatpush1.msra.mxu0 0.0
    %771 = vmatprep.subr.mxu0 0.0
    %772 = vmatpush1.msra.mxu0 0.0
    %773 = vmatprep.subr.mxu0 0.0
    %774 = vmatpush1.msra.mxu0 0.0
    %775 = vmatprep.subr.mxu0 0.0
    %776 = vmatpush1.msra.mxu0 0.0
    %777 = vmatprep.subr.mxu0 0.0
    %778 = vmatpush1.msra.mxu0 0.0
    %779 = vmatprep.subr.mxu0 0.0
    %780 = vmatpush1.msra.mxu0 0.0
    %781 = vmatprep.subr.mxu0 0.0
    %782 = vmatpush1.msra.mxu0 0.0
    %783 = vmatprep.subr.mxu0 0.0
    %784 = vmatpush1.msra.mxu0 0.0
    %785 = vmatprep.subr.mxu0 0.0
    %786 = vmatpush1.msra.mxu0 0.0
    %787 = vmatprep.subr.mxu0 0.0
    %788 = vmatpush1.msra.mxu0 0.0
    %789 = vmatprep.subr.mxu0 0.0
    %790 = vmatpush1.msra.mxu0 0.0
    %791 = vmatprep.subr.mxu0 0.0
    %792 = vmatpush1.msra.mxu0 0.0
    %793 = vmatprep.subr.mxu0 0.0
    %794 = vmatpush1.msra.mxu0 0.0
    %795 = vmatprep.subr.mxu0 0.0
    %796 = vmatpush1.msra.mxu0 0.0
    %797 = vmatprep.subr.mxu0 0.0
    %798 = vmatpush1.msra.mxu0 0.0
    %799 = vmatprep.subr.mxu0 0.0
    %800 = vmatpush1.msra.mxu0 0.0
    %801 = vmatprep.subr.mxu0 0.0
    %802 = vmatpush1.msra.mxu0 0.0
    %803 = vmatprep.subr.mxu0 0.0
    %804 = vmatpush1.msra.mxu0 0.0
    %805 = vmatprep.subr.mxu0 0.0
    %806 = vmatpush1.msra.mxu0 0.0
    %807 = vmatprep.subr.mxu0 0.0
    %808 = vmatpush1.msra.mxu0 0.0
    %809 = vmatprep.subr.mxu0 0.0
    %810 = vmatpush1.msra.mxu0 0.0
    %811 = vmatprep.subr.mxu0 0.0
    %812 = vmatpush1.msra.mxu0 0.0
    %813 = vmatprep.subr.mxu0 0.0
    %814 = vmatpush1.msra.mxu0 0.0
    %815 = vmatprep.subr.mxu0 0.0
    %816 = vmatpush1.msra.mxu0 0.0
    %817 = vmatprep.subr.mxu0 0.0
    %818 = vmatpush1.msra.mxu0 0.0
    %819 = vmatprep.subr.mxu0 0.0
    %820 = vmatpush1.msra.mxu0 0.0
    %821 = vmatprep.subr.mxu0 0.0
    %822 = vmatpush1.msra.mxu0 0.0
    %823 = vmatprep.subr.mxu0 0.0
    %824 = vmatpush1.msra.mxu0 0.0
    %825 = vmatprep.subr.mxu0 0.0
    %826 = vmatpush1.msra.mxu0 0.0
    %827 = vmatprep.subr.mxu0 0.0
    %828 = vmatpush1.msra.mxu0 0.0
    %829 = vmatprep.mubr.f32.mxu0 0.0
    %830 = vmatmul.mubr.f32.gmra.mrb[0].mxu0 %v611
    %v831 = vpop.f32.mrb[0].mxu0
    %v832 = vadd.f32 0.0, %v831
    %v833 = vpop.f32.mrb[0].mxu0
    %834 = vdwg.mxu0
    %v835 = vadd.f32 %v441, %v690
    %v836 = vadd.f32 %v443, %v692
    %v837 = vadd.f32 %v512, %v761
    %v838 = vadd.f32 %v514, %v763
    %v839 = vadd.f32 %v583, %v832
    %v840 = vld [vmem:[%s1 + $0x18] sm:$0xff]
    %v841 = vld [vmem:[%s0] sm:$0xff]
    %v842 = vld [vmem:[%s0 + $0x8] sm:$0xff]
    %v843 = vld [vmem:[%s0 + $0x10] sm:$0xf]
    %v847 = vcombine.high %v841, %v841
    %v848 = vcombine.high %v842, %v842
    %849 = vrot.lane.b32.xlu0 %v841, 112
    %v850 = vpop.permute.xlu0 %849
    %851 = vrot.lane.b32.xlu0 %v847, 112
    %v852 = vpop.permute.xlu0 %851
    %853 = vrot.lane.b32.xlu0 %v842, 112
    %v854 = vpop.permute.xlu0 %853
    %855 = vrot.lane.b32.xlu0 %v848, 112
    %v856 = vpop.permute.xlu0 %855
    %857 = vrot.lane.b32.xlu0 %v843, 112
    %v858 = vpop.permute.xlu0 %857
    %vm859 = vcmask 916480
    %v860 = vsel %vm859, %v850, %v852
    %v861 = vsel %vm859, %v852, %v854
    %v862 = vsel %vm859, %v854, %v856
    %v863 = vsel %vm859, %v856, %v858
    %v865 = vsel %vm134, %v840, 0
    %v867 = vsel %vm138, %v860, 0
    %v869 = vsel %vm138, %v861, 0
    %v871 = vsel %vm138, %v862, 0
    %v873 = vsel %vm138, %v863, 0
    %v875 = vsel %vm138, %v858, 0
    %877 = vmatprep.subr.mxu0 %v869
    %878 = vmatpush1.msra.mxu0 %v867
    %879 = vmatprep.subr.mxu0 0.0
    %880 = vmatpush1.msra.mxu0 0.0
    %881 = vmatprep.subr.mxu0 0.0
    %882 = vmatpush1.msra.mxu0 0.0
    %883 = vmatprep.subr.mxu0 0.0
    %884 = vmatpush1.msra.mxu0 0.0
    %885 = vmatprep.subr.mxu0 0.0
    %886 = vmatpush1.msra.mxu0 0.0
    %887 = vmatprep.subr.mxu0 0.0
    %888 = vmatpush1.msra.mxu0 0.0
    %889 = vmatprep.subr.mxu0 0.0
    %890 = vmatpush1.msra.mxu0 0.0
    %891 = vmatprep.subr.mxu0 0.0
    %892 = vmatpush1.msra.mxu0 0.0
    %893 = vmatprep.subr.mxu0 0.0
    %894 = vmatpush1.msra.mxu0 0.0
    %895 = vmatprep.subr.mxu0 0.0
    %896 = vmatpush1.msra.mxu0 0.0
    %897 = vmatprep.subr.mxu0 0.0
    %898 = vmatpush1.msra.mxu0 0.0
    %899 = vmatprep.subr.mxu0 0.0
    %900 = vmatpush1.msra.mxu0 0.0
    %901 = vmatprep.subr.mxu0 0.0
    %902 = vmatpush1.msra.mxu0 0.0
    %903 = vmatprep.subr.mxu0 0.0
    %904 = vmatpush1.msra.mxu0 0.0
    %905 = vmatprep.subr.mxu0 0.0
    %906 = vmatpush1.msra.mxu0 0.0
    %907 = vmatprep.subr.mxu0 0.0
    %908 = vmatpush1.msra.mxu0 0.0
    %909 = vmatprep.subr.mxu0 0.0
    %910 = vmatpush1.msra.mxu0 0.0
    %911 = vmatprep.subr.mxu0 0.0
    %912 = vmatpush1.msra.mxu0 0.0
    %913 = vmatprep.subr.mxu0 0.0
    %914 = vmatpush1.msra.mxu0 0.0
    %915 = vmatprep.subr.mxu0 0.0
    %916 = vmatpush1.msra.mxu0 0.0
    %917 = vmatprep.subr.mxu0 0.0
    %918 = vmatpush1.msra.mxu0 0.0
    %919 = vmatprep.subr.mxu0 0.0
    %920 = vmatpush1.msra.mxu0 0.0
    %921 = vmatprep.subr.mxu0 0.0
    %922 = vmatpush1.msra.mxu0 0.0
    %923 = vmatprep.subr.mxu0 0.0
    %924 = vmatpush1.msra.mxu0 0.0
    %925 = vmatprep.subr.mxu0 0.0
    %926 = vmatpush1.msra.mxu0 0.0
    %927 = vmatprep.subr.mxu0 0.0
    %928 = vmatpush1.msra.mxu0 0.0
    %929 = vmatprep.subr.mxu0 0.0
    %930 = vmatpush1.msra.mxu0 0.0
    %931 = vmatprep.subr.mxu0 0.0
    %932 = vmatpush1.msra.mxu0 0.0
    %933 = vmatprep.subr.mxu0 0.0
    %934 = vmatpush1.msra.mxu0 0.0
    %935 = vmatprep.subr.mxu0 0.0
    %936 = vmatpush1.msra.mxu0 0.0
    %937 = vmatprep.subr.mxu0 0.0
    %938 = vmatpush1.msra.mxu0 0.0
    %939 = vmatprep.subr.mxu0 0.0
    %940 = vmatpush1.msra.mxu0 0.0
    %941 = vmatprep.mubr.f32.mxu0 0.0
    %942 = vmatmul.mubr.f32.gmra.mrb[0].mxu0 %v865
    %v943 = vpop.f32.mrb[0].mxu0
    %v944 = vadd.f32 0.0, %v943
    %v945 = vpop.f32.mrb[0].mxu0
    %v946 = vadd.f32 0.0, %v945
    %947 = vdwg.mxu0
    %948 = vmatprep.subr.mxu0 %v873
    %949 = vmatpush1.msra.mxu0 %v871
    %950 = vmatprep.subr.mxu0 0.0
    %951 = vmatpush1.msra.mxu0 0.0
    %952 = vmatprep.subr.mxu0 0.0
    %953 = vmatpush1.msra.mxu0 0.0
    %954 = vmatprep.subr.mxu0 0.0
    %955 = vmatpush1.msra.mxu0 0.0
    %956 = vmatprep.subr.mxu0 0.0
    %957 = vmatpush1.msra.mxu0 0.0
    %958 = vmatprep.subr.mxu0 0.0
    %959 = vmatpush1.msra.mxu0 0.0
    %960 = vmatprep.subr.mxu0 0.0
    %961 = vmatpush1.msra.mxu0 0.0
    %962 = vmatprep.subr.mxu0 0.0
    %963 = vmatpush1.msra.mxu0 0.0
    %964 = vmatprep.subr.mxu0 0.0
    %965 = vmatpush1.msra.mxu0 0.0
    %966 = vmatprep.subr.mxu0 0.0
    %967 = vmatpush1.msra.mxu0 0.0
    %968 = vmatprep.subr.mxu0 0.0
    %969 = vmatpush1.msra.mxu0 0.0
    %970 = vmatprep.subr.mxu0 0.0
    %971 = vmatpush1.msra.mxu0 0.0
    %972 = vmatprep.subr.mxu0 0.0
    %973 = vmatpush1.msra.mxu0 0.0
    %974 = vmatprep.subr.mxu0 0.0
    %975 = vmatpush1.msra.mxu0 0.0
    %976 = vmatprep.subr.mxu0 0.0
    %977 = vmatpush1.msra.mxu0 0.0
    %978 = vmatprep.subr.mxu0 0.0
    %979 = vmatpush1.msra.mxu0 0.0
    %980 = vmatprep.subr.mxu0 0.0
    %981 = vmatpush1.msra.mxu0 0.0
    %982 = vmatprep.subr.mxu0 0.0
    %983 = vmatpush1.msra.mxu0 0.0
    %984 = vmatprep.subr.mxu0 0.0
    %985 = vmatpush1.msra.mxu0 0.0
    %986 = vmatprep.subr.mxu0 0.0
    %987 = vmatpush1.msra.mxu0 0.0
    %988 = vmatprep.subr.mxu0 0.0
    %989 = vmatpush1.msra.mxu0 0.0
    %990 = vmatprep.subr.mxu0 0.0
    %991 = vmatpush1.msra.mxu0 0.0
    %992 = vmatprep.subr.mxu0 0.0
    %993 = vmatpush1.msra.mxu0 0.0
    %994 = vmatprep.subr.mxu0 0.0
    %995 = vmatpush1.msra.mxu0 0.0
    %996 = vmatprep.subr.mxu0 0.0
    %997 = vmatpush1.msra.mxu0 0.0
    %998 = vmatprep.subr.mxu0 0.0
    %999 = vmatpush1.msra.mxu0 0.0
    %1000 = vmatprep.subr.mxu0 0.0
    %1001 = vmatpush1.msra.mxu0 0.0
    %1002 = vmatprep.subr.mxu0 0.0
    %1003 = vmatpush1.msra.mxu0 0.0
    %1004 = vmatprep.subr.mxu0 0.0
    %1005 = vmatpush1.msra.mxu0 0.0
    %1006 = vmatprep.subr.mxu0 0.0
    %1007 = vmatpush1.msra.mxu0 0.0
    %1008 = vmatprep.subr.mxu0 0.0
    %1009 = vmatpush1.msra.mxu0 0.0
    %1010 = vmatprep.subr.mxu0 0.0
    %1011 = vmatpush1.msra.mxu0 0.0
    %1012 = vmatprep.mubr.f32.mxu0 0.0
    %1013 = vmatmul.mubr.f32.gmra.mrb[0].mxu0 %v865
    %v1014 = vpop.f32.mrb[0].mxu0
    %v1015 = vadd.f32 0.0, %v1014
    %v1016 = vpop.f32.mrb[0].mxu0
    %v1017 = vadd.f32 0.0, %v1016
    %1018 = vdwg.mxu0
    %1019 = vmatprep.subr.mxu0 0.0
    %1020 = vmatpush1.msra.mxu0 %v875
    %1021 = vmatprep.subr.mxu0 0.0
    %1022 = vmatpush1.msra.mxu0 0.0
    %1023 = vmatprep.subr.mxu0 0.0
    %1024 = vmatpush1.msra.mxu0 0.0
    %1025 = vmatprep.subr.mxu0 0.0
    %1026 = vmatpush1.msra.mxu0 0.0
    %1027 = vmatprep.subr.mxu0 0.0
    %1028 = vmatpush1.msra.mxu0 0.0
    %1029 = vmatprep.subr.mxu0 0.0
    %1030 = vmatpush1.msra.mxu0 0.0
    %1031 = vmatprep.subr.mxu0 0.0
    %1032 = vmatpush1.msra.mxu0 0.0
    %1033 = vmatprep.subr.mxu0 0.0
    %1034 = vmatpush1.msra.mxu0 0.0
    %1035 = vmatprep.subr.mxu0 0.0
    %1036 = vmatpush1.msra.mxu0 0.0
    %1037 = vmatprep.subr.mxu0 0.0
    %1038 = vmatpush1.msra.mxu0 0.0
    %1039 = vmatprep.subr.mxu0 0.0
    %1040 = vmatpush1.msra.mxu0 0.0
    %1041 = vmatprep.subr.mxu0 0.0
    %1042 = vmatpush1.msra.mxu0 0.0
    %1043 = vmatprep.subr.mxu0 0.0
    %1044 = vmatpush1.msra.mxu0 0.0
    %1045 = vmatprep.subr.mxu0 0.0
    %1046 = vmatpush1.msra.mxu0 0.0
    %1047 = vmatprep.subr.mxu0 0.0
    %1048 = vmatpush1.msra.mxu0 0.0
    %1049 = vmatprep.subr.mxu0 0.0
    %1050 = vmatpush1.msra.mxu0 0.0
    %1051 = vmatprep.subr.mxu0 0.0
    %1052 = vmatpush1.msra.mxu0 0.0
    %1053 = vmatprep.subr.mxu0 0.0
    %1054 = vmatpush1.msra.mxu0 0.0
    %1055 = vmatprep.subr.mxu0 0.0
    %1056 = vmatpush1.msra.mxu0 0.0
    %1057 = vmatprep.subr.mxu0 0.0
    %1058 = vmatpush1.msra.mxu0 0.0
    %1059 = vmatprep.subr.mxu0 0.0
    %1060 = vmatpush1.msra.mxu0 0.0
    %1061 = vmatprep.subr.mxu0 0.0
    %1062 = vmatpush1.msra.mxu0 0.0
    %1063 = vmatprep.subr.mxu0 0.0
    %1064 = vmatpush1.msra.mxu0 0.0
    %1065 = vmatprep.subr.mxu0 0.0
    %1066 = vmatpush1.msra.mxu0 0.0
    %1067 = vmatprep.subr.mxu0 0.0
    %1068 = vmatpush1.msra.mxu0 0.0
    %1069 = vmatprep.subr.mxu0 0.0
    %1070 = vmatpush1.msra.mxu0 0.0
    %1071 = vmatprep.subr.mxu0 0.0
    %1072 = vmatpush1.msra.mxu0 0.0
    %1073 = vmatprep.subr.mxu0 0.0
    %1074 = vmatpush1.msra.mxu0 0.0
    %1075 = vmatprep.subr.mxu0 0.0
    %1076 = vmatpush1.msra.mxu0 0.0
    %1077 = vmatprep.subr.mxu0 0.0
    %1078 = vmatpush1.msra.mxu0 0.0
    %1079 = vmatprep.subr.mxu0 0.0
    %1080 = vmatpush1.msra.mxu0 0.0
    %1081 = vmatprep.subr.mxu0 0.0
    %1082 = vmatpush1.msra.mxu0 0.0
    %1083 = vmatprep.mubr.f32.mxu0 0.0
    %1084 = vmatmul.mubr.f32.gmra.mrb[0].mxu0 %v865
    %v1085 = vpop.f32.mrb[0].mxu0
    %v1086 = vadd.f32 0.0, %v1085
    %v1087 = vpop.f32.mrb[0].mxu0
    %1088 = vdwg.mxu0
    %v1089 = vadd.f32 %v835, %v944
    %v1090 = vadd.f32 %v836, %v946
    %v1091 = vadd.f32 %v837, %v1015
    %v1092 = vadd.f32 %v838, %v1017
    %v1093 = vadd.f32 %v839, %v1086
    %v1094 = vld [vmem:[%s1 + $0x20] sm:$0xff]
    %v1095 = vld [vmem:[%s0] sm:$0xff]
    %v1096 = vld [vmem:[%s0 + $0x8] sm:$0xff]
    %v1097 = vld [vmem:[%s0 + $0x10] sm:$0xf]
    %v1101 = vcombine.high %v1095, %v1095
    %v1102 = vcombine.high %v1096, %v1096
    %1103 = vrot.lane.b32.xlu0 %v1095, 111
    %v1104 = vpop.permute.xlu0 %1103
    %1105 = vrot.lane.b32.xlu0 %v1101, 111
    %v1106 = vpop.permute.xlu0 %1105
    %1107 = vrot.lane.b32.xlu0 %v1096, 111
    %v1108 = vpop.permute.xlu0 %1107
    %1109 = vrot.lane.b32.xlu0 %v1102, 111
    %v1110 = vpop.permute.xlu0 %1109
    %1111 = vrot.lane.b32.xlu0 %v1097, 111
    %v1112 = vpop.permute.xlu0 %1111
    %vm1113 = vcmask 908288
    %v1114 = vsel %vm1113, %v1104, %v1106
    %v1115 = vsel %vm1113, %v1106, %v1108
    %v1116 = vsel %vm1113, %v1108, %v1110
    %v1117 = vsel %vm1113, %v1110, %v1112
    %v1119 = vsel %vm134, %v1094, 0
    %v1121 = vsel %vm138, %v1114, 0
    %v1123 = vsel %vm138, %v1115, 0
    %v1125 = vsel %vm138, %v1116, 0
    %v1127 = vsel %vm138, %v1117, 0
    %v1129 = vsel %vm138, %v1112, 0
    %1131 = vmatprep.subr.mxu0 %v1123
    %1132 = vmatpush1.msra.mxu0 %v1121
    %1133 = vmatprep.subr.mxu0 0.0
    %1134 = vmatpush1.msra.mxu0 0.0
    %1135 = vmatprep.subr.mxu0 0.0
    %1136 = vmatpush1.msra.mxu0 0.0
    %1137 = vmatprep.subr.mxu0 0.0
    %1138 = vmatpush1.msra.mxu0 0.0
    %1139 = vmatprep.subr.mxu0 0.0
    %1140 = vmatpush1.msra.mxu0 0.0
    %1141 = vmatprep.subr.mxu0 0.0
    %1142 = vmatpush1.msra.mxu0 0.0
    %1143 = vmatprep.subr.mxu0 0.0
    %1144 = vmatpush1.msra.mxu0 0.0
    %1145 = vmatprep.subr.mxu0 0.0
    %1146 = vmatpush1.msra.mxu0 0.0
    %1147 = vmatprep.subr.mxu0 0.0
    %1148 = vmatpush1.msra.mxu0 0.0
    %1149 = vmatprep.subr.mxu0 0.0
    %1150 = vmatpush1.msra.mxu0 0.0
    %1151 = vmatprep.subr.mxu0 0.0
    %1152 = vmatpush1.msra.mxu0 0.0
    %1153 = vmatprep.subr.mxu0 0.0
    %1154 = vmatpush1.msra.mxu0 0.0
    %1155 = vmatprep.subr.mxu0 0.0
    %1156 = vmatpush1.msra.mxu0 0.0
    %1157 = vmatprep.subr.mxu0 0.0
    %1158 = vmatpush1.msra.mxu0 0.0
    %1159 = vmatprep.subr.mxu0 0.0
    %1160 = vmatpush1.msra.mxu0 0.0
    %1161 = vmatprep.subr.mxu0 0.0
    %1162 = vmatpush1.msra.mxu0 0.0
    %1163 = vmatprep.subr.mxu0 0.0
    %1164 = vmatpush1.msra.mxu0 0.0
    %1165 = vmatprep.subr.mxu0 0.0
    %1166 = vmatpush1.msra.mxu0 0.0
    %1167 = vmatprep.subr.mxu0 0.0
    %1168 = vmatpush1.msra.mxu0 0.0
    %1169 = vmatprep.subr.mxu0 0.0
    %1170 = vmatpush1.msra.mxu0 0.0
    %1171 = vmatprep.subr.mxu0 0.0
    %1172 = vmatpush1.msra.mxu0 0.0
    %1173 = vmatprep.subr.mxu0 0.0
    %1174 = vmatpush1.msra.mxu0 0.0
    %1175 = vmatprep.subr.mxu0 0.0
    %1176 = vmatpush1.msra.mxu0 0.0
    %1177 = vmatprep.subr.mxu0 0.0
    %1178 = vmatpush1.msra.mxu0 0.0
    %1179 = vmatprep.subr.mxu0 0.0
    %1180 = vmatpush1.msra.mxu0 0.0
    %1181 = vmatprep.subr.mxu0 0.0
    %1182 = vmatpush1.msra.mxu0 0.0
    %1183 = vmatprep.subr.mxu0 0.0
    %1184 = vmatpush1.msra.mxu0 0.0
    %1185 = vmatprep.subr.mxu0 0.0
    %1186 = vmatpush1.msra.mxu0 0.0
    %1187 = vmatprep.subr.mxu0 0.0
    %1188 = vmatpush1.msra.mxu0 0.0
    %1189 = vmatprep.subr.mxu0 0.0
    %1190 = vmatpush1.msra.mxu0 0.0
    %1191 = vmatprep.subr.mxu0 0.0
    %1192 = vmatpush1.msra.mxu0 0.0
    %1193 = vmatprep.subr.mxu0 0.0
    %1194 = vmatpush1.msra.mxu0 0.0
    %1195 = vmatprep.mubr.f32.mxu0 0.0
    %1196 = vmatmul.mubr.f32.gmra.mrb[0].mxu0 %v1119
    %v1197 = vpop.f32.mrb[0].mxu0
    %v1198 = vadd.f32 0.0, %v1197
    %v1199 = vpop.f32.mrb[0].mxu0
    %v1200 = vadd.f32 0.0, %v1199
    %1201 = vdwg.mxu0
    %1202 = vmatprep.subr.mxu0 %v1127
    %1203 = vmatpush1.msra.mxu0 %v1125
    %1204 = vmatprep.subr.mxu0 0.0
    %1205 = vmatpush1.msra.mxu0 0.0
    %1206 = vmatprep.subr.mxu0 0.0
    %1207 = vmatpush1.msra.mxu0 0.0
    %1208 = vmatprep.subr.mxu0 0.0
    %1209 = vmatpush1.msra.mxu0 0.0
    %1210 = vmatprep.subr.mxu0 0.0
    %1211 = vmatpush1.msra.mxu0 0.0
    %1212 = vmatprep.subr.mxu0 0.0
    %1213 = vmatpush1.msra.mxu0 0.0
    %1214 = vmatprep.subr.mxu0 0.0
    %1215 = vmatpush1.msra.mxu0 0.0
    %1216 = vmatprep.subr.mxu0 0.0
    %1217 = vmatpush1.msra.mxu0 0.0
    %1218 = vmatprep.subr.mxu0 0.0
    %1219 = vmatpush1.msra.mxu0 0.0
    %1220 = vmatprep.subr.mxu0 0.0
    %1221 = vmatpush1.msra.mxu0 0.0
    %1222 = vmatprep.subr.mxu0 0.0
    %1223 = vmatpush1.msra.mxu0 0.0
    %1224 = vmatprep.subr.mxu0 0.0
    %1225 = vmatpush1.msra.mxu0 0.0
    %1226 = vmatprep.subr.mxu0 0.0
    %1227 = vmatpush1.msra.mxu0 0.0
    %1228 = vmatprep.subr.mxu0 0.0
    %1229 = vmatpush1.msra.mxu0 0.0
    %1230 = vmatprep.subr.mxu0 0.0
    %1231 = vmatpush1.msra.mxu0 0.0
    %1232 = vmatprep.subr.mxu0 0.0
    %1233 = vmatpush1.msra.mxu0 0.0
    %1234 = vmatprep.subr.mxu0 0.0
    %1235 = vmatpush1.msra.mxu0 0.0
    %1236 = vmatprep.subr.mxu0 0.0
    %1237 = vmatpush1.msra.mxu0 0.0
    %1238 = vmatprep.subr.mxu0 0.0
    %1239 = vmatpush1.msra.mxu0 0.0
    %1240 = vmatprep.subr.mxu0 0.0
    %1241 = vmatpush1.msra.mxu0 0.0
    %1242 = vmatprep.subr.mxu0 0.0
    %1243 = vmatpush1.msra.mxu0 0.0
    %1244 = vmatprep.subr.mxu0 0.0
    %1245 = vmatpush1.msra.mxu0 0.0
    %1246 = vmatprep.subr.mxu0 0.0
    %1247 = vmatpush1.msra.mxu0 0.0
    %1248 = vmatprep.subr.mxu0 0.0
    %1249 = vmatpush1.msra.mxu0 0.0
    %1250 = vmatprep.subr.mxu0 0.0
    %1251 = vmatpush1.msra.mxu0 0.0
    %1252 = vmatprep.subr.mxu0 0.0
    %1253 = vmatpush1.msra.mxu0 0.0
    %1254 = vmatprep.subr.mxu0 0.0
    %1255 = vmatpush1.msra.mxu0 0.0
    %1256 = vmatprep.subr.mxu0 0.0
    %1257 = vmatpush1.msra.mxu0 0.0
    %1258 = vmatprep.subr.mxu0 0.0
    %1259 = vmatpush1.msra.mxu0 0.0
    %1260 = vmatprep.subr.mxu0 0.0
    %1261 = vmatpush1.msra.mxu0 0.0
    %1262 = vmatprep.subr.mxu0 0.0
    %1263 = vmatpush1.msra.mxu0 0.0
    %1264 = vmatprep.subr.mxu0 0.0
    %1265 = vmatpush1.msra.mxu0 0.0
    %1266 = vmatprep.mubr.f32.mxu0 0.0
    %1267 = vmatmul.mubr.f32.gmra.mrb[0].mxu0 %v1119
    %v1268 = vpop.f32.mrb[0].mxu0
    %v1269 = vadd.f32 0.0, %v1268
    %v1270 = vpop.f32.mrb[0].mxu0
    %v1271 = vadd.f32 0.0, %v1270
    %1272 = vdwg.mxu0
    %1273 = vmatprep.subr.mxu0 0.0
    %1274 = vmatpush1.msra.mxu0 %v1129
    %1275 = vmatprep.subr.mxu0 0.0
    %1276 = vmatpush1.msra.mxu0 0.0
    %1277 = vmatprep.subr.mxu0 0.0
    %1278 = vmatpush1.msra.mxu0 0.0
    %1279 = vmatprep.subr.mxu0 0.0
    %1280 = vmatpush1.msra.mxu0 0.0
    %1281 = vmatprep.subr.mxu0 0.0
    %1282 = vmatpush1.msra.mxu0 0.0
    %1283 = vmatprep.subr.mxu0 0.0
    %1284 = vmatpush1.msra.mxu0 0.0
    %1285 = vmatprep.subr.mxu0 0.0
    %1286 = vmatpush1.msra.mxu0 0.0
    %1287 = vmatprep.subr.mxu0 0.0
    %1288 = vmatpush1.msra.mxu0 0.0
    %1289 = vmatprep.subr.mxu0 0.0
    %1290 = vmatpush1.msra.mxu0 0.0
    %1291 = vmatprep.subr.mxu0 0.0
    %1292 = vmatpush1.msra.mxu0 0.0
    %1293 = vmatprep.subr.mxu0 0.0
    %1294 = vmatpush1.msra.mxu0 0.0
    %1295 = vmatprep.subr.mxu0 0.0
    %1296 = vmatpush1.msra.mxu0 0.0
    %1297 = vmatprep.subr.mxu0 0.0
    %1298 = vmatpush1.msra.mxu0 0.0
    %1299 = vmatprep.subr.mxu0 0.0
    %1300 = vmatpush1.msra.mxu0 0.0
    %1301 = vmatprep.subr.mxu0 0.0
    %1302 = vmatpush1.msra.mxu0 0.0
    %1303 = vmatprep.subr.mxu0 0.0
    %1304 = vmatpush1.msra.mxu0 0.0
    %1305 = vmatprep.subr.mxu0 0.0
    %1306 = vmatpush1.msra.mxu0 0.0
    %1307 = vmatprep.subr.mxu0 0.0
    %1308 = vmatpush1.msra.mxu0 0.0
    %1309 = vmatprep.subr.mxu0 0.0
    %1310 = vmatpush1.msra.mxu0 0.0
    %1311 = vmatprep.subr.mxu0 0.0
    %1312 = vmatpush1.msra.mxu0 0.0
    %1313 = vmatprep.subr.mxu0 0.0
    %1314 = vmatpush1.msra.mxu0 0.0
    %1315 = vmatprep.subr.mxu0 0.0
    %1316 = vmatpush1.msra.mxu0 0.0
    %1317 = vmatprep.subr.mxu0 0.0
    %1318 = vmatpush1.msra.mxu0 0.0
    %1319 = vmatprep.subr.mxu0 0.0
    %1320 = vmatpush1.msra.mxu0 0.0
    %1321 = vmatprep.subr.mxu0 0.0
    %1322 = vmatpush1.msra.mxu0 0.0
    %1323 = vmatprep.subr.mxu0 0.0
    %1324 = vmatpush1.msra.mxu0 0.0
    %1325 = vmatprep.subr.mxu0 0.0
    %1326 = vmatpush1.msra.mxu0 0.0
    %1327 = vmatprep.subr.mxu0 0.0
    %1328 = vmatpush1.msra.mxu0 0.0
    %1329 = vmatprep.subr.mxu0 0.0
    %1330 = vmatpush1.msra.mxu0 0.0
    %1331 = vmatprep.subr.mxu0 0.0
    %1332 = vmatpush1.msra.mxu0 0.0
    %1333 = vmatprep.subr.mxu0 0.0
    %1334 = vmatpush1.msra.mxu0 0.0
    %1335 = vmatprep.subr.mxu0 0.0
    %1336 = vmatpush1.msra.mxu0 0.0
    %1337 = vmatprep.mubr.f32.mxu0 0.0
    %1338 = vmatmul.mubr.f32.gmra.mrb[0].mxu0 %v1119
    %v1339 = vpop.f32.mrb[0].mxu0
    %v1340 = vadd.f32 0.0, %v1339
    %v1341 = vpop.f32.mrb[0].mxu0
    %1342 = vdwg.mxu0
    %v1343 = vadd.f32 %v1089, %v1198
    %v1344 = vadd.f32 %v1090, %v1200
    %v1345 = vadd.f32 %v1091, %v1269
    %v1346 = vadd.f32 %v1092, %v1271
    %v1347 = vadd.f32 %v1093, %v1340
    %v1348 = vld [vmem:[%s1 + $0x28] sm:$0xff]
    %v1349 = vld [vmem:[%s0] sm:$0xff]
    %v1350 = vld [vmem:[%s0 + $0x8] sm:$0xff]
    %v1351 = vld [vmem:[%s0 + $0x10] sm:$0xf]
    %v1355 = vcombine.high %v1349, %v1349
    %v1356 = vcombine.high %v1350, %v1350
    %1357 = vrot.lane.b32.xlu0 %v1349, 110
    %v1358 = vpop.permute.xlu0 %1357
    %1359 = vrot.lane.b32.xlu0 %v1355, 110
    %v1360 = vpop.permute.xlu0 %1359
    %1361 = vrot.lane.b32.xlu0 %v1350, 110
    %v1362 = vpop.permute.xlu0 %1361
    %1363 = vrot.lane.b32.xlu0 %v1356, 110
    %v1364 = vpop.permute.xlu0 %1363
    %1365 = vrot.lane.b32.xlu0 %v1351, 110
    %v1366 = vpop.permute.xlu0 %1365
    %vm1367 = vcmask 900096
    %v1368 = vsel %vm1367, %v1358, %v1360
    %v1369 = vsel %vm1367, %v1360, %v1362
    %v1370 = vsel %vm1367, %v1362, %v1364
    %v1371 = vsel %vm1367, %v1364, %v1366
    %v1373 = vsel %vm134, %v1348, 0
    %v1375 = vsel %vm138, %v1368, 0
    %v1377 = vsel %vm138, %v1369, 0
    %v1379 = vsel %vm138, %v1370, 0
    %v1381 = vsel %vm138, %v1371, 0
    %v1383 = vsel %vm138, %v1366, 0
    %1385 = vmatprep.subr.mxu0 %v1377
    %1386 = vmatpush1.msra.mxu0 %v1375
    %1387 = vmatprep.subr.mxu0 0.0
    %1388 = vmatpush1.msra.mxu0 0.0
    %1389 = vmatprep.subr.mxu0 0.0
    %1390 = vmatpush1.msra.mxu0 0.0
    %1391 = vmatprep.subr.mxu0 0.0
    %1392 = vmatpush1.msra.mxu0 0.0
    %1393 = vmatprep.subr.mxu0 0.0
    %1394 = vmatpush1.msra.mxu0 0.0
    %1395 = vmatprep.subr.mxu0 0.0
    %1396 = vmatpush1.msra.mxu0 0.0
    %1397 = vmatprep.subr.mxu0 0.0
    %1398 = vmatpush1.msra.mxu0 0.0
    %1399 = vmatprep.subr.mxu0 0.0
    %1400 = vmatpush1.msra.mxu0 0.0
    %1401 = vmatprep.subr.mxu0 0.0
    %1402 = vmatpush1.msra.mxu0 0.0
    %1403 = vmatprep.subr.mxu0 0.0
    %1404 = vmatpush1.msra.mxu0 0.0
    %1405 = vmatprep.subr.mxu0 0.0
    %1406 = vmatpush1.msra.mxu0 0.0
    %1407 = vmatprep.subr.mxu0 0.0
    %1408 = vmatpush1.msra.mxu0 0.0
    %1409 = vmatprep.subr.mxu0 0.0
    %1410 = vmatpush1.msra.mxu0 0.0
    %1411 = vmatprep.subr.mxu0 0.0
    %1412 = vmatpush1.msra.mxu0 0.0
    %1413 = vmatprep.subr.mxu0 0.0
    %1414 = vmatpush1.msra.mxu0 0.0
    %1415 = vmatprep.subr.mxu0 0.0
    %1416 = vmatpush1.msra.mxu0 0.0
    %1417 = vmatprep.subr.mxu0 0.0
    %1418 = vmatpush1.msra.mxu0 0.0
    %1419 = vmatprep.subr.mxu0 0.0
    %1420 = vmatpush1.msra.mxu0 0.0
    %1421 = vmatprep.subr.mxu0 0.0
    %1422 = vmatpush1.msra.mxu0 0.0
    %1423 = vmatprep.subr.mxu0 0.0
    %1424 = vmatpush1.msra.mxu0 0.0
    %1425 = vmatprep.subr.mxu0 0.0
    %1426 = vmatpush1.msra.mxu0 0.0
    %1427 = vmatprep.subr.mxu0 0.0
    %1428 = vmatpush1.msra.mxu0 0.0
    %1429 = vmatprep.subr.mxu0 0.0
    %1430 = vmatpush1.msra.mxu0 0.0
    %1431 = vmatprep.subr.mxu0 0.0
    %1432 = vmatpush1.msra.mxu0 0.0
    %1433 = vmatprep.subr.mxu0 0.0
    %1434 = vmatpush1.msra.mxu0 0.0
    %1435 = vmatprep.subr.mxu0 0.0
    %1436 = vmatpush1.msra.mxu0 0.0
    %1437 = vmatprep.subr.mxu0 0.0
    %1438 = vmatpush1.msra.mxu0 0.0
    %1439 = vmatprep.subr.mxu0 0.0
    %1440 = vmatpush1.msra.mxu0 0.0
    %1441 = vmatprep.subr.mxu0 0.0
    %1442 = vmatpush1.msra.mxu0 0.0
    %1443 = vmatprep.subr.mxu0 0.0
    %1444 = vmatpush1.msra.mxu0 0.0
    %1445 = vmatprep.subr.mxu0 0.0
    %1446 = vmatpush1.msra.mxu0 0.0
    %1447 = vmatprep.subr.mxu0 0.0
    %1448 = vmatpush1.msra.mxu0 0.0
    %1449 = vmatprep.mubr.f32.mxu0 0.0
    %1450 = vmatmul.mubr.f32.gmra.mrb[0].mxu0 %v1373
    %v1451 = vpop.f32.mrb[0].mxu0
    %v1452 = vadd.f32 0.0, %v1451
    %v1453 = vpop.f32.mrb[0].mxu0
    %v1454 = vadd.f32 0.0, %v1453
    %1455 = vdwg.mxu0
    %1456 = vmatprep.subr.mxu0 %v1381
    %1457 = vmatpush1.msra.mxu0 %v1379
    %1458 = vmatprep.subr.mxu0 0.0
    %1459 = vmatpush1.msra.mxu0 0.0
    %1460 = vmatprep.subr.mxu0 0.0
    %1461 = vmatpush1.msra.mxu0 0.0
    %1462 = vmatprep.subr.mxu0 0.0
    %1463 = vmatpush1.msra.mxu0 0.0
    %1464 = vmatprep.subr.mxu0 0.0
    %1465 = vmatpush1.msra.mxu0 0.0
    %1466 = vmatprep.subr.mxu0 0.0
    %1467 = vmatpush1.msra.mxu0 0.0
    %1468 = vmatprep.subr.mxu0 0.0
    %1469 = vmatpush1.msra.mxu0 0.0
    %1470 = vmatprep.subr.mxu0 0.0
    %1471 = vmatpush1.msra.mxu0 0.0
    %1472 = vmatprep.subr.mxu0 0.0
    %1473 = vmatpush1.msra.mxu0 0.0
    %1474 = vmatprep.subr.mxu0 0.0
    %1475 = vmatpush1.msra.mxu0 0.0
    %1476 = vmatprep.subr.mxu0 0.0
    %1477 = vmatpush1.msra.mxu0 0.0
    %1478 = vmatprep.subr.mxu0 0.0
    %1479 = vmatpush1.msra.mxu0 0.0
    %1480 = vmatprep.subr.mxu0 0.0
    %1481 = vmatpush1.msra.mxu0 0.0
    %1482 = vmatprep.subr.mxu0 0.0
    %1483 = vmatpush1.msra.mxu0 0.0
    %1484 = vmatprep.subr.mxu0 0.0
    %1485 = vmatpush1.msra.mxu0 0.0
    %1486 = vmatprep.subr.mxu0 0.0
    %1487 = vmatpush1.msra.mxu0 0.0
    %1488 = vmatprep.subr.mxu0 0.0
    %1489 = vmatpush1.msra.mxu0 0.0
    %1490 = vmatprep.subr.mxu0 0.0
    %1491 = vmatpush1.msra.mxu0 0.0
    %1492 = vmatprep.subr.mxu0 0.0
    %1493 = vmatpush1.msra.mxu0 0.0
    %1494 = vmatprep.subr.mxu0 0.0
    %1495 = vmatpush1.msra.mxu0 0.0
    %1496 = vmatprep.subr.mxu0 0.0
    %1497 = vmatpush1.msra.mxu0 0.0
    %1498 = vmatprep.subr.mxu0 0.0
    %1499 = vmatpush1.msra.mxu0 0.0
    %1500 = vmatprep.subr.mxu0 0.0
    %1501 = vmatpush1.msra.mxu0 0.0
    %1502 = vmatprep.subr.mxu0 0.0
    %1503 = vmatpush1.msra.mxu0 0.0
    %1504 = vmatprep.subr.mxu0 0.0
    %1505 = vmatpush1.msra.mxu0 0.0
    %1506 = vmatprep.subr.mxu0 0.0
    %1507 = vmatpush1.msra.mxu0 0.0
    %1508 = vmatprep.subr.mxu0 0.0
    %1509 = vmatpush1.msra.mxu0 0.0
    %1510 = vmatprep.subr.mxu0 0.0
    %1511 = vmatpush1.msra.mxu0 0.0
    %1512 = vmatprep.subr.mxu0 0.0
    %1513 = vmatpush1.msra.mxu0 0.0
    %1514 = vmatprep.subr.mxu0 0.0
    %1515 = vmatpush1.msra.mxu0 0.0
    %1516 = vmatprep.subr.mxu0 0.0
    %1517 = vmatpush1.msra.mxu0 0.0
    %1518 = vmatprep.subr.mxu0 0.0
    %1519 = vmatpush1.msra.mxu0 0.0
    %1520 = vmatprep.mubr.f32.mxu0 0.0
    %1521 = vmatmul.mubr.f32.gmra.mrb[0].mxu0 %v1373
    %v1522 = vpop.f32.mrb[0].mxu0
    %v1523 = vadd.f32 0.0, %v1522
    %v1524 = vpop.f32.mrb[0].mxu0
    %v1525 = vadd.f32 0.0, %v1524
    %1526 = vdwg.mxu0
    %1527 = vmatprep.subr.mxu0 0.0
    %1528 = vmatpush1.msra.mxu0 %v1383
    %1529 = vmatprep.subr.mxu0 0.0
    %1530 = vmatpush1.msra.mxu0 0.0
    %1531 = vmatprep.subr.mxu0 0.0
    %1532 = vmatpush1.msra.mxu0 0.0
    %1533 = vmatprep.subr.mxu0 0.0
    %1534 = vmatpush1.msra.mxu0 0.0
    %1535 = vmatprep.subr.mxu0 0.0
    %1536 = vmatpush1.msra.mxu0 0.0
    %1537 = vmatprep.subr.mxu0 0.0
    %1538 = vmatpush1.msra.mxu0 0.0
    %1539 = vmatprep.subr.mxu0 0.0
    %1540 = vmatpush1.msra.mxu0 0.0
    %1541 = vmatprep.subr.mxu0 0.0
    %1542 = vmatpush1.msra.mxu0 0.0
    %1543 = vmatprep.subr.mxu0 0.0
    %1544 = vmatpush1.msra.mxu0 0.0
    %1545 = vmatprep.subr.mxu0 0.0
    %1546 = vmatpush1.msra.mxu0 0.0
    %1547 = vmatprep.subr.mxu0 0.0
    %1548 = vmatpush1.msra.mxu0 0.0
    %1549 = vmatprep.subr.mxu0 0.0
    %1550 = vmatpush1.msra.mxu0 0.0
    %1551 = vmatprep.subr.mxu0 0.0
    %1552 = vmatpush1.msra.mxu0 0.0
    %1553 = vmatprep.subr.mxu0 0.0
    %1554 = vmatpush1.msra.mxu0 0.0
    %1555 = vmatprep.subr.mxu0 0.0
    %1556 = vmatpush1.msra.mxu0 0.0
    %1557 = vmatprep.subr.mxu0 0.0
    %1558 = vmatpush1.msra.mxu0 0.0
    %1559 = vmatprep.subr.mxu0 0.0
    %1560 = vmatpush1.msra.mxu0 0.0
    %1561 = vmatprep.subr.mxu0 0.0
    %1562 = vmatpush1.msra.mxu0 0.0
    %1563 = vmatprep.subr.mxu0 0.0
    %1564 = vmatpush1.msra.mxu0 0.0
    %1565 = vmatprep.subr.mxu0 0.0
    %1566 = vmatpush1.msra.mxu0 0.0
    %1567 = vmatprep.subr.mxu0 0.0
    %1568 = vmatpush1.msra.mxu0 0.0
    %1569 = vmatprep.subr.mxu0 0.0
    %1570 = vmatpush1.msra.mxu0 0.0
    %1571 = vmatprep.subr.mxu0 0.0
    %1572 = vmatpush1.msra.mxu0 0.0
    %1573 = vmatprep.subr.mxu0 0.0
    %1574 = vmatpush1.msra.mxu0 0.0
    %1575 = vmatprep.subr.mxu0 0.0
    %1576 = vmatpush1.msra.mxu0 0.0
    %1577 = vmatprep.subr.mxu0 0.0
    %1578 = vmatpush1.msra.mxu0 0.0
    %1579 = vmatprep.subr.mxu0 0.0
    %1580 = vmatpush1.msra.mxu0 0.0
    %1581 = vmatprep.subr.mxu0 0.0
    %1582 = vmatpush1.msra.mxu0 0.0
    %1583 = vmatprep.subr.mxu0 0.0
    %1584 = vmatpush1.msra.mxu0 0.0
    %1585 = vmatprep.subr.mxu0 0.0
    %1586 = vmatpush1.msra.mxu0 0.0
    %1587 = vmatprep.subr.mxu0 0.0
    %1588 = vmatpush1.msra.mxu0 0.0
    %1589 = vmatprep.subr.mxu0 0.0
    %1590 = vmatpush1.msra.mxu0 0.0
    %1591 = vmatprep.mubr.f32.mxu0 0.0
    %1592 = vmatmul.mubr.f32.gmra.mrb[0].mxu0 %v1373
    %v1593 = vpop.f32.mrb[0].mxu0
    %v1594 = vadd.f32 0.0, %v1593
    %v1595 = vpop.f32.mrb[0].mxu0
    %1596 = vdwg.mxu0
    %v1597 = vadd.f32 %v1343, %v1452
    %v1598 = vadd.f32 %v1344, %v1454
    %v1599 = vadd.f32 %v1345, %v1523
    %v1600 = vadd.f32 %v1346, %v1525
    %v1601 = vadd.f32 %v1347, %v1594
    %v1602 = vld [vmem:[%s1 + $0x30] sm:$0xff]
    %v1603 = vld [vmem:[%s0] sm:$0xff]
    %v1604 = vld [vmem:[%s0 + $0x8] sm:$0xff]
    %v1605 = vld [vmem:[%s0 + $0x10] sm:$0xf]
    %v1609 = vcombine.high %v1603, %v1603
    %v1610 = vcombine.high %v1604, %v1604
    %1611 = vrot.lane.b32.xlu0 %v1603, 96
    %v1612 = vpop.permute.xlu0 %1611
    %1613 = vrot.lane.b32.xlu0 %v1609, 96
    %v1614 = vpop.permute.xlu0 %1613
    %1615 = vrot.lane.b32.xlu0 %v1604, 96
    %v1616 = vpop.permute.xlu0 %1615
    %1617 = vrot.lane.b32.xlu0 %v1610, 96
    %v1618 = vpop.permute.xlu0 %1617
    %1619 = vrot.lane.b32.xlu0 %v1605, 96
    %v1620 = vpop.permute.xlu0 %1619
    %vm1621 = vcmask 785408
    %v1622 = vsel %vm1621, %v1612, %v1614
    %v1623 = vsel %vm1621, %v1614, %v1616
    %v1624 = vsel %vm1621, %v1616, %v1618
    %v1625 = vsel %vm1621, %v1618, %v1620
    %v1627 = vsel %vm134, %v1602, 0
    %v1629 = vsel %vm138, %v1622, 0
    %v1631 = vsel %vm138, %v1623, 0
    %v1633 = vsel %vm138, %v1624, 0
    %v1635 = vsel %vm138, %v1625, 0
    %v1637 = vsel %vm138, %v1620, 0
    %1639 = vmatprep.subr.mxu0 %v1631
    %1640 = vmatpush1.msra.mxu0 %v1629
    %1641 = vmatprep.subr.mxu0 0.0
    %1642 = vmatpush1.msra.mxu0 0.0
    %1643 = vmatprep.subr.mxu0 0.0
    %1644 = vmatpush1.msra.mxu0 0.0
    %1645 = vmatprep.subr.mxu0 0.0
    %1646 = vmatpush1.msra.mxu0 0.0
    %1647 = vmatprep.subr.mxu0 0.0
    %1648 = vmatpush1.msra.mxu0 0.0
    %1649 = vmatprep.subr.mxu0 0.0
    %1650 = vmatpush1.msra.mxu0 0.0
    %1651 = vmatprep.subr.mxu0 0.0
    %1652 = vmatpush1.msra.mxu0 0.0
    %1653 = vmatprep.subr.mxu0 0.0
    %1654 = vmatpush1.msra.mxu0 0.0
    %1655 = vmatprep.subr.mxu0 0.0
    %1656 = vmatpush1.msra.mxu0 0.0
    %1657 = vmatprep.subr.mxu0 0.0
    %1658 = vmatpush1.msra.mxu0 0.0
    %1659 = vmatprep.subr.mxu0 0.0
    %1660 = vmatpush1.msra.mxu0 0.0
    %1661 = vmatprep.subr.mxu0 0.0
    %1662 = vmatpush1.msra.mxu0 0.0
    %1663 = vmatprep.subr.mxu0 0.0
    %1664 = vmatpush1.msra.mxu0 0.0
    %1665 = vmatprep.subr.mxu0 0.0
    %1666 = vmatpush1.msra.mxu0 0.0
    %1667 = vmatprep.subr.mxu0 0.0
    %1668 = vmatpush1.msra.mxu0 0.0
    %1669 = vmatprep.subr.mxu0 0.0
    %1670 = vmatpush1.msra.mxu0 0.0
    %1671 = vmatprep.subr.mxu0 0.0
    %1672 = vmatpush1.msra.mxu0 0.0
    %1673 = vmatprep.subr.mxu0 0.0
    %1674 = vmatpush1.msra.mxu0 0.0
    %1675 = vmatprep.subr.mxu0 0.0
    %1676 = vmatpush1.msra.mxu0 0.0
    %1677 = vmatprep.subr.mxu0 0.0
    %1678 = vmatpush1.msra.mxu0 0.0
    %1679 = vmatprep.subr.mxu0 0.0
    %1680 = vmatpush1.msra.mxu0 0.0
    %1681 = vmatprep.subr.mxu0 0.0
    %1682 = vmatpush1.msra.mxu0 0.0
    %1683 = vmatprep.subr.mxu0 0.0
    %1684 = vmatpush1.msra.mxu0 0.0
    %1685 = vmatprep.subr.mxu0 0.0
    %1686 = vmatpush1.msra.mxu0 0.0
    %1687 = vmatprep.subr.mxu0 0.0
    %1688 = vmatpush1.msra.mxu0 0.0
    %1689 = vmatprep.subr.mxu0 0.0
    %1690 = vmatpush1.msra.mxu0 0.0
    %1691 = vmatprep.subr.mxu0 0.0
    %1692 = vmatpush1.msra.mxu0 0.0
    %1693 = vmatprep.subr.mxu0 0.0
    %1694 = vmatpush1.msra.mxu0 0.0
    %1695 = vmatprep.subr.mxu0 0.0
    %1696 = vmatpush1.msra.mxu0 0.0
    %1697 = vmatprep.subr.mxu0 0.0
    %1698 = vmatpush1.msra.mxu0 0.0
    %1699 = vmatprep.subr.mxu0 0.0
    %1700 = vmatpush1.msra.mxu0 0.0
    %1701 = vmatprep.subr.mxu0 0.0
    %1702 = vmatpush1.msra.mxu0 0.0
    %1703 = vmatprep.mubr.f32.mxu0 0.0
    %1704 = vmatmul.mubr.f32.gmra.mrb[0].mxu0 %v1627
    %v1705 = vpop.f32.mrb[0].mxu0
    %v1706 = vadd.f32 0.0, %v1705
    %v1707 = vpop.f32.mrb[0].mxu0
    %v1708 = vadd.f32 0.0, %v1707
    %1709 = vdwg.mxu0
    %1710 = vmatprep.subr.mxu0 %v1635
    %1711 = vmatpush1.msra.mxu0 %v1633
    %1712 = vmatprep.subr.mxu0 0.0
    %1713 = vmatpush1.msra.mxu0 0.0
    %1714 = vmatprep.subr.mxu0 0.0
    %1715 = vmatpush1.msra.mxu0 0.0
    %1716 = vmatprep.subr.mxu0 0.0
    %1717 = vmatpush1.msra.mxu0 0.0
    %1718 = vmatprep.subr.mxu0 0.0
    %1719 = vmatpush1.msra.mxu0 0.0
    %1720 = vmatprep.subr.mxu0 0.0
    %1721 = vmatpush1.msra.mxu0 0.0
    %1722 = vmatprep.subr.mxu0 0.0
    %1723 = vmatpush1.msra.mxu0 0.0
    %1724 = vmatprep.subr.mxu0 0.0
    %1725 = vmatpush1.msra.mxu0 0.0
    %1726 = vmatprep.subr.mxu0 0.0
    %1727 = vmatpush1.msra.mxu0 0.0
    %1728 = vmatprep.subr.mxu0 0.0
    %1729 = vmatpush1.msra.mxu0 0.0
    %1730 = vmatprep.subr.mxu0 0.0
    %1731 = vmatpush1.msra.mxu0 0.0
    %1732 = vmatprep.subr.mxu0 0.0
    %1733 = vmatpush1.msra.mxu0 0.0
    %1734 = vmatprep.subr.mxu0 0.0
    %1735 = vmatpush1.msra.mxu0 0.0
    %1736 = vmatprep.subr.mxu0 0.0
    %1737 = vmatpush1.msra.mxu0 0.0
    %1738 = vmatprep.subr.mxu0 0.0
    %1739 = vmatpush1.msra.mxu0 0.0
    %1740 = vmatprep.subr.mxu0 0.0
    %1741 = vmatpush1.msra.mxu0 0.0
    %1742 = vmatprep.subr.mxu0 0.0
    %1743 = vmatpush1.msra.mxu0 0.0
    %1744 = vmatprep.subr.mxu0 0.0
    %1745 = vmatpush1.msra.mxu0 0.0
    %1746 = vmatprep.subr.mxu0 0.0
    %1747 = vmatpush1.msra.mxu0 0.0
    %1748 = vmatprep.subr.mxu0 0.0
    %1749 = vmatpush1.msra.mxu0 0.0
    %1750 = vmatprep.subr.mxu0 0.0
    %1751 = vmatpush1.msra.mxu0 0.0
    %1752 = vmatprep.subr.mxu0 0.0
    %1753 = vmatpush1.msra.mxu0 0.0
    %1754 = vmatprep.subr.mxu0 0.0
    %1755 = vmatpush1.msra.mxu0 0.0
    %1756 = vmatprep.subr.mxu0 0.0
    %1757 = vmatpush1.msra.mxu0 0.0
    %1758 = vmatprep.subr.mxu0 0.0
    %1759 = vmatpush1.msra.mxu0 0.0
    %1760 = vmatprep.subr.mxu0 0.0
    %1761 = vmatpush1.msra.mxu0 0.0
    %1762 = vmatprep.subr.mxu0 0.0
    %1763 = vmatpush1.msra.mxu0 0.0
    %1764 = vmatprep.subr.mxu0 0.0
    %1765 = vmatpush1.msra.mxu0 0.0
    %1766 = vmatprep.subr.mxu0 0.0
    %1767 = vmatpush1.msra.mxu0 0.0
    %1768 = vmatprep.subr.mxu0 0.0
    %1769 = vmatpush1.msra.mxu0 0.0
    %1770 = vmatprep.subr.mxu0 0.0
    %1771 = vmatpush1.msra.mxu0 0.0
    %1772 = vmatprep.subr.mxu0 0.0
    %1773 = vmatpush1.msra.mxu0 0.0
    %1774 = vmatprep.mubr.f32.mxu0 0.0
    %1775 = vmatmul.mubr.f32.gmra.mrb[0].mxu0 %v1627
    %v1776 = vpop.f32.mrb[0].mxu0
    %v1777 = vadd.f32 0.0, %v1776
    %v1778 = vpop.f32.mrb[0].mxu0
    %v1779 = vadd.f32 0.0, %v1778
    %1780 = vdwg.mxu0
    %1781 = vmatprep.subr.mxu0 0.0
    %1782 = vmatpush1.msra.mxu0 %v1637
    %1783 = vmatprep.subr.mxu0 0.0
    %1784 = vmatpush1.msra.mxu0 0.0
    %1785 = vmatprep.subr.mxu0 0.0
    %1786 = vmatpush1.msra.mxu0 0.0
    %1787 = vmatprep.subr.mxu0 0.0
    %1788 = vmatpush1.msra.mxu0 0.0
    %1789 = vmatprep.subr.mxu0 0.0
    %1790 = vmatpush1.msra.mxu0 0.0
    %1791 = vmatprep.subr.mxu0 0.0
    %1792 = vmatpush1.msra.mxu0 0.0
    %1793 = vmatprep.subr.mxu0 0.0
    %1794 = vmatpush1.msra.mxu0 0.0
    %1795 = vmatprep.subr.mxu0 0.0
    %1796 = vmatpush1.msra.mxu0 0.0
    %1797 = vmatprep.subr.mxu0 0.0
    %1798 = vmatpush1.msra.mxu0 0.0
    %1799 = vmatprep.subr.mxu0 0.0
    %1800 = vmatpush1.msra.mxu0 0.0
    %1801 = vmatprep.subr.mxu0 0.0
    %1802 = vmatpush1.msra.mxu0 0.0
    %1803 = vmatprep.subr.mxu0 0.0
    %1804 = vmatpush1.msra.mxu0 0.0
    %1805 = vmatprep.subr.mxu0 0.0
    %1806 = vmatpush1.msra.mxu0 0.0
    %1807 = vmatprep.subr.mxu0 0.0
    %1808 = vmatpush1.msra.mxu0 0.0
    %1809 = vmatprep.subr.mxu0 0.0
    %1810 = vmatpush1.msra.mxu0 0.0
    %1811 = vmatprep.subr.mxu0 0.0
    %1812 = vmatpush1.msra.mxu0 0.0
    %1813 = vmatprep.subr.mxu0 0.0
    %1814 = vmatpush1.msra.mxu0 0.0
    %1815 = vmatprep.subr.mxu0 0.0
    %1816 = vmatpush1.msra.mxu0 0.0
    %1817 = vmatprep.subr.mxu0 0.0
    %1818 = vmatpush1.msra.mxu0 0.0
    %1819 = vmatprep.subr.mxu0 0.0
    %1820 = vmatpush1.msra.mxu0 0.0
    %1821 = vmatprep.subr.mxu0 0.0
    %1822 = vmatpush1.msra.mxu0 0.0
    %1823 = vmatprep.subr.mxu0 0.0
    %1824 = vmatpush1.msra.mxu0 0.0
    %1825 = vmatprep.subr.mxu0 0.0
    %1826 = vmatpush1.msra.mxu0 0.0
    %1827 = vmatprep.subr.mxu0 0.0
    %1828 = vmatpush1.msra.mxu0 0.0
    %1829 = vmatprep.subr.mxu0 0.0
    %1830 = vmatpush1.msra.mxu0 0.0
    %1831 = vmatprep.subr.mxu0 0.0
    %1832 = vmatpush1.msra.mxu0 0.0
    %1833 = vmatprep.subr.mxu0 0.0
    %1834 = vmatpush1.msra.mxu0 0.0
    %1835 = vmatprep.subr.mxu0 0.0
    %1836 = vmatpush1.msra.mxu0 0.0
    %1837 = vmatprep.subr.mxu0 0.0
    %1838 = vmatpush1.msra.mxu0 0.0
    %1839 = vmatprep.subr.mxu0 0.0
    %1840 = vmatpush1.msra.mxu0 0.0
    %1841 = vmatprep.subr.mxu0 0.0
    %1842 = vmatpush1.msra.mxu0 0.0
    %1843 = vmatprep.subr.mxu0 0.0
    %1844 = vmatpush1.msra.mxu0 0.0
    %1845 = vmatprep.mubr.f32.mxu0 0.0
    %1846 = vmatmul.mubr.f32.gmra.mrb[0].mxu0 %v1627
    %v1847 = vpop.f32.mrb[0].mxu0
    %v1848 = vadd.f32 0.0, %v1847
    %v1849 = vpop.f32.mrb[0].mxu0
    %1850 = vdwg.mxu0
    %v1851 = vadd.f32 %v1597, %v1706
    %v1852 = vadd.f32 %v1598, %v1708
    %v1853 = vadd.f32 %v1599, %v1777
    %v1854 = vadd.f32 %v1600, %v1779
    %v1855 = vadd.f32 %v1601, %v1848
    %v1856 = vld [vmem:[%s1 + $0x38] sm:$0xff]
    %v1857 = vld [vmem:[%s0] sm:$0xff]
    %v1858 = vld [vmem:[%s0 + $0x8] sm:$0xff]
    %v1859 = vld [vmem:[%s0 + $0x10] sm:$0xf]
    %v1863 = vcombine.high %v1857, %v1857
    %v1864 = vcombine.high %v1858, %v1858
    %1865 = vrot.lane.b32.xlu0 %v1857, 95
    %v1866 = vpop.permute.xlu0 %1865
    %1867 = vrot.lane.b32.xlu0 %v1863, 95
    %v1868 = vpop.permute.xlu0 %1867
    %1869 = vrot.lane.b32.xlu0 %v1858, 95
    %v1870 = vpop.permute.xlu0 %1869
    %1871 = vrot.lane.b32.xlu0 %v1864, 95
    %v1872 = vpop.permute.xlu0 %1871
    %1873 = vrot.lane.b32.xlu0 %v1859, 95
    %v1874 = vpop.permute.xlu0 %1873
    %vm1875 = vcmask 777216
    %v1876 = vsel %vm1875, %v1866, %v1868
    %v1877 = vsel %vm1875, %v1868, %v1870
    %v1878 = vsel %vm1875, %v1870, %v1872
    %v1879 = vsel %vm1875, %v1872, %v1874
    %v1881 = vsel %vm134, %v1856, 0
    %v1883 = vsel %vm138, %v1876, 0
    %v1885 = vsel %vm138, %v1877, 0
    %v1887 = vsel %vm138, %v1878, 0
    %v1889 = vsel %vm138, %v1879, 0
    %v1891 = vsel %vm138, %v1874, 0
    %1893 = vmatprep.subr.mxu0 %v1885
    %1894 = vmatpush1.msra.mxu0 %v1883
    %1895 = vmatprep.subr.mxu0 0.0
    %1896 = vmatpush1.msra.mxu0 0.0
    %1897 = vmatprep.subr.mxu0 0.0
    %1898 = vmatpush1.msra.mxu0 0.0
    %1899 = vmatprep.subr.mxu0 0.0
    %1900 = vmatpush1.msra.mxu0 0.0
    %1901 = vmatprep.subr.mxu0 0.0
    %1902 = vmatpush1.msra.mxu0 0.0
    %1903 = vmatprep.subr.mxu0 0.0
    %1904 = vmatpush1.msra.mxu0 0.0
    %1905 = vmatprep.subr.mxu0 0.0
    %1906 = vmatpush1.msra.mxu0 0.0
    %1907 = vmatprep.subr.mxu0 0.0
    %1908 = vmatpush1.msra.mxu0 0.0
    %1909 = vmatprep.subr.mxu0 0.0
    %1910 = vmatpush1.msra.mxu0 0.0
    %1911 = vmatprep.subr.mxu0 0.0
    %1912 = vmatpush1.msra.mxu0 0.0
    %1913 = vmatprep.subr.mxu0 0.0
    %1914 = vmatpush1.msra.mxu0 0.0
    %1915 = vmatprep.subr.mxu0 0.0
    %1916 = vmatpush1.msra.mxu0 0.0
    %1917 = vmatprep.subr.mxu0 0.0
    %1918 = vmatpush1.msra.mxu0 0.0
    %1919 = vmatprep.subr.mxu0 0.0
    %1920 = vmatpush1.msra.mxu0 0.0
    %1921 = vmatprep.subr.mxu0 0.0
    %1922 = vmatpush1.msra.mxu0 0.0
    %1923 = vmatprep.subr.mxu0 0.0
    %1924 = vmatpush1.msra.mxu0 0.0
    %1925 = vmatprep.subr.mxu0 0.0
    %1926 = vmatpush1.msra.mxu0 0.0
    %1927 = vmatprep.subr.mxu0 0.0
    %1928 = vmatpush1.msra.mxu0 0.0
    %1929 = vmatprep.subr.mxu0 0.0
    %1930 = vmatpush1.msra.mxu0 0.0
    %1931 = vmatprep.subr.mxu0 0.0
    %1932 = vmatpush1.msra.mxu0 0.0
    %1933 = vmatprep.subr.mxu0 0.0
    %1934 = vmatpush1.msra.mxu0 0.0
    %1935 = vmatprep.subr.mxu0 0.0
    %1936 = vmatpush1.msra.mxu0 0.0
    %1937 = vmatprep.subr.mxu0 0.0
    %1938 = vmatpush1.msra.mxu0 0.0
    %1939 = vmatprep.subr.mxu0 0.0
    %1940 = vmatpush1.msra.mxu0 0.0
    %1941 = vmatprep.subr.mxu0 0.0
    %1942 = vmatpush1.msra.mxu0 0.0
    %1943 = vmatprep.subr.mxu0 0.0
    %1944 = vmatpush1.msra.mxu0 0.0
    %1945 = vmatprep.subr.mxu0 0.0
    %1946 = vmatpush1.msra.mxu0 0.0
    %1947 = vmatprep.subr.mxu0 0.0
    %1948 = vmatpush1.msra.mxu0 0.0
    %1949 = vmatprep.subr.mxu0 0.0
    %1950 = vmatpush1.msra.mxu0 0.0
    %1951 = vmatprep.subr.mxu0 0.0
    %1952 = vmatpush1.msra.mxu0 0.0
    %1953 = vmatprep.subr.mxu0 0.0
    %1954 = vmatpush1.msra.mxu0 0.0
    %1955 = vmatprep.subr.mxu0 0.0
    %1956 = vmatpush1.msra.mxu0 0.0
    %1957 = vmatprep.mubr.f32.mxu0 0.0
    %1958 = vmatmul.mubr.f32.gmra.mrb[0].mxu0 %v1881
    %v1959 = vpop.f32.mrb[0].mxu0
    %v1960 = vadd.f32 0.0, %v1959
    %v1961 = vpop.f32.mrb[0].mxu0
    %v1962 = vadd.f32 0.0, %v1961
    %1963 = vdwg.mxu0
    %1964 = vmatprep.subr.mxu0 %v1889
    %1965 = vmatpush1.msra.mxu0 %v1887
    %1966 = vmatprep.subr.mxu0 0.0
    %1967 = vmatpush1.msra.mxu0 0.0
    %1968 = vmatprep.subr.mxu0 0.0
    %1969 = vmatpush1.msra.mxu0 0.0
    %1970 = vmatprep.subr.mxu0 0.0
    %1971 = vmatpush1.msra.mxu0 0.0
    %1972 = vmatprep.subr.mxu0 0.0
    %1973 = vmatpush1.msra.mxu0 0.0
    %1974 = vmatprep.subr.mxu0 0.0
    %1975 = vmatpush1.msra.mxu0 0.0
    %1976 = vmatprep.subr.mxu0 0.0
    %1977 = vmatpush1.msra.mxu0 0.0
    %1978 = vmatprep.subr.mxu0 0.0
    %1979 = vmatpush1.msra.mxu0 0.0
    %1980 = vmatprep.subr.mxu0 0.0
    %1981 = vmatpush1.msra.mxu0 0.0
    %1982 = vmatprep.subr.mxu0 0.0
    %1983 = vmatpush1.msra.mxu0 0.0
    %1984 = vmatprep.subr.mxu0 0.0
    %1985 = vmatpush1.msra.mxu0 0.0
    %1986 = vmatprep.subr.mxu0 0.0
    %1987 = vmatpush1.msra.mxu0 0.0
    %1988 = vmatprep.subr.mxu0 0.0
    %1989 = vmatpush1.msra.mxu0 0.0
    %1990 = vmatprep.subr.mxu0 0.0
    %1991 = vmatpush1.msra.mxu0 0.0
    %1992 = vmatprep.subr.mxu0 0.0
    %1993 = vmatpush1.msra.mxu0 0.0
    %1994 = vmatprep.subr.mxu0 0.0
    %1995 = vmatpush1.msra.mxu0 0.0
    %1996 = vmatprep.subr.mxu0 0.0
    %1997 = vmatpush1.msra.mxu0 0.0
    %1998 = vmatprep.subr.mxu0 0.0
    %1999 = vmatpush1.msra.mxu0 0.0
    %2000 = vmatprep.subr.mxu0 0.0
    %2001 = vmatpush1.msra.mxu0 0.0
    %2002 = vmatprep.subr.mxu0 0.0
    %2003 = vmatpush1.msra.mxu0 0.0
    %2004 = vmatprep.subr.mxu0 0.0
    %2005 = vmatpush1.msra.mxu0 0.0
    %2006 = vmatprep.subr.mxu0 0.0
    %2007 = vmatpush1.msra.mxu0 0.0
    %2008 = vmatprep.subr.mxu0 0.0
    %2009 = vmatpush1.msra.mxu0 0.0
    %2010 = vmatprep.subr.mxu0 0.0
    %2011 = vmatpush1.msra.mxu0 0.0
    %2012 = vmatprep.subr.mxu0 0.0
    %2013 = vmatpush1.msra.mxu0 0.0
    %2014 = vmatprep.subr.mxu0 0.0
    %2015 = vmatpush1.msra.mxu0 0.0
    %2016 = vmatprep.subr.mxu0 0.0
    %2017 = vmatpush1.msra.mxu0 0.0
    %2018 = vmatprep.subr.mxu0 0.0
    %2019 = vmatpush1.msra.mxu0 0.0
    %2020 = vmatprep.subr.mxu0 0.0
    %2021 = vmatpush1.msra.mxu0 0.0
    %2022 = vmatprep.subr.mxu0 0.0
    %2023 = vmatpush1.msra.mxu0 0.0
    %2024 = vmatprep.subr.mxu0 0.0
    %2025 = vmatpush1.msra.mxu0 0.0
    %2026 = vmatprep.subr.mxu0 0.0
    %2027 = vmatpush1.msra.mxu0 0.0
    %2028 = vmatprep.mubr.f32.mxu0 0.0
    %2029 = vmatmul.mubr.f32.gmra.mrb[0].mxu0 %v1881
    %v2030 = vpop.f32.mrb[0].mxu0
    %v2031 = vadd.f32 0.0, %v2030
    %v2032 = vpop.f32.mrb[0].mxu0
    %v2033 = vadd.f32 0.0, %v2032
    %2034 = vdwg.mxu0
    %2035 = vmatprep.subr.mxu0 0.0
    %2036 = vmatpush1.msra.mxu0 %v1891
    %2037 = vmatprep.subr.mxu0 0.0
    %2038 = vmatpush1.msra.mxu0 0.0
    %2039 = vmatprep.subr.mxu0 0.0
    %2040 = vmatpush1.msra.mxu0 0.0
    %2041 = vmatprep.subr.mxu0 0.0
    %2042 = vmatpush1.msra.mxu0 0.0
    %2043 = vmatprep.subr.mxu0 0.0
    %2044 = vmatpush1.msra.mxu0 0.0
    %2045 = vmatprep.subr.mxu0 0.0
    %2046 = vmatpush1.msra.mxu0 0.0
    %2047 = vmatprep.subr.mxu0 0.0
    %2048 = vmatpush1.msra.mxu0 0.0
    %2049 = vmatprep.subr.mxu0 0.0
    %2050 = vmatpush1.msra.mxu0 0.0
    %2051 = vmatprep.subr.mxu0 0.0
    %2052 = vmatpush1.msra.mxu0 0.0
    %2053 = vmatprep.subr.mxu0 0.0
    %2054 = vmatpush1.msra.mxu0 0.0
    %2055 = vmatprep.subr.mxu0 0.0
    %2056 = vmatpush1.msra.mxu0 0.0
    %2057 = vmatprep.subr.mxu0 0.0
    %2058 = vmatpush1.msra.mxu0 0.0
    %2059 = vmatprep.subr.mxu0 0.0
    %2060 = vmatpush1.msra.mxu0 0.0
    %2061 = vmatprep.subr.mxu0 0.0
    %2062 = vmatpush1.msra.mxu0 0.0
    %2063 = vmatprep.subr.mxu0 0.0
    %2064 = vmatpush1.msra.mxu0 0.0
    %2065 = vmatprep.subr.mxu0 0.0
    %2066 = vmatpush1.msra.mxu0 0.0
    %2067 = vmatprep.subr.mxu0 0.0
    %2068 = vmatpush1.msra.mxu0 0.0
    %2069 = vmatprep.subr.mxu0 0.0
    %2070 = vmatpush1.msra.mxu0 0.0
    %2071 = vmatprep.subr.mxu0 0.0
    %2072 = vmatpush1.msra.mxu0 0.0
    %2073 = vmatprep.subr.mxu0 0.0
    %2074 = vmatpush1.msra.mxu0 0.0
    %2075 = vmatprep.subr.mxu0 0.0
    %2076 = vmatpush1.msra.mxu0 0.0
    %2077 = vmatprep.subr.mxu0 0.0
    %2078 = vmatpush1.msra.mxu0 0.0
    %2079 = vmatprep.subr.mxu0 0.0
    %2080 = vmatpush1.msra.mxu0 0.0
    %2081 = vmatprep.subr.mxu0 0.0
    %2082 = vmatpush1.msra.mxu0 0.0
    %2083 = vmatprep.subr.mxu0 0.0
    %2084 = vmatpush1.msra.mxu0 0.0
    %2085 = vmatprep.subr.mxu0 0.0
    %2086 = vmatpush1.msra.mxu0 0.0
    %2087 = vmatprep.subr.mxu0 0.0
    %2088 = vmatpush1.msra.mxu0 0.0
    %2089 = vmatprep.subr.mxu0 0.0
    %2090 = vmatpush1.msra.mxu0 0.0
    %2091 = vmatprep.subr.mxu0 0.0
    %2092 = vmatpush1.msra.mxu0 0.0
    %2093 = vmatprep.subr.mxu0 0.0
    %2094 = vmatpush1.msra.mxu0 0.0
    %2095 = vmatprep.subr.mxu0 0.0
    %2096 = vmatpush1.msra.mxu0 0.0
    %2097 = vmatprep.subr.mxu0 0.0
    %2098 = vmatpush1.msra.mxu0 0.0
    %2099 = vmatprep.mubr.f32.mxu0 0.0
    %2100 = vmatmul.mubr.f32.gmra.mrb[0].mxu0 %v1881
    %v2101 = vpop.f32.mrb[0].mxu0
    %v2102 = vadd.f32 0.0, %v2101
    %v2103 = vpop.f32.mrb[0].mxu0
    %2104 = vdwg.mxu0
    %v2105 = vadd.f32 %v1851, %v1960
    %v2106 = vadd.f32 %v1852, %v1962
    %v2107 = vadd.f32 %v1853, %v2031
    %v2108 = vadd.f32 %v1854, %v2033
    %v2109 = vadd.f32 %v1855, %v2102
    %v2110 = vld [vmem:[%s1 + $0x40] sm:$0xff]
    %v2111 = vld [vmem:[%s0] sm:$0xff]
    %v2112 = vld [vmem:[%s0 + $0x8] sm:$0xff]
    %v2113 = vld [vmem:[%s0 + $0x10] sm:$0xf]
    %v2117 = vcombine.high %v2111, %v2111
    %v2118 = vcombine.high %v2112, %v2112
    %2119 = vrot.lane.b32.xlu0 %v2111, 94
    %v2120 = vpop.permute.xlu0 %2119
    %2121 = vrot.lane.b32.xlu0 %v2117, 94
    %v2122 = vpop.permute.xlu0 %2121
    %2123 = vrot.lane.b32.xlu0 %v2112, 94
    %v2124 = vpop.permute.xlu0 %2123
    %2125 = vrot.lane.b32.xlu0 %v2118, 94
    %v2126 = vpop.permute.xlu0 %2125
    %2127 = vrot.lane.b32.xlu0 %v2113, 94
    %v2128 = vpop.permute.xlu0 %2127
    %vm2129 = vcmask 769024
    %v2130 = vsel %vm2129, %v2120, %v2122
    %v2131 = vsel %vm2129, %v2122, %v2124
    %v2132 = vsel %vm2129, %v2124, %v2126
    %v2133 = vsel %vm2129, %v2126, %v2128
    %v2135 = vsel %vm134, %v2110, 0
    %v2137 = vsel %vm138, %v2130, 0
    %v2139 = vsel %vm138, %v2131, 0
    %v2141 = vsel %vm138, %v2132, 0
    %v2143 = vsel %vm138, %v2133, 0
    %v2145 = vsel %vm138, %v2128, 0
    %2147 = vmatprep.subr.mxu0 %v2139
    %2148 = vmatpush1.msra.mxu0 %v2137
    %2149 = vmatprep.subr.mxu0 0.0
    %2150 = vmatpush1.msra.mxu0 0.0
    %2151 = vmatprep.subr.mxu0 0.0
    %2152 = vmatpush1.msra.mxu0 0.0
    %2153 = vmatprep.subr.mxu0 0.0
    %2154 = vmatpush1.msra.mxu0 0.0
    %2155 = vmatprep.subr.mxu0 0.0
    %2156 = vmatpush1.msra.mxu0 0.0
    %2157 = vmatprep.subr.mxu0 0.0
    %2158 = vmatpush1.msra.mxu0 0.0
    %2159 = vmatprep.subr.mxu0 0.0
    %2160 = vmatpush1.msra.mxu0 0.0
    %2161 = vmatprep.subr.mxu0 0.0
    %2162 = vmatpush1.msra.mxu0 0.0
    %2163 = vmatprep.subr.mxu0 0.0
    %2164 = vmatpush1.msra.mxu0 0.0
    %2165 = vmatprep.subr.mxu0 0.0
    %2166 = vmatpush1.msra.mxu0 0.0
    %2167 = vmatprep.subr.mxu0 0.0
    %2168 = vmatpush1.msra.mxu0 0.0
    %2169 = vmatprep.subr.mxu0 0.0
    %2170 = vmatpush1.msra.mxu0 0.0
    %2171 = vmatprep.subr.mxu0 0.0
    %2172 = vmatpush1.msra.mxu0 0.0
    %2173 = vmatprep.subr.mxu0 0.0
    %2174 = vmatpush1.msra.mxu0 0.0
    %2175 = vmatprep.subr.mxu0 0.0
    %2176 = vmatpush1.msra.mxu0 0.0
    %2177 = vmatprep.subr.mxu0 0.0
    %2178 = vmatpush1.msra.mxu0 0.0
    %2179 = vmatprep.subr.mxu0 0.0
    %2180 = vmatpush1.msra.mxu0 0.0
    %2181 = vmatprep.subr.mxu0 0.0
    %2182 = vmatpush1.msra.mxu0 0.0
    %2183 = vmatprep.subr.mxu0 0.0
    %2184 = vmatpush1.msra.mxu0 0.0
    %2185 = vmatprep.subr.mxu0 0.0
    %2186 = vmatpush1.msra.mxu0 0.0
    %2187 = vmatprep.subr.mxu0 0.0
    %2188 = vmatpush1.msra.mxu0 0.0
    %2189 = vmatprep.subr.mxu0 0.0
    %2190 = vmatpush1.msra.mxu0 0.0
    %2191 = vmatprep.subr.mxu0 0.0
    %2192 = vmatpush1.msra.mxu0 0.0
    %2193 = vmatprep.subr.mxu0 0.0
    %2194 = vmatpush1.msra.mxu0 0.0
    %2195 = vmatprep.subr.mxu0 0.0
    %2196 = vmatpush1.msra.mxu0 0.0
    %2197 = vmatprep.subr.mxu0 0.0
    %2198 = vmatpush1.msra.mxu0 0.0
    %2199 = vmatprep.subr.mxu0 0.0
    %2200 = vmatpush1.msra.mxu0 0.0
    %2201 = vmatprep.subr.mxu0 0.0
    %2202 = vmatpush1.msra.mxu0 0.0
    %2203 = vmatprep.subr.mxu0 0.0
    %2204 = vmatpush1.msra.mxu0 0.0
    %2205 = vmatprep.subr.mxu0 0.0
    %2206 = vmatpush1.msra.mxu0 0.0
    %2207 = vmatprep.subr.mxu0 0.0
    %2208 = vmatpush1.msra.mxu0 0.0
    %2209 = vmatprep.subr.mxu0 0.0
    %2210 = vmatpush1.msra.mxu0 0.0
    %2211 = vmatprep.mubr.f32.mxu0 0.0
    %2212 = vmatmul.mubr.f32.gmra.mrb[0].mxu0 %v2135
    %v2213 = vpop.f32.mrb[0].mxu0
    %v2214 = vadd.f32 0.0, %v2213
    %v2215 = vpop.f32.mrb[0].mxu0
    %v2216 = vadd.f32 0.0, %v2215
    %2217 = vdwg.mxu0
    %2218 = vmatprep.subr.mxu0 %v2143
    %2219 = vmatpush1.msra.mxu0 %v2141
    %2220 = vmatprep.subr.mxu0 0.0
    %2221 = vmatpush1.msra.mxu0 0.0
    %2222 = vmatprep.subr.mxu0 0.0
    %2223 = vmatpush1.msra.mxu0 0.0
    %2224 = vmatprep.subr.mxu0 0.0
    %2225 = vmatpush1.msra.mxu0 0.0
    %2226 = vmatprep.subr.mxu0 0.0
    %2227 = vmatpush1.msra.mxu0 0.0
    %2228 = vmatprep.subr.mxu0 0.0
    %2229 = vmatpush1.msra.mxu0 0.0
    %2230 = vmatprep.subr.mxu0 0.0
    %2231 = vmatpush1.msra.mxu0 0.0
    %2232 = vmatprep.subr.mxu0 0.0
    %2233 = vmatpush1.msra.mxu0 0.0
    %2234 = vmatprep.subr.mxu0 0.0
    %2235 = vmatpush1.msra.mxu0 0.0
    %2236 = vmatprep.subr.mxu0 0.0
    %2237 = vmatpush1.msra.mxu0 0.0
    %2238 = vmatprep.subr.mxu0 0.0
    %2239 = vmatpush1.msra.mxu0 0.0
    %2240 = vmatprep.subr.mxu0 0.0
    %2241 = vmatpush1.msra.mxu0 0.0
    %2242 = vmatprep.subr.mxu0 0.0
    %2243 = vmatpush1.msra.mxu0 0.0
    %2244 = vmatprep.subr.mxu0 0.0
    %2245 = vmatpush1.msra.mxu0 0.0
    %2246 = vmatprep.subr.mxu0 0.0
    %2247 = vmatpush1.msra.mxu0 0.0
    %2248 = vmatprep.subr.mxu0 0.0
    %2249 = vmatpush1.msra.mxu0 0.0
    %2250 = vmatprep.subr.mxu0 0.0
    %2251 = vmatpush1.msra.mxu0 0.0
    %2252 = vmatprep.subr.mxu0 0.0
    %2253 = vmatpush1.msra.mxu0 0.0
    %2254 = vmatprep.subr.mxu0 0.0
    %2255 = vmatpush1.msra.mxu0 0.0
    %2256 = vmatprep.subr.mxu0 0.0
    %2257 = vmatpush1.msra.mxu0 0.0
    %2258 = vmatprep.subr.mxu0 0.0
    %2259 = vmatpush1.msra.mxu0 0.0
    %2260 = vmatprep.subr.mxu0 0.0
    %2261 = vmatpush1.msra.mxu0 0.0
    %2262 = vmatprep.subr.mxu0 0.0
    %2263 = vmatpush1.msra.mxu0 0.0
    %2264 = vmatprep.subr.mxu0 0.0
    %2265 = vmatpush1.msra.mxu0 0.0
    %2266 = vmatprep.subr.mxu0 0.0
    %2267 = vmatpush1.msra.mxu0 0.0
    %2268 = vmatprep.subr.mxu0 0.0
    %2269 = vmatpush1.msra.mxu0 0.0
    %2270 = vmatprep.subr.mxu0 0.0
    %2271 = vmatpush1.msra.mxu0 0.0
    %2272 = vmatprep.subr.mxu0 0.0
    %2273 = vmatpush1.msra.mxu0 0.0
    %2274 = vmatprep.subr.mxu0 0.0
    %2275 = vmatpush1.msra.mxu0 0.0
    %2276 = vmatprep.subr.mxu0 0.0
    %2277 = vmatpush1.msra.mxu0 0.0
    %2278 = vmatprep.subr.mxu0 0.0
    %2279 = vmatpush1.msra.mxu0 0.0
    %2280 = vmatprep.subr.mxu0 0.0
    %2281 = vmatpush1.msra.mxu0 0.0
    %2282 = vmatprep.mubr.f32.mxu0 0.0
    %2283 = vmatmul.mubr.f32.gmra.mrb[0].mxu0 %v2135
    %v2284 = vpop.f32.mrb[0].mxu0
    %v2285 = vadd.f32 0.0, %v2284
    %v2286 = vpop.f32.mrb[0].mxu0
    %v2287 = vadd.f32 0.0, %v2286
    %2288 = vdwg.mxu0
    %2289 = vmatprep.subr.mxu0 0.0
    %2290 = vmatpush1.msra.mxu0 %v2145
    %2291 = vmatprep.subr.mxu0 0.0
    %2292 = vmatpush1.msra.mxu0 0.0
    %2293 = vmatprep.subr.mxu0 0.0
    %2294 = vmatpush1.msra.mxu0 0.0
    %2295 = vmatprep.subr.mxu0 0.0
    %2296 = vmatpush1.msra.mxu0 0.0
    %2297 = vmatprep.subr.mxu0 0.0
    %2298 = vmatpush1.msra.mxu0 0.0
    %2299 = vmatprep.subr.mxu0 0.0
    %2300 = vmatpush1.msra.mxu0 0.0
    %2301 = vmatprep.subr.mxu0 0.0
    %2302 = vmatpush1.msra.mxu0 0.0
    %2303 = vmatprep.subr.mxu0 0.0
    %2304 = vmatpush1.msra.mxu0 0.0
    %2305 = vmatprep.subr.mxu0 0.0
    %2306 = vmatpush1.msra.mxu0 0.0
    %2307 = vmatprep.subr.mxu0 0.0
    %2308 = vmatpush1.msra.mxu0 0.0
    %2309 = vmatprep.subr.mxu0 0.0
    %2310 = vmatpush1.msra.mxu0 0.0
    %2311 = vmatprep.subr.mxu0 0.0
    %2312 = vmatpush1.msra.mxu0 0.0
    %2313 = vmatprep.subr.mxu0 0.0
    %2314 = vmatpush1.msra.mxu0 0.0
    %2315 = vmatprep.subr.mxu0 0.0
    %2316 = vmatpush1.msra.mxu0 0.0
    %2317 = vmatprep.subr.mxu0 0.0
    %2318 = vmatpush1.msra.mxu0 0.0
    %2319 = vmatprep.subr.mxu0 0.0
    %2320 = vmatpush1.msra.mxu0 0.0
    %2321 = vmatprep.subr.mxu0 0.0
    %2322 = vmatpush1.msra.mxu0 0.0
    %2323 = vmatprep.subr.mxu0 0.0
    %2324 = vmatpush1.msra.mxu0 0.0
    %2325 = vmatprep.subr.mxu0 0.0
    %2326 = vmatpush1.msra.mxu0 0.0
    %2327 = vmatprep.subr.mxu0 0.0
    %2328 = vmatpush1.msra.mxu0 0.0
    %2329 = vmatprep.subr.mxu0 0.0
    %2330 = vmatpush1.msra.mxu0 0.0
    %2331 = vmatprep.subr.mxu0 0.0
    %2332 = vmatpush1.msra.mxu0 0.0
    %2333 = vmatprep.subr.mxu0 0.0
    %2334 = vmatpush1.msra.mxu0 0.0
    %2335 = vmatprep.subr.mxu0 0.0
    %2336 = vmatpush1.msra.mxu0 0.0
    %2337 = vmatprep.subr.mxu0 0.0
    %2338 = vmatpush1.msra.mxu0 0.0
    %2339 = vmatprep.subr.mxu0 0.0
    %2340 = vmatpush1.msra.mxu0 0.0
    %2341 = vmatprep.subr.mxu0 0.0
    %2342 = vmatpush1.msra.mxu0 0.0
    %2343 = vmatprep.subr.mxu0 0.0
    %2344 = vmatpush1.msra.mxu0 0.0
    %2345 = vmatprep.subr.mxu0 0.0
    %2346 = vmatpush1.msra.mxu0 0.0
    %2347 = vmatprep.subr.mxu0 0.0
    %2348 = vmatpush1.msra.mxu0 0.0
    %2349 = vmatprep.subr.mxu0 0.0
    %2350 = vmatpush1.msra.mxu0 0.0
    %2351 = vmatprep.subr.mxu0 0.0
    %2352 = vmatpush1.msra.mxu0 0.0
    %2353 = vmatprep.mubr.f32.mxu0 0.0
    %2354 = vmatmul.mubr.f32.gmra.mrb[0].mxu0 %v2135
    %v2355 = vpop.f32.mrb[0].mxu0
    %v2356 = vadd.f32 0.0, %v2355
    %v2357 = vpop.f32.mrb[0].mxu0
    %2358 = vdwg.mxu0
    %v2359 = vadd.f32 %v2105, %v2214
    %v2360 = vadd.f32 %v2106, %v2216
    %v2361 = vadd.f32 %v2107, %v2285
    %v2362 = vadd.f32 %v2108, %v2287
    %v2363 = vadd.f32 %v2109, %v2356
    %v2364 = vld [vmem:[%s2] sm:$0xff]
    %2366 = vset.pattern.permute.xlu0 0
    %2367 = vperm.xlu0 %2366, %v2364
    %v2368 = vpop.permute.xlu0 %2367
    %v2370 = vadd.f32 %v2359, %v2368
    %v2371 = vadd.f32 %v2360, %v2368
    %v2372 = vadd.f32 %v2361, %v2368
    %v2373 = vadd.f32 %v2362, %v2368
    %v2374 = vadd.f32 %v2363, %v2368
    %v2375 = vmax.f32 %v2370, 0.0
    %v2376 = vmax.f32 %v2371, 0.0
    %v2377 = vmax.f32 %v2372, 0.0
    %v2378 = vmax.f32 %v2373, 0.0
    %v2379 = vmax.f32 %v2374, 0.0
    %2380 = vst [vmem:[#allocation2] sm:$0xff] %v2375
    %2381 = vst [vmem:[#allocation2 + $0x8] sm:$0xff] %v2376
    %2382 = vst [vmem:[#allocation2 + $0x10] sm:$0xff] %v2377
    %2383 = vst [vmem:[#allocation2 + $0x18] sm:$0xff] %v2378
    %vm2384 = vcmask 556032
    %2385 = vst.msk [vmem:[#allocation2 + $0x20] sm:$0xff] %vm2384, %v2379
    %v2386 = vld [vmem:[%s3] sm:$0xff]
    %v2387 = vld [vmem:[%s3 + $0x8] sm:$0xff]
    %v2388 = vld [vmem:[#allocation2] sm:$0xff]
    %v2389 = vld [vmem:[#allocation2 + $0x8] sm:$0xff]
    %v2390 = vld [vmem:[#allocation2 + $0x10] sm:$0xff]
    %v2391 = vld [vmem:[#allocation2 + $0x18] sm:$0xff]
    %v2392 = vld [vmem:[#allocation2 + $0x20] sm:$0xff]
    %v2393 = vld [vmem:[%s3 + $0x10] sm:$0xff]
    %v2394 = vld [vmem:[%s3 + $0x18] sm:$0xff]
    %2400 = vrot.lane.b32.xlu0 %v2388, 127
    %v2401 = vpop.permute.xlu0 %2400
    %2402 = vrot.lane.b32.xlu0 %v2389, 127
    %v2403 = vpop.permute.xlu0 %2402
    %2404 = vrot.lane.b32.xlu0 %v2390, 127
    %v2405 = vpop.permute.xlu0 %2404
    %2406 = vrot.lane.b32.xlu0 %v2391, 127
    %v2407 = vpop.permute.xlu0 %2406
    %2408 = vrot.lane.b32.xlu0 %v2392, 127
    %v2409 = vpop.permute.xlu0 %2408
    %v2410 = vsel %vm129, %v2401, %v2403
    %v2411 = vsel %vm129, %v2403, %v2405
    %v2412 = vsel %vm129, %v2405, %v2407
    %v2413 = vsel %vm129, %v2407, %v2409
    %vm2419 = vcmask 64512
    %v2421 = vsel %vm2419, %v2393, 0
    %v2424 = vsel %vm2419, %v2394, 0
    %2426 = vmatprep.subr.mxu0 %v2411
    %2427 = vmatpush1.msra.mxu0 %v2410
    %2428 = vmatprep.subr.mxu0 0.0
    %2429 = vmatpush1.msra.mxu0 0.0
    %2430 = vmatprep.subr.mxu0 0.0
    %2431 = vmatpush1.msra.mxu0 0.0
    %2432 = vmatprep.subr.mxu0 0.0
    %2433 = vmatpush1.msra.mxu0 0.0
    %2434 = vmatprep.subr.mxu0 0.0
    %2435 = vmatpush1.msra.mxu0 0.0
    %2436 = vmatprep.subr.mxu0 0.0
    %2437 = vmatpush1.msra.mxu0 0.0
    %2438 = vmatprep.subr.mxu0 0.0
    %2439 = vmatpush1.msra.mxu0 0.0
    %2440 = vmatprep.subr.mxu0 0.0
    %2441 = vmatpush1.msra.mxu0 0.0
    %2442 = vmatprep.subr.mxu0 0.0
    %2443 = vmatpush1.msra.mxu0 0.0
    %2444 = vmatprep.subr.mxu0 0.0
    %2445 = vmatpush1.msra.mxu0 0.0
    %2446 = vmatprep.subr.mxu0 0.0
    %2447 = vmatpush1.msra.mxu0 0.0
    %2448 = vmatprep.subr.mxu0 0.0
    %2449 = vmatpush1.msra.mxu0 0.0
    %2450 = vmatprep.subr.mxu0 0.0
    %2451 = vmatpush1.msra.mxu0 0.0
    %2452 = vmatprep.subr.mxu0 0.0
    %2453 = vmatpush1.msra.mxu0 0.0
    %2454 = vmatprep.subr.mxu0 0.0
    %2455 = vmatpush1.msra.mxu0 0.0
    %2456 = vmatprep.subr.mxu0 0.0
    %2457 = vmatpush1.msra.mxu0 0.0
    %2458 = vmatprep.subr.mxu0 0.0
    %2459 = vmatpush1.msra.mxu0 0.0
    %2460 = vmatprep.subr.mxu0 0.0
    %2461 = vmatpush1.msra.mxu0 0.0
    %2462 = vmatprep.subr.mxu0 0.0
    %2463 = vmatpush1.msra.mxu0 0.0
    %2464 = vmatprep.subr.mxu0 0.0
    %2465 = vmatpush1.msra.mxu0 0.0
    %2466 = vmatprep.subr.mxu0 0.0
    %2467 = vmatpush1.msra.mxu0 0.0
    %2468 = vmatprep.subr.mxu0 0.0
    %2469 = vmatpush1.msra.mxu0 0.0
    %2470 = vmatprep.subr.mxu0 0.0
    %2471 = vmatpush1.msra.mxu0 0.0
    %2472 = vmatprep.subr.mxu0 0.0
    %2473 = vmatpush1.msra.mxu0 0.0
    %2474 = vmatprep.subr.mxu0 0.0
    %2475 = vmatpush1.msra.mxu0 0.0
    %2476 = vmatprep.subr.mxu0 0.0
    %2477 = vmatpush1.msra.mxu0 0.0
    %2478 = vmatprep.subr.mxu0 0.0
    %2479 = vmatpush1.msra.mxu0 0.0
    %2480 = vmatprep.subr.mxu0 0.0
    %2481 = vmatpush1.msra.mxu0 0.0
    %2482 = vmatprep.subr.mxu0 0.0
    %2483 = vmatpush1.msra.mxu0 0.0
    %2484 = vmatprep.subr.mxu0 0.0
    %2485 = vmatpush1.msra.mxu0 0.0
    %2486 = vmatprep.subr.mxu0 0.0
    %2487 = vmatpush1.msra.mxu0 0.0
    %2488 = vmatprep.subr.mxu0 0.0
    %2489 = vmatpush1.msra.mxu0 0.0
    %2490 = vmatprep.mubr.f32.mxu0 0.0
    %2491 = vmatmul.mubr.f32.gmra.mrb[0].mxu0 %v2421
    %v2492 = vpop.f32.mrb[0].mxu0
    %v2493 = vadd.f32 0.0, %v2492
    %v2494 = vpop.f32.mrb[0].mxu0
    %v2495 = vadd.f32 0.0, %v2494
    %2496 = vmatprep.mubr.f32.mxu0 0.0
    %2497 = vmatmul.mubr.f32.gmra.mrb[0].mxu0 %v2424
    %v2498 = vpop.f32.mrb[0].mxu0
    %v2499 = vadd.f32 0.0, %v2498
    %v2500 = vpop.f32.mrb[0].mxu0
    %v2501 = vadd.f32 0.0, %v2500
    %2502 = vdwg.mxu0
    %2503 = vmatprep.subr.mxu0 %v2413
    %2504 = vmatpush1.msra.mxu0 %v2412
    %2505 = vmatprep.subr.mxu0 0.0
    %2506 = vmatpush1.msra.mxu0 0.0
    %2507 = vmatprep.subr.mxu0 0.0
    %2508 = vmatpush1.msra.mxu0 0.0
    %2509 = vmatprep.subr.mxu0 0.0
    %2510 = vmatpush1.msra.mxu0 0.0
    %2511 = vmatprep.subr.mxu0 0.0
    %2512 = vmatpush1.msra.mxu0 0.0
    %2513 = vmatprep.subr.mxu0 0.0
    %2514 = vmatpush1.msra.mxu0 0.0
    %2515 = vmatprep.subr.mxu0 0.0
    %2516 = vmatpush1.msra.mxu0 0.0
    %2517 = vmatprep.subr.mxu0 0.0
    %2518 = vmatpush1.msra.mxu0 0.0
    %2519 = vmatprep.subr.mxu0 0.0
    %2520 = vmatpush1.msra.mxu0 0.0
    %2521 = vmatprep.subr.mxu0 0.0
    %2522 = vmatpush1.msra.mxu0 0.0
    %2523 = vmatprep.subr.mxu0 0.0
    %2524 = vmatpush1.msra.mxu0 0.0
    %2525 = vmatprep.subr.mxu0 0.0
    %2526 = vmatpush1.msra.mxu0 0.0
    %2527 = vmatprep.subr.mxu0 0.0
    %2528 = vmatpush1.msra.mxu0 0.0
    %2529 = vmatprep.subr.mxu0 0.0
    %2530 = vmatpush1.msra.mxu0 0.0
    %2531 = vmatprep.subr.mxu0 0.0
    %2532 = vmatpush1.msra.mxu0 0.0
    %2533 = vmatprep.subr.mxu0 0.0
    %2534 = vmatpush1.msra.mxu0 0.0
    %2535 = vmatprep.subr.mxu0 0.0
    %2536 = vmatpush1.msra.mxu0 0.0
    %2537 = vmatprep.subr.mxu0 0.0
    %2538 = vmatpush1.msra.mxu0 0.0
    %2539 = vmatprep.subr.mxu0 0.0
    %2540 = vmatpush1.msra.mxu0 0.0
    %2541 = vmatprep.subr.mxu0 0.0
    %2542 = vmatpush1.msra.mxu0 0.0
    %2543 = vmatprep.subr.mxu0 0.0
    %2544 = vmatpush1.msra.mxu0 0.0
    %2545 = vmatprep.subr.mxu0 0.0
    %2546 = vmatpush1.msra.mxu0 0.0
    %2547 = vmatprep.subr.mxu0 0.0
    %2548 = vmatpush1.msra.mxu0 0.0
    %2549 = vmatprep.subr.mxu0 0.0
    %2550 = vmatpush1.msra.mxu0 0.0
    %2551 = vmatprep.subr.mxu0 0.0
    %2552 = vmatpush1.msra.mxu0 0.0
    %2553 = vmatprep.subr.mxu0 0.0
    %2554 = vmatpush1.msra.mxu0 0.0
    %2555 = vmatprep.subr.mxu0 0.0
    %2556 = vmatpush1.msra.mxu0 0.0
    %2557 = vmatprep.subr.mxu0 0.0
    %2558 = vmatpush1.msra.mxu0 0.0
    %2559 = vmatprep.subr.mxu0 0.0
    %2560 = vmatpush1.msra.mxu0 0.0
    %2561 = vmatprep.subr.mxu0 0.0
    %2562 = vmatpush1.msra.mxu0 0.0
    %2563 = vmatprep.subr.mxu0 0.0
    %2564 = vmatpush1.msra.mxu0 0.0
    %2565 = vmatprep.subr.mxu0 0.0
    %2566 = vmatpush1.msra.mxu0 0.0
    %2567 = vmatprep.mubr.f32.mxu0 0.0
    %2568 = vmatmul.mubr.f32.gmra.mrb[0].mxu0 %v2421
    %v2569 = vpop.f32.mrb[0].mxu0
    %v2570 = vadd.f32 0.0, %v2569
    %v2571 = vpop.f32.mrb[0].mxu0
    %v2572 = vadd.f32 0.0, %v2571
    %2573 = vmatprep.mubr.f32.mxu0 0.0
    %2574 = vmatmul.mubr.f32.gmra.mrb[0].mxu0 %v2424
    %v2575 = vpop.f32.mrb[0].mxu0
    %v2576 = vadd.f32 0.0, %v2575
    %v2577 = vpop.f32.mrb[0].mxu0
    %v2578 = vadd.f32 0.0, %v2577
    %2579 = vdwg.mxu0
    %2580 = vmatprep.subr.mxu0 0.0
    %2581 = vmatpush1.msra.mxu0 %v2409
    %2582 = vmatprep.subr.mxu0 0.0
    %2583 = vmatpush1.msra.mxu0 0.0
    %2584 = vmatprep.subr.mxu0 0.0
    %2585 = vmatpush1.msra.mxu0 0.0
    %2586 = vmatprep.subr.mxu0 0.0
    %2587 = vmatpush1.msra.mxu0 0.0
    %2588 = vmatprep.subr.mxu0 0.0
    %2589 = vmatpush1.msra.mxu0 0.0
    %2590 = vmatprep.subr.mxu0 0.0
    %2591 = vmatpush1.msra.mxu0 0.0
    %2592 = vmatprep.subr.mxu0 0.0
    %2593 = vmatpush1.msra.mxu0 0.0
    %2594 = vmatprep.subr.mxu0 0.0
    %2595 = vmatpush1.msra.mxu0 0.0
    %2596 = vmatprep.subr.mxu0 0.0
    %2597 = vmatpush1.msra.mxu0 0.0
    %2598 = vmatprep.subr.mxu0 0.0
    %2599 = vmatpush1.msra.mxu0 0.0
    %2600 = vmatprep.subr.mxu0 0.0
    %2601 = vmatpush1.msra.mxu0 0.0
    %2602 = vmatprep.subr.mxu0 0.0
    %2603 = vmatpush1.msra.mxu0 0.0
    %2604 = vmatprep.subr.mxu0 0.0
    %2605 = vmatpush1.msra.mxu0 0.0
    %2606 = vmatprep.subr.mxu0 0.0
    %2607 = vmatpush1.msra.mxu0 0.0
    %2608 = vmatprep.subr.mxu0 0.0
    %2609 = vmatpush1.msra.mxu0 0.0
    %2610 = vmatprep.subr.mxu0 0.0
    %2611 = vmatpush1.msra.mxu0 0.0
    %2612 = vmatprep.subr.mxu0 0.0
    %2613 = vmatpush1.msra.mxu0 0.0
    %2614 = vmatprep.subr.mxu0 0.0
    %2615 = vmatpush1.msra.mxu0 0.0
    %2616 = vmatprep.subr.mxu0 0.0
    %2617 = vmatpush1.msra.mxu0 0.0
    %2618 = vmatprep.subr.mxu0 0.0
    %2619 = vmatpush1.msra.mxu0 0.0
    %2620 = vmatprep.subr.mxu0 0.0
    %2621 = vmatpush1.msra.mxu0 0.0
    %2622 = vmatprep.subr.mxu0 0.0
    %2623 = vmatpush1.msra.mxu0 0.0
    %2624 = vmatprep.subr.mxu0 0.0
    %2625 = vmatpush1.msra.mxu0 0.0
    %2626 = vmatprep.subr.mxu0 0.0
    %2627 = vmatpush1.msra.mxu0 0.0
    %2628 = vmatprep.subr.mxu0 0.0
    %2629 = vmatpush1.msra.mxu0 0.0
    %2630 = vmatprep.subr.mxu0 0.0
    %2631 = vmatpush1.msra.mxu0 0.0
    %2632 = vmatprep.subr.mxu0 0.0
    %2633 = vmatpush1.msra.mxu0 0.0
    %2634 = vmatprep.subr.mxu0 0.0
    %2635 = vmatpush1.msra.mxu0 0.0
    %2636 = vmatprep.subr.mxu0 0.0
    %2637 = vmatpush1.msra.mxu0 0.0
    %2638 = vmatprep.subr.mxu0 0.0
    %2639 = vmatpush1.msra.mxu0 0.0
    %2640 = vmatprep.subr.mxu0 0.0
    %2641 = vmatpush1.msra.mxu0 0.0
    %2642 = vmatprep.subr.mxu0 0.0
    %2643 = vmatpush1.msra.mxu0 0.0
    %2644 = vmatprep.mubr.f32.mxu0 0.0
    %2645 = vmatmul.mubr.f32.gmra.mrb[0].mxu0 %v2421
    %v2646 = vpop.f32.mrb[0].mxu0
    %v2647 = vadd.f32 0.0, %v2646
    %v2648 = vpop.f32.mrb[0].mxu0
    %2649 = vmatprep.mubr.f32.mxu0 0.0
    %2650 = vmatmul.mubr.f32.gmra.mrb[0].mxu0 %v2424
    %v2651 = vpop.f32.mrb[0].mxu0
    %v2652 = vadd.f32 0.0, %v2651
    %v2653 = vpop.f32.mrb[0].mxu0
    %2654 = vdwg.mxu0
    %v2656 = vsel %vm2419, %v2386, 0
    %v2659 = vsel %vm2419, %v2387, 0
    %2661 = vmatprep.subr.mxu0 %v2389
    %2662 = vmatpush1.msra.mxu0 %v2388
    %2663 = vmatprep.subr.mxu0 0.0
    %2664 = vmatpush1.msra.mxu0 0.0
    %2665 = vmatprep.subr.mxu0 0.0
    %2666 = vmatpush1.msra.mxu0 0.0
    %2667 = vmatprep.subr.mxu0 0.0
    %2668 = vmatpush1.msra.mxu0 0.0
    %2669 = vmatprep.subr.mxu0 0.0
    %2670 = vmatpush1.msra.mxu0 0.0
    %2671 = vmatprep.subr.mxu0 0.0
    %2672 = vmatpush1.msra.mxu0 0.0
    %2673 = vmatprep.subr.mxu0 0.0
    %2674 = vmatpush1.msra.mxu0 0.0
    %2675 = vmatprep.subr.mxu0 0.0
    %2676 = vmatpush1.msra.mxu0 0.0
    %2677 = vmatprep.subr.mxu0 0.0
    %2678 = vmatpush1.msra.mxu0 0.0
    %2679 = vmatprep.subr.mxu0 0.0
    %2680 = vmatpush1.msra.mxu0 0.0
    %2681 = vmatprep.subr.mxu0 0.0
    %2682 = vmatpush1.msra.mxu0 0.0
    %2683 = vmatprep.subr.mxu0 0.0
    %2684 = vmatpush1.msra.mxu0 0.0
    %2685 = vmatprep.subr.mxu0 0.0
    %2686 = vmatpush1.msra.mxu0 0.0
    %2687 = vmatprep.subr.mxu0 0.0
    %2688 = vmatpush1.msra.mxu0 0.0
    %2689 = vmatprep.subr.mxu0 0.0
    %2690 = vmatpush1.msra.mxu0 0.0
    %2691 = vmatprep.subr.mxu0 0.0
    %2692 = vmatpush1.msra.mxu0 0.0
    %2693 = vmatprep.subr.mxu0 0.0
    %2694 = vmatpush1.msra.mxu0 0.0
    %2695 = vmatprep.subr.mxu0 0.0
    %2696 = vmatpush1.msra.mxu0 0.0
    %2697 = vmatprep.subr.mxu0 0.0
    %2698 = vmatpush1.msra.mxu0 0.0
    %2699 = vmatprep.subr.mxu0 0.0
    %2700 = vmatpush1.msra.mxu0 0.0
    %2701 = vmatprep.subr.mxu0 0.0
    %2702 = vmatpush1.msra.mxu0 0.0
    %2703 = vmatprep.subr.mxu0 0.0
    %2704 = vmatpush1.msra.mxu0 0.0
    %2705 = vmatprep.subr.mxu0 0.0
    %2706 = vmatpush1.msra.mxu0 0.0
    %2707 = vmatprep.subr.mxu0 0.0
    %2708 = vmatpush1.msra.mxu0 0.0
    %2709 = vmatprep.subr.mxu0 0.0
    %2710 = vmatpush1.msra.mxu0 0.0
    %2711 = vmatprep.subr.mxu0 0.0
    %2712 = vmatpush1.msra.mxu0 0.0
    %2713 = vmatprep.subr.mxu0 0.0
    %2714 = vmatpush1.msra.mxu0 0.0
    %2715 = vmatprep.subr.mxu0 0.0
    %2716 = vmatpush1.msra.mxu0 0.0
    %2717 = vmatprep.subr.mxu0 0.0
    %2718 = vmatpush1.msra.mxu0 0.0
    %2719 = vmatprep.subr.mxu0 0.0
    %2720 = vmatpush1.msra.mxu0 0.0
    %2721 = vmatprep.subr.mxu0 0.0
    %2722 = vmatpush1.msra.mxu0 0.0
    %2723 = vmatprep.subr.mxu0 0.0
    %2724 = vmatpush1.msra.mxu0 0.0
    %2725 = vmatprep.mubr.f32.mxu0 0.0
    %2726 = vmatmul.mubr.f32.gmra.mrb[0].mxu0 %v2656
    %v2727 = vpop.f32.mrb[0].mxu0
    %v2728 = vadd.f32 %v2493, %v2727
    %v2729 = vpop.f32.mrb[0].mxu0
    %v2730 = vadd.f32 %v2495, %v2729
    %2731 = vmatprep.mubr.f32.mxu0 0.0
    %2732 = vmatmul.mubr.f32.gmra.mrb[0].mxu0 %v2659
    %v2733 = vpop.f32.mrb[0].mxu0
    %v2734 = vadd.f32 %v2499, %v2733
    %v2735 = vpop.f32.mrb[0].mxu0
    %v2736 = vadd.f32 %v2501, %v2735
    %2737 = vdwg.mxu0
    %2738 = vmatprep.subr.mxu0 %v2391
    %2739 = vmatpush1.msra.mxu0 %v2390
    %2740 = vmatprep.subr.mxu0 0.0
    %2741 = vmatpush1.msra.mxu0 0.0
    %2742 = vmatprep.subr.mxu0 0.0
    %2743 = vmatpush1.msra.mxu0 0.0
    %2744 = vmatprep.subr.mxu0 0.0
    %2745 = vmatpush1.msra.mxu0 0.0
    %2746 = vmatprep.subr.mxu0 0.0
    %2747 = vmatpush1.msra.mxu0 0.0
    %2748 = vmatprep.subr.mxu0 0.0
    %2749 = vmatpush1.msra.mxu0 0.0
    %2750 = vmatprep.subr.mxu0 0.0
    %2751 = vmatpush1.msra.mxu0 0.0
    %2752 = vmatprep.subr.mxu0 0.0
    %2753 = vmatpush1.msra.mxu0 0.0
    %2754 = vmatprep.subr.mxu0 0.0
    %2755 = vmatpush1.msra.mxu0 0.0
    %2756 = vmatprep.subr.mxu0 0.0
    %2757 = vmatpush1.msra.mxu0 0.0
    %2758 = vmatprep.subr.mxu0 0.0
    %2759 = vmatpush1.msra.mxu0 0.0
    %2760 = vmatprep.subr.mxu0 0.0
    %2761 = vmatpush1.msra.mxu0 0.0
    %2762 = vmatprep.subr.mxu0 0.0
    %2763 = vmatpush1.msra.mxu0 0.0
    %2764 = vmatprep.subr.mxu0 0.0
    %2765 = vmatpush1.msra.mxu0 0.0
    %2766 = vmatprep.subr.mxu0 0.0
    %2767 = vmatpush1.msra.mxu0 0.0
    %2768 = vmatprep.subr.mxu0 0.0
    %2769 = vmatpush1.msra.mxu0 0.0
    %2770 = vmatprep.subr.mxu0 0.0
    %2771 = vmatpush1.msra.mxu0 0.0
    %2772 = vmatprep.subr.mxu0 0.0
    %2773 = vmatpush1.msra.mxu0 0.0
    %2774 = vmatprep.subr.mxu0 0.0
    %2775 = vmatpush1.msra.mxu0 0.0
    %2776 = vmatprep.subr.mxu0 0.0
    %2777 = vmatpush1.msra.mxu0 0.0
    %2778 = vmatprep.subr.mxu0 0.0
    %2779 = vmatpush1.msra.mxu0 0.0
    %2780 = vmatprep.subr.mxu0 0.0
    %2781 = vmatpush1.msra.mxu0 0.0
    %2782 = vmatprep.subr.mxu0 0.0
    %2783 = vmatpush1.msra.mxu0 0.0
    %2784 = vmatprep.subr.mxu0 0.0
    %2785 = vmatpush1.msra.mxu0 0.0
    %2786 = vmatprep.subr.mxu0 0.0
    %2787 = vmatpush1.msra.mxu0 0.0
    %2788 = vmatprep.subr.mxu0 0.0
    %2789 = vmatpush1.msra.mxu0 0.0
    %2790 = vmatprep.subr.mxu0 0.0
    %2791 = vmatpush1.msra.mxu0 0.0
    %2792 = vmatprep.subr.mxu0 0.0
    %2793 = vmatpush1.msra.mxu0 0.0
    %2794 = vmatprep.subr.mxu0 0.0
    %2795 = vmatpush1.msra.mxu0 0.0
    %2796 = vmatprep.subr.mxu0 0.0
    %2797 = vmatpush1.msra.mxu0 0.0
    %2798 = vmatprep.subr.mxu0 0.0
    %2799 = vmatpush1.msra.mxu0 0.0
    %2800 = vmatprep.subr.mxu0 0.0
    %2801 = vmatpush1.msra.mxu0 0.0
    %2802 = vmatprep.mubr.f32.mxu0 0.0
    %2803 = vmatmul.mubr.f32.gmra.mrb[0].mxu0 %v2656
    %v2804 = vpop.f32.mrb[0].mxu0
    %v2805 = vadd.f32 %v2570, %v2804
    %v2806 = vpop.f32.mrb[0].mxu0
    %v2807 = vadd.f32 %v2572, %v2806
    %2808 = vmatprep.mubr.f32.mxu0 0.0
    %2809 = vmatmul.mubr.f32.gmra.mrb[0].mxu0 %v2659
    %v2810 = vpop.f32.mrb[0].mxu0
    %v2811 = vadd.f32 %v2576, %v2810
    %v2812 = vpop.f32.mrb[0].mxu0
    %v2813 = vadd.f32 %v2578, %v2812
    %2814 = vdwg.mxu0
    %2815 = vmatprep.subr.mxu0 0.0
    %2816 = vmatpush1.msra.mxu0 %v2392
    %2817 = vmatprep.subr.mxu0 0.0
    %2818 = vmatpush1.msra.mxu0 0.0
    %2819 = vmatprep.subr.mxu0 0.0
    %2820 = vmatpush1.msra.mxu0 0.0
    %2821 = vmatprep.subr.mxu0 0.0
    %2822 = vmatpush1.msra.mxu0 0.0
    %2823 = vmatprep.subr.mxu0 0.0
    %2824 = vmatpush1.msra.mxu0 0.0
    %2825 = vmatprep.subr.mxu0 0.0
    %2826 = vmatpush1.msra.mxu0 0.0
    %2827 = vmatprep.subr.mxu0 0.0
    %2828 = vmatpush1.msra.mxu0 0.0
    %2829 = vmatprep.subr.mxu0 0.0
    %2830 = vmatpush1.msra.mxu0 0.0
    %2831 = vmatprep.subr.mxu0 0.0
    %2832 = vmatpush1.msra.mxu0 0.0
    %2833 = vmatprep.subr.mxu0 0.0
    %2834 = vmatpush1.msra.mxu0 0.0
    %2835 = vmatprep.subr.mxu0 0.0
    %2836 = vmatpush1.msra.mxu0 0.0
    %2837 = vmatprep.subr.mxu0 0.0
    %2838 = vmatpush1.msra.mxu0 0.0
    %2839 = vmatprep.subr.mxu0 0.0
    %2840 = vmatpush1.msra.mxu0 0.0
    %2841 = vmatprep.subr.mxu0 0.0
    %2842 = vmatpush1.msra.mxu0 0.0
    %2843 = vmatprep.subr.mxu0 0.0
    %2844 = vmatpush1.msra.mxu0 0.0
    %2845 = vmatprep.subr.mxu0 0.0
    %2846 = vmatpush1.msra.mxu0 0.0
    %2847 = vmatprep.subr.mxu0 0.0
    %2848 = vmatpush1.msra.mxu0 0.0
    %2849 = vmatprep.subr.mxu0 0.0
    %2850 = vmatpush1.msra.mxu0 0.0
    %2851 = vmatprep.subr.mxu0 0.0
    %2852 = vmatpush1.msra.mxu0 0.0
    %2853 = vmatprep.subr.mxu0 0.0
    %2854 = vmatpush1.msra.mxu0 0.0
    %2855 = vmatprep.subr.mxu0 0.0
    %2856 = vmatpush1.msra.mxu0 0.0
    %2857 = vmatprep.subr.mxu0 0.0
    %2858 = vmatpush1.msra.mxu0 0.0
    %2859 = vmatprep.subr.mxu0 0.0
    %2860 = vmatpush1.msra.mxu0 0.0
    %2861 = vmatprep.subr.mxu0 0.0
    %2862 = vmatpush1.msra.mxu0 0.0
    %2863 = vmatprep.subr.mxu0 0.0
    %2864 = vmatpush1.msra.mxu0 0.0
    %2865 = vmatprep.subr.mxu0 0.0
    %2866 = vmatpush1.msra.mxu0 0.0
    %2867 = vmatprep.subr.mxu0 0.0
    %2868 = vmatpush1.msra.mxu0 0.0
    %2869 = vmatprep.subr.mxu0 0.0
    %2870 = vmatpush1.msra.mxu0 0.0
    %2871 = vmatprep.subr.mxu0 0.0
    %2872 = vmatpush1.msra.mxu0 0.0
    %2873 = vmatprep.subr.mxu0 0.0
    %2874 = vmatpush1.msra.mxu0 0.0
    %2875 = vmatprep.subr.mxu0 0.0
    %2876 = vmatpush1.msra.mxu0 0.0
    %2877 = vmatprep.subr.mxu0 0.0
    %2878 = vmatpush1.msra.mxu0 0.0
    %2879 = vmatprep.mubr.f32.mxu0 0.0
    %2880 = vmatmul.mubr.f32.gmra.mrb[0].mxu0 %v2656
    %v2881 = vpop.f32.mrb[0].mxu0
    %v2882 = vadd.f32 %v2647, %v2881
    %v2883 = vpop.f32.mrb[0].mxu0
    %2884 = vmatprep.mubr.f32.mxu0 0.0
    %2885 = vmatmul.mubr.f32.gmra.mrb[0].mxu0 %v2659
    %v2886 = vpop.f32.mrb[0].mxu0
    %v2887 = vadd.f32 %v2652, %v2886
    %v2888 = vpop.f32.mrb[0].mxu0
    %2889 = vdwg.mxu0
    %v2890 = vld [vmem:[%s3 + $0x20] sm:$0xff]
    %v2891 = vld [vmem:[%s3 + $0x28] sm:$0xff]
    %2892 = vrot.lane.b32.xlu0 %v2388, 126
    %v2893 = vpop.permute.xlu0 %2892
    %2894 = vrot.lane.b32.xlu0 %v2389, 126
    %v2895 = vpop.permute.xlu0 %2894
    %2896 = vrot.lane.b32.xlu0 %v2390, 126
    %v2897 = vpop.permute.xlu0 %2896
    %2898 = vrot.lane.b32.xlu0 %v2391, 126
    %v2899 = vpop.permute.xlu0 %2898
    %2900 = vrot.lane.b32.xlu0 %v2392, 126
    %v2901 = vpop.permute.xlu0 %2900
    %v2902 = vsel %vm605, %v2893, %v2895
    %v2903 = vsel %vm605, %v2895, %v2897
    %v2904 = vsel %vm605, %v2897, %v2899
    %v2905 = vsel %vm605, %v2899, %v2901
    %v2912 = vsel %vm2419, %v2890, 0
    %v2915 = vsel %vm2419, %v2891, 0
    %2917 = vmatprep.subr.mxu0 %v2903
    %2918 = vmatpush1.msra.mxu0 %v2902
    %2919 = vmatprep.subr.mxu0 0.0
    %2920 = vmatpush1.msra.mxu0 0.0
    %2921 = vmatprep.subr.mxu0 0.0
    %2922 = vmatpush1.msra.mxu0 0.0
    %2923 = vmatprep.subr.mxu0 0.0
    %2924 = vmatpush1.msra.mxu0 0.0
    %2925 = vmatprep.subr.mxu0 0.0
    %2926 = vmatpush1.msra.mxu0 0.0
    %2927 = vmatprep.subr.mxu0 0.0
    %2928 = vmatpush1.msra.mxu0 0.0
    %2929 = vmatprep.subr.mxu0 0.0
    %2930 = vmatpush1.msra.mxu0 0.0
    %2931 = vmatprep.subr.mxu0 0.0
    %2932 = vmatpush1.msra.mxu0 0.0
    %2933 = vmatprep.subr.mxu0 0.0
    %2934 = vmatpush1.msra.mxu0 0.0
    %2935 = vmatprep.subr.mxu0 0.0
    %2936 = vmatpush1.msra.mxu0 0.0
    %2937 = vmatprep.subr.mxu0 0.0
    %2938 = vmatpush1.msra.mxu0 0.0
    %2939 = vmatprep.subr.mxu0 0.0
    %2940 = vmatpush1.msra.mxu0 0.0
    %2941 = vmatprep.subr.mxu0 0.0
    %2942 = vmatpush1.msra.mxu0 0.0
    %2943 = vmatprep.subr.mxu0 0.0
    %2944 = vmatpush1.msra.mxu0 0.0
    %2945 = vmatprep.subr.mxu0 0.0
    %2946 = vmatpush1.msra.mxu0 0.0
    %2947 = vmatprep.subr.mxu0 0.0
    %2948 = vmatpush1.msra.mxu0 0.0
    %2949 = vmatprep.subr.mxu0 0.0
    %2950 = vmatpush1.msra.mxu0 0.0
    %2951 = vmatprep.subr.mxu0 0.0
    %2952 = vmatpush1.msra.mxu0 0.0
    %2953 = vmatprep.subr.mxu0 0.0
    %2954 = vmatpush1.msra.mxu0 0.0
    %2955 = vmatprep.subr.mxu0 0.0
    %2956 = vmatpush1.msra.mxu0 0.0
    %2957 = vmatprep.subr.mxu0 0.0
    %2958 = vmatpush1.msra.mxu0 0.0
    %2959 = vmatprep.subr.mxu0 0.0
    %2960 = vmatpush1.msra.mxu0 0.0
    %2961 = vmatprep.subr.mxu0 0.0
    %2962 = vmatpush1.msra.mxu0 0.0
    %2963 = vmatprep.subr.mxu0 0.0
    %2964 = vmatpush1.msra.mxu0 0.0
    %2965 = vmatprep.subr.mxu0 0.0
    %2966 = vmatpush1.msra.mxu0 0.0
    %2967 = vmatprep.subr.mxu0 0.0
    %2968 = vmatpush1.msra.mxu0 0.0
    %2969 = vmatprep.subr.mxu0 0.0
    %2970 = vmatpush1.msra.mxu0 0.0
    %2971 = vmatprep.subr.mxu0 0.0
    %2972 = vmatpush1.msra.mxu0 0.0
    %2973 = vmatprep.subr.mxu0 0.0
    %2974 = vmatpush1.msra.mxu0 0.0
    %2975 = vmatprep.subr.mxu0 0.0
    %2976 = vmatpush1.msra.mxu0 0.0
    %2977 = vmatprep.subr.mxu0 0.0
    %2978 = vmatpush1.msra.mxu0 0.0
    %2979 = vmatprep.subr.mxu0 0.0
    %2980 = vmatpush1.msra.mxu0 0.0
    %2981 = vmatprep.mubr.f32.mxu0 0.0
    %2982 = vmatmul.mubr.f32.gmra.mrb[0].mxu0 %v2912
    %v2983 = vpop.f32.mrb[0].mxu0
    %v2984 = vadd.f32 0.0, %v2983
    %v2985 = vpop.f32.mrb[0].mxu0
    %v2986 = vadd.f32 0.0, %v2985
    %2987 = vmatprep.mubr.f32.mxu0 0.0
    %2988 = vmatmul.mubr.f32.gmra.mrb[0].mxu0 %v2915
    %v2989 = vpop.f32.mrb[0].mxu0
    %v2990 = vadd.f32 0.0, %v2989
    %v2991 = vpop.f32.mrb[0].mxu0
    %v2992 = vadd.f32 0.0, %v2991
    %2993 = vdwg.mxu0
    %2994 = vmatprep.subr.mxu0 %v2905
    %2995 = vmatpush1.msra.mxu0 %v2904
    %2996 = vmatprep.subr.mxu0 0.0
    %2997 = vmatpush1.msra.mxu0 0.0
    %2998 = vmatprep.subr.mxu0 0.0
    %2999 = vmatpush1.msra.mxu0 0.0
    %3000 = vmatprep.subr.mxu0 0.0
    %3001 = vmatpush1.msra.mxu0 0.0
    %3002 = vmatprep.subr.mxu0 0.0
    %3003 = vmatpush1.msra.mxu0 0.0
    %3004 = vmatprep.subr.mxu0 0.0
    %3005 = vmatpush1.msra.mxu0 0.0
    %3006 = vmatprep.subr.mxu0 0.0
    %3007 = vmatpush1.msra.mxu0 0.0
    %3008 = vmatprep.subr.mxu0 0.0
    %3009 = vmatpush1.msra.mxu0 0.0
    %3010 = vmatprep.subr.mxu0 0.0
    %3011 = vmatpush1.msra.mxu0 0.0
    %3012 = vmatprep.subr.mxu0 0.0
    %3013 = vmatpush1.msra.mxu0 0.0
    %3014 = vmatprep.subr.mxu0 0.0
    %3015 = vmatpush1.msra.mxu0 0.0
    %3016 = vmatprep.subr.mxu0 0.0
    %3017 = vmatpush1.msra.mxu0 0.0
    %3018 = vmatprep.subr.mxu0 0.0
    %3019 = vmatpush1.msra.mxu0 0.0
    %3020 = vmatprep.subr.mxu0 0.0
    %3021 = vmatpush1.msra.mxu0 0.0
    %3022 = vmatprep.subr.mxu0 0.0
    %3023 = vmatpush1.msra.mxu0 0.0
    %3024 = vmatprep.subr.mxu0 0.0
    %3025 = vmatpush1.msra.mxu0 0.0
    %3026 = vmatprep.subr.mxu0 0.0
    %3027 = vmatpush1.msra.mxu0 0.0
    %3028 = vmatprep.subr.mxu0 0.0
    %3029 = vmatpush1.msra.mxu0 0.0
    %3030 = vmatprep.subr.mxu0 0.0
    %3031 = vmatpush1.msra.mxu0 0.0
    %3032 = vmatprep.subr.mxu0 0.0
    %3033 = vmatpush1.msra.mxu0 0.0
    %3034 = vmatprep.subr.mxu0 0.0
    %3035 = vmatpush1.msra.mxu0 0.0
    %3036 = vmatprep.subr.mxu0 0.0
    %3037 = vmatpush1.msra.mxu0 0.0
    %3038 = vmatprep.subr.mxu0 0.0
    %3039 = vmatpush1.msra.mxu0 0.0
    %3040 = vmatprep.subr.mxu0 0.0
    %3041 = vmatpush1.msra.mxu0 0.0
    %3042 = vmatprep.subr.mxu0 0.0
    %3043 = vmatpush1.msra.mxu0 0.0
    %3044 = vmatprep.subr.mxu0 0.0
    %3045 = vmatpush1.msra.mxu0 0.0
    %3046 = vmatprep.subr.mxu0 0.0
    %3047 = vmatpush1.msra.mxu0 0.0
    %3048 = vmatprep.subr.mxu0 0.0
    %3049 = vmatpush1.msra.mxu0 0.0
    %3050 = vmatprep.subr.mxu0 0.0
    %3051 = vmatpush1.msra.mxu0 0.0
    %3052 = vmatprep.subr.mxu0 0.0
    %3053 = vmatpush1.msra.mxu0 0.0
    %3054 = vmatprep.subr.mxu0 0.0
    %3055 = vmatpush1.msra.mxu0 0.0
    %3056 = vmatprep.subr.mxu0 0.0
    %3057 = vmatpush1.msra.mxu0 0.0
    %3058 = vmatprep.mubr.f32.mxu0 0.0
    %3059 = vmatmul.mubr.f32.gmra.mrb[0].mxu0 %v2912
    %v3060 = vpop.f32.mrb[0].mxu0
    %v3061 = vadd.f32 0.0, %v3060
    %v3062 = vpop.f32.mrb[0].mxu0
    %v3063 = vadd.f32 0.0, %v3062
    %3064 = vmatprep.mubr.f32.mxu0 0.0
    %3065 = vmatmul.mubr.f32.gmra.mrb[0].mxu0 %v2915
    %v3066 = vpop.f32.mrb[0].mxu0
    %v3067 = vadd.f32 0.0, %v3066
    %v3068 = vpop.f32.mrb[0].mxu0
    %v3069 = vadd.f32 0.0, %v3068
    %3070 = vdwg.mxu0
    %3071 = vmatprep.subr.mxu0 0.0
    %3072 = vmatpush1.msra.mxu0 %v2901
    %3073 = vmatprep.subr.mxu0 0.0
    %3074 = vmatpush1.msra.mxu0 0.0
    %3075 = vmatprep.subr.mxu0 0.0
    %3076 = vmatpush1.msra.mxu0 0.0
    %3077 = vmatprep.subr.mxu0 0.0
    %3078 = vmatpush1.msra.mxu0 0.0
    %3079 = vmatprep.subr.mxu0 0.0
    %3080 = vmatpush1.msra.mxu0 0.0
    %3081 = vmatprep.subr.mxu0 0.0
    %3082 = vmatpush1.msra.mxu0 0.0
    %3083 = vmatprep.subr.mxu0 0.0
    %3084 = vmatpush1.msra.mxu0 0.0
    %3085 = vmatprep.subr.mxu0 0.0
    %3086 = vmatpush1.msra.mxu0 0.0
    %3087 = vmatprep.subr.mxu0 0.0
    %3088 = vmatpush1.msra.mxu0 0.0
    %3089 = vmatprep.subr.mxu0 0.0
    %3090 = vmatpush1.msra.mxu0 0.0
    %3091 = vmatprep.subr.mxu0 0.0
    %3092 = vmatpush1.msra.mxu0 0.0
    %3093 = vmatprep.subr.mxu0 0.0
    %3094 = vmatpush1.msra.mxu0 0.0
    %3095 = vmatprep.subr.mxu0 0.0
    %3096 = vmatpush1.msra.mxu0 0.0
    %3097 = vmatprep.subr.mxu0 0.0
    %3098 = vmatpush1.msra.mxu0 0.0
    %3099 = vmatprep.subr.mxu0 0.0
    %3100 = vmatpush1.msra.mxu0 0.0
    %3101 = vmatprep.subr.mxu0 0.0
    %3102 = vmatpush1.msra.mxu0 0.0
    %3103 = vmatprep.subr.mxu0 0.0
    %3104 = vmatpush1.msra.mxu0 0.0
    %3105 = vmatprep.subr.mxu0 0.0
    %3106 = vmatpush1.msra.mxu0 0.0
    %3107 = vmatprep.subr.mxu0 0.0
    %3108 = vmatpush1.msra.mxu0 0.0
    %3109 = vmatprep.subr.mxu0 0.0
    %3110 = vmatpush1.msra.mxu0 0.0
    %3111 = vmatprep.subr.mxu0 0.0
    %3112 = vmatpush1.msra.mxu0 0.0
    %3113 = vmatprep.subr.mxu0 0.0
    %3114 = vmatpush1.msra.mxu0 0.0
    %3115 = vmatprep.subr.mxu0 0.0
    %3116 = vmatpush1.msra.mxu0 0.0
    %3117 = vmatprep.subr.mxu0 0.0
    %3118 = vmatpush1.msra.mxu0 0.0
    %3119 = vmatprep.subr.mxu0 0.0
    %3120 = vmatpush1.msra.mxu0 0.0
    %3121 = vmatprep.subr.mxu0 0.0
    %3122 = vmatpush1.msra.mxu0 0.0
    %3123 = vmatprep.subr.mxu0 0.0
    %3124 = vmatpush1.msra.mxu0 0.0
    %3125 = vmatprep.subr.mxu0 0.0
    %3126 = vmatpush1.msra.mxu0 0.0
    %3127 = vmatprep.subr.mxu0 0.0
    %3128 = vmatpush1.msra.mxu0 0.0
    %3129 = vmatprep.subr.mxu0 0.0
    %3130 = vmatpush1.msra.mxu0 0.0
    %3131 = vmatprep.subr.mxu0 0.0
    %3132 = vmatpush1.msra.mxu0 0.0
    %3133 = vmatprep.subr.mxu0 0.0
    %3134 = vmatpush1.msra.mxu0 0.0
    %3135 = vmatprep.mubr.f32.mxu0 0.0
    %3136 = vmatmul.mubr.f32.gmra.mrb[0].mxu0 %v2912
    %v3137 = vpop.f32.mrb[0].mxu0
    %v3138 = vadd.f32 0.0, %v3137
    %v3139 = vpop.f32.mrb[0].mxu0
    %3140 = vmatprep.mubr.f32.mxu0 0.0
    %3141 = vmatmul.mubr.f32.gmra.mrb[0].mxu0 %v2915
    %v3142 = vpop.f32.mrb[0].mxu0
    %v3143 = vadd.f32 0.0, %v3142
    %v3144 = vpop.f32.mrb[0].mxu0
    %3145 = vdwg.mxu0
    %v3146 = vadd.f32 %v2728, %v2984
    %v3147 = vadd.f32 %v2730, %v2986
    %v3148 = vadd.f32 %v2805, %v3061
    %v3149 = vadd.f32 %v2807, %v3063
    %v3150 = vadd.f32 %v2882, %v3138
    %v3151 = vadd.f32 %v2734, %v2990
    %v3152 = vadd.f32 %v2736, %v2992
    %v3153 = vadd.f32 %v2811, %v3067
    %v3154 = vadd.f32 %v2813, %v3069
    %v3155 = vadd.f32 %v2887, %v3143
    %v3156 = vld [vmem:[%s3 + $0x30] sm:$0xff]
    %v3157 = vld [vmem:[%s3 + $0x38] sm:$0xff]
    %3158 = vrot.lane.b32.xlu0 %v2388, 112
    %v3159 = vpop.permute.xlu0 %3158
    %3160 = vrot.lane.b32.xlu0 %v2389, 112
    %v3161 = vpop.permute.xlu0 %3160
    %3162 = vrot.lane.b32.xlu0 %v2390, 112
    %v3163 = vpop.permute.xlu0 %3162
    %3164 = vrot.lane.b32.xlu0 %v2391, 112
    %v3165 = vpop.permute.xlu0 %3164
    %3166 = vrot.lane.b32.xlu0 %v2392, 112
    %v3167 = vpop.permute.xlu0 %3166
    %v3168 = vsel %vm859, %v3159, %v3161
    %v3169 = vsel %vm859, %v3161, %v3163
    %v3170 = vsel %vm859, %v3163, %v3165
    %v3171 = vsel %vm859, %v3165, %v3167
    %v3178 = vsel %vm2419, %v3156, 0
    %v3181 = vsel %vm2419, %v3157, 0
    %3183 = vmatprep.subr.mxu0 %v3169
    %3184 = vmatpush1.msra.mxu0 %v3168
    %3185 = vmatprep.subr.mxu0 0.0
    %3186 = vmatpush1.msra.mxu0 0.0
    %3187 = vmatprep.subr.mxu0 0.0
    %3188 = vmatpush1.msra.mxu0 0.0
    %3189 = vmatprep.subr.mxu0 0.0
    %3190 = vmatpush1.msra.mxu0 0.0
    %3191 = vmatprep.subr.mxu0 0.0
    %3192 = vmatpush1.msra.mxu0 0.0
    %3193 = vmatprep.subr.mxu0 0.0
    %3194 = vmatpush1.msra.mxu0 0.0
    %3195 = vmatprep.subr.mxu0 0.0
    %3196 = vmatpush1.msra.mxu0 0.0
    %3197 = vmatprep.subr.mxu0 0.0
    %3198 = vmatpush1.msra.mxu0 0.0
    %3199 = vmatprep.subr.mxu0 0.0
    %3200 = vmatpush1.msra.mxu0 0.0
    %3201 = vmatprep.subr.mxu0 0.0
    %3202 = vmatpush1.msra.mxu0 0.0
    %3203 = vmatprep.subr.mxu0 0.0
    %3204 = vmatpush1.msra.mxu0 0.0
    %3205 = vmatprep.subr.mxu0 0.0
    %3206 = vmatpush1.msra.mxu0 0.0
    %3207 = vmatprep.subr.mxu0 0.0
    %3208 = vmatpush1.msra.mxu0 0.0
    %3209 = vmatprep.subr.mxu0 0.0
    %3210 = vmatpush1.msra.mxu0 0.0
    %3211 = vmatprep.subr.mxu0 0.0
    %3212 = vmatpush1.msra.mxu0 0.0
    %3213 = vmatprep.subr.mxu0 0.0
    %3214 = vmatpush1.msra.mxu0 0.0
    %3215 = vmatprep.subr.mxu0 0.0
    %3216 = vmatpush1.msra.mxu0 0.0
    %3217 = vmatprep.subr.mxu0 0.0
    %3218 = vmatpush1.msra.mxu0 0.0
    %3219 = vmatprep.subr.mxu0 0.0
    %3220 = vmatpush1.msra.mxu0 0.0
    %3221 = vmatprep.subr.mxu0 0.0
    %3222 = vmatpush1.msra.mxu0 0.0
    %3223 = vmatprep.subr.mxu0 0.0
    %3224 = vmatpush1.msra.mxu0 0.0
    %3225 = vmatprep.subr.mxu0 0.0
    %3226 = vmatpush1.msra.mxu0 0.0
    %3227 = vmatprep.subr.mxu0 0.0
    %3228 = vmatpush1.msra.mxu0 0.0
    %3229 = vmatprep.subr.mxu0 0.0
    %3230 = vmatpush1.msra.mxu0 0.0
    %3231 = vmatprep.subr.mxu0 0.0
    %3232 = vmatpush1.msra.mxu0 0.0
    %3233 = vmatprep.subr.mxu0 0.0
    %3234 = vmatpush1.msra.mxu0 0.0
    %3235 = vmatprep.subr.mxu0 0.0
    %3236 = vmatpush1.msra.mxu0 0.0
    %3237 = vmatprep.subr.mxu0 0.0
    %3238 = vmatpush1.msra.mxu0 0.0
    %3239 = vmatprep.subr.mxu0 0.0
    %3240 = vmatpush1.msra.mxu0 0.0
    %3241 = vmatprep.subr.mxu0 0.0
    %3242 = vmatpush1.msra.mxu0 0.0
    %3243 = vmatprep.subr.mxu0 0.0
    %3244 = vmatpush1.msra.mxu0 0.0
    %3245 = vmatprep.subr.mxu0 0.0
    %3246 = vmatpush1.msra.mxu0 0.0
    %3247 = vmatprep.mubr.f32.mxu0 0.0
    %3248 = vmatmul.mubr.f32.gmra.mrb[0].mxu0 %v3178
    %v3249 = vpop.f32.mrb[0].mxu0
    %v3250 = vadd.f32 0.0, %v3249
    %v3251 = vpop.f32.mrb[0].mxu0
    %v3252 = vadd.f32 0.0, %v3251
    %3253 = vmatprep.mubr.f32.mxu0 0.0
    %3254 = vmatmul.mubr.f32.gmra.mrb[0].mxu0 %v3181
    %v3255 = vpop.f32.mrb[0].mxu0
    %v3256 = vadd.f32 0.0, %v3255
    %v3257 = vpop.f32.mrb[0].mxu0
    %v3258 = vadd.f32 0.0, %v3257
    %3259 = vdwg.mxu0
    %3260 = vmatprep.subr.mxu0 %v3171
    %3261 = vmatpush1.msra.mxu0 %v3170
    %3262 = vmatprep.subr.mxu0 0.0
    %3263 = vmatpush1.msra.mxu0 0.0
    %3264 = vmatprep.subr.mxu0 0.0
    %3265 = vmatpush1.msra.mxu0 0.0
    %3266 = vmatprep.subr.mxu0 0.0
    %3267 = vmatpush1.msra.mxu0 0.0
    %3268 = vmatprep.subr.mxu0 0.0
    %3269 = vmatpush1.msra.mxu0 0.0
    %3270 = vmatprep.subr.mxu0 0.0
    %3271 = vmatpush1.msra.mxu0 0.0
    %3272 = vmatprep.subr.mxu0 0.0
    %3273 = vmatpush1.msra.mxu0 0.0
    %3274 = vmatprep.subr.mxu0 0.0
    %3275 = vmatpush1.msra.mxu0 0.0
    %3276 = vmatprep.subr.mxu0 0.0
    %3277 = vmatpush1.msra.mxu0 0.0
    %3278 = vmatprep.subr.mxu0 0.0
    %3279 = vmatpush1.msra.mxu0 0.0
    %3280 = vmatprep.subr.mxu0 0.0
    %3281 = vmatpush1.msra.mxu0 0.0
    %3282 = vmatprep.subr.mxu0 0.0
    %3283 = vmatpush1.msra.mxu0 0.0
    %3284 = vmatprep.subr.mxu0 0.0
    %3285 = vmatpush1.msra.mxu0 0.0
    %3286 = vmatprep.subr.mxu0 0.0
    %3287 = vmatpush1.msra.mxu0 0.0
    %3288 = vmatprep.subr.mxu0 0.0
    %3289 = vmatpush1.msra.mxu0 0.0
    %3290 = vmatprep.subr.mxu0 0.0
    %3291 = vmatpush1.msra.mxu0 0.0
    %3292 = vmatprep.subr.mxu0 0.0
    %3293 = vmatpush1.msra.mxu0 0.0
    %3294 = vmatprep.subr.mxu0 0.0
    %3295 = vmatpush1.msra.mxu0 0.0
    %3296 = vmatprep.subr.mxu0 0.0
    %3297 = vmatpush1.msra.mxu0 0.0
    %3298 = vmatprep.subr.mxu0 0.0
    %3299 = vmatpush1.msra.mxu0 0.0
    %3300 = vmatprep.subr.mxu0 0.0
    %3301 = vmatpush1.msra.mxu0 0.0
    %3302 = vmatprep.subr.mxu0 0.0
    %3303 = vmatpush1.msra.mxu0 0.0
    %3304 = vmatprep.subr.mxu0 0.0
    %3305 = vmatpush1.msra.mxu0 0.0
    %3306 = vmatprep.subr.mxu0 0.0
    %3307 = vmatpush1.msra.mxu0 0.0
    %3308 = vmatprep.subr.mxu0 0.0
    %3309 = vmatpush1.msra.mxu0 0.0
    %3310 = vmatprep.subr.mxu0 0.0
    %3311 = vmatpush1.msra.mxu0 0.0
    %3312 = vmatprep.subr.mxu0 0.0
    %3313 = vmatpush1.msra.mxu0 0.0
    %3314 = vmatprep.subr.mxu0 0.0
    %3315 = vmatpush1.msra.mxu0 0.0
    %3316 = vmatprep.subr.mxu0 0.0
    %3317 = vmatpush1.msra.mxu0 0.0
    %3318 = vmatprep.subr.mxu0 0.0
    %3319 = vmatpush1.msra.mxu0 0.0
    %3320 = vmatprep.subr.mxu0 0.0
    %3321 = vmatpush1.msra.mxu0 0.0
    %3322 = vmatprep.subr.mxu0 0.0
    %3323 = vmatpush1.msra.mxu0 0.0
    %3324 = vmatprep.mubr.f32.mxu0 0.0
    %3325 = vmatmul.mubr.f32.gmra.mrb[0].mxu0 %v3178
    %v3326 = vpop.f32.mrb[0].mxu0
    %v3327 = vadd.f32 0.0, %v3326
    %v3328 = vpop.f32.mrb[0].mxu0
    %v3329 = vadd.f32 0.0, %v3328
    %3330 = vmatprep.mubr.f32.mxu0 0.0
    %3331 = vmatmul.mubr.f32.gmra.mrb[0].mxu0 %v3181
    %v3332 = vpop.f32.mrb[0].mxu0
    %v3333 = vadd.f32 0.0, %v3332
    %v3334 = vpop.f32.mrb[0].mxu0
    %v3335 = vadd.f32 0.0, %v3334
    %3336 = vdwg.mxu0
    %3337 = vmatprep.subr.mxu0 0.0
    %3338 = vmatpush1.msra.mxu0 %v3167
    %3339 = vmatprep.subr.mxu0 0.0
    %3340 = vmatpush1.msra.mxu0 0.0
    %3341 = vmatprep.subr.mxu0 0.0
    %3342 = vmatpush1.msra.mxu0 0.0
    %3343 = vmatprep.subr.mxu0 0.0
    %3344 = vmatpush1.msra.mxu0 0.0
    %3345 = vmatprep.subr.mxu0 0.0
    %3346 = vmatpush1.msra.mxu0 0.0
    %3347 = vmatprep.subr.mxu0 0.0
    %3348 = vmatpush1.msra.mxu0 0.0
    %3349 = vmatprep.subr.mxu0 0.0
    %3350 = vmatpush1.msra.mxu0 0.0
    %3351 = vmatprep.subr.mxu0 0.0
    %3352 = vmatpush1.msra.mxu0 0.0
    %3353 = vmatprep.subr.mxu0 0.0
    %3354 = vmatpush1.msra.mxu0 0.0
    %3355 = vmatprep.subr.mxu0 0.0
    %3356 = vmatpush1.msra.mxu0 0.0
    %3357 = vmatprep.subr.mxu0 0.0
    %3358 = vmatpush1.msra.mxu0 0.0
    %3359 = vmatprep.subr.mxu0 0.0
    %3360 = vmatpush1.msra.mxu0 0.0
    %3361 = vmatprep.subr.mxu0 0.0
    %3362 = vmatpush1.msra.mxu0 0.0
    %3363 = vmatprep.subr.mxu0 0.0
    %3364 = vmatpush1.msra.mxu0 0.0
    %3365 = vmatprep.subr.mxu0 0.0
    %3366 = vmatpush1.msra.mxu0 0.0
    %3367 = vmatprep.subr.mxu0 0.0
    %3368 = vmatpush1.msra.mxu0 0.0
    %3369 = vmatprep.subr.mxu0 0.0
    %3370 = vmatpush1.msra.mxu0 0.0
    %3371 = vmatprep.subr.mxu0 0.0
    %3372 = vmatpush1.msra.mxu0 0.0
    %3373 = vmatprep.subr.mxu0 0.0
    %3374 = vmatpush1.msra.mxu0 0.0
    %3375 = vmatprep.subr.mxu0 0.0
    %3376 = vmatpush1.msra.mxu0 0.0
    %3377 = vmatprep.subr.mxu0 0.0
    %3378 = vmatpush1.msra.mxu0 0.0
    %3379 = vmatprep.subr.mxu0 0.0
    %3380 = vmatpush1.msra.mxu0 0.0
    %3381 = vmatprep.subr.mxu0 0.0
    %3382 = vmatpush1.msra.mxu0 0.0
    %3383 = vmatprep.subr.mxu0 0.0
    %3384 = vmatpush1.msra.mxu0 0.0
    %3385 = vmatprep.subr.mxu0 0.0
    %3386 = vmatpush1.msra.mxu0 0.0
    %3387 = vmatprep.subr.mxu0 0.0
    %3388 = vmatpush1.msra.mxu0 0.0
    %3389 = vmatprep.subr.mxu0 0.0
    %3390 = vmatpush1.msra.mxu0 0.0
    %3391 = vmatprep.subr.mxu0 0.0
    %3392 = vmatpush1.msra.mxu0 0.0
    %3393 = vmatprep.subr.mxu0 0.0
    %3394 = vmatpush1.msra.mxu0 0.0
    %3395 = vmatprep.subr.mxu0 0.0
    %3396 = vmatpush1.msra.mxu0 0.0
    %3397 = vmatprep.subr.mxu0 0.0
    %3398 = vmatpush1.msra.mxu0 0.0
    %3399 = vmatprep.subr.mxu0 0.0
    %3400 = vmatpush1.msra.mxu0 0.0
    %3401 = vmatprep.mubr.f32.mxu0 0.0
    %3402 = vmatmul.mubr.f32.gmra.mrb[0].mxu0 %v3178
    %v3403 = vpop.f32.mrb[0].mxu0
    %v3404 = vadd.f32 0.0, %v3403
    %v3405 = vpop.f32.mrb[0].mxu0
    %3406 = vmatprep.mubr.f32.mxu0 0.0
    %3407 = vmatmul.mubr.f32.gmra.mrb[0].mxu0 %v3181
    %v3408 = vpop.f32.mrb[0].mxu0
    %v3409 = vadd.f32 0.0, %v3408
    %v3410 = vpop.f32.mrb[0].mxu0
    %3411 = vdwg.mxu0
    %v3412 = vadd.f32 %v3146, %v3250
    %v3413 = vadd.f32 %v3147, %v3252
    %v3414 = vadd.f32 %v3148, %v3327
    %v3415 = vadd.f32 %v3149, %v3329
    %v3416 = vadd.f32 %v3150, %v3404
    %v3417 = vadd.f32 %v3151, %v3256
    %v3418 = vadd.f32 %v3152, %v3258
    %v3419 = vadd.f32 %v3153, %v3333
    %v3420 = vadd.f32 %v3154, %v3335
    %v3421 = vadd.f32 %v3155, %v3409
    %v3422 = vld [vmem:[%s3 + $0x40] sm:$0xff]
    %v3423 = vld [vmem:[%s3 + $0x48] sm:$0xff]
    %3424 = vrot.lane.b32.xlu0 %v2388, 111
    %v3425 = vpop.permute.xlu0 %3424
    %3426 = vrot.lane.b32.xlu0 %v2389, 111
    %v3427 = vpop.permute.xlu0 %3426
    %3428 = vrot.lane.b32.xlu0 %v2390, 111
    %v3429 = vpop.permute.xlu0 %3428
    %3430 = vrot.lane.b32.xlu0 %v2391, 111
    %v3431 = vpop.permute.xlu0 %3430
    %3432 = vrot.lane.b32.xlu0 %v2392, 111
    %v3433 = vpop.permute.xlu0 %3432
    %v3434 = vsel %vm1113, %v3425, %v3427
    %v3435 = vsel %vm1113, %v3427, %v3429
    %v3436 = vsel %vm1113, %v3429, %v3431
    %v3437 = vsel %vm1113, %v3431, %v3433
    %v3444 = vsel %vm2419, %v3422, 0
    %v3447 = vsel %vm2419, %v3423, 0
    %3449 = vmatprep.subr.mxu0 %v3435
    %3450 = vmatpush1.msra.mxu0 %v3434
    %3451 = vmatprep.subr.mxu0 0.0
    %3452 = vmatpush1.msra.mxu0 0.0
    %3453 = vmatprep.subr.mxu0 0.0
    %3454 = vmatpush1.msra.mxu0 0.0
    %3455 = vmatprep.subr.mxu0 0.0
    %3456 = vmatpush1.msra.mxu0 0.0
    %3457 = vmatprep.subr.mxu0 0.0
    %3458 = vmatpush1.msra.mxu0 0.0
    %3459 = vmatprep.subr.mxu0 0.0
    %3460 = vmatpush1.msra.mxu0 0.0
    %3461 = vmatprep.subr.mxu0 0.0
    %3462 = vmatpush1.msra.mxu0 0.0
    %3463 = vmatprep.subr.mxu0 0.0
    %3464 = vmatpush1.msra.mxu0 0.0
    %3465 = vmatprep.subr.mxu0 0.0
    %3466 = vmatpush1.msra.mxu0 0.0
    %3467 = vmatprep.subr.mxu0 0.0
    %3468 = vmatpush1.msra.mxu0 0.0
    %3469 = vmatprep.subr.mxu0 0.0
    %3470 = vmatpush1.msra.mxu0 0.0
    %3471 = vmatprep.subr.mxu0 0.0
    %3472 = vmatpush1.msra.mxu0 0.0
    %3473 = vmatprep.subr.mxu0 0.0
    %3474 = vmatpush1.msra.mxu0 0.0
    %3475 = vmatprep.subr.mxu0 0.0
    %3476 = vmatpush1.msra.mxu0 0.0
    %3477 = vmatprep.subr.mxu0 0.0
    %3478 = vmatpush1.msra.mxu0 0.0
    %3479 = vmatprep.subr.mxu0 0.0
    %3480 = vmatpush1.msra.mxu0 0.0
    %3481 = vmatprep.subr.mxu0 0.0
    %3482 = vmatpush1.msra.mxu0 0.0
    %3483 = vmatprep.subr.mxu0 0.0
    %3484 = vmatpush1.msra.mxu0 0.0
    %3485 = vmatprep.subr.mxu0 0.0
    %3486 = vmatpush1.msra.mxu0 0.0
    %3487 = vmatprep.subr.mxu0 0.0
    %3488 = vmatpush1.msra.mxu0 0.0
    %3489 = vmatprep.subr.mxu0 0.0
    %3490 = vmatpush1.msra.mxu0 0.0
    %3491 = vmatprep.subr.mxu0 0.0
    %3492 = vmatpush1.msra.mxu0 0.0
    %3493 = vmatprep.subr.mxu0 0.0
    %3494 = vmatpush1.msra.mxu0 0.0
    %3495 = vmatprep.subr.mxu0 0.0
    %3496 = vmatpush1.msra.mxu0 0.0
    %3497 = vmatprep.subr.mxu0 0.0
    %3498 = vmatpush1.msra.mxu0 0.0
    %3499 = vmatprep.subr.mxu0 0.0
    %3500 = vmatpush1.msra.mxu0 0.0
    %3501 = vmatprep.subr.mxu0 0.0
    %3502 = vmatpush1.msra.mxu0 0.0
    %3503 = vmatprep.subr.mxu0 0.0
    %3504 = vmatpush1.msra.mxu0 0.0
    %3505 = vmatprep.subr.mxu0 0.0
    %3506 = vmatpush1.msra.mxu0 0.0
    %3507 = vmatprep.subr.mxu0 0.0
    %3508 = vmatpush1.msra.mxu0 0.0
    %3509 = vmatprep.subr.mxu0 0.0
    %3510 = vmatpush1.msra.mxu0 0.0
    %3511 = vmatprep.subr.mxu0 0.0
    %3512 = vmatpush1.msra.mxu0 0.0
    %3513 = vmatprep.mubr.f32.mxu0 0.0
    %3514 = vmatmul.mubr.f32.gmra.mrb[0].mxu0 %v3444
    %v3515 = vpop.f32.mrb[0].mxu0
    %v3516 = vadd.f32 0.0, %v3515
    %v3517 = vpop.f32.mrb[0].mxu0
    %v3518 = vadd.f32 0.0, %v3517
    %3519 = vmatprep.mubr.f32.mxu0 0.0
    %3520 = vmatmul.mubr.f32.gmra.mrb[0].mxu0 %v3447
    %v3521 = vpop.f32.mrb[0].mxu0
    %v3522 = vadd.f32 0.0, %v3521
    %v3523 = vpop.f32.mrb[0].mxu0
    %v3524 = vadd.f32 0.0, %v3523
    %3525 = vdwg.mxu0
    %3526 = vmatprep.subr.mxu0 %v3437
    %3527 = vmatpush1.msra.mxu0 %v3436
    %3528 = vmatprep.subr.mxu0 0.0
    %3529 = vmatpush1.msra.mxu0 0.0
    %3530 = vmatprep.subr.mxu0 0.0
    %3531 = vmatpush1.msra.mxu0 0.0
    %3532 = vmatprep.subr.mxu0 0.0
    %3533 = vmatpush1.msra.mxu0 0.0
    %3534 = vmatprep.subr.mxu0 0.0
    %3535 = vmatpush1.msra.mxu0 0.0
    %3536 = vmatprep.subr.mxu0 0.0
    %3537 = vmatpush1.msra.mxu0 0.0
    %3538 = vmatprep.subr.mxu0 0.0
    %3539 = vmatpush1.msra.mxu0 0.0
    %3540 = vmatprep.subr.mxu0 0.0
    %3541 = vmatpush1.msra.mxu0 0.0
    %3542 = vmatprep.subr.mxu0 0.0
    %3543 = vmatpush1.msra.mxu0 0.0
    %3544 = vmatprep.subr.mxu0 0.0
    %3545 = vmatpush1.msra.mxu0 0.0
    %3546 = vmatprep.subr.mxu0 0.0
    %3547 = vmatpush1.msra.mxu0 0.0
    %3548 = vmatprep.subr.mxu0 0.0
    %3549 = vmatpush1.msra.mxu0 0.0
    %3550 = vmatprep.subr.mxu0 0.0
    %3551 = vmatpush1.msra.mxu0 0.0
    %3552 = vmatprep.subr.mxu0 0.0
    %3553 = vmatpush1.msra.mxu0 0.0
    %3554 = vmatprep.subr.mxu0 0.0
    %3555 = vmatpush1.msra.mxu0 0.0
    %3556 = vmatprep.subr.mxu0 0.0
    %3557 = vmatpush1.msra.mxu0 0.0
    %3558 = vmatprep.subr.mxu0 0.0
    %3559 = vmatpush1.msra.mxu0 0.0
    %3560 = vmatprep.subr.mxu0 0.0
    %3561 = vmatpush1.msra.mxu0 0.0
    %3562 = vmatprep.subr.mxu0 0.0
    %3563 = vmatpush1.msra.mxu0 0.0
    %3564 = vmatprep.subr.mxu0 0.0
    %3565 = vmatpush1.msra.mxu0 0.0
    %3566 = vmatprep.subr.mxu0 0.0
    %3567 = vmatpush1.msra.mxu0 0.0
    %3568 = vmatprep.subr.mxu0 0.0
    %3569 = vmatpush1.msra.mxu0 0.0
    %3570 = vmatprep.subr.mxu0 0.0
    %3571 = vmatpush1.msra.mxu0 0.0
    %3572 = vmatprep.subr.mxu0 0.0
    %3573 = vmatpush1.msra.mxu0 0.0
    %3574 = vmatprep.subr.mxu0 0.0
    %3575 = vmatpush1.msra.mxu0 0.0
    %3576 = vmatprep.subr.mxu0 0.0
    %3577 = vmatpush1.msra.mxu0 0.0
    %3578 = vmatprep.subr.mxu0 0.0
    %3579 = vmatpush1.msra.mxu0 0.0
    %3580 = vmatprep.subr.mxu0 0.0
    %3581 = vmatpush1.msra.mxu0 0.0
    %3582 = vmatprep.subr.mxu0 0.0
    %3583 = vmatpush1.msra.mxu0 0.0
    %3584 = vmatprep.subr.mxu0 0.0
    %3585 = vmatpush1.msra.mxu0 0.0
    %3586 = vmatprep.subr.mxu0 0.0
    %3587 = vmatpush1.msra.mxu0 0.0
    %3588 = vmatprep.subr.mxu0 0.0
    %3589 = vmatpush1.msra.mxu0 0.0
    %3590 = vmatprep.mubr.f32.mxu0 0.0
    %3591 = vmatmul.mubr.f32.gmra.mrb[0].mxu0 %v3444
    %v3592 = vpop.f32.mrb[0].mxu0
    %v3593 = vadd.f32 0.0, %v3592
    %v3594 = vpop.f32.mrb[0].mxu0
    %v3595 = vadd.f32 0.0, %v3594
    %3596 = vmatprep.mubr.f32.mxu0 0.0
    %3597 = vmatmul.mubr.f32.gmra.mrb[0].mxu0 %v3447
    %v3598 = vpop.f32.mrb[0].mxu0
    %v3599 = vadd.f32 0.0, %v3598
    %v3600 = vpop.f32.mrb[0].mxu0
    %v3601 = vadd.f32 0.0, %v3600
    %3602 = vdwg.mxu0
    %3603 = vmatprep.subr.mxu0 0.0
    %3604 = vmatpush1.msra.mxu0 %v3433
    %3605 = vmatprep.subr.mxu0 0.0
    %3606 = vmatpush1.msra.mxu0 0.0
    %3607 = vmatprep.subr.mxu0 0.0
    %3608 = vmatpush1.msra.mxu0 0.0
    %3609 = vmatprep.subr.mxu0 0.0
    %3610 = vmatpush1.msra.mxu0 0.0
    %3611 = vmatprep.subr.mxu0 0.0
    %3612 = vmatpush1.msra.mxu0 0.0
    %3613 = vmatprep.subr.mxu0 0.0
    %3614 = vmatpush1.msra.mxu0 0.0
    %3615 = vmatprep.subr.mxu0 0.0
    %3616 = vmatpush1.msra.mxu0 0.0
    %3617 = vmatprep.subr.mxu0 0.0
    %3618 = vmatpush1.msra.mxu0 0.0
    %3619 = vmatprep.subr.mxu0 0.0
    %3620 = vmatpush1.msra.mxu0 0.0
    %3621 = vmatprep.subr.mxu0 0.0
    %3622 = vmatpush1.msra.mxu0 0.0
    %3623 = vmatprep.subr.mxu0 0.0
    %3624 = vmatpush1.msra.mxu0 0.0
    %3625 = vmatprep.subr.mxu0 0.0
    %3626 = vmatpush1.msra.mxu0 0.0
    %3627 = vmatprep.subr.mxu0 0.0
    %3628 = vmatpush1.msra.mxu0 0.0
    %3629 = vmatprep.subr.mxu0 0.0
    %3630 = vmatpush1.msra.mxu0 0.0
    %3631 = vmatprep.subr.mxu0 0.0
    %3632 = vmatpush1.msra.mxu0 0.0
    %3633 = vmatprep.subr.mxu0 0.0
    %3634 = vmatpush1.msra.mxu0 0.0
    %3635 = vmatprep.subr.mxu0 0.0
    %3636 = vmatpush1.msra.mxu0 0.0
    %3637 = vmatprep.subr.mxu0 0.0
    %3638 = vmatpush1.msra.mxu0 0.0
    %3639 = vmatprep.subr.mxu0 0.0
    %3640 = vmatpush1.msra.mxu0 0.0
    %3641 = vmatprep.subr.mxu0 0.0
    %3642 = vmatpush1.msra.mxu0 0.0
    %3643 = vmatprep.subr.mxu0 0.0
    %3644 = vmatpush1.msra.mxu0 0.0
    %3645 = vmatprep.subr.mxu0 0.0
    %3646 = vmatpush1.msra.mxu0 0.0
    %3647 = vmatprep.subr.mxu0 0.0
    %3648 = vmatpush1.msra.mxu0 0.0
    %3649 = vmatprep.subr.mxu0 0.0
    %3650 = vmatpush1.msra.mxu0 0.0
    %3651 = vmatprep.subr.mxu0 0.0
    %3652 = vmatpush1.msra.mxu0 0.0
    %3653 = vmatprep.subr.mxu0 0.0
    %3654 = vmatpush1.msra.mxu0 0.0
    %3655 = vmatprep.subr.mxu0 0.0
    %3656 = vmatpush1.msra.mxu0 0.0
    %3657 = vmatprep.subr.mxu0 0.0
    %3658 = vmatpush1.msra.mxu0 0.0
    %3659 = vmatprep.subr.mxu0 0.0
    %3660 = vmatpush1.msra.mxu0 0.0
    %3661 = vmatprep.subr.mxu0 0.0
    %3662 = vmatpush1.msra.mxu0 0.0
    %3663 = vmatprep.subr.mxu0 0.0
    %3664 = vmatpush1.msra.mxu0 0.0
    %3665 = vmatprep.subr.mxu0 0.0
    %3666 = vmatpush1.msra.mxu0 0.0
    %3667 = vmatprep.mubr.f32.mxu0 0.0
    %3668 = vmatmul.mubr.f32.gmra.mrb[0].mxu0 %v3444
    %v3669 = vpop.f32.mrb[0].mxu0
    %v3670 = vadd.f32 0.0, %v3669
    %v3671 = vpop.f32.mrb[0].mxu0
    %3672 = vmatprep.mubr.f32.mxu0 0.0
    %3673 = vmatmul.mubr.f32.gmra.mrb[0].mxu0 %v3447
    %v3674 = vpop.f32.mrb[0].mxu0
    %v3675 = vadd.f32 0.0, %v3674
    %v3676 = vpop.f32.mrb[0].mxu0
    %3677 = vdwg.mxu0
    %v3678 = vadd.f32 %v3412, %v3516
    %v3679 = vadd.f32 %v3413, %v3518
    %v3680 = vadd.f32 %v3414, %v3593
    %v3681 = vadd.f32 %v3415, %v3595
    %v3682 = vadd.f32 %v3416, %v3670
    %v3683 = vadd.f32 %v3417, %v3522
    %v3684 = vadd.f32 %v3418, %v3524
    %v3685 = vadd.f32 %v3419, %v3599
    %v3686 = vadd.f32 %v3420, %v3601
    %v3687 = vadd.f32 %v3421, %v3675
    %v3688 = vld [vmem:[%s3 + $0x50] sm:$0xff]
    %v3689 = vld [vmem:[%s3 + $0x58] sm:$0xff]
    %3690 = vrot.lane.b32.xlu0 %v2388, 110
    %v3691 = vpop.permute.xlu0 %3690
    %3692 = vrot.lane.b32.xlu0 %v2389, 110
    %v3693 = vpop.permute.xlu0 %3692
    %3694 = vrot.lane.b32.xlu0 %v2390, 110
    %v3695 = vpop.permute.xlu0 %3694
    %3696 = vrot.lane.b32.xlu0 %v2391, 110
    %v3697 = vpop.permute.xlu0 %3696
    %3698 = vrot.lane.b32.xlu0 %v2392, 110
    %v3699 = vpop.permute.xlu0 %3698
    %v3700 = vsel %vm1367, %v3691, %v3693
    %v3701 = vsel %vm1367, %v3693, %v3695
    %v3702 = vsel %vm1367, %v3695, %v3697
    %v3703 = vsel %vm1367, %v3697, %v3699
    %v3710 = vsel %vm2419, %v3688, 0
    %v3713 = vsel %vm2419, %v3689, 0
    %3715 = vmatprep.subr.mxu0 %v3701
    %3716 = vmatpush1.msra.mxu0 %v3700
    %3717 = vmatprep.subr.mxu0 0.0
    %3718 = vmatpush1.msra.mxu0 0.0
    %3719 = vmatprep.subr.mxu0 0.0
    %3720 = vmatpush1.msra.mxu0 0.0
    %3721 = vmatprep.subr.mxu0 0.0
    %3722 = vmatpush1.msra.mxu0 0.0
    %3723 = vmatprep.subr.mxu0 0.0
    %3724 = vmatpush1.msra.mxu0 0.0
    %3725 = vmatprep.subr.mxu0 0.0
    %3726 = vmatpush1.msra.mxu0 0.0
    %3727 = vmatprep.subr.mxu0 0.0
    %3728 = vmatpush1.msra.mxu0 0.0
    %3729 = vmatprep.subr.mxu0 0.0
    %3730 = vmatpush1.msra.mxu0 0.0
    %3731 = vmatprep.subr.mxu0 0.0
    %3732 = vmatpush1.msra.mxu0 0.0
    %3733 = vmatprep.subr.mxu0 0.0
    %3734 = vmatpush1.msra.mxu0 0.0
    %3735 = vmatprep.subr.mxu0 0.0
    %3736 = vmatpush1.msra.mxu0 0.0
    %3737 = vmatprep.subr.mxu0 0.0
    %3738 = vmatpush1.msra.mxu0 0.0
    %3739 = vmatprep.subr.mxu0 0.0
    %3740 = vmatpush1.msra.mxu0 0.0
    %3741 = vmatprep.subr.mxu0 0.0
    %3742 = vmatpush1.msra.mxu0 0.0
    %3743 = vmatprep.subr.mxu0 0.0
    %3744 = vmatpush1.msra.mxu0 0.0
    %3745 = vmatprep.subr.mxu0 0.0
    %3746 = vmatpush1.msra.mxu0 0.0
    %3747 = vmatprep.subr.mxu0 0.0
    %3748 = vmatpush1.msra.mxu0 0.0
    %3749 = vmatprep.subr.mxu0 0.0
    %3750 = vmatpush1.msra.mxu0 0.0
    %3751 = vmatprep.subr.mxu0 0.0
    %3752 = vmatpush1.msra.mxu0 0.0
    %3753 = vmatprep.subr.mxu0 0.0
    %3754 = vmatpush1.msra.mxu0 0.0
    %3755 = vmatprep.subr.mxu0 0.0
    %3756 = vmatpush1.msra.mxu0 0.0
    %3757 = vmatprep.subr.mxu0 0.0
    %3758 = vmatpush1.msra.mxu0 0.0
    %3759 = vmatprep.subr.mxu0 0.0
    %3760 = vmatpush1.msra.mxu0 0.0
    %3761 = vmatprep.subr.mxu0 0.0
    %3762 = vmatpush1.msra.mxu0 0.0
    %3763 = vmatprep.subr.mxu0 0.0
    %3764 = vmatpush1.msra.mxu0 0.0
    %3765 = vmatprep.subr.mxu0 0.0
    %3766 = vmatpush1.msra.mxu0 0.0
    %3767 = vmatprep.subr.mxu0 0.0
    %3768 = vmatpush1.msra.mxu0 0.0
    %3769 = vmatprep.subr.mxu0 0.0
    %3770 = vmatpush1.msra.mxu0 0.0
    %3771 = vmatprep.subr.mxu0 0.0
    %3772 = vmatpush1.msra.mxu0 0.0
    %3773 = vmatprep.subr.mxu0 0.0
    %3774 = vmatpush1.msra.mxu0 0.0
    %3775 = vmatprep.subr.mxu0 0.0
    %3776 = vmatpush1.msra.mxu0 0.0
    %3777 = vmatprep.subr.mxu0 0.0
    %3778 = vmatpush1.msra.mxu0 0.0
    %3779 = vmatprep.mubr.f32.mxu0 0.0
    %3780 = vmatmul.mubr.f32.gmra.mrb[0].mxu0 %v3710
    %v3781 = vpop.f32.mrb[0].mxu0
    %v3782 = vadd.f32 0.0, %v3781
    %v3783 = vpop.f32.mrb[0].mxu0
    %v3784 = vadd.f32 0.0, %v3783
    %3785 = vmatprep.mubr.f32.mxu0 0.0
    %3786 = vmatmul.mubr.f32.gmra.mrb[0].mxu0 %v3713
    %v3787 = vpop.f32.mrb[0].mxu0
    %v3788 = vadd.f32 0.0, %v3787
    %v3789 = vpop.f32.mrb[0].mxu0
    %v3790 = vadd.f32 0.0, %v3789
    %3791 = vdwg.mxu0
    %3792 = vmatprep.subr.mxu0 %v3703
    %3793 = vmatpush1.msra.mxu0 %v3702
    %3794 = vmatprep.subr.mxu0 0.0
    %3795 = vmatpush1.msra.mxu0 0.0
    %3796 = vmatprep.subr.mxu0 0.0
    %3797 = vmatpush1.msra.mxu0 0.0
    %3798 = vmatprep.subr.mxu0 0.0
    %3799 = vmatpush1.msra.mxu0 0.0
    %3800 = vmatprep.subr.mxu0 0.0
    %3801 = vmatpush1.msra.mxu0 0.0
    %3802 = vmatprep.subr.mxu0 0.0
    %3803 = vmatpush1.msra.mxu0 0.0
    %3804 = vmatprep.subr.mxu0 0.0
    %3805 = vmatpush1.msra.mxu0 0.0
    %3806 = vmatprep.subr.mxu0 0.0
    %3807 = vmatpush1.msra.mxu0 0.0
    %3808 = vmatprep.subr.mxu0 0.0
    %3809 = vmatpush1.msra.mxu0 0.0
    %3810 = vmatprep.subr.mxu0 0.0
    %3811 = vmatpush1.msra.mxu0 0.0
    %3812 = vmatprep.subr.mxu0 0.0
    %3813 = vmatpush1.msra.mxu0 0.0
    %3814 = vmatprep.subr.mxu0 0.0
    %3815 = vmatpush1.msra.mxu0 0.0
    %3816 = vmatprep.subr.mxu0 0.0
    %3817 = vmatpush1.msra.mxu0 0.0
    %3818 = vmatprep.subr.mxu0 0.0
    %3819 = vmatpush1.msra.mxu0 0.0
    %3820 = vmatprep.subr.mxu0 0.0
    %3821 = vmatpush1.msra.mxu0 0.0
    %3822 = vmatprep.subr.mxu0 0.0
    %3823 = vmatpush1.msra.mxu0 0.0
    %3824 = vmatprep.subr.mxu0 0.0
    %3825 = vmatpush1.msra.mxu0 0.0
    %3826 = vmatprep.subr.mxu0 0.0
    %3827 = vmatpush1.msra.mxu0 0.0
    %3828 = vmatprep.subr.mxu0 0.0
    %3829 = vmatpush1.msra.mxu0 0.0
    %3830 = vmatprep.subr.mxu0 0.0
    %3831 = vmatpush1.msra.mxu0 0.0
    %3832 = vmatprep.subr.mxu0 0.0
    %3833 = vmatpush1.msra.mxu0 0.0
    %3834 = vmatprep.subr.mxu0 0.0
    %3835 = vmatpush1.msra.mxu0 0.0
    %3836 = vmatprep.subr.mxu0 0.0
    %3837 = vmatpush1.msra.mxu0 0.0
    %3838 = vmatprep.subr.mxu0 0.0
    %3839 = vmatpush1.msra.mxu0 0.0
    %3840 = vmatprep.subr.mxu0 0.0
    %3841 = vmatpush1.msra.mxu0 0.0
    %3842 = vmatprep.subr.mxu0 0.0
    %3843 = vmatpush1.msra.mxu0 0.0
    %3844 = vmatprep.subr.mxu0 0.0
    %3845 = vmatpush1.msra.mxu0 0.0
    %3846 = vmatprep.subr.mxu0 0.0
    %3847 = vmatpush1.msra.mxu0 0.0
    %3848 = vmatprep.subr.mxu0 0.0
    %3849 = vmatpush1.msra.mxu0 0.0
    %3850 = vmatprep.subr.mxu0 0.0
    %3851 = vmatpush1.msra.mxu0 0.0
    %3852 = vmatprep.subr.mxu0 0.0
    %3853 = vmatpush1.msra.mxu0 0.0
    %3854 = vmatprep.subr.mxu0 0.0
    %3855 = vmatpush1.msra.mxu0 0.0
    %3856 = vmatprep.mubr.f32.mxu0 0.0
    %3857 = vmatmul.mubr.f32.gmra.mrb[0].mxu0 %v3710
    %v3858 = vpop.f32.mrb[0].mxu0
    %v3859 = vadd.f32 0.0, %v3858
    %v3860 = vpop.f32.mrb[0].mxu0
    %v3861 = vadd.f32 0.0, %v3860
    %3862 = vmatprep.mubr.f32.mxu0 0.0
    %3863 = vmatmul.mubr.f32.gmra.mrb[0].mxu0 %v3713
    %v3864 = vpop.f32.mrb[0].mxu0
    %v3865 = vadd.f32 0.0, %v3864
    %v3866 = vpop.f32.mrb[0].mxu0
    %v3867 = vadd.f32 0.0, %v3866
    %3868 = vdwg.mxu0
    %3869 = vmatprep.subr.mxu0 0.0
    %3870 = vmatpush1.msra.mxu0 %v3699
    %3871 = vmatprep.subr.mxu0 0.0
    %3872 = vmatpush1.msra.mxu0 0.0
    %3873 = vmatprep.subr.mxu0 0.0
    %3874 = vmatpush1.msra.mxu0 0.0
    %3875 = vmatprep.subr.mxu0 0.0
    %3876 = vmatpush1.msra.mxu0 0.0
    %3877 = vmatprep.subr.mxu0 0.0
    %3878 = vmatpush1.msra.mxu0 0.0
    %3879 = vmatprep.subr.mxu0 0.0
    %3880 = vmatpush1.msra.mxu0 0.0
    %3881 = vmatprep.subr.mxu0 0.0
    %3882 = vmatpush1.msra.mxu0 0.0
    %3883 = vmatprep.subr.mxu0 0.0
    %3884 = vmatpush1.msra.mxu0 0.0
    %3885 = vmatprep.subr.mxu0 0.0
    %3886 = vmatpush1.msra.mxu0 0.0
    %3887 = vmatprep.subr.mxu0 0.0
    %3888 = vmatpush1.msra.mxu0 0.0
    %3889 = vmatprep.subr.mxu0 0.0
    %3890 = vmatpush1.msra.mxu0 0.0
    %3891 = vmatprep.subr.mxu0 0.0
    %3892 = vmatpush1.msra.mxu0 0.0
    %3893 = vmatprep.subr.mxu0 0.0
    %3894 = vmatpush1.msra.mxu0 0.0
    %3895 = vmatprep.subr.mxu0 0.0
    %3896 = vmatpush1.msra.mxu0 0.0
    %3897 = vmatprep.subr.mxu0 0.0
    %3898 = vmatpush1.msra.mxu0 0.0
    %3899 = vmatprep.subr.mxu0 0.0
    %3900 = vmatpush1.msra.mxu0 0.0
    %3901 = vmatprep.subr.mxu0 0.0
    %3902 = vmatpush1.msra.mxu0 0.0
    %3903 = vmatprep.subr.mxu0 0.0
    %3904 = vmatpush1.msra.mxu0 0.0
    %3905 = vmatprep.subr.mxu0 0.0
    %3906 = vmatpush1.msra.mxu0 0.0
    %3907 = vmatprep.subr.mxu0 0.0
    %3908 = vmatpush1.msra.mxu0 0.0
    %3909 = vmatprep.subr.mxu0 0.0
    %3910 = vmatpush1.msra.mxu0 0.0
    %3911 = vmatprep.subr.mxu0 0.0
    %3912 = vmatpush1.msra.mxu0 0.0
    %3913 = vmatprep.subr.mxu0 0.0
    %3914 = vmatpush1.msra.mxu0 0.0
    %3915 = vmatprep.subr.mxu0 0.0
    %3916 = vmatpush1.msra.mxu0 0.0
    %3917 = vmatprep.subr.mxu0 0.0
    %3918 = vmatpush1.msra.mxu0 0.0
    %3919 = vmatprep.subr.mxu0 0.0
    %3920 = vmatpush1.msra.mxu0 0.0
    %3921 = vmatprep.subr.mxu0 0.0
    %3922 = vmatpush1.msra.mxu0 0.0
    %3923 = vmatprep.subr.mxu0 0.0
    %3924 = vmatpush1.msra.mxu0 0.0
    %3925 = vmatprep.subr.mxu0 0.0
    %3926 = vmatpush1.msra.mxu0 0.0
    %3927 = vmatprep.subr.mxu0 0.0
    %3928 = vmatpush1.msra.mxu0 0.0
    %3929 = vmatprep.subr.mxu0 0.0
    %3930 = vmatpush1.msra.mxu0 0.0
    %3931 = vmatprep.subr.mxu0 0.0
    %3932 = vmatpush1.msra.mxu0 0.0
    %3933 = vmatprep.mubr.f32.mxu0 0.0
    %3934 = vmatmul.mubr.f32.gmra.mrb[0].mxu0 %v3710
    %v3935 = vpop.f32.mrb[0].mxu0
    %v3936 = vadd.f32 0.0, %v3935
    %v3937 = vpop.f32.mrb[0].mxu0
    %3938 = vmatprep.mubr.f32.mxu0 0.0
    %3939 = vmatmul.mubr.f32.gmra.mrb[0].mxu0 %v3713
    %v3940 = vpop.f32.mrb[0].mxu0
    %v3941 = vadd.f32 0.0, %v3940
    %v3942 = vpop.f32.mrb[0].mxu0
    %3943 = vdwg.mxu0
    %v3944 = vadd.f32 %v3678, %v3782
    %v3945 = vadd.f32 %v3679, %v3784
    %v3946 = vadd.f32 %v3680, %v3859
    %v3947 = vadd.f32 %v3681, %v3861
    %v3948 = vadd.f32 %v3682, %v3936
    %v3949 = vadd.f32 %v3683, %v3788
    %v3950 = vadd.f32 %v3684, %v3790
    %v3951 = vadd.f32 %v3685, %v3865
    %v3952 = vadd.f32 %v3686, %v3867
    %v3953 = vadd.f32 %v3687, %v3941
    %v3954 = vld [vmem:[%s3 + $0x60] sm:$0xff]
    %v3955 = vld [vmem:[%s3 + $0x68] sm:$0xff]
    %3956 = vrot.lane.b32.xlu0 %v2388, 96
    %v3957 = vpop.permute.xlu0 %3956
    %3958 = vrot.lane.b32.xlu0 %v2389, 96
    %v3959 = vpop.permute.xlu0 %3958
    %3960 = vrot.lane.b32.xlu0 %v2390, 96
    %v3961 = vpop.permute.xlu0 %3960
    %3962 = vrot.lane.b32.xlu0 %v2391, 96
    %v3963 = vpop.permute.xlu0 %3962
    %3964 = vrot.lane.b32.xlu0 %v2392, 96
    %v3965 = vpop.permute.xlu0 %3964
    %v3966 = vsel %vm1621, %v3957, %v3959
    %v3967 = vsel %vm1621, %v3959, %v3961
    %v3968 = vsel %vm1621, %v3961, %v3963
    %v3969 = vsel %vm1621, %v3963, %v3965
    %v3976 = vsel %vm2419, %v3954, 0
    %v3979 = vsel %vm2419, %v3955, 0
    %3981 = vmatprep.subr.mxu0 %v3967
    %3982 = vmatpush1.msra.mxu0 %v3966
    %3983 = vmatprep.subr.mxu0 0.0
    %3984 = vmatpush1.msra.mxu0 0.0
    %3985 = vmatprep.subr.mxu0 0.0
    %3986 = vmatpush1.msra.mxu0 0.0
    %3987 = vmatprep.subr.mxu0 0.0
    %3988 = vmatpush1.msra.mxu0 0.0
    %3989 = vmatprep.subr.mxu0 0.0
    %3990 = vmatpush1.msra.mxu0 0.0
    %3991 = vmatprep.subr.mxu0 0.0
    %3992 = vmatpush1.msra.mxu0 0.0
    %3993 = vmatprep.subr.mxu0 0.0
    %3994 = vmatpush1.msra.mxu0 0.0
    %3995 = vmatprep.subr.mxu0 0.0
    %3996 = vmatpush1.msra.mxu0 0.0
    %3997 = vmatprep.subr.mxu0 0.0
    %3998 = vmatpush1.msra.mxu0 0.0
    %3999 = vmatprep.subr.mxu0 0.0
    %4000 = vmatpush1.msra.mxu0 0.0
    %4001 = vmatprep.subr.mxu0 0.0
    %4002 = vmatpush1.msra.mxu0 0.0
    %4003 = vmatprep.subr.mxu0 0.0
    %4004 = vmatpush1.msra.mxu0 0.0
    %4005 = vmatprep.subr.mxu0 0.0
    %4006 = vmatpush1.msra.mxu0 0.0
    %4007 = vmatprep.subr.mxu0 0.0
    %4008 = vmatpush1.msra.mxu0 0.0
    %4009 = vmatprep.subr.mxu0 0.0
    %4010 = vmatpush1.msra.mxu0 0.0
    %4011 = vmatprep.subr.mxu0 0.0
    %4012 = vmatpush1.msra.mxu0 0.0
    %4013 = vmatprep.subr.mxu0 0.0
    %4014 = vmatpush1.msra.mxu0 0.0
    %4015 = vmatprep.subr.mxu0 0.0
    %4016 = vmatpush1.msra.mxu0 0.0
    %4017 = vmatprep.subr.mxu0 0.0
    %4018 = vmatpush1.msra.mxu0 0.0
    %4019 = vmatprep.subr.mxu0 0.0
    %4020 = vmatpush1.msra.mxu0 0.0
    %4021 = vmatprep.subr.mxu0 0.0
    %4022 = vmatpush1.msra.mxu0 0.0
    %4023 = vmatprep.subr.mxu0 0.0
    %4024 = vmatpush1.msra.mxu0 0.0
    %4025 = vmatprep.subr.mxu0 0.0
    %4026 = vmatpush1.msra.mxu0 0.0
    %4027 = vmatprep.subr.mxu0 0.0
    %4028 = vmatpush1.msra.mxu0 0.0
    %4029 = vmatprep.subr.mxu0 0.0
    %4030 = vmatpush1.msra.mxu0 0.0
    %4031 = vmatprep.subr.mxu0 0.0
    %4032 = vmatpush1.msra.mxu0 0.0
    %4033 = vmatprep.subr.mxu0 0.0
    %4034 = vmatpush1.msra.mxu0 0.0
    %4035 = vmatprep.subr.mxu0 0.0
    %4036 = vmatpush1.msra.mxu0 0.0
    %4037 = vmatprep.subr.mxu0 0.0
    %4038 = vmatpush1.msra.mxu0 0.0
    %4039 = vmatprep.subr.mxu0 0.0
    %4040 = vmatpush1.msra.mxu0 0.0
    %4041 = vmatprep.subr.mxu0 0.0
    %4042 = vmatpush1.msra.mxu0 0.0
    %4043 = vmatprep.subr.mxu0 0.0
    %4044 = vmatpush1.msra.mxu0 0.0
    %4045 = vmatprep.mubr.f32.mxu0 0.0
    %4046 = vmatmul.mubr.f32.gmra.mrb[0].mxu0 %v3976
    %v4047 = vpop.f32.mrb[0].mxu0
    %v4048 = vadd.f32 0.0, %v4047
    %v4049 = vpop.f32.mrb[0].mxu0
    %v4050 = vadd.f32 0.0, %v4049
    %4051 = vmatprep.mubr.f32.mxu0 0.0
    %4052 = vmatmul.mubr.f32.gmra.mrb[0].mxu0 %v3979
    %v4053 = vpop.f32.mrb[0].mxu0
    %v4054 = vadd.f32 0.0, %v4053
    %v4055 = vpop.f32.mrb[0].mxu0
    %v4056 = vadd.f32 0.0, %v4055
    %4057 = vdwg.mxu0
    %4058 = vmatprep.subr.mxu0 %v3969
    %4059 = vmatpush1.msra.mxu0 %v3968
    %4060 = vmatprep.subr.mxu0 0.0
    %4061 = vmatpush1.msra.mxu0 0.0
    %4062 = vmatprep.subr.mxu0 0.0
    %4063 = vmatpush1.msra.mxu0 0.0
    %4064 = vmatprep.subr.mxu0 0.0
    %4065 = vmatpush1.msra.mxu0 0.0
    %4066 = vmatprep.subr.mxu0 0.0
    %4067 = vmatpush1.msra.mxu0 0.0
    %4068 = vmatprep.subr.mxu0 0.0
    %4069 = vmatpush1.msra.mxu0 0.0
    %4070 = vmatprep.subr.mxu0 0.0
    %4071 = vmatpush1.msra.mxu0 0.0
    %4072 = vmatprep.subr.mxu0 0.0
    %4073 = vmatpush1.msra.mxu0 0.0
    %4074 = vmatprep.subr.mxu0 0.0
    %4075 = vmatpush1.msra.mxu0 0.0
    %4076 = vmatprep.subr.mxu0 0.0
    %4077 = vmatpush1.msra.mxu0 0.0
    %4078 = vmatprep.subr.mxu0 0.0
    %4079 = vmatpush1.msra.mxu0 0.0
    %4080 = vmatprep.subr.mxu0 0.0
    %4081 = vmatpush1.msra.mxu0 0.0
    %4082 = vmatprep.subr.mxu0 0.0
    %4083 = vmatpush1.msra.mxu0 0.0
    %4084 = vmatprep.subr.mxu0 0.0
    %4085 = vmatpush1.msra.mxu0 0.0
    %4086 = vmatprep.subr.mxu0 0.0
    %4087 = vmatpush1.msra.mxu0 0.0
    %4088 = vmatprep.subr.mxu0 0.0
    %4089 = vmatpush1.msra.mxu0 0.0
    %4090 = vmatprep.subr.mxu0 0.0
    %4091 = vmatpush1.msra.mxu0 0.0
    %4092 = vmatprep.subr.mxu0 0.0
    %4093 = vmatpush1.msra.mxu0 0.0
    %4094 = vmatprep.subr.mxu0 0.0
    %4095 = vmatpush1.msra.mxu0 0.0
    %4096 = vmatprep.subr.mxu0 0.0
    %4097 = vmatpush1.msra.mxu0 0.0
    %4098 = vmatprep.subr.mxu0 0.0
    %4099 = vmatpush1.msra.mxu0 0.0
    %4100 = vmatprep.subr.mxu0 0.0
    %4101 = vmatpush1.msra.mxu0 0.0
    %4102 = vmatprep.subr.mxu0 0.0
    %4103 = vmatpush1.msra.mxu0 0.0
    %4104 = vmatprep.subr.mxu0 0.0
    %4105 = vmatpush1.msra.mxu0 0.0
    %4106 = vmatprep.subr.mxu0 0.0
    %4107 = vmatpush1.msra.mxu0 0.0
    %4108 = vmatprep.subr.mxu0 0.0
    %4109 = vmatpush1.msra.mxu0 0.0
    %4110 = vmatprep.subr.mxu0 0.0
    %4111 = vmatpush1.msra.mxu0 0.0
    %4112 = vmatprep.subr.mxu0 0.0
    %4113 = vmatpush1.msra.mxu0 0.0
    %4114 = vmatprep.subr.mxu0 0.0
    %4115 = vmatpush1.msra.mxu0 0.0
    %4116 = vmatprep.subr.mxu0 0.0
    %4117 = vmatpush1.msra.mxu0 0.0
    %4118 = vmatprep.subr.mxu0 0.0
    %4119 = vmatpush1.msra.mxu0 0.0
    %4120 = vmatprep.subr.mxu0 0.0
    %4121 = vmatpush1.msra.mxu0 0.0
    %4122 = vmatprep.mubr.f32.mxu0 0.0
    %4123 = vmatmul.mubr.f32.gmra.mrb[0].mxu0 %v3976
    %v4124 = vpop.f32.mrb[0].mxu0
    %v4125 = vadd.f32 0.0, %v4124
    %v4126 = vpop.f32.mrb[0].mxu0
    %v4127 = vadd.f32 0.0, %v4126
    %4128 = vmatprep.mubr.f32.mxu0 0.0
    %4129 = vmatmul.mubr.f32.gmra.mrb[0].mxu0 %v3979
    %v4130 = vpop.f32.mrb[0].mxu0
    %v4131 = vadd.f32 0.0, %v4130
    %v4132 = vpop.f32.mrb[0].mxu0
    %v4133 = vadd.f32 0.0, %v4132
    %4134 = vdwg.mxu0
    %4135 = vmatprep.subr.mxu0 0.0
    %4136 = vmatpush1.msra.mxu0 %v3965
    %4137 = vmatprep.subr.mxu0 0.0
    %4138 = vmatpush1.msra.mxu0 0.0
    %4139 = vmatprep.subr.mxu0 0.0
    %4140 = vmatpush1.msra.mxu0 0.0
    %4141 = vmatprep.subr.mxu0 0.0
    %4142 = vmatpush1.msra.mxu0 0.0
    %4143 = vmatprep.subr.mxu0 0.0
    %4144 = vmatpush1.msra.mxu0 0.0
    %4145 = vmatprep.subr.mxu0 0.0
    %4146 = vmatpush1.msra.mxu0 0.0
    %4147 = vmatprep.subr.mxu0 0.0
    %4148 = vmatpush1.msra.mxu0 0.0
    %4149 = vmatprep.subr.mxu0 0.0
    %4150 = vmatpush1.msra.mxu0 0.0
    %4151 = vmatprep.subr.mxu0 0.0
    %4152 = vmatpush1.msra.mxu0 0.0
    %4153 = vmatprep.subr.mxu0 0.0
    %4154 = vmatpush1.msra.mxu0 0.0
    %4155 = vmatprep.subr.mxu0 0.0
    %4156 = vmatpush1.msra.mxu0 0.0
    %4157 = vmatprep.subr.mxu0 0.0
    %4158 = vmatpush1.msra.mxu0 0.0
    %4159 = vmatprep.subr.mxu0 0.0
    %4160 = vmatpush1.msra.mxu0 0.0
    %4161 = vmatprep.subr.mxu0 0.0
    %4162 = vmatpush1.msra.mxu0 0.0
    %4163 = vmatprep.subr.mxu0 0.0
    %4164 = vmatpush1.msra.mxu0 0.0
    %4165 = vmatprep.subr.mxu0 0.0
    %4166 = vmatpush1.msra.mxu0 0.0
    %4167 = vmatprep.subr.mxu0 0.0
    %4168 = vmatpush1.msra.mxu0 0.0
    %4169 = vmatprep.subr.mxu0 0.0
    %4170 = vmatpush1.msra.mxu0 0.0
    %4171 = vmatprep.subr.mxu0 0.0
    %4172 = vmatpush1.msra.mxu0 0.0
    %4173 = vmatprep.subr.mxu0 0.0
    %4174 = vmatpush1.msra.mxu0 0.0
    %4175 = vmatprep.subr.mxu0 0.0
    %4176 = vmatpush1.msra.mxu0 0.0
    %4177 = vmatprep.subr.mxu0 0.0
    %4178 = vmatpush1.msra.mxu0 0.0
    %4179 = vmatprep.subr.mxu0 0.0
    %4180 = vmatpush1.msra.mxu0 0.0
    %4181 = vmatprep.subr.mxu0 0.0
    %4182 = vmatpush1.msra.mxu0 0.0
    %4183 = vmatprep.subr.mxu0 0.0
    %4184 = vmatpush1.msra.mxu0 0.0
    %4185 = vmatprep.subr.mxu0 0.0
    %4186 = vmatpush1.msra.mxu0 0.0
    %4187 = vmatprep.subr.mxu0 0.0
    %4188 = vmatpush1.msra.mxu0 0.0
    %4189 = vmatprep.subr.mxu0 0.0
    %4190 = vmatpush1.msra.mxu0 0.0
    %4191 = vmatprep.subr.mxu0 0.0
    %4192 = vmatpush1.msra.mxu0 0.0
    %4193 = vmatprep.subr.mxu0 0.0
    %4194 = vmatpush1.msra.mxu0 0.0
    %4195 = vmatprep.subr.mxu0 0.0
    %4196 = vmatpush1.msra.mxu0 0.0
    %4197 = vmatprep.subr.mxu0 0.0
    %4198 = vmatpush1.msra.mxu0 0.0
    %4199 = vmatprep.mubr.f32.mxu0 0.0
    %4200 = vmatmul.mubr.f32.gmra.mrb[0].mxu0 %v3976
    %v4201 = vpop.f32.mrb[0].mxu0
    %v4202 = vadd.f32 0.0, %v4201
    %v4203 = vpop.f32.mrb[0].mxu0
    %4204 = vmatprep.mubr.f32.mxu0 0.0
    %4205 = vmatmul.mubr.f32.gmra.mrb[0].mxu0 %v3979
    %v4206 = vpop.f32.mrb[0].mxu0
    %v4207 = vadd.f32 0.0, %v4206
    %v4208 = vpop.f32.mrb[0].mxu0
    %4209 = vdwg.mxu0
    %v4210 = vadd.f32 %v3944, %v4048
    %v4211 = vadd.f32 %v3945, %v4050
    %v4212 = vadd.f32 %v3946, %v4125
    %v4213 = vadd.f32 %v3947, %v4127
    %v4214 = vadd.f32 %v3948, %v4202
    %v4215 = vadd.f32 %v3949, %v4054
    %v4216 = vadd.f32 %v3950, %v4056
    %v4217 = vadd.f32 %v3951, %v4131
    %v4218 = vadd.f32 %v3952, %v4133
    %v4219 = vadd.f32 %v3953, %v4207
    %v4220 = vld [vmem:[%s3 + $0x70] sm:$0xff]
    %v4221 = vld [vmem:[%s3 + $0x78] sm:$0xff]
    %4222 = vrot.lane.b32.xlu0 %v2388, 95
    %v4223 = vpop.permute.xlu0 %4222
    %4224 = vrot.lane.b32.xlu0 %v2389, 95
    %v4225 = vpop.permute.xlu0 %4224
    %4226 = vrot.lane.b32.xlu0 %v2390, 95
    %v4227 = vpop.permute.xlu0 %4226
    %4228 = vrot.lane.b32.xlu0 %v2391, 95
    %v4229 = vpop.permute.xlu0 %4228
    %4230 = vrot.lane.b32.xlu0 %v2392, 95
    %v4231 = vpop.permute.xlu0 %4230
    %v4232 = vsel %vm1875, %v4223, %v4225
    %v4233 = vsel %vm1875, %v4225, %v4227
    %v4234 = vsel %vm1875, %v4227, %v4229
    %v4235 = vsel %vm1875, %v4229, %v4231
    %v4242 = vsel %vm2419, %v4220, 0
    %v4245 = vsel %vm2419, %v4221, 0
    %4247 = vmatprep.subr.mxu0 %v4233
    %4248 = vmatpush1.msra.mxu0 %v4232
    %4249 = vmatprep.subr.mxu0 0.0
    %4250 = vmatpush1.msra.mxu0 0.0
    %4251 = vmatprep.subr.mxu0 0.0
    %4252 = vmatpush1.msra.mxu0 0.0
    %4253 = vmatprep.subr.mxu0 0.0
    %4254 = vmatpush1.msra.mxu0 0.0
    %4255 = vmatprep.subr.mxu0 0.0
    %4256 = vmatpush1.msra.mxu0 0.0
    %4257 = vmatprep.subr.mxu0 0.0
    %4258 = vmatpush1.msra.mxu0 0.0
    %4259 = vmatprep.subr.mxu0 0.0
    %4260 = vmatpush1.msra.mxu0 0.0
    %4261 = vmatprep.subr.mxu0 0.0
    %4262 = vmatpush1.msra.mxu0 0.0
    %4263 = vmatprep.subr.mxu0 0.0
    %4264 = vmatpush1.msra.mxu0 0.0
    %4265 = vmatprep.subr.mxu0 0.0
    %4266 = vmatpush1.msra.mxu0 0.0
    %4267 = vmatprep.subr.mxu0 0.0
    %4268 = vmatpush1.msra.mxu0 0.0
    %4269 = vmatprep.subr.mxu0 0.0
    %4270 = vmatpush1.msra.mxu0 0.0
    %4271 = vmatprep.subr.mxu0 0.0
    %4272 = vmatpush1.msra.mxu0 0.0
    %4273 = vmatprep.subr.mxu0 0.0
    %4274 = vmatpush1.msra.mxu0 0.0
    %4275 = vmatprep.subr.mxu0 0.0
    %4276 = vmatpush1.msra.mxu0 0.0
    %4277 = vmatprep.subr.mxu0 0.0
    %4278 = vmatpush1.msra.mxu0 0.0
    %4279 = vmatprep.subr.mxu0 0.0
    %4280 = vmatpush1.msra.mxu0 0.0
    %4281 = vmatprep.subr.mxu0 0.0
    %4282 = vmatpush1.msra.mxu0 0.0
    %4283 = vmatprep.subr.mxu0 0.0
    %4284 = vmatpush1.msra.mxu0 0.0
    %4285 = vmatprep.subr.mxu0 0.0
    %4286 = vmatpush1.msra.mxu0 0.0
    %4287 = vmatprep.subr.mxu0 0.0
    %4288 = vmatpush1.msra.mxu0 0.0
    %4289 = vmatprep.subr.mxu0 0.0
    %4290 = vmatpush1.msra.mxu0 0.0
    %4291 = vmatprep.subr.mxu0 0.0
    %4292 = vmatpush1.msra.mxu0 0.0
    %4293 = vmatprep.subr.mxu0 0.0
    %4294 = vmatpush1.msra.mxu0 0.0
    %4295 = vmatprep.subr.mxu0 0.0
    %4296 = vmatpush1.msra.mxu0 0.0
    %4297 = vmatprep.subr.mxu0 0.0
    %4298 = vmatpush1.msra.mxu0 0.0
    %4299 = vmatprep.subr.mxu0 0.0
    %4300 = vmatpush1.msra.mxu0 0.0
    %4301 = vmatprep.subr.mxu0 0.0
    %4302 = vmatpush1.msra.mxu0 0.0
    %4303 = vmatprep.subr.mxu0 0.0
    %4304 = vmatpush1.msra.mxu0 0.0
    %4305 = vmatprep.subr.mxu0 0.0
    %4306 = vmatpush1.msra.mxu0 0.0
    %4307 = vmatprep.subr.mxu0 0.0
    %4308 = vmatpush1.msra.mxu0 0.0
    %4309 = vmatprep.subr.mxu0 0.0
    %4310 = vmatpush1.msra.mxu0 0.0
    %4311 = vmatprep.mubr.f32.mxu0 0.0
    %4312 = vmatmul.mubr.f32.gmra.mrb[0].mxu0 %v4242
    %v4313 = vpop.f32.mrb[0].mxu0
    %v4314 = vadd.f32 0.0, %v4313
    %v4315 = vpop.f32.mrb[0].mxu0
    %v4316 = vadd.f32 0.0, %v4315
    %4317 = vmatprep.mubr.f32.mxu0 0.0
    %4318 = vmatmul.mubr.f32.gmra.mrb[0].mxu0 %v4245
    %v4319 = vpop.f32.mrb[0].mxu0
    %v4320 = vadd.f32 0.0, %v4319
    %v4321 = vpop.f32.mrb[0].mxu0
    %v4322 = vadd.f32 0.0, %v4321
    %4323 = vdwg.mxu0
    %4324 = vmatprep.subr.mxu0 %v4235
    %4325 = vmatpush1.msra.mxu0 %v4234
    %4326 = vmatprep.subr.mxu0 0.0
    %4327 = vmatpush1.msra.mxu0 0.0
    %4328 = vmatprep.subr.mxu0 0.0
    %4329 = vmatpush1.msra.mxu0 0.0
    %4330 = vmatprep.subr.mxu0 0.0
    %4331 = vmatpush1.msra.mxu0 0.0
    %4332 = vmatprep.subr.mxu0 0.0
    %4333 = vmatpush1.msra.mxu0 0.0
    %4334 = vmatprep.subr.mxu0 0.0
    %4335 = vmatpush1.msra.mxu0 0.0
    %4336 = vmatprep.subr.mxu0 0.0
    %4337 = vmatpush1.msra.mxu0 0.0
    %4338 = vmatprep.subr.mxu0 0.0
    %4339 = vmatpush1.msra.mxu0 0.0
    %4340 = vmatprep.subr.mxu0 0.0
    %4341 = vmatpush1.msra.mxu0 0.0
    %4342 = vmatprep.subr.mxu0 0.0
    %4343 = vmatpush1.msra.mxu0 0.0
    %4344 = vmatprep.subr.mxu0 0.0
    %4345 = vmatpush1.msra.mxu0 0.0
    %4346 = vmatprep.subr.mxu0 0.0
    %4347 = vmatpush1.msra.mxu0 0.0
    %4348 = vmatprep.subr.mxu0 0.0
    %4349 = vmatpush1.msra.mxu0 0.0
    %4350 = vmatprep.subr.mxu0 0.0
    %4351 = vmatpush1.msra.mxu0 0.0
    %4352 = vmatprep.subr.mxu0 0.0
    %4353 = vmatpush1.msra.mxu0 0.0
    %4354 = vmatprep.subr.mxu0 0.0
    %4355 = vmatpush1.msra.mxu0 0.0
    %4356 = vmatprep.subr.mxu0 0.0
    %4357 = vmatpush1.msra.mxu0 0.0
    %4358 = vmatprep.subr.mxu0 0.0
    %4359 = vmatpush1.msra.mxu0 0.0
    %4360 = vmatprep.subr.mxu0 0.0
    %4361 = vmatpush1.msra.mxu0 0.0
    %4362 = vmatprep.subr.mxu0 0.0
    %4363 = vmatpush1.msra.mxu0 0.0
    %4364 = vmatprep.subr.mxu0 0.0
    %4365 = vmatpush1.msra.mxu0 0.0
    %4366 = vmatprep.subr.mxu0 0.0
    %4367 = vmatpush1.msra.mxu0 0.0
    %4368 = vmatprep.subr.mxu0 0.0
    %4369 = vmatpush1.msra.mxu0 0.0
    %4370 = vmatprep.subr.mxu0 0.0
    %4371 = vmatpush1.msra.mxu0 0.0
    %4372 = vmatprep.subr.mxu0 0.0
    %4373 = vmatpush1.msra.mxu0 0.0
    %4374 = vmatprep.subr.mxu0 0.0
    %4375 = vmatpush1.msra.mxu0 0.0
    %4376 = vmatprep.subr.mxu0 0.0
    %4377 = vmatpush1.msra.mxu0 0.0
    %4378 = vmatprep.subr.mxu0 0.0
    %4379 = vmatpush1.msra.mxu0 0.0
    %4380 = vmatprep.subr.mxu0 0.0
    %4381 = vmatpush1.msra.mxu0 0.0
    %4382 = vmatprep.subr.mxu0 0.0
    %4383 = vmatpush1.msra.mxu0 0.0
    %4384 = vmatprep.subr.mxu0 0.0
    %4385 = vmatpush1.msra.mxu0 0.0
    %4386 = vmatprep.subr.mxu0 0.0
    %4387 = vmatpush1.msra.mxu0 0.0
    %4388 = vmatprep.mubr.f32.mxu0 0.0
    %4389 = vmatmul.mubr.f32.gmra.mrb[0].mxu0 %v4242
    %v4390 = vpop.f32.mrb[0].mxu0
    %v4391 = vadd.f32 0.0, %v4390
    %v4392 = vpop.f32.mrb[0].mxu0
    %v4393 = vadd.f32 0.0, %v4392
    %4394 = vmatprep.mubr.f32.mxu0 0.0
    %4395 = vmatmul.mubr.f32.gmra.mrb[0].mxu0 %v4245
    %v4396 = vpop.f32.mrb[0].mxu0
    %v4397 = vadd.f32 0.0, %v4396
    %v4398 = vpop.f32.mrb[0].mxu0
    %v4399 = vadd.f32 0.0, %v4398
    %4400 = vdwg.mxu0
    %4401 = vmatprep.subr.mxu0 0.0
    %4402 = vmatpush1.msra.mxu0 %v4231
    %4403 = vmatprep.subr.mxu0 0.0
    %4404 = vmatpush1.msra.mxu0 0.0
    %4405 = vmatprep.subr.mxu0 0.0
    %4406 = vmatpush1.msra.mxu0 0.0
    %4407 = vmatprep.subr.mxu0 0.0
    %4408 = vmatpush1.msra.mxu0 0.0
    %4409 = vmatprep.subr.mxu0 0.0
    %4410 = vmatpush1.msra.mxu0 0.0
    %4411 = vmatprep.subr.mxu0 0.0
    %4412 = vmatpush1.msra.mxu0 0.0
    %4413 = vmatprep.subr.mxu0 0.0
    %4414 = vmatpush1.msra.mxu0 0.0
    %4415 = vmatprep.subr.mxu0 0.0
    %4416 = vmatpush1.msra.mxu0 0.0
    %4417 = vmatprep.subr.mxu0 0.0
    %4418 = vmatpush1.msra.mxu0 0.0
    %4419 = vmatprep.subr.mxu0 0.0
    %4420 = vmatpush1.msra.mxu0 0.0
    %4421 = vmatprep.subr.mxu0 0.0
    %4422 = vmatpush1.msra.mxu0 0.0
    %4423 = vmatprep.subr.mxu0 0.0
    %4424 = vmatpush1.msra.mxu0 0.0
    %4425 = vmatprep.subr.mxu0 0.0
    %4426 = vmatpush1.msra.mxu0 0.0
    %4427 = vmatprep.subr.mxu0 0.0
    %4428 = vmatpush1.msra.mxu0 0.0
    %4429 = vmatprep.subr.mxu0 0.0
    %4430 = vmatpush1.msra.mxu0 0.0
    %4431 = vmatprep.subr.mxu0 0.0
    %4432 = vmatpush1.msra.mxu0 0.0
    %4433 = vmatprep.subr.mxu0 0.0
    %4434 = vmatpush1.msra.mxu0 0.0
    %4435 = vmatprep.subr.mxu0 0.0
    %4436 = vmatpush1.msra.mxu0 0.0
    %4437 = vmatprep.subr.mxu0 0.0
    %4438 = vmatpush1.msra.mxu0 0.0
    %4439 = vmatprep.subr.mxu0 0.0
    %4440 = vmatpush1.msra.mxu0 0.0
    %4441 = vmatprep.subr.mxu0 0.0
    %4442 = vmatpush1.msra.mxu0 0.0
    %4443 = vmatprep.subr.mxu0 0.0
    %4444 = vmatpush1.msra.mxu0 0.0
    %4445 = vmatprep.subr.mxu0 0.0
    %4446 = vmatpush1.msra.mxu0 0.0
    %4447 = vmatprep.subr.mxu0 0.0
    %4448 = vmatpush1.msra.mxu0 0.0
    %4449 = vmatprep.subr.mxu0 0.0
    %4450 = vmatpush1.msra.mxu0 0.0
    %4451 = vmatprep.subr.mxu0 0.0
    %4452 = vmatpush1.msra.mxu0 0.0
    %4453 = vmatprep.subr.mxu0 0.0
    %4454 = vmatpush1.msra.mxu0 0.0
    %4455 = vmatprep.subr.mxu0 0.0
    %4456 = vmatpush1.msra.mxu0 0.0
    %4457 = vmatprep.subr.mxu0 0.0
    %4458 = vmatpush1.msra.mxu0 0.0
    %4459 = vmatprep.subr.mxu0 0.0
    %4460 = vmatpush1.msra.mxu0 0.0
    %4461 = vmatprep.subr.mxu0 0.0
    %4462 = vmatpush1.msra.mxu0 0.0
    %4463 = vmatprep.subr.mxu0 0.0
    %4464 = vmatpush1.msra.mxu0 0.0
    %4465 = vmatprep.mubr.f32.mxu0 0.0
    %4466 = vmatmul.mubr.f32.gmra.mrb[0].mxu0 %v4242
    %v4467 = vpop.f32.mrb[0].mxu0
    %v4468 = vadd.f32 0.0, %v4467
    %v4469 = vpop.f32.mrb[0].mxu0
    %4470 = vmatprep.mubr.f32.mxu0 0.0
    %4471 = vmatmul.mubr.f32.gmra.mrb[0].mxu0 %v4245
    %v4472 = vpop.f32.mrb[0].mxu0
    %v4473 = vadd.f32 0.0, %v4472
    %v4474 = vpop.f32.mrb[0].mxu0
    %4475 = vdwg.mxu0
    %v4476 = vadd.f32 %v4210, %v4314
    %v4477 = vadd.f32 %v4211, %v4316
    %v4478 = vadd.f32 %v4212, %v4391
    %v4479 = vadd.f32 %v4213, %v4393
    %v4480 = vadd.f32 %v4214, %v4468
    %v4481 = vadd.f32 %v4215, %v4320
    %v4482 = vadd.f32 %v4216, %v4322
    %v4483 = vadd.f32 %v4217, %v4397
    %v4484 = vadd.f32 %v4218, %v4399
    %v4485 = vadd.f32 %v4219, %v4473
    %v4486 = vld [vmem:[%s3 + $0x80] sm:$0xff]
    %v4487 = vld [vmem:[%s3 + $0x88] sm:$0xff]
    %4488 = vrot.lane.b32.xlu0 %v2388, 94
    %v4489 = vpop.permute.xlu0 %4488
    %4490 = vrot.lane.b32.xlu0 %v2389, 94
    %v4491 = vpop.permute.xlu0 %4490
    %4492 = vrot.lane.b32.xlu0 %v2390, 94
    %v4493 = vpop.permute.xlu0 %4492
    %4494 = vrot.lane.b32.xlu0 %v2391, 94
    %v4495 = vpop.permute.xlu0 %4494
    %4496 = vrot.lane.b32.xlu0 %v2392, 94
    %v4497 = vpop.permute.xlu0 %4496
    %v4498 = vsel %vm2129, %v4489, %v4491
    %v4499 = vsel %vm2129, %v4491, %v4493
    %v4500 = vsel %vm2129, %v4493, %v4495
    %v4501 = vsel %vm2129, %v4495, %v4497
    %v4508 = vsel %vm2419, %v4486, 0
    %v4511 = vsel %vm2419, %v4487, 0
    %4513 = vmatprep.subr.mxu0 %v4499
    %4514 = vmatpush1.msra.mxu0 %v4498
    %4515 = vmatprep.subr.mxu0 0.0
    %4516 = vmatpush1.msra.mxu0 0.0
    %4517 = vmatprep.subr.mxu0 0.0
    %4518 = vmatpush1.msra.mxu0 0.0
    %4519 = vmatprep.subr.mxu0 0.0
    %4520 = vmatpush1.msra.mxu0 0.0
    %4521 = vmatprep.subr.mxu0 0.0
    %4522 = vmatpush1.msra.mxu0 0.0
    %4523 = vmatprep.subr.mxu0 0.0
    %4524 = vmatpush1.msra.mxu0 0.0
    %4525 = vmatprep.subr.mxu0 0.0
    %4526 = vmatpush1.msra.mxu0 0.0
    %4527 = vmatprep.subr.mxu0 0.0
    %4528 = vmatpush1.msra.mxu0 0.0
    %4529 = vmatprep.subr.mxu0 0.0
    %4530 = vmatpush1.msra.mxu0 0.0
    %4531 = vmatprep.subr.mxu0 0.0
    %4532 = vmatpush1.msra.mxu0 0.0
    %4533 = vmatprep.subr.mxu0 0.0
    %4534 = vmatpush1.msra.mxu0 0.0
    %4535 = vmatprep.subr.mxu0 0.0
    %4536 = vmatpush1.msra.mxu0 0.0
    %4537 = vmatprep.subr.mxu0 0.0
    %4538 = vmatpush1.msra.mxu0 0.0
    %4539 = vmatprep.subr.mxu0 0.0
    %4540 = vmatpush1.msra.mxu0 0.0
    %4541 = vmatprep.subr.mxu0 0.0
    %4542 = vmatpush1.msra.mxu0 0.0
    %4543 = vmatprep.subr.mxu0 0.0
    %4544 = vmatpush1.msra.mxu0 0.0
    %4545 = vmatprep.subr.mxu0 0.0
    %4546 = vmatpush1.msra.mxu0 0.0
    %4547 = vmatprep.subr.mxu0 0.0
    %4548 = vmatpush1.msra.mxu0 0.0
    %4549 = vmatprep.subr.mxu0 0.0
    %4550 = vmatpush1.msra.mxu0 0.0
    %4551 = vmatprep.subr.mxu0 0.0
    %4552 = vmatpush1.msra.mxu0 0.0
    %4553 = vmatprep.subr.mxu0 0.0
    %4554 = vmatpush1.msra.mxu0 0.0
    %4555 = vmatprep.subr.mxu0 0.0
    %4556 = vmatpush1.msra.mxu0 0.0
    %4557 = vmatprep.subr.mxu0 0.0
    %4558 = vmatpush1.msra.mxu0 0.0
    %4559 = vmatprep.subr.mxu0 0.0
    %4560 = vmatpush1.msra.mxu0 0.0
    %4561 = vmatprep.subr.mxu0 0.0
    %4562 = vmatpush1.msra.mxu0 0.0
    %4563 = vmatprep.subr.mxu0 0.0
    %4564 = vmatpush1.msra.mxu0 0.0
    %4565 = vmatprep.subr.mxu0 0.0
    %4566 = vmatpush1.msra.mxu0 0.0
    %4567 = vmatprep.subr.mxu0 0.0
    %4568 = vmatpush1.msra.mxu0 0.0
    %4569 = vmatprep.subr.mxu0 0.0
    %4570 = vmatpush1.msra.mxu0 0.0
    %4571 = vmatprep.subr.mxu0 0.0
    %4572 = vmatpush1.msra.mxu0 0.0
    %4573 = vmatprep.subr.mxu0 0.0
    %4574 = vmatpush1.msra.mxu0 0.0
    %4575 = vmatprep.subr.mxu0 0.0
    %4576 = vmatpush1.msra.mxu0 0.0
    %4577 = vmatprep.mubr.f32.mxu0 0.0
    %4578 = vmatmul.mubr.f32.gmra.mrb[0].mxu0 %v4508
    %v4579 = vpop.f32.mrb[0].mxu0
    %v4580 = vadd.f32 0.0, %v4579
    %v4581 = vpop.f32.mrb[0].mxu0
    %v4582 = vadd.f32 0.0, %v4581
    %4583 = vmatprep.mubr.f32.mxu0 0.0
    %4584 = vmatmul.mubr.f32.gmra.mrb[0].mxu0 %v4511
    %v4585 = vpop.f32.mrb[0].mxu0
    %v4586 = vadd.f32 0.0, %v4585
    %v4587 = vpop.f32.mrb[0].mxu0
    %v4588 = vadd.f32 0.0, %v4587
    %4589 = vdwg.mxu0
    %4590 = vmatprep.subr.mxu0 %v4501
    %4591 = vmatpush1.msra.mxu0 %v4500
    %4592 = vmatprep.subr.mxu0 0.0
    %4593 = vmatpush1.msra.mxu0 0.0
    %4594 = vmatprep.subr.mxu0 0.0
    %4595 = vmatpush1.msra.mxu0 0.0
    %4596 = vmatprep.subr.mxu0 0.0
    %4597 = vmatpush1.msra.mxu0 0.0
    %4598 = vmatprep.subr.mxu0 0.0
    %4599 = vmatpush1.msra.mxu0 0.0
    %4600 = vmatprep.subr.mxu0 0.0
    %4601 = vmatpush1.msra.mxu0 0.0
    %4602 = vmatprep.subr.mxu0 0.0
    %4603 = vmatpush1.msra.mxu0 0.0
    %4604 = vmatprep.subr.mxu0 0.0
    %4605 = vmatpush1.msra.mxu0 0.0
    %4606 = vmatprep.subr.mxu0 0.0
    %4607 = vmatpush1.msra.mxu0 0.0
    %4608 = vmatprep.subr.mxu0 0.0
    %4609 = vmatpush1.msra.mxu0 0.0
    %4610 = vmatprep.subr.mxu0 0.0
    %4611 = vmatpush1.msra.mxu0 0.0
    %4612 = vmatprep.subr.mxu0 0.0
    %4613 = vmatpush1.msra.mxu0 0.0
    %4614 = vmatprep.subr.mxu0 0.0
    %4615 = vmatpush1.msra.mxu0 0.0
    %4616 = vmatprep.subr.mxu0 0.0
    %4617 = vmatpush1.msra.mxu0 0.0
    %4618 = vmatprep.subr.mxu0 0.0
    %4619 = vmatpush1.msra.mxu0 0.0
    %4620 = vmatprep.subr.mxu0 0.0
    %4621 = vmatpush1.msra.mxu0 0.0
    %4622 = vmatprep.subr.mxu0 0.0
    %4623 = vmatpush1.msra.mxu0 0.0
    %4624 = vmatprep.subr.mxu0 0.0
    %4625 = vmatpush1.msra.mxu0 0.0
    %4626 = vmatprep.subr.mxu0 0.0
    %4627 = vmatpush1.msra.mxu0 0.0
    %4628 = vmatprep.subr.mxu0 0.0
    %4629 = vmatpush1.msra.mxu0 0.0
    %4630 = vmatprep.subr.mxu0 0.0
    %4631 = vmatpush1.msra.mxu0 0.0
    %4632 = vmatprep.subr.mxu0 0.0
    %4633 = vmatpush1.msra.mxu0 0.0
    %4634 = vmatprep.subr.mxu0 0.0
    %4635 = vmatpush1.msra.mxu0 0.0
    %4636 = vmatprep.subr.mxu0 0.0
    %4637 = vmatpush1.msra.mxu0 0.0
    %4638 = vmatprep.subr.mxu0 0.0
    %4639 = vmatpush1.msra.mxu0 0.0
    %4640 = vmatprep.subr.mxu0 0.0
    %4641 = vmatpush1.msra.mxu0 0.0
    %4642 = vmatprep.subr.mxu0 0.0
    %4643 = vmatpush1.msra.mxu0 0.0
    %4644 = vmatprep.subr.mxu0 0.0
    %4645 = vmatpush1.msra.mxu0 0.0
    %4646 = vmatprep.subr.mxu0 0.0
    %4647 = vmatpush1.msra.mxu0 0.0
    %4648 = vmatprep.subr.mxu0 0.0
    %4649 = vmatpush1.msra.mxu0 0.0
    %4650 = vmatprep.subr.mxu0 0.0
    %4651 = vmatpush1.msra.mxu0 0.0
    %4652 = vmatprep.subr.mxu0 0.0
    %4653 = vmatpush1.msra.mxu0 0.0
    %4654 = vmatprep.mubr.f32.mxu0 0.0
    %4655 = vmatmul.mubr.f32.gmra.mrb[0].mxu0 %v4508
    %v4656 = vpop.f32.mrb[0].mxu0
    %v4657 = vadd.f32 0.0, %v4656
    %v4658 = vpop.f32.mrb[0].mxu0
    %v4659 = vadd.f32 0.0, %v4658
    %4660 = vmatprep.mubr.f32.mxu0 0.0
    %4661 = vmatmul.mubr.f32.gmra.mrb[0].mxu0 %v4511
    %v4662 = vpop.f32.mrb[0].mxu0
    %v4663 = vadd.f32 0.0, %v4662
    %v4664 = vpop.f32.mrb[0].mxu0
    %v4665 = vadd.f32 0.0, %v4664
    %4666 = vdwg.mxu0
    %4667 = vmatprep.subr.mxu0 0.0
    %4668 = vmatpush1.msra.mxu0 %v4497
    %4669 = vmatprep.subr.mxu0 0.0
    %4670 = vmatpush1.msra.mxu0 0.0
    %4671 = vmatprep.subr.mxu0 0.0
    %4672 = vmatpush1.msra.mxu0 0.0
    %4673 = vmatprep.subr.mxu0 0.0
    %4674 = vmatpush1.msra.mxu0 0.0
    %4675 = vmatprep.subr.mxu0 0.0
    %4676 = vmatpush1.msra.mxu0 0.0
    %4677 = vmatprep.subr.mxu0 0.0
    %4678 = vmatpush1.msra.mxu0 0.0
    %4679 = vmatprep.subr.mxu0 0.0
    %4680 = vmatpush1.msra.mxu0 0.0
    %4681 = vmatprep.subr.mxu0 0.0
    %4682 = vmatpush1.msra.mxu0 0.0
    %4683 = vmatprep.subr.mxu0 0.0
    %4684 = vmatpush1.msra.mxu0 0.0
    %4685 = vmatprep.subr.mxu0 0.0
    %4686 = vmatpush1.msra.mxu0 0.0
    %4687 = vmatprep.subr.mxu0 0.0
    %4688 = vmatpush1.msra.mxu0 0.0
    %4689 = vmatprep.subr.mxu0 0.0
    %4690 = vmatpush1.msra.mxu0 0.0
    %4691 = vmatprep.subr.mxu0 0.0
    %4692 = vmatpush1.msra.mxu0 0.0
    %4693 = vmatprep.subr.mxu0 0.0
    %4694 = vmatpush1.msra.mxu0 0.0
    %4695 = vmatprep.subr.mxu0 0.0
    %4696 = vmatpush1.msra.mxu0 0.0
    %4697 = vmatprep.subr.mxu0 0.0
    %4698 = vmatpush1.msra.mxu0 0.0
    %4699 = vmatprep.subr.mxu0 0.0
    %4700 = vmatpush1.msra.mxu0 0.0
    %4701 = vmatprep.subr.mxu0 0.0
    %4702 = vmatpush1.msra.mxu0 0.0
    %4703 = vmatprep.subr.mxu0 0.0
    %4704 = vmatpush1.msra.mxu0 0.0
    %4705 = vmatprep.subr.mxu0 0.0
    %4706 = vmatpush1.msra.mxu0 0.0
    %4707 = vmatprep.subr.mxu0 0.0
    %4708 = vmatpush1.msra.mxu0 0.0
    %4709 = vmatprep.subr.mxu0 0.0
    %4710 = vmatpush1.msra.mxu0 0.0
    %4711 = vmatprep.subr.mxu0 0.0
    %4712 = vmatpush1.msra.mxu0 0.0
    %4713 = vmatprep.subr.mxu0 0.0
    %4714 = vmatpush1.msra.mxu0 0.0
    %4715 = vmatprep.subr.mxu0 0.0
    %4716 = vmatpush1.msra.mxu0 0.0
    %4717 = vmatprep.subr.mxu0 0.0
    %4718 = vmatpush1.msra.mxu0 0.0
    %4719 = vmatprep.subr.mxu0 0.0
    %4720 = vmatpush1.msra.mxu0 0.0
    %4721 = vmatprep.subr.mxu0 0.0
    %4722 = vmatpush1.msra.mxu0 0.0
    %4723 = vmatprep.subr.mxu0 0.0
    %4724 = vmatpush1.msra.mxu0 0.0
    %4725 = vmatprep.subr.mxu0 0.0
    %4726 = vmatpush1.msra.mxu0 0.0
    %4727 = vmatprep.subr.mxu0 0.0
    %4728 = vmatpush1.msra.mxu0 0.0
    %4729 = vmatprep.subr.mxu0 0.0
    %4730 = vmatpush1.msra.mxu0 0.0
    %4731 = vmatprep.mubr.f32.mxu0 0.0
    %4732 = vmatmul.mubr.f32.gmra.mrb[0].mxu0 %v4508
    %v4733 = vpop.f32.mrb[0].mxu0
    %v4734 = vadd.f32 0.0, %v4733
    %v4735 = vpop.f32.mrb[0].mxu0
    %4736 = vmatprep.mubr.f32.mxu0 0.0
    %4737 = vmatmul.mubr.f32.gmra.mrb[0].mxu0 %v4511
    %v4738 = vpop.f32.mrb[0].mxu0
    %v4739 = vadd.f32 0.0, %v4738
    %v4740 = vpop.f32.mrb[0].mxu0
    %4741 = vdwg.mxu0
    %v4742 = vadd.f32 %v4476, %v4580
    %v4743 = vadd.f32 %v4477, %v4582
    %v4744 = vadd.f32 %v4478, %v4657
    %v4745 = vadd.f32 %v4479, %v4659
    %v4746 = vadd.f32 %v4480, %v4734
    %v4747 = vadd.f32 %v4481, %v4586
    %v4748 = vadd.f32 %v4482, %v4588
    %v4749 = vadd.f32 %v4483, %v4663
    %v4750 = vadd.f32 %v4484, %v4665
    %v4751 = vadd.f32 %v4485, %v4739
    %v4752 = vld [vmem:[%s4] sm:$0xff]
    %v4753 = vld [vmem:[%s4 + $0x8] sm:$0xff]
    %4755 = vset.pattern.permute.xlu0 0
    %4756 = vperm.xlu0 %4755, %v4752
    %v4757 = vpop.permute.xlu0 %4756
    %4760 = vset.pattern.permute.xlu0 0
    %4761 = vperm.xlu0 %4760, %v4753
    %v4762 = vpop.permute.xlu0 %4761
    %v4764 = vadd.f32 %v4742, %v4757
    %v4765 = vadd.f32 %v4743, %v4757
    %v4766 = vadd.f32 %v4744, %v4757
    %v4767 = vadd.f32 %v4745, %v4757
    %v4768 = vadd.f32 %v4746, %v4757
    %v4769 = vadd.f32 %v4747, %v4762
    %v4770 = vadd.f32 %v4748, %v4762
    %v4771 = vadd.f32 %v4749, %v4762
    %v4772 = vadd.f32 %v4750, %v4762
    %v4773 = vadd.f32 %v4751, %v4762
    %v4774 = vmax.f32 %v4764, 0.0
    %v4775 = vmax.f32 %v4765, 0.0
    %v4776 = vmax.f32 %v4766, 0.0
    %v4777 = vmax.f32 %v4767, 0.0
    %v4778 = vmax.f32 %v4768, 0.0
    %v4779 = vmax.f32 %v4769, 0.0
    %v4780 = vmax.f32 %v4770, 0.0
    %v4781 = vmax.f32 %v4771, 0.0
    %v4782 = vmax.f32 %v4772, 0.0
    %v4783 = vmax.f32 %v4773, 0.0
    %4784 = vst [vmem:[#allocation3] sm:$0xff] %v4774
    %4785 = vst [vmem:[#allocation3 + $0x8] sm:$0xff] %v4775
    %4786 = vst [vmem:[#allocation3 + $0x10] sm:$0xff] %v4776
    %4787 = vst [vmem:[#allocation3 + $0x18] sm:$0xff] %v4777
    %vm4788 = vcmask 277504
    %4789 = vst.msk [vmem:[#allocation3 + $0x20] sm:$0xff] %vm4788, %v4778
    %4790 = vst [vmem:[#allocation3 + $0x28] sm:$0xff] %v4779
    %4791 = vst [vmem:[#allocation3 + $0x30] sm:$0xff] %v4780
    %4792 = vst [vmem:[#allocation3 + $0x38] sm:$0xff] %v4781
    %4793 = vst [vmem:[#allocation3 + $0x40] sm:$0xff] %v4782
    %4794 = vst.msk [vmem:[#allocation3 + $0x48] sm:$0xff] %vm4788, %v4783
    %v4795 = vld [vmem:[%s5] sm:$0xff]
    %v4796 = vld [vmem:[%s5 + $0x8] sm:$0xff]
    %v4797 = vld [vmem:[%s5 + $0x10] sm:$0xff]
    %v4798 = vld [vmem:[%s5 + $0x18] sm:$0xff]
    %v4799 = vld [vmem:[#allocation3] sm:$0xff]
    %v4800 = vld [vmem:[#allocation3 + $0x8] sm:$0xff]
    %v4801 = vld [vmem:[#allocation3 + $0x10] sm:$0xff]
    %v4802 = vld [vmem:[#allocation3 + $0x18] sm:$0xff]
    %v4803 = vld [vmem:[#allocation3 + $0x28] sm:$0xff]
    %v4804 = vld [vmem:[#allocation3 + $0x30] sm:$0xff]
    %v4805 = vld [vmem:[#allocation3 + $0x38] sm:$0xff]
    %v4806 = vld [vmem:[#allocation3 + $0x40] sm:$0xff]
    %v4807 = vld [vmem:[%s5 + $0x20] sm:$0xff]
    %v4808 = vld [vmem:[%s5 + $0x28] sm:$0xff]
    %v4809 = vld [vmem:[%s5 + $0x30] sm:$0xff]
    %v4810 = vld [vmem:[%s5 + $0x38] sm:$0xff]
    %v4811 = vld [vmem:[#allocation3 + $0x20] sm:$0xff]
    %v4812 = vld [vmem:[#allocation3 + $0x48] sm:$0xff]
    %4823 = vrot.lane.b32.xlu0 %v4799, 127
    %v4824 = vpop.permute.xlu0 %4823
    %4825 = vrot.lane.b32.xlu0 %v4800, 127
    %v4826 = vpop.permute.xlu0 %4825
    %4827 = vrot.lane.b32.xlu0 %v4801, 127
    %v4828 = vpop.permute.xlu0 %4827
    %4829 = vrot.lane.b32.xlu0 %v4802, 127
    %v4830 = vpop.permute.xlu0 %4829
    %4831 = vrot.lane.b32.xlu0 %v4811, 127
    %v4832 = vpop.permute.xlu0 %4831
    %4833 = vrot.lane.b32.xlu0 %v4803, 127
    %v4834 = vpop.permute.xlu0 %4833
    %4835 = vrot.lane.b32.xlu0 %v4804, 127
    %v4836 = vpop.permute.xlu0 %4835
    %4837 = vrot.lane.b32.xlu0 %v4805, 127
    %v4838 = vpop.permute.xlu0 %4837
    %4839 = vrot.lane.b32.xlu0 %v4806, 127
    %v4840 = vpop.permute.xlu0 %4839
    %4841 = vrot.lane.b32.xlu0 %v4812, 127
    %v4842 = vpop.permute.xlu0 %4841
    %v4843 = vsel %vm129, %v4824, %v4826
    %v4844 = vsel %vm129, %v4826, %v4828
    %v4845 = vsel %vm129, %v4828, %v4830
    %v4846 = vsel %vm129, %v4830, %v4832
    %v4847 = vsel %vm129, %v4834, %v4836
    %v4848 = vsel %vm129, %v4836, %v4838
    %v4849 = vsel %vm129, %v4838, %v4840
    %v4850 = vsel %vm129, %v4840, %v4842
    %vm4859 = vcmask 130048
    %v4861 = vsel %vm4859, %v4807, 0
    %v4864 = vsel %vm4859, %v4808, 0
    %v4867 = vsel %vm4859, %v4809, 0
    %v4870 = vsel %vm4859, %v4810, 0
    %4872 = vmatprep.subr.mxu0 %v4844
    %4873 = vmatpush1.msra.mxu0 %v4843
    %4874 = vmatprep.subr.mxu0 %v4848
    %4875 = vmatpush1.msra.mxu0 %v4847
    %4876 = vmatprep.subr.mxu0 0.0
    %4877 = vmatpush1.msra.mxu0 0.0
    %4878 = vmatprep.subr.mxu0 0.0
    %4879 = vmatpush1.msra.mxu0 0.0
    %4880 = vmatprep.subr.mxu0 0.0
    %4881 = vmatpush1.msra.mxu0 0.0
    %4882 = vmatprep.subr.mxu0 0.0
    %4883 = vmatpush1.msra.mxu0 0.0
    %4884 = vmatprep.subr.mxu0 0.0
    %4885 = vmatpush1.msra.mxu0 0.0
    %4886 = vmatprep.subr.mxu0 0.0
    %4887 = vmatpush1.msra.mxu0 0.0
    %4888 = vmatprep.subr.mxu0 0.0
    %4889 = vmatpush1.msra.mxu0 0.0
    %4890 = vmatprep.subr.mxu0 0.0
    %4891 = vmatpush1.msra.mxu0 0.0
    %4892 = vmatprep.subr.mxu0 0.0
    %4893 = vmatpush1.msra.mxu0 0.0
    %4894 = vmatprep.subr.mxu0 0.0
    %4895 = vmatpush1.msra.mxu0 0.0
    %4896 = vmatprep.subr.mxu0 0.0
    %4897 = vmatpush1.msra.mxu0 0.0
    %4898 = vmatprep.subr.mxu0 0.0
    %4899 = vmatpush1.msra.mxu0 0.0
    %4900 = vmatprep.subr.mxu0 0.0
    %4901 = vmatpush1.msra.mxu0 0.0
    %4902 = vmatprep.subr.mxu0 0.0
    %4903 = vmatpush1.msra.mxu0 0.0
    %4904 = vmatprep.subr.mxu0 0.0
    %4905 = vmatpush1.msra.mxu0 0.0
    %4906 = vmatprep.subr.mxu0 0.0
    %4907 = vmatpush1.msra.mxu0 0.0
    %4908 = vmatprep.subr.mxu0 0.0
    %4909 = vmatpush1.msra.mxu0 0.0
    %4910 = vmatprep.subr.mxu0 0.0
    %4911 = vmatpush1.msra.mxu0 0.0
    %4912 = vmatprep.subr.mxu0 0.0
    %4913 = vmatpush1.msra.mxu0 0.0
    %4914 = vmatprep.subr.mxu0 0.0
    %4915 = vmatpush1.msra.mxu0 0.0
    %4916 = vmatprep.subr.mxu0 0.0
    %4917 = vmatpush1.msra.mxu0 0.0
    %4918 = vmatprep.subr.mxu0 0.0
    %4919 = vmatpush1.msra.mxu0 0.0
    %4920 = vmatprep.subr.mxu0 0.0
    %4921 = vmatpush1.msra.mxu0 0.0
    %4922 = vmatprep.subr.mxu0 0.0
    %4923 = vmatpush1.msra.mxu0 0.0
    %4924 = vmatprep.subr.mxu0 0.0
    %4925 = vmatpush1.msra.mxu0 0.0
    %4926 = vmatprep.subr.mxu0 0.0
    %4927 = vmatpush1.msra.mxu0 0.0
    %4928 = vmatprep.subr.mxu0 0.0
    %4929 = vmatpush1.msra.mxu0 0.0
    %4930 = vmatprep.subr.mxu0 0.0
    %4931 = vmatpush1.msra.mxu0 0.0
    %4932 = vmatprep.subr.mxu0 0.0
    %4933 = vmatpush1.msra.mxu0 0.0
    %4934 = vmatprep.subr.mxu0 0.0
    %4935 = vmatpush1.msra.mxu0 0.0
    %4936 = vmatprep.mubr.f32.mxu0 0.0
    %4937 = vmatmul.mubr.f32.gmra.mrb[0].mxu0 %v4861
    %v4938 = vpop.f32.mrb[0].mxu0
    %v4939 = vadd.f32 0.0, %v4938
    %v4940 = vpop.f32.mrb[0].mxu0
    %v4941 = vadd.f32 0.0, %v4940
    %4942 = vmatprep.mubr.f32.mxu0 0.0
    %4943 = vmatmul.mubr.f32.gmra.mrb[0].mxu0 %v4864
    %v4944 = vpop.f32.mrb[0].mxu0
    %v4945 = vadd.f32 0.0, %v4944
    %v4946 = vpop.f32.mrb[0].mxu0
    %v4947 = vadd.f32 0.0, %v4946
    %4948 = vmatprep.mubr.f32.mxu0 0.0
    %4949 = vmatmul.mubr.f32.gmra.mrb[0].mxu0 %v4867
    %v4950 = vpop.f32.mrb[0].mxu0
    %v4951 = vadd.f32 0.0, %v4950
    %v4952 = vpop.f32.mrb[0].mxu0
    %v4953 = vadd.f32 0.0, %v4952
    %4954 = vmatprep.mubr.f32.mxu0 0.0
    %4955 = vmatmul.mubr.f32.gmra.mrb[0].mxu0 %v4870
    %v4956 = vpop.f32.mrb[0].mxu0
    %v4957 = vadd.f32 0.0, %v4956
    %v4958 = vpop.f32.mrb[0].mxu0
    %v4959 = vadd.f32 0.0, %v4958
    %4960 = vdwg.mxu0
    %4961 = vmatprep.subr.mxu0 %v4846
    %4962 = vmatpush1.msra.mxu0 %v4845
    %4963 = vmatprep.subr.mxu0 %v4850
    %4964 = vmatpush1.msra.mxu0 %v4849
    %4965 = vmatprep.subr.mxu0 0.0
    %4966 = vmatpush1.msra.mxu0 0.0
    %4967 = vmatprep.subr.mxu0 0.0
    %4968 = vmatpush1.msra.mxu0 0.0
    %4969 = vmatprep.subr.mxu0 0.0
    %4970 = vmatpush1.msra.mxu0 0.0
    %4971 = vmatprep.subr.mxu0 0.0
    %4972 = vmatpush1.msra.mxu0 0.0
    %4973 = vmatprep.subr.mxu0 0.0
    %4974 = vmatpush1.msra.mxu0 0.0
    %4975 = vmatprep.subr.mxu0 0.0
    %4976 = vmatpush1.msra.mxu0 0.0
    %4977 = vmatprep.subr.mxu0 0.0
    %4978 = vmatpush1.msra.mxu0 0.0
    %4979 = vmatprep.subr.mxu0 0.0
    %4980 = vmatpush1.msra.mxu0 0.0
    %4981 = vmatprep.subr.mxu0 0.0
    %4982 = vmatpush1.msra.mxu0 0.0
    %4983 = vmatprep.subr.mxu0 0.0
    %4984 = vmatpush1.msra.mxu0 0.0
    %4985 = vmatprep.subr.mxu0 0.0
    %4986 = vmatpush1.msra.mxu0 0.0
    %4987 = vmatprep.subr.mxu0 0.0
    %4988 = vmatpush1.msra.mxu0 0.0
    %4989 = vmatprep.subr.mxu0 0.0
    %4990 = vmatpush1.msra.mxu0 0.0
    %4991 = vmatprep.subr.mxu0 0.0
    %4992 = vmatpush1.msra.mxu0 0.0
    %4993 = vmatprep.subr.mxu0 0.0
    %4994 = vmatpush1.msra.mxu0 0.0
    %4995 = vmatprep.subr.mxu0 0.0
    %4996 = vmatpush1.msra.mxu0 0.0
    %4997 = vmatprep.subr.mxu0 0.0
    %4998 = vmatpush1.msra.mxu0 0.0
    %4999 = vmatprep.subr.mxu0 0.0
    %5000 = vmatpush1.msra.mxu0 0.0
    %5001 = vmatprep.subr.mxu0 0.0
    %5002 = vmatpush1.msra.mxu0 0.0
    %5003 = vmatprep.subr.mxu0 0.0
    %5004 = vmatpush1.msra.mxu0 0.0
    %5005 = vmatprep.subr.mxu0 0.0
    %5006 = vmatpush1.msra.mxu0 0.0
    %5007 = vmatprep.subr.mxu0 0.0
    %5008 = vmatpush1.msra.mxu0 0.0
    %5009 = vmatprep.subr.mxu0 0.0
    %5010 = vmatpush1.msra.mxu0 0.0
    %5011 = vmatprep.subr.mxu0 0.0
    %5012 = vmatpush1.msra.mxu0 0.0
    %5013 = vmatprep.subr.mxu0 0.0
    %5014 = vmatpush1.msra.mxu0 0.0
    %5015 = vmatprep.subr.mxu0 0.0
    %5016 = vmatpush1.msra.mxu0 0.0
    %5017 = vmatprep.subr.mxu0 0.0
    %5018 = vmatpush1.msra.mxu0 0.0
    %5019 = vmatprep.subr.mxu0 0.0
    %5020 = vmatpush1.msra.mxu0 0.0
    %5021 = vmatprep.subr.mxu0 0.0
    %5022 = vmatpush1.msra.mxu0 0.0
    %5023 = vmatprep.subr.mxu0 0.0
    %5024 = vmatpush1.msra.mxu0 0.0
    %5025 = vmatprep.mubr.f32.mxu0 0.0
    %5026 = vmatmul.mubr.f32.gmra.mrb[0].mxu0 %v4861
    %v5027 = vpop.f32.mrb[0].mxu0
    %v5028 = vadd.f32 0.0, %v5027
    %v5029 = vpop.f32.mrb[0].mxu0
    %v5030 = vadd.f32 0.0, %v5029
    %5031 = vmatprep.mubr.f32.mxu0 0.0
    %5032 = vmatmul.mubr.f32.gmra.mrb[0].mxu0 %v4864
    %v5033 = vpop.f32.mrb[0].mxu0
    %v5034 = vadd.f32 0.0, %v5033
    %v5035 = vpop.f32.mrb[0].mxu0
    %v5036 = vadd.f32 0.0, %v5035
    %5037 = vmatprep.mubr.f32.mxu0 0.0
    %5038 = vmatmul.mubr.f32.gmra.mrb[0].mxu0 %v4867
    %v5039 = vpop.f32.mrb[0].mxu0
    %v5040 = vadd.f32 0.0, %v5039
    %v5041 = vpop.f32.mrb[0].mxu0
    %v5042 = vadd.f32 0.0, %v5041
    %5043 = vmatprep.mubr.f32.mxu0 0.0
    %5044 = vmatmul.mubr.f32.gmra.mrb[0].mxu0 %v4870
    %v5045 = vpop.f32.mrb[0].mxu0
    %v5046 = vadd.f32 0.0, %v5045
    %v5047 = vpop.f32.mrb[0].mxu0
    %v5048 = vadd.f32 0.0, %v5047
    %5049 = vdwg.mxu0
    %v5051 = vsel %vm4859, %v4795, 0
    %v5054 = vsel %vm4859, %v4796, 0
    %v5057 = vsel %vm4859, %v4797, 0
    %v5060 = vsel %vm4859, %v4798, 0
    %5062 = vmatprep.subr.mxu0 %v4800
    %5063 = vmatpush1.msra.mxu0 %v4799
    %5064 = vmatprep.subr.mxu0 %v4804
    %5065 = vmatpush1.msra.mxu0 %v4803
    %5066 = vmatprep.subr.mxu0 0.0
    %5067 = vmatpush1.msra.mxu0 0.0
    %5068 = vmatprep.subr.mxu0 0.0
    %5069 = vmatpush1.msra.mxu0 0.0
    %5070 = vmatprep.subr.mxu0 0.0
    %5071 = vmatpush1.msra.mxu0 0.0
    %5072 = vmatprep.subr.mxu0 0.0
    %5073 = vmatpush1.msra.mxu0 0.0
    %5074 = vmatprep.subr.mxu0 0.0
    %5075 = vmatpush1.msra.mxu0 0.0
    %5076 = vmatprep.subr.mxu0 0.0
    %5077 = vmatpush1.msra.mxu0 0.0
    %5078 = vmatprep.subr.mxu0 0.0
    %5079 = vmatpush1.msra.mxu0 0.0
    %5080 = vmatprep.subr.mxu0 0.0
    %5081 = vmatpush1.msra.mxu0 0.0
    %5082 = vmatprep.subr.mxu0 0.0
    %5083 = vmatpush1.msra.mxu0 0.0
    %5084 = vmatprep.subr.mxu0 0.0
    %5085 = vmatpush1.msra.mxu0 0.0
    %5086 = vmatprep.subr.mxu0 0.0
    %5087 = vmatpush1.msra.mxu0 0.0
    %5088 = vmatprep.subr.mxu0 0.0
    %5089 = vmatpush1.msra.mxu0 0.0
    %5090 = vmatprep.subr.mxu0 0.0
    %5091 = vmatpush1.msra.mxu0 0.0
    %5092 = vmatprep.subr.mxu0 0.0
    %5093 = vmatpush1.msra.mxu0 0.0
    %5094 = vmatprep.subr.mxu0 0.0
    %5095 = vmatpush1.msra.mxu0 0.0
    %5096 = vmatprep.subr.mxu0 0.0
    %5097 = vmatpush1.msra.mxu0 0.0
    %5098 = vmatprep.subr.mxu0 0.0
    %5099 = vmatpush1.msra.mxu0 0.0
    %5100 = vmatprep.subr.mxu0 0.0
    %5101 = vmatpush1.msra.mxu0 0.0
    %5102 = vmatprep.subr.mxu0 0.0
    %5103 = vmatpush1.msra.mxu0 0.0
    %5104 = vmatprep.subr.mxu0 0.0
    %5105 = vmatpush1.msra.mxu0 0.0
    %5106 = vmatprep.subr.mxu0 0.0
    %5107 = vmatpush1.msra.mxu0 0.0
    %5108 = vmatprep.subr.mxu0 0.0
    %5109 = vmatpush1.msra.mxu0 0.0
    %5110 = vmatprep.subr.mxu0 0.0
    %5111 = vmatpush1.msra.mxu0 0.0
    %5112 = vmatprep.subr.mxu0 0.0
    %5113 = vmatpush1.msra.mxu0 0.0
    %5114 = vmatprep.subr.mxu0 0.0
    %5115 = vmatpush1.msra.mxu0 0.0
    %5116 = vmatprep.subr.mxu0 0.0
    %5117 = vmatpush1.msra.mxu0 0.0
    %5118 = vmatprep.subr.mxu0 0.0
    %5119 = vmatpush1.msra.mxu0 0.0
    %5120 = vmatprep.subr.mxu0 0.0
    %5121 = vmatpush1.msra.mxu0 0.0
    %5122 = vmatprep.subr.mxu0 0.0
    %5123 = vmatpush1.msra.mxu0 0.0
    %5124 = vmatprep.subr.mxu0 0.0
    %5125 = vmatpush1.msra.mxu0 0.0
    %5126 = vmatprep.mubr.f32.mxu0 0.0
    %5127 = vmatmul.mubr.f32.gmra.mrb[0].mxu0 %v5051
    %v5128 = vpop.f32.mrb[0].mxu0
    %v5129 = vadd.f32 %v4939, %v5128
    %v5130 = vpop.f32.mrb[0].mxu0
    %v5131 = vadd.f32 %v4941, %v5130
    %5132 = vmatprep.mubr.f32.mxu0 0.0
    %5133 = vmatmul.mubr.f32.gmra.mrb[0].mxu0 %v5054
    %v5134 = vpop.f32.mrb[0].mxu0
    %v5135 = vadd.f32 %v4945, %v5134
    %v5136 = vpop.f32.mrb[0].mxu0
    %v5137 = vadd.f32 %v4947, %v5136
    %5138 = vmatprep.mubr.f32.mxu0 0.0
    %5139 = vmatmul.mubr.f32.gmra.mrb[0].mxu0 %v5057
    %v5140 = vpop.f32.mrb[0].mxu0
    %v5141 = vadd.f32 %v4951, %v5140
    %v5142 = vpop.f32.mrb[0].mxu0
    %v5143 = vadd.f32 %v4953, %v5142
    %5144 = vmatprep.mubr.f32.mxu0 0.0
    %5145 = vmatmul.mubr.f32.gmra.mrb[0].mxu0 %v5060
    %v5146 = vpop.f32.mrb[0].mxu0
    %v5147 = vadd.f32 %v4957, %v5146
    %v5148 = vpop.f32.mrb[0].mxu0
    %v5149 = vadd.f32 %v4959, %v5148
    %5150 = vdwg.mxu0
    %5151 = vmatprep.subr.mxu0 %v4802
    %5152 = vmatpush1.msra.mxu0 %v4801
    %5153 = vmatprep.subr.mxu0 %v4806
    %5154 = vmatpush1.msra.mxu0 %v4805
    %5155 = vmatprep.subr.mxu0 0.0
    %5156 = vmatpush1.msra.mxu0 0.0
    %5157 = vmatprep.subr.mxu0 0.0
    %5158 = vmatpush1.msra.mxu0 0.0
    %5159 = vmatprep.subr.mxu0 0.0
    %5160 = vmatpush1.msra.mxu0 0.0
    %5161 = vmatprep.subr.mxu0 0.0
    %5162 = vmatpush1.msra.mxu0 0.0
    %5163 = vmatprep.subr.mxu0 0.0
    %5164 = vmatpush1.msra.mxu0 0.0
    %5165 = vmatprep.subr.mxu0 0.0
    %5166 = vmatpush1.msra.mxu0 0.0
    %5167 = vmatprep.subr.mxu0 0.0
    %5168 = vmatpush1.msra.mxu0 0.0
    %5169 = vmatprep.subr.mxu0 0.0
    %5170 = vmatpush1.msra.mxu0 0.0
    %5171 = vmatprep.subr.mxu0 0.0
    %5172 = vmatpush1.msra.mxu0 0.0
    %5173 = vmatprep.subr.mxu0 0.0
    %5174 = vmatpush1.msra.mxu0 0.0
    %5175 = vmatprep.subr.mxu0 0.0
    %5176 = vmatpush1.msra.mxu0 0.0
    %5177 = vmatprep.subr.mxu0 0.0
    %5178 = vmatpush1.msra.mxu0 0.0
    %5179 = vmatprep.subr.mxu0 0.0
    %5180 = vmatpush1.msra.mxu0 0.0
    %5181 = vmatprep.subr.mxu0 0.0
    %5182 = vmatpush1.msra.mxu0 0.0
    %5183 = vmatprep.subr.mxu0 0.0
    %5184 = vmatpush1.msra.mxu0 0.0
    %5185 = vmatprep.subr.mxu0 0.0
    %5186 = vmatpush1.msra.mxu0 0.0
    %5187 = vmatprep.subr.mxu0 0.0
    %5188 = vmatpush1.msra.mxu0 0.0
    %5189 = vmatprep.subr.mxu0 0.0
    %5190 = vmatpush1.msra.mxu0 0.0
    %5191 = vmatprep.subr.mxu0 0.0
    %5192 = vmatpush1.msra.mxu0 0.0
    %5193 = vmatprep.subr.mxu0 0.0
    %5194 = vmatpush1.msra.mxu0 0.0
    %5195 = vmatprep.subr.mxu0 0.0
    %5196 = vmatpush1.msra.mxu0 0.0
    %5197 = vmatprep.subr.mxu0 0.0
    %5198 = vmatpush1.msra.mxu0 0.0
    %5199 = vmatprep.subr.mxu0 0.0
    %5200 = vmatpush1.msra.mxu0 0.0
    %5201 = vmatprep.subr.mxu0 0.0
    %5202 = vmatpush1.msra.mxu0 0.0
    %5203 = vmatprep.subr.mxu0 0.0
    %5204 = vmatpush1.msra.mxu0 0.0
    %5205 = vmatprep.subr.mxu0 0.0
    %5206 = vmatpush1.msra.mxu0 0.0
    %5207 = vmatprep.subr.mxu0 0.0
    %5208 = vmatpush1.msra.mxu0 0.0
    %5209 = vmatprep.subr.mxu0 0.0
    %5210 = vmatpush1.msra.mxu0 0.0
    %5211 = vmatprep.subr.mxu0 0.0
    %5212 = vmatpush1.msra.mxu0 0.0
    %5213 = vmatprep.subr.mxu0 0.0
    %5214 = vmatpush1.msra.mxu0 0.0
    %5215 = vmatprep.mubr.f32.mxu0 0.0
    %5216 = vmatmul.mubr.f32.gmra.mrb[0].mxu0 %v5051
    %v5217 = vpop.f32.mrb[0].mxu0
    %v5218 = vadd.f32 %v5028, %v5217
    %v5219 = vpop.f32.mrb[0].mxu0
    %v5220 = vadd.f32 %v5030, %v5219
    %5221 = vmatprep.mubr.f32.mxu0 0.0
    %5222 = vmatmul.mubr.f32.gmra.mrb[0].mxu0 %v5054
    %v5223 = vpop.f32.mrb[0].mxu0
    %v5224 = vadd.f32 %v5034, %v5223
    %v5225 = vpop.f32.mrb[0].mxu0
    %v5226 = vadd.f32 %v5036, %v5225
    %5227 = vmatprep.mubr.f32.mxu0 0.0
    %5228 = vmatmul.mubr.f32.gmra.mrb[0].mxu0 %v5057
    %v5229 = vpop.f32.mrb[0].mxu0
    %v5230 = vadd.f32 %v5040, %v5229
    %v5231 = vpop.f32.mrb[0].mxu0
    %v5232 = vadd.f32 %v5042, %v5231
    %5233 = vmatprep.mubr.f32.mxu0 0.0
    %5234 = vmatmul.mubr.f32.gmra.mrb[0].mxu0 %v5060
    %v5235 = vpop.f32.mrb[0].mxu0
    %v5236 = vadd.f32 %v5046, %v5235
    %v5237 = vpop.f32.mrb[0].mxu0
    %v5238 = vadd.f32 %v5048, %v5237
    %5239 = vdwg.mxu0
    %v5240 = vld [vmem:[%s5 + $0x40] sm:$0xff]
    %v5241 = vld [vmem:[%s5 + $0x48] sm:$0xff]
    %v5242 = vld [vmem:[%s5 + $0x50] sm:$0xff]
    %v5243 = vld [vmem:[%s5 + $0x58] sm:$0xff]
    %5244 = vrot.lane.b32.xlu0 %v4799, 126
    %v5245 = vpop.permute.xlu0 %5244
    %5246 = vrot.lane.b32.xlu0 %v4800, 126
    %v5247 = vpop.permute.xlu0 %5246
    %5248 = vrot.lane.b32.xlu0 %v4801, 126
    %v5249 = vpop.permute.xlu0 %5248
    %5250 = vrot.lane.b32.xlu0 %v4802, 126
    %v5251 = vpop.permute.xlu0 %5250
    %5252 = vrot.lane.b32.xlu0 %v4811, 126
    %v5253 = vpop.permute.xlu0 %5252
    %5254 = vrot.lane.b32.xlu0 %v4803, 126
    %v5255 = vpop.permute.xlu0 %5254
    %5256 = vrot.lane.b32.xlu0 %v4804, 126
    %v5257 = vpop.permute.xlu0 %5256
    %5258 = vrot.lane.b32.xlu0 %v4805, 126
    %v5259 = vpop.permute.xlu0 %5258
    %5260 = vrot.lane.b32.xlu0 %v4806, 126
    %v5261 = vpop.permute.xlu0 %5260
    %5262 = vrot.lane.b32.xlu0 %v4812, 126
    %v5263 = vpop.permute.xlu0 %5262
    %v5264 = vsel %vm605, %v5245, %v5247
    %v5265 = vsel %vm605, %v5247, %v5249
    %v5266 = vsel %vm605, %v5249, %v5251
    %v5267 = vsel %vm605, %v5251, %v5253
    %v5268 = vsel %vm605, %v5255, %v5257
    %v5269 = vsel %vm605, %v5257, %v5259
    %v5270 = vsel %vm605, %v5259, %v5261
    %v5271 = vsel %vm605, %v5261, %v5263
    %v5281 = vsel %vm4859, %v5240, 0
    %v5284 = vsel %vm4859, %v5241, 0
    %v5287 = vsel %vm4859, %v5242, 0
    %v5290 = vsel %vm4859, %v5243, 0
    %5292 = vmatprep.subr.mxu0 %v5265
    %5293 = vmatpush1.msra.mxu0 %v5264
    %5294 = vmatprep.subr.mxu0 %v5269
    %5295 = vmatpush1.msra.mxu0 %v5268
    %5296 = vmatprep.subr.mxu0 0.0
    %5297 = vmatpush1.msra.mxu0 0.0
    %5298 = vmatprep.subr.mxu0 0.0
    %5299 = vmatpush1.msra.mxu0 0.0
    %5300 = vmatprep.subr.mxu0 0.0
    %5301 = vmatpush1.msra.mxu0 0.0
    %5302 = vmatprep.subr.mxu0 0.0
    %5303 = vmatpush1.msra.mxu0 0.0
    %5304 = vmatprep.subr.mxu0 0.0
    %5305 = vmatpush1.msra.mxu0 0.0
    %5306 = vmatprep.subr.mxu0 0.0
    %5307 = vmatpush1.msra.mxu0 0.0
    %5308 = vmatprep.subr.mxu0 0.0
    %5309 = vmatpush1.msra.mxu0 0.0
    %5310 = vmatprep.subr.mxu0 0.0
    %5311 = vmatpush1.msra.mxu0 0.0
    %5312 = vmatprep.subr.mxu0 0.0
    %5313 = vmatpush1.msra.mxu0 0.0
    %5314 = vmatprep.subr.mxu0 0.0
    %5315 = vmatpush1.msra.mxu0 0.0
    %5316 = vmatprep.subr.mxu0 0.0
    %5317 = vmatpush1.msra.mxu0 0.0
    %5318 = vmatprep.subr.mxu0 0.0
    %5319 = vmatpush1.msra.mxu0 0.0
    %5320 = vmatprep.subr.mxu0 0.0
    %5321 = vmatpush1.msra.mxu0 0.0
    %5322 = vmatprep.subr.mxu0 0.0
    %5323 = vmatpush1.msra.mxu0 0.0
    %5324 = vmatprep.subr.mxu0 0.0
    %5325 = vmatpush1.msra.mxu0 0.0
    %5326 = vmatprep.subr.mxu0 0.0
    %5327 = vmatpush1.msra.mxu0 0.0
    %5328 = vmatprep.subr.mxu0 0.0
    %5329 = vmatpush1.msra.mxu0 0.0
    %5330 = vmatprep.subr.mxu0 0.0
    %5331 = vmatpush1.msra.mxu0 0.0
    %5332 = vmatprep.subr.mxu0 0.0
    %5333 = vmatpush1.msra.mxu0 0.0
    %5334 = vmatprep.subr.mxu0 0.0
    %5335 = vmatpush1.msra.mxu0 0.0
    %5336 = vmatprep.subr.mxu0 0.0
    %5337 = vmatpush1.msra.mxu0 0.0
    %5338 = vmatprep.subr.mxu0 0.0
    %5339 = vmatpush1.msra.mxu0 0.0
    %5340 = vmatprep.subr.mxu0 0.0
    %5341 = vmatpush1.msra.mxu0 0.0
    %5342 = vmatprep.subr.mxu0 0.0
    %5343 = vmatpush1.msra.mxu0 0.0
    %5344 = vmatprep.subr.mxu0 0.0
    %5345 = vmatpush1.msra.mxu0 0.0
    %5346 = vmatprep.subr.mxu0 0.0
    %5347 = vmatpush1.msra.mxu0 0.0
    %5348 = vmatprep.subr.mxu0 0.0
    %5349 = vmatpush1.msra.mxu0 0.0
    %5350 = vmatprep.subr.mxu0 0.0
    %5351 = vmatpush1.msra.mxu0 0.0
    %5352 = vmatprep.subr.mxu0 0.0
    %5353 = vmatpush1.msra.mxu0 0.0
    %5354 = vmatprep.subr.mxu0 0.0
    %5355 = vmatpush1.msra.mxu0 0.0
    %5356 = vmatprep.mubr.f32.mxu0 0.0
    %5357 = vmatmul.mubr.f32.gmra.mrb[0].mxu0 %v5281
    %v5358 = vpop.f32.mrb[0].mxu0
    %v5359 = vadd.f32 0.0, %v5358
    %v5360 = vpop.f32.mrb[0].mxu0
    %v5361 = vadd.f32 0.0, %v5360
    %5362 = vmatprep.mubr.f32.mxu0 0.0
    %5363 = vmatmul.mubr.f32.gmra.mrb[0].mxu0 %v5284
    %v5364 = vpop.f32.mrb[0].mxu0
    %v5365 = vadd.f32 0.0, %v5364
    %v5366 = vpop.f32.mrb[0].mxu0
    %v5367 = vadd.f32 0.0, %v5366
    %5368 = vmatprep.mubr.f32.mxu0 0.0
    %5369 = vmatmul.mubr.f32.gmra.mrb[0].mxu0 %v5287
    %v5370 = vpop.f32.mrb[0].mxu0
    %v5371 = vadd.f32 0.0, %v5370
    %v5372 = vpop.f32.mrb[0].mxu0
    %v5373 = vadd.f32 0.0, %v5372
    %5374 = vmatprep.mubr.f32.mxu0 0.0
    %5375 = vmatmul.mubr.f32.gmra.mrb[0].mxu0 %v5290
    %v5376 = vpop.f32.mrb[0].mxu0
    %v5377 = vadd.f32 0.0, %v5376
    %v5378 = vpop.f32.mrb[0].mxu0
    %v5379 = vadd.f32 0.0, %v5378
    %5380 = vdwg.mxu0
    %5381 = vmatprep.subr.mxu0 %v5267
    %5382 = vmatpush1.msra.mxu0 %v5266
    %5383 = vmatprep.subr.mxu0 %v5271
    %5384 = vmatpush1.msra.mxu0 %v5270
    %5385 = vmatprep.subr.mxu0 0.0
    %5386 = vmatpush1.msra.mxu0 0.0
    %5387 = vmatprep.subr.mxu0 0.0
    %5388 = vmatpush1.msra.mxu0 0.0
    %5389 = vmatprep.subr.mxu0 0.0
    %5390 = vmatpush1.msra.mxu0 0.0
    %5391 = vmatprep.subr.mxu0 0.0
    %5392 = vmatpush1.msra.mxu0 0.0
    %5393 = vmatprep.subr.mxu0 0.0
    %5394 = vmatpush1.msra.mxu0 0.0
    %5395 = vmatprep.subr.mxu0 0.0
    %5396 = vmatpush1.msra.mxu0 0.0
    %5397 = vmatprep.subr.mxu0 0.0
    %5398 = vmatpush1.msra.mxu0 0.0
    %5399 = vmatprep.subr.mxu0 0.0
    %5400 = vmatpush1.msra.mxu0 0.0
    %5401 = vmatprep.subr.mxu0 0.0
    %5402 = vmatpush1.msra.mxu0 0.0
    %5403 = vmatprep.subr.mxu0 0.0
    %5404 = vmatpush1.msra.mxu0 0.0
    %5405 = vmatprep.subr.mxu0 0.0
    %5406 = vmatpush1.msra.mxu0 0.0
    %5407 = vmatprep.subr.mxu0 0.0
    %5408 = vmatpush1.msra.mxu0 0.0
    %5409 = vmatprep.subr.mxu0 0.0
    %5410 = vmatpush1.msra.mxu0 0.0
    %5411 = vmatprep.subr.mxu0 0.0
    %5412 = vmatpush1.msra.mxu0 0.0
    %5413 = vmatprep.subr.mxu0 0.0
    %5414 = vmatpush1.msra.mxu0 0.0
    %5415 = vmatprep.subr.mxu0 0.0
    %5416 = vmatpush1.msra.mxu0 0.0
    %5417 = vmatprep.subr.mxu0 0.0
    %5418 = vmatpush1.msra.mxu0 0.0
    %5419 = vmatprep.subr.mxu0 0.0
    %5420 = vmatpush1.msra.mxu0 0.0
    %5421 = vmatprep.subr.mxu0 0.0
    %5422 = vmatpush1.msra.mxu0 0.0
    %5423 = vmatprep.subr.mxu0 0.0
    %5424 = vmatpush1.msra.mxu0 0.0
    %5425 = vmatprep.subr.mxu0 0.0
    %5426 = vmatpush1.msra.mxu0 0.0
    %5427 = vmatprep.subr.mxu0 0.0
    %5428 = vmatpush1.msra.mxu0 0.0
    %5429 = vmatprep.subr.mxu0 0.0
    %5430 = vmatpush1.msra.mxu0 0.0
    %5431 = vmatprep.subr.mxu0 0.0
    %5432 = vmatpush1.msra.mxu0 0.0
    %5433 = vmatprep.subr.mxu0 0.0
    %5434 = vmatpush1.msra.mxu0 0.0
    %5435 = vmatprep.subr.mxu0 0.0
    %5436 = vmatpush1.msra.mxu0 0.0
    %5437 = vmatprep.subr.mxu0 0.0
    %5438 = vmatpush1.msra.mxu0 0.0
    %5439 = vmatprep.subr.mxu0 0.0
    %5440 = vmatpush1.msra.mxu0 0.0
    %5441 = vmatprep.subr.mxu0 0.0
    %5442 = vmatpush1.msra.mxu0 0.0
    %5443 = vmatprep.subr.mxu0 0.0
    %5444 = vmatpush1.msra.mxu0 0.0
    %5445 = vmatprep.mubr.f32.mxu0 0.0
    %5446 = vmatmul.mubr.f32.gmra.mrb[0].mxu0 %v5281
    %v5447 = vpop.f32.mrb[0].mxu0
    %v5448 = vadd.f32 0.0, %v5447
    %v5449 = vpop.f32.mrb[0].mxu0
    %v5450 = vadd.f32 0.0, %v5449
    %5451 = vmatprep.mubr.f32.mxu0 0.0
    %5452 = vmatmul.mubr.f32.gmra.mrb[0].mxu0 %v5284
    %v5453 = vpop.f32.mrb[0].mxu0
    %v5454 = vadd.f32 0.0, %v5453
    %v5455 = vpop.f32.mrb[0].mxu0
    %v5456 = vadd.f32 0.0, %v5455
    %5457 = vmatprep.mubr.f32.mxu0 0.0
    %5458 = vmatmul.mubr.f32.gmra.mrb[0].mxu0 %v5287
    %v5459 = vpop.f32.mrb[0].mxu0
    %v5460 = vadd.f32 0.0, %v5459
    %v5461 = vpop.f32.mrb[0].mxu0
    %v5462 = vadd.f32 0.0, %v5461
    %5463 = vmatprep.mubr.f32.mxu0 0.0
    %5464 = vmatmul.mubr.f32.gmra.mrb[0].mxu0 %v5290
    %v5465 = vpop.f32.mrb[0].mxu0
    %v5466 = vadd.f32 0.0, %v5465
    %v5467 = vpop.f32.mrb[0].mxu0
    %v5468 = vadd.f32 0.0, %v5467
    %5469 = vdwg.mxu0
    %v5470 = vadd.f32 %v5129, %v5359
    %v5471 = vadd.f32 %v5131, %v5361
    %v5472 = vadd.f32 %v5218, %v5448
    %v5473 = vadd.f32 %v5220, %v5450
    %v5474 = vadd.f32 %v5135, %v5365
    %v5475 = vadd.f32 %v5137, %v5367
    %v5476 = vadd.f32 %v5224, %v5454
    %v5477 = vadd.f32 %v5226, %v5456
    %v5478 = vadd.f32 %v5141, %v5371
    %v5479 = vadd.f32 %v5143, %v5373
    %v5480 = vadd.f32 %v5230, %v5460
    %v5481 = vadd.f32 %v5232, %v5462
    %v5482 = vadd.f32 %v5147, %v5377
    %v5483 = vadd.f32 %v5149, %v5379
    %v5484 = vadd.f32 %v5236, %v5466
    %v5485 = vadd.f32 %v5238, %v5468
    %v5486 = vld [vmem:[%s5 + $0x60] sm:$0xff]
    %v5487 = vld [vmem:[%s5 + $0x68] sm:$0xff]
    %v5488 = vld [vmem:[%s5 + $0x70] sm:$0xff]
    %v5489 = vld [vmem:[%s5 + $0x78] sm:$0xff]
    %5490 = vrot.lane.b32.xlu0 %v4799, 112
    %v5491 = vpop.permute.xlu0 %5490
    %5492 = vrot.lane.b32.xlu0 %v4800, 112
    %v5493 = vpop.permute.xlu0 %5492
    %5494 = vrot.lane.b32.xlu0 %v4801, 112
    %v5495 = vpop.permute.xlu0 %5494
    %5496 = vrot.lane.b32.xlu0 %v4802, 112
    %v5497 = vpop.permute.xlu0 %5496
    %5498 = vrot.lane.b32.xlu0 %v4811, 112
    %v5499 = vpop.permute.xlu0 %5498
    %5500 = vrot.lane.b32.xlu0 %v4803, 112
    %v5501 = vpop.permute.xlu0 %5500
    %5502 = vrot.lane.b32.xlu0 %v4804, 112
    %v5503 = vpop.permute.xlu0 %5502
    %5504 = vrot.lane.b32.xlu0 %v4805, 112
    %v5505 = vpop.permute.xlu0 %5504
    %5506 = vrot.lane.b32.xlu0 %v4806, 112
    %v5507 = vpop.permute.xlu0 %5506
    %5508 = vrot.lane.b32.xlu0 %v4812, 112
    %v5509 = vpop.permute.xlu0 %5508
    %v5510 = vsel %vm859, %v5491, %v5493
    %v5511 = vsel %vm859, %v5493, %v5495
    %v5512 = vsel %vm859, %v5495, %v5497
    %v5513 = vsel %vm859, %v5497, %v5499
    %v5514 = vsel %vm859, %v5501, %v5503
    %v5515 = vsel %vm859, %v5503, %v5505
    %v5516 = vsel %vm859, %v5505, %v5507
    %v5517 = vsel %vm859, %v5507, %v5509
    %v5527 = vsel %vm4859, %v5486, 0
    %v5530 = vsel %vm4859, %v5487, 0
    %v5533 = vsel %vm4859, %v5488, 0
    %v5536 = vsel %vm4859, %v5489, 0
    %5538 = vmatprep.subr.mxu0 %v5511
    %5539 = vmatpush1.msra.mxu0 %v5510
    %5540 = vmatprep.subr.mxu0 %v5515
    %5541 = vmatpush1.msra.mxu0 %v5514
    %5542 = vmatprep.subr.mxu0 0.0
    %5543 = vmatpush1.msra.mxu0 0.0
    %5544 = vmatprep.subr.mxu0 0.0
    %5545 = vmatpush1.msra.mxu0 0.0
    %5546 = vmatprep.subr.mxu0 0.0
    %5547 = vmatpush1.msra.mxu0 0.0
    %5548 = vmatprep.subr.mxu0 0.0
    %5549 = vmatpush1.msra.mxu0 0.0
    %5550 = vmatprep.subr.mxu0 0.0
    %5551 = vmatpush1.msra.mxu0 0.0
    %5552 = vmatprep.subr.mxu0 0.0
    %5553 = vmatpush1.msra.mxu0 0.0
    %5554 = vmatprep.subr.mxu0 0.0
    %5555 = vmatpush1.msra.mxu0 0.0
    %5556 = vmatprep.subr.mxu0 0.0
    %5557 = vmatpush1.msra.mxu0 0.0
    %5558 = vmatprep.subr.mxu0 0.0
    %5559 = vmatpush1.msra.mxu0 0.0
    %5560 = vmatprep.subr.mxu0 0.0
    %5561 = vmatpush1.msra.mxu0 0.0
    %5562 = vmatprep.subr.mxu0 0.0
    %5563 = vmatpush1.msra.mxu0 0.0
    %5564 = vmatprep.subr.mxu0 0.0
    %5565 = vmatpush1.msra.mxu0 0.0
    %5566 = vmatprep.subr.mxu0 0.0
    %5567 = vmatpush1.msra.mxu0 0.0
    %5568 = vmatprep.subr.mxu0 0.0
    %5569 = vmatpush1.msra.mxu0 0.0
    %5570 = vmatprep.subr.mxu0 0.0
    %5571 = vmatpush1.msra.mxu0 0.0
    %5572 = vmatprep.subr.mxu0 0.0
    %5573 = vmatpush1.msra.mxu0 0.0
    %5574 = vmatprep.subr.mxu0 0.0
    %5575 = vmatpush1.msra.mxu0 0.0
    %5576 = vmatprep.subr.mxu0 0.0
    %5577 = vmatpush1.msra.mxu0 0.0
    %5578 = vmatprep.subr.mxu0 0.0
    %5579 = vmatpush1.msra.mxu0 0.0
    %5580 = vmatprep.subr.mxu0 0.0
    %5581 = vmatpush1.msra.mxu0 0.0
    %5582 = vmatprep.subr.mxu0 0.0
    %5583 = vmatpush1.msra.mxu0 0.0
    %5584 = vmatprep.subr.mxu0 0.0
    %5585 = vmatpush1.msra.mxu0 0.0
    %5586 = vmatprep.subr.mxu0 0.0
    %5587 = vmatpush1.msra.mxu0 0.0
    %5588 = vmatprep.subr.mxu0 0.0
    %5589 = vmatpush1.msra.mxu0 0.0
    %5590 = vmatprep.subr.mxu0 0.0
    %5591 = vmatpush1.msra.mxu0 0.0
    %5592 = vmatprep.subr.mxu0 0.0
    %5593 = vmatpush1.msra.mxu0 0.0
    %5594 = vmatprep.subr.mxu0 0.0
    %5595 = vmatpush1.msra.mxu0 0.0
    %5596 = vmatprep.subr.mxu0 0.0
    %5597 = vmatpush1.msra.mxu0 0.0
    %5598 = vmatprep.subr.mxu0 0.0
    %5599 = vmatpush1.msra.mxu0 0.0
    %5600 = vmatprep.subr.mxu0 0.0
    %5601 = vmatpush1.msra.mxu0 0.0
    %5602 = vmatprep.mubr.f32.mxu0 0.0
    %5603 = vmatmul.mubr.f32.gmra.mrb[0].mxu0 %v5527
    %v5604 = vpop.f32.mrb[0].mxu0
    %v5605 = vadd.f32 0.0, %v5604
    %v5606 = vpop.f32.mrb[0].mxu0
    %v5607 = vadd.f32 0.0, %v5606
    %5608 = vmatprep.mubr.f32.mxu0 0.0
    %5609 = vmatmul.mubr.f32.gmra.mrb[0].mxu0 %v5530
    %v5610 = vpop.f32.mrb[0].mxu0
    %v5611 = vadd.f32 0.0, %v5610
    %v5612 = vpop.f32.mrb[0].mxu0
    %v5613 = vadd.f32 0.0, %v5612
    %5614 = vmatprep.mubr.f32.mxu0 0.0
    %5615 = vmatmul.mubr.f32.gmra.mrb[0].mxu0 %v5533
    %v5616 = vpop.f32.mrb[0].mxu0
    %v5617 = vadd.f32 0.0, %v5616
    %v5618 = vpop.f32.mrb[0].mxu0
    %v5619 = vadd.f32 0.0, %v5618
    %5620 = vmatprep.mubr.f32.mxu0 0.0
    %5621 = vmatmul.mubr.f32.gmra.mrb[0].mxu0 %v5536
    %v5622 = vpop.f32.mrb[0].mxu0
    %v5623 = vadd.f32 0.0, %v5622
    %v5624 = vpop.f32.mrb[0].mxu0
    %v5625 = vadd.f32 0.0, %v5624
    %5626 = vdwg.mxu0
    %5627 = vmatprep.subr.mxu0 %v5513
    %5628 = vmatpush1.msra.mxu0 %v5512
    %5629 = vmatprep.subr.mxu0 %v5517
    %5630 = vmatpush1.msra.mxu0 %v5516
    %5631 = vmatprep.subr.mxu0 0.0
    %5632 = vmatpush1.msra.mxu0 0.0
    %5633 = vmatprep.subr.mxu0 0.0
    %5634 = vmatpush1.msra.mxu0 0.0
    %5635 = vmatprep.subr.mxu0 0.0
    %5636 = vmatpush1.msra.mxu0 0.0
    %5637 = vmatprep.subr.mxu0 0.0
    %5638 = vmatpush1.msra.mxu0 0.0
    %5639 = vmatprep.subr.mxu0 0.0
    %5640 = vmatpush1.msra.mxu0 0.0
    %5641 = vmatprep.subr.mxu0 0.0
    %5642 = vmatpush1.msra.mxu0 0.0
    %5643 = vmatprep.subr.mxu0 0.0
    %5644 = vmatpush1.msra.mxu0 0.0
    %5645 = vmatprep.subr.mxu0 0.0
    %5646 = vmatpush1.msra.mxu0 0.0
    %5647 = vmatprep.subr.mxu0 0.0
    %5648 = vmatpush1.msra.mxu0 0.0
    %5649 = vmatprep.subr.mxu0 0.0
    %5650 = vmatpush1.msra.mxu0 0.0
    %5651 = vmatprep.subr.mxu0 0.0
    %5652 = vmatpush1.msra.mxu0 0.0
    %5653 = vmatprep.subr.mxu0 0.0
    %5654 = vmatpush1.msra.mxu0 0.0
    %5655 = vmatprep.subr.mxu0 0.0
    %5656 = vmatpush1.msra.mxu0 0.0
    %5657 = vmatprep.subr.mxu0 0.0
    %5658 = vmatpush1.msra.mxu0 0.0
    %5659 = vmatprep.subr.mxu0 0.0
    %5660 = vmatpush1.msra.mxu0 0.0
    %5661 = vmatprep.subr.mxu0 0.0
    %5662 = vmatpush1.msra.mxu0 0.0
    %5663 = vmatprep.subr.mxu0 0.0
    %5664 = vmatpush1.msra.mxu0 0.0
    %5665 = vmatprep.subr.mxu0 0.0
    %5666 = vmatpush1.msra.mxu0 0.0
    %5667 = vmatprep.subr.mxu0 0.0
    %5668 = vmatpush1.msra.mxu0 0.0
    %5669 = vmatprep.subr.mxu0 0.0
    %5670 = vmatpush1.msra.mxu0 0.0
    %5671 = vmatprep.subr.mxu0 0.0
    %5672 = vmatpush1.msra.mxu0 0.0
    %5673 = vmatprep.subr.mxu0 0.0
    %5674 = vmatpush1.msra.mxu0 0.0
    %5675 = vmatprep.subr.mxu0 0.0
    %5676 = vmatpush1.msra.mxu0 0.0
    %5677 = vmatprep.subr.mxu0 0.0
    %5678 = vmatpush1.msra.mxu0 0.0
    %5679 = vmatprep.subr.mxu0 0.0
    %5680 = vmatpush1.msra.mxu0 0.0
    %5681 = vmatprep.subr.mxu0 0.0
    %5682 = vmatpush1.msra.mxu0 0.0
    %5683 = vmatprep.subr.mxu0 0.0
    %5684 = vmatpush1.msra.mxu0 0.0
    %5685 = vmatprep.subr.mxu0 0.0
    %5686 = vmatpush1.msra.mxu0 0.0
    %5687 = vmatprep.subr.mxu0 0.0
    %5688 = vmatpush1.msra.mxu0 0.0
    %5689 = vmatprep.subr.mxu0 0.0
    %5690 = vmatpush1.msra.mxu0 0.0
    %5691 = vmatprep.mubr.f32.mxu0 0.0
    %5692 = vmatmul.mubr.f32.gmra.mrb[0].mxu0 %v5527
    %v5693 = vpop.f32.mrb[0].mxu0
    %v5694 = vadd.f32 0.0, %v5693
    %v5695 = vpop.f32.mrb[0].mxu0
    %v5696 = vadd.f32 0.0, %v5695
    %5697 = vmatprep.mubr.f32.mxu0 0.0
    %5698 = vmatmul.mubr.f32.gmra.mrb[0].mxu0 %v5530
    %v5699 = vpop.f32.mrb[0].mxu0
    %v5700 = vadd.f32 0.0, %v5699
    %v5701 = vpop.f32.mrb[0].mxu0
    %v5702 = vadd.f32 0.0, %v5701
    %5703 = vmatprep.mubr.f32.mxu0 0.0
    %5704 = vmatmul.mubr.f32.gmra.mrb[0].mxu0 %v5533
    %v5705 = vpop.f32.mrb[0].mxu0
    %v5706 = vadd.f32 0.0, %v5705
    %v5707 = vpop.f32.mrb[0].mxu0
    %v5708 = vadd.f32 0.0, %v5707
    %5709 = vmatprep.mubr.f32.mxu0 0.0
    %5710 = vmatmul.mubr.f32.gmra.mrb[0].mxu0 %v5536
    %v5711 = vpop.f32.mrb[0].mxu0
    %v5712 = vadd.f32 0.0, %v5711
    %v5713 = vpop.f32.mrb[0].mxu0
    %v5714 = vadd.f32 0.0, %v5713
    %5715 = vdwg.mxu0
    %v5716 = vadd.f32 %v5470, %v5605
    %v5717 = vadd.f32 %v5471, %v5607
    %v5718 = vadd.f32 %v5472, %v5694
    %v5719 = vadd.f32 %v5473, %v5696
    %v5720 = vadd.f32 %v5474, %v5611
    %v5721 = vadd.f32 %v5475, %v5613
    %v5722 = vadd.f32 %v5476, %v5700
    %v5723 = vadd.f32 %v5477, %v5702
    %v5724 = vadd.f32 %v5478, %v5617
    %v5725 = vadd.f32 %v5479, %v5619
    %v5726 = vadd.f32 %v5480, %v5706
    %v5727 = vadd.f32 %v5481, %v5708
    %v5728 = vadd.f32 %v5482, %v5623
    %v5729 = vadd.f32 %v5483, %v5625
    %v5730 = vadd.f32 %v5484, %v5712
    %v5731 = vadd.f32 %v5485, %v5714
    %v5732 = vld [vmem:[%s5 + $0x80] sm:$0xff]
    %v5733 = vld [vmem:[%s5 + $0x88] sm:$0xff]
    %v5734 = vld [vmem:[%s5 + $0x90] sm:$0xff]
    %v5735 = vld [vmem:[%s5 + $0x98] sm:$0xff]
    %5736 = vrot.lane.b32.xlu0 %v4799, 111
    %v5737 = vpop.permute.xlu0 %5736
    %5738 = vrot.lane.b32.xlu0 %v4800, 111
    %v5739 = vpop.permute.xlu0 %5738
    %5740 = vrot.lane.b32.xlu0 %v4801, 111
    %v5741 = vpop.permute.xlu0 %5740
    %5742 = vrot.lane.b32.xlu0 %v4802, 111
    %v5743 = vpop.permute.xlu0 %5742
    %5744 = vrot.lane.b32.xlu0 %v4811, 111
    %v5745 = vpop.permute.xlu0 %5744
    %5746 = vrot.lane.b32.xlu0 %v4803, 111
    %v5747 = vpop.permute.xlu0 %5746
    %5748 = vrot.lane.b32.xlu0 %v4804, 111
    %v5749 = vpop.permute.xlu0 %5748
    %5750 = vrot.lane.b32.xlu0 %v4805, 111
    %v5751 = vpop.permute.xlu0 %5750
    %5752 = vrot.lane.b32.xlu0 %v4806, 111
    %v5753 = vpop.permute.xlu0 %5752
    %5754 = vrot.lane.b32.xlu0 %v4812, 111
    %v5755 = vpop.permute.xlu0 %5754
    %v5756 = vsel %vm1113, %v5737, %v5739
    %v5757 = vsel %vm1113, %v5739, %v5741
    %v5758 = vsel %vm1113, %v5741, %v5743
    %v5759 = vsel %vm1113, %v5743, %v5745
    %v5760 = vsel %vm1113, %v5747, %v5749
    %v5761 = vsel %vm1113, %v5749, %v5751
    %v5762 = vsel %vm1113, %v5751, %v5753
    %v5763 = vsel %vm1113, %v5753, %v5755
    %v5773 = vsel %vm4859, %v5732, 0
    %v5776 = vsel %vm4859, %v5733, 0
    %v5779 = vsel %vm4859, %v5734, 0
    %v5782 = vsel %vm4859, %v5735, 0
    %5784 = vmatprep.subr.mxu0 %v5757
    %5785 = vmatpush1.msra.mxu0 %v5756
    %5786 = vmatprep.subr.mxu0 %v5761
    %5787 = vmatpush1.msra.mxu0 %v5760
    %5788 = vmatprep.subr.mxu0 0.0
    %5789 = vmatpush1.msra.mxu0 0.0
    %5790 = vmatprep.subr.mxu0 0.0
    %5791 = vmatpush1.msra.mxu0 0.0
    %5792 = vmatprep.subr.mxu0 0.0
    %5793 = vmatpush1.msra.mxu0 0.0
    %5794 = vmatprep.subr.mxu0 0.0
    %5795 = vmatpush1.msra.mxu0 0.0
    %5796 = vmatprep.subr.mxu0 0.0
    %5797 = vmatpush1.msra.mxu0 0.0
    %5798 = vmatprep.subr.mxu0 0.0
    %5799 = vmatpush1.msra.mxu0 0.0
    %5800 = vmatprep.subr.mxu0 0.0
    %5801 = vmatpush1.msra.mxu0 0.0
    %5802 = vmatprep.subr.mxu0 0.0
    %5803 = vmatpush1.msra.mxu0 0.0
    %5804 = vmatprep.subr.mxu0 0.0
    %5805 = vmatpush1.msra.mxu0 0.0
    %5806 = vmatprep.subr.mxu0 0.0
    %5807 = vmatpush1.msra.mxu0 0.0
    %5808 = vmatprep.subr.mxu0 0.0
    %5809 = vmatpush1.msra.mxu0 0.0
    %5810 = vmatprep.subr.mxu0 0.0
    %5811 = vmatpush1.msra.mxu0 0.0
    %5812 = vmatprep.subr.mxu0 0.0
    %5813 = vmatpush1.msra.mxu0 0.0
    %5814 = vmatprep.subr.mxu0 0.0
    %5815 = vmatpush1.msra.mxu0 0.0
    %5816 = vmatprep.subr.mxu0 0.0
    %5817 = vmatpush1.msra.mxu0 0.0
    %5818 = vmatprep.subr.mxu0 0.0
    %5819 = vmatpush1.msra.mxu0 0.0
    %5820 = vmatprep.subr.mxu0 0.0
    %5821 = vmatpush1.msra.mxu0 0.0
    %5822 = vmatprep.subr.mxu0 0.0
    %5823 = vmatpush1.msra.mxu0 0.0
    %5824 = vmatprep.subr.mxu0 0.0
    %5825 = vmatpush1.msra.mxu0 0.0
    %5826 = vmatprep.subr.mxu0 0.0
    %5827 = vmatpush1.msra.mxu0 0.0
    %5828 = vmatprep.subr.mxu0 0.0
    %5829 = vmatpush1.msra.mxu0 0.0
    %5830 = vmatprep.subr.mxu0 0.0
    %5831 = vmatpush1.msra.mxu0 0.0
    %5832 = vmatprep.subr.mxu0 0.0
    %5833 = vmatpush1.msra.mxu0 0.0
    %5834 = vmatprep.subr.mxu0 0.0
    %5835 = vmatpush1.msra.mxu0 0.0
    %5836 = vmatprep.subr.mxu0 0.0
    %5837 = vmatpush1.msra.mxu0 0.0
    %5838 = vmatprep.subr.mxu0 0.0
    %5839 = vmatpush1.msra.mxu0 0.0
    %5840 = vmatprep.subr.mxu0 0.0
    %5841 = vmatpush1.msra.mxu0 0.0
    %5842 = vmatprep.subr.mxu0 0.0
    %5843 = vmatpush1.msra.mxu0 0.0
    %5844 = vmatprep.subr.mxu0 0.0
    %5845 = vmatpush1.msra.mxu0 0.0
    %5846 = vmatprep.subr.mxu0 0.0
    %5847 = vmatpush1.msra.mxu0 0.0
    %5848 = vmatprep.mubr.f32.mxu0 0.0
    %5849 = vmatmul.mubr.f32.gmra.mrb[0].mxu0 %v5773
    %v5850 = vpop.f32.mrb[0].mxu0
    %v5851 = vadd.f32 0.0, %v5850
    %v5852 = vpop.f32.mrb[0].mxu0
    %v5853 = vadd.f32 0.0, %v5852
    %5854 = vmatprep.mubr.f32.mxu0 0.0
    %5855 = vmatmul.mubr.f32.gmra.mrb[0].mxu0 %v5776
    %v5856 = vpop.f32.mrb[0].mxu0
    %v5857 = vadd.f32 0.0, %v5856
    %v5858 = vpop.f32.mrb[0].mxu0
    %v5859 = vadd.f32 0.0, %v5858
    %5860 = vmatprep.mubr.f32.mxu0 0.0
    %5861 = vmatmul.mubr.f32.gmra.mrb[0].mxu0 %v5779
    %v5862 = vpop.f32.mrb[0].mxu0
    %v5863 = vadd.f32 0.0, %v5862
    %v5864 = vpop.f32.mrb[0].mxu0
    %v5865 = vadd.f32 0.0, %v5864
    %5866 = vmatprep.mubr.f32.mxu0 0.0
    %5867 = vmatmul.mubr.f32.gmra.mrb[0].mxu0 %v5782
    %v5868 = vpop.f32.mrb[0].mxu0
    %v5869 = vadd.f32 0.0, %v5868
    %v5870 = vpop.f32.mrb[0].mxu0
    %v5871 = vadd.f32 0.0, %v5870
    %5872 = vdwg.mxu0
    %5873 = vmatprep.subr.mxu0 %v5759
    %5874 = vmatpush1.msra.mxu0 %v5758
    %5875 = vmatprep.subr.mxu0 %v5763
    %5876 = vmatpush1.msra.mxu0 %v5762
    %5877 = vmatprep.subr.mxu0 0.0
    %5878 = vmatpush1.msra.mxu0 0.0
    %5879 = vmatprep.subr.mxu0 0.0
    %5880 = vmatpush1.msra.mxu0 0.0
    %5881 = vmatprep.subr.mxu0 0.0
    %5882 = vmatpush1.msra.mxu0 0.0
    %5883 = vmatprep.subr.mxu0 0.0
    %5884 = vmatpush1.msra.mxu0 0.0
    %5885 = vmatprep.subr.mxu0 0.0
    %5886 = vmatpush1.msra.mxu0 0.0
    %5887 = vmatprep.subr.mxu0 0.0
    %5888 = vmatpush1.msra.mxu0 0.0
    %5889 = vmatprep.subr.mxu0 0.0
    %5890 = vmatpush1.msra.mxu0 0.0
    %5891 = vmatprep.subr.mxu0 0.0
    %5892 = vmatpush1.msra.mxu0 0.0
    %5893 = vmatprep.subr.mxu0 0.0
    %5894 = vmatpush1.msra.mxu0 0.0
    %5895 = vmatprep.subr.mxu0 0.0
    %5896 = vmatpush1.msra.mxu0 0.0
    %5897 = vmatprep.subr.mxu0 0.0
    %5898 = vmatpush1.msra.mxu0 0.0
    %5899 = vmatprep.subr.mxu0 0.0
    %5900 = vmatpush1.msra.mxu0 0.0
    %5901 = vmatprep.subr.mxu0 0.0
    %5902 = vmatpush1.msra.mxu0 0.0
    %5903 = vmatprep.subr.mxu0 0.0
    %5904 = vmatpush1.msra.mxu0 0.0
    %5905 = vmatprep.subr.mxu0 0.0
    %5906 = vmatpush1.msra.mxu0 0.0
    %5907 = vmatprep.subr.mxu0 0.0
    %5908 = vmatpush1.msra.mxu0 0.0
    %5909 = vmatprep.subr.mxu0 0.0
    %5910 = vmatpush1.msra.mxu0 0.0
    %5911 = vmatprep.subr.mxu0 0.0
    %5912 = vmatpush1.msra.mxu0 0.0
    %5913 = vmatprep.subr.mxu0 0.0
    %5914 = vmatpush1.msra.mxu0 0.0
    %5915 = vmatprep.subr.mxu0 0.0
    %5916 = vmatpush1.msra.mxu0 0.0
    %5917 = vmatprep.subr.mxu0 0.0
    %5918 = vmatpush1.msra.mxu0 0.0
    %5919 = vmatprep.subr.mxu0 0.0
    %5920 = vmatpush1.msra.mxu0 0.0
    %5921 = vmatprep.subr.mxu0 0.0
    %5922 = vmatpush1.msra.mxu0 0.0
    %5923 = vmatprep.subr.mxu0 0.0
    %5924 = vmatpush1.msra.mxu0 0.0
    %5925 = vmatprep.subr.mxu0 0.0
    %5926 = vmatpush1.msra.mxu0 0.0
    %5927 = vmatprep.subr.mxu0 0.0
    %5928 = vmatpush1.msra.mxu0 0.0
    %5929 = vmatprep.subr.mxu0 0.0
    %5930 = vmatpush1.msra.mxu0 0.0
    %5931 = vmatprep.subr.mxu0 0.0
    %5932 = vmatpush1.msra.mxu0 0.0
    %5933 = vmatprep.subr.mxu0 0.0
    %5934 = vmatpush1.msra.mxu0 0.0
    %5935 = vmatprep.subr.mxu0 0.0
    %5936 = vmatpush1.msra.mxu0 0.0
    %5937 = vmatprep.mubr.f32.mxu0 0.0
    %5938 = vmatmul.mubr.f32.gmra.mrb[0].mxu0 %v5773
    %v5939 = vpop.f32.mrb[0].mxu0
    %v5940 = vadd.f32 0.0, %v5939
    %v5941 = vpop.f32.mrb[0].mxu0
    %v5942 = vadd.f32 0.0, %v5941
    %5943 = vmatprep.mubr.f32.mxu0 0.0
    %5944 = vmatmul.mubr.f32.gmra.mrb[0].mxu0 %v5776
    %v5945 = vpop.f32.mrb[0].mxu0
    %v5946 = vadd.f32 0.0, %v5945
    %v5947 = vpop.f32.mrb[0].mxu0
    %v5948 = vadd.f32 0.0, %v5947
    %5949 = vmatprep.mubr.f32.mxu0 0.0
    %5950 = vmatmul.mubr.f32.gmra.mrb[0].mxu0 %v5779
    %v5951 = vpop.f32.mrb[0].mxu0
    %v5952 = vadd.f32 0.0, %v5951
    %v5953 = vpop.f32.mrb[0].mxu0
    %v5954 = vadd.f32 0.0, %v5953
    %5955 = vmatprep.mubr.f32.mxu0 0.0
    %5956 = vmatmul.mubr.f32.gmra.mrb[0].mxu0 %v5782
    %v5957 = vpop.f32.mrb[0].mxu0
    %v5958 = vadd.f32 0.0, %v5957
    %v5959 = vpop.f32.mrb[0].mxu0
    %v5960 = vadd.f32 0.0, %v5959
    %5961 = vdwg.mxu0
    %v5962 = vadd.f32 %v5716, %v5851
    %v5963 = vadd.f32 %v5717, %v5853
    %v5964 = vadd.f32 %v5718, %v5940
    %v5965 = vadd.f32 %v5719, %v5942
    %v5966 = vadd.f32 %v5720, %v5857
    %v5967 = vadd.f32 %v5721, %v5859
    %v5968 = vadd.f32 %v5722, %v5946
    %v5969 = vadd.f32 %v5723, %v5948
    %v5970 = vadd.f32 %v5724, %v5863
    %v5971 = vadd.f32 %v5725, %v5865
    %v5972 = vadd.f32 %v5726, %v5952
    %v5973 = vadd.f32 %v5727, %v5954
    %v5974 = vadd.f32 %v5728, %v5869
    %v5975 = vadd.f32 %v5729, %v5871
    %v5976 = vadd.f32 %v5730, %v5958
    %v5977 = vadd.f32 %v5731, %v5960
    %v5978 = vld [vmem:[%s5 + $0xa0] sm:$0xff]
    %v5979 = vld [vmem:[%s5 + $0xa8] sm:$0xff]
    %v5980 = vld [vmem:[%s5 + $0xb0] sm:$0xff]
    %v5981 = vld [vmem:[%s5 + $0xb8] sm:$0xff]
    %5982 = vrot.lane.b32.xlu0 %v4799, 110
    %v5983 = vpop.permute.xlu0 %5982
    %5984 = vrot.lane.b32.xlu0 %v4800, 110
    %v5985 = vpop.permute.xlu0 %5984
    %5986 = vrot.lane.b32.xlu0 %v4801, 110
    %v5987 = vpop.permute.xlu0 %5986
    %5988 = vrot.lane.b32.xlu0 %v4802, 110
    %v5989 = vpop.permute.xlu0 %5988
    %5990 = vrot.lane.b32.xlu0 %v4811, 110
    %v5991 = vpop.permute.xlu0 %5990
    %5992 = vrot.lane.b32.xlu0 %v4803, 110
    %v5993 = vpop.permute.xlu0 %5992
    %5994 = vrot.lane.b32.xlu0 %v4804, 110
    %v5995 = vpop.permute.xlu0 %5994
    %5996 = vrot.lane.b32.xlu0 %v4805, 110
    %v5997 = vpop.permute.xlu0 %5996
    %5998 = vrot.lane.b32.xlu0 %v4806, 110
    %v5999 = vpop.permute.xlu0 %5998
    %6000 = vrot.lane.b32.xlu0 %v4812, 110
    %v6001 = vpop.permute.xlu0 %6000
    %v6002 = vsel %vm1367, %v5983, %v5985
    %v6003 = vsel %vm1367, %v5985, %v5987
    %v6004 = vsel %vm1367, %v5987, %v5989
    %v6005 = vsel %vm1367, %v5989, %v5991
    %v6006 = vsel %vm1367, %v5993, %v5995
    %v6007 = vsel %vm1367, %v5995, %v5997
    %v6008 = vsel %vm1367, %v5997, %v5999
    %v6009 = vsel %vm1367, %v5999, %v6001
    %v6019 = vsel %vm4859, %v5978, 0
    %v6022 = vsel %vm4859, %v5979, 0
    %v6025 = vsel %vm4859, %v5980, 0
    %v6028 = vsel %vm4859, %v5981, 0
    %6030 = vmatprep.subr.mxu0 %v6003
    %6031 = vmatpush1.msra.mxu0 %v6002
    %6032 = vmatprep.subr.mxu0 %v6007
    %6033 = vmatpush1.msra.mxu0 %v6006
    %6034 = vmatprep.subr.mxu0 0.0
    %6035 = vmatpush1.msra.mxu0 0.0
    %6036 = vmatprep.subr.mxu0 0.0
    %6037 = vmatpush1.msra.mxu0 0.0
    %6038 = vmatprep.subr.mxu0 0.0
    %6039 = vmatpush1.msra.mxu0 0.0
    %6040 = vmatprep.subr.mxu0 0.0
    %6041 = vmatpush1.msra.mxu0 0.0
    %6042 = vmatprep.subr.mxu0 0.0
    %6043 = vmatpush1.msra.mxu0 0.0
    %6044 = vmatprep.subr.mxu0 0.0
    %6045 = vmatpush1.msra.mxu0 0.0
    %6046 = vmatprep.subr.mxu0 0.0
    %6047 = vmatpush1.msra.mxu0 0.0
    %6048 = vmatprep.subr.mxu0 0.0
    %6049 = vmatpush1.msra.mxu0 0.0
    %6050 = vmatprep.subr.mxu0 0.0
    %6051 = vmatpush1.msra.mxu0 0.0
    %6052 = vmatprep.subr.mxu0 0.0
    %6053 = vmatpush1.msra.mxu0 0.0
    %6054 = vmatprep.subr.mxu0 0.0
    %6055 = vmatpush1.msra.mxu0 0.0
    %6056 = vmatprep.subr.mxu0 0.0
    %6057 = vmatpush1.msra.mxu0 0.0
    %6058 = vmatprep.subr.mxu0 0.0
    %6059 = vmatpush1.msra.mxu0 0.0
    %6060 = vmatprep.subr.mxu0 0.0
    %6061 = vmatpush1.msra.mxu0 0.0
    %6062 = vmatprep.subr.mxu0 0.0
    %6063 = vmatpush1.msra.mxu0 0.0
    %6064 = vmatprep.subr.mxu0 0.0
    %6065 = vmatpush1.msra.mxu0 0.0
    %6066 = vmatprep.subr.mxu0 0.0
    %6067 = vmatpush1.msra.mxu0 0.0
    %6068 = vmatprep.subr.mxu0 0.0
    %6069 = vmatpush1.msra.mxu0 0.0
    %6070 = vmatprep.subr.mxu0 0.0
    %6071 = vmatpush1.msra.mxu0 0.0
    %6072 = vmatprep.subr.mxu0 0.0
    %6073 = vmatpush1.msra.mxu0 0.0
    %6074 = vmatprep.subr.mxu0 0.0
    %6075 = vmatpush1.msra.mxu0 0.0
    %6076 = vmatprep.subr.mxu0 0.0
    %6077 = vmatpush1.msra.mxu0 0.0
    %6078 = vmatprep.subr.mxu0 0.0
    %6079 = vmatpush1.msra.mxu0 0.0
    %6080 = vmatprep.subr.mxu0 0.0
    %6081 = vmatpush1.msra.mxu0 0.0
    %6082 = vmatprep.subr.mxu0 0.0
    %6083 = vmatpush1.msra.mxu0 0.0
    %6084 = vmatprep.subr.mxu0 0.0
    %6085 = vmatpush1.msra.mxu0 0.0
    %6086 = vmatprep.subr.mxu0 0.0
    %6087 = vmatpush1.msra.mxu0 0.0
    %6088 = vmatprep.subr.mxu0 0.0
    %6089 = vmatpush1.msra.mxu0 0.0
    %6090 = vmatprep.subr.mxu0 0.0
    %6091 = vmatpush1.msra.mxu0 0.0
    %6092 = vmatprep.subr.mxu0 0.0
    %6093 = vmatpush1.msra.mxu0 0.0
    %6094 = vmatprep.mubr.f32.mxu0 0.0
    %6095 = vmatmul.mubr.f32.gmra.mrb[0].mxu0 %v6019
    %v6096 = vpop.f32.mrb[0].mxu0
    %v6097 = vadd.f32 0.0, %v6096
    %v6098 = vpop.f32.mrb[0].mxu0
    %v6099 = vadd.f32 0.0, %v6098
    %6100 = vmatprep.mubr.f32.mxu0 0.0
    %6101 = vmatmul.mubr.f32.gmra.mrb[0].mxu0 %v6022
    %v6102 = vpop.f32.mrb[0].mxu0
    %v6103 = vadd.f32 0.0, %v6102
    %v6104 = vpop.f32.mrb[0].mxu0
    %v6105 = vadd.f32 0.0, %v6104
    %6106 = vmatprep.mubr.f32.mxu0 0.0
    %6107 = vmatmul.mubr.f32.gmra.mrb[0].mxu0 %v6025
    %v6108 = vpop.f32.mrb[0].mxu0
    %v6109 = vadd.f32 0.0, %v6108
    %v6110 = vpop.f32.mrb[0].mxu0
    %v6111 = vadd.f32 0.0, %v6110
    %6112 = vmatprep.mubr.f32.mxu0 0.0
    %6113 = vmatmul.mubr.f32.gmra.mrb[0].mxu0 %v6028
    %v6114 = vpop.f32.mrb[0].mxu0
    %v6115 = vadd.f32 0.0, %v6114
    %v6116 = vpop.f32.mrb[0].mxu0
    %v6117 = vadd.f32 0.0, %v6116
    %6118 = vdwg.mxu0
    %6119 = vmatprep.subr.mxu0 %v6005
    %6120 = vmatpush1.msra.mxu0 %v6004
    %6121 = vmatprep.subr.mxu0 %v6009
    %6122 = vmatpush1.msra.mxu0 %v6008
    %6123 = vmatprep.subr.mxu0 0.0
    %6124 = vmatpush1.msra.mxu0 0.0
    %6125 = vmatprep.subr.mxu0 0.0
    %6126 = vmatpush1.msra.mxu0 0.0
    %6127 = vmatprep.subr.mxu0 0.0
    %6128 = vmatpush1.msra.mxu0 0.0
    %6129 = vmatprep.subr.mxu0 0.0
    %6130 = vmatpush1.msra.mxu0 0.0
    %6131 = vmatprep.subr.mxu0 0.0
    %6132 = vmatpush1.msra.mxu0 0.0
    %6133 = vmatprep.subr.mxu0 0.0
    %6134 = vmatpush1.msra.mxu0 0.0
    %6135 = vmatprep.subr.mxu0 0.0
    %6136 = vmatpush1.msra.mxu0 0.0
    %6137 = vmatprep.subr.mxu0 0.0
    %6138 = vmatpush1.msra.mxu0 0.0
    %6139 = vmatprep.subr.mxu0 0.0
    %6140 = vmatpush1.msra.mxu0 0.0
    %6141 = vmatprep.subr.mxu0 0.0
    %6142 = vmatpush1.msra.mxu0 0.0
    %6143 = vmatprep.subr.mxu0 0.0
    %6144 = vmatpush1.msra.mxu0 0.0
    %6145 = vmatprep.subr.mxu0 0.0
    %6146 = vmatpush1.msra.mxu0 0.0
    %6147 = vmatprep.subr.mxu0 0.0
    %6148 = vmatpush1.msra.mxu0 0.0
    %6149 = vmatprep.subr.mxu0 0.0
    %6150 = vmatpush1.msra.mxu0 0.0
    %6151 = vmatprep.subr.mxu0 0.0
    %6152 = vmatpush1.msra.mxu0 0.0
    %6153 = vmatprep.subr.mxu0 0.0
    %6154 = vmatpush1.msra.mxu0 0.0
    %6155 = vmatprep.subr.mxu0 0.0
    %6156 = vmatpush1.msra.mxu0 0.0
    %6157 = vmatprep.subr.mxu0 0.0
    %6158 = vmatpush1.msra.mxu0 0.0
    %6159 = vmatprep.subr.mxu0 0.0
    %6160 = vmatpush1.msra.mxu0 0.0
    %6161 = vmatprep.subr.mxu0 0.0
    %6162 = vmatpush1.msra.mxu0 0.0
    %6163 = vmatprep.subr.mxu0 0.0
    %6164 = vmatpush1.msra.mxu0 0.0
    %6165 = vmatprep.subr.mxu0 0.0
    %6166 = vmatpush1.msra.mxu0 0.0
    %6167 = vmatprep.subr.mxu0 0.0
    %6168 = vmatpush1.msra.mxu0 0.0
    %6169 = vmatprep.subr.mxu0 0.0
    %6170 = vmatpush1.msra.mxu0 0.0
    %6171 = vmatprep.subr.mxu0 0.0
    %6172 = vmatpush1.msra.mxu0 0.0
    %6173 = vmatprep.subr.mxu0 0.0
    %6174 = vmatpush1.msra.mxu0 0.0
    %6175 = vmatprep.subr.mxu0 0.0
    %6176 = vmatpush1.msra.mxu0 0.0
    %6177 = vmatprep.subr.mxu0 0.0
    %6178 = vmatpush1.msra.mxu0 0.0
    %6179 = vmatprep.subr.mxu0 0.0
    %6180 = vmatpush1.msra.mxu0 0.0
    %6181 = vmatprep.subr.mxu0 0.0
    %6182 = vmatpush1.msra.mxu0 0.0
    %6183 = vmatprep.mubr.f32.mxu0 0.0
    %6184 = vmatmul.mubr.f32.gmra.mrb[0].mxu0 %v6019
    %v6185 = vpop.f32.mrb[0].mxu0
    %v6186 = vadd.f32 0.0, %v6185
    %v6187 = vpop.f32.mrb[0].mxu0
    %v6188 = vadd.f32 0.0, %v6187
    %6189 = vmatprep.mubr.f32.mxu0 0.0
    %6190 = vmatmul.mubr.f32.gmra.mrb[0].mxu0 %v6022
    %v6191 = vpop.f32.mrb[0].mxu0
    %v6192 = vadd.f32 0.0, %v6191
    %v6193 = vpop.f32.mrb[0].mxu0
    %v6194 = vadd.f32 0.0, %v6193
    %6195 = vmatprep.mubr.f32.mxu0 0.0
    %6196 = vmatmul.mubr.f32.gmra.mrb[0].mxu0 %v6025
    %v6197 = vpop.f32.mrb[0].mxu0
    %v6198 = vadd.f32 0.0, %v6197
    %v6199 = vpop.f32.mrb[0].mxu0
    %v6200 = vadd.f32 0.0, %v6199
    %6201 = vmatprep.mubr.f32.mxu0 0.0
    %6202 = vmatmul.mubr.f32.gmra.mrb[0].mxu0 %v6028
    %v6203 = vpop.f32.mrb[0].mxu0
    %v6204 = vadd.f32 0.0, %v6203
    %v6205 = vpop.f32.mrb[0].mxu0
    %v6206 = vadd.f32 0.0, %v6205
    %6207 = vdwg.mxu0
    %v6208 = vadd.f32 %v5962, %v6097
    %v6209 = vadd.f32 %v5963, %v6099
    %v6210 = vadd.f32 %v5964, %v6186
    %v6211 = vadd.f32 %v5965, %v6188
    %v6212 = vadd.f32 %v5966, %v6103
    %v6213 = vadd.f32 %v5967, %v6105
    %v6214 = vadd.f32 %v5968, %v6192
    %v6215 = vadd.f32 %v5969, %v6194
    %v6216 = vadd.f32 %v5970, %v6109
    %v6217 = vadd.f32 %v5971, %v6111
    %v6218 = vadd.f32 %v5972, %v6198
    %v6219 = vadd.f32 %v5973, %v6200
    %v6220 = vadd.f32 %v5974, %v6115
    %v6221 = vadd.f32 %v5975, %v6117
    %v6222 = vadd.f32 %v5976, %v6204
    %v6223 = vadd.f32 %v5977, %v6206
    %v6224 = vld [vmem:[%s5 + $0xc0] sm:$0xff]
    %v6225 = vld [vmem:[%s5 + $0xc8] sm:$0xff]
    %v6226 = vld [vmem:[%s5 + $0xd0] sm:$0xff]
    %v6227 = vld [vmem:[%s5 + $0xd8] sm:$0xff]
    %6228 = vrot.lane.b32.xlu0 %v4799, 96
    %v6229 = vpop.permute.xlu0 %6228
    %6230 = vrot.lane.b32.xlu0 %v4800, 96
    %v6231 = vpop.permute.xlu0 %6230
    %6232 = vrot.lane.b32.xlu0 %v4801, 96
    %v6233 = vpop.permute.xlu0 %6232
    %6234 = vrot.lane.b32.xlu0 %v4802, 96
    %v6235 = vpop.permute.xlu0 %6234
    %6236 = vrot.lane.b32.xlu0 %v4811, 96
    %v6237 = vpop.permute.xlu0 %6236
    %6238 = vrot.lane.b32.xlu0 %v4803, 96
    %v6239 = vpop.permute.xlu0 %6238
    %6240 = vrot.lane.b32.xlu0 %v4804, 96
    %v6241 = vpop.permute.xlu0 %6240
    %6242 = vrot.lane.b32.xlu0 %v4805, 96
    %v6243 = vpop.permute.xlu0 %6242
    %6244 = vrot.lane.b32.xlu0 %v4806, 96
    %v6245 = vpop.permute.xlu0 %6244
    %6246 = vrot.lane.b32.xlu0 %v4812, 96
    %v6247 = vpop.permute.xlu0 %6246
    %v6248 = vsel %vm1621, %v6229, %v6231
    %v6249 = vsel %vm1621, %v6231, %v6233
    %v6250 = vsel %vm1621, %v6233, %v6235
    %v6251 = vsel %vm1621, %v6235, %v6237
    %v6252 = vsel %vm1621, %v6239, %v6241
    %v6253 = vsel %vm1621, %v6241, %v6243
    %v6254 = vsel %vm1621, %v6243, %v6245
    %v6255 = vsel %vm1621, %v6245, %v6247
    %v6265 = vsel %vm4859, %v6224, 0
    %v6268 = vsel %vm4859, %v6225, 0
    %v6271 = vsel %vm4859, %v6226, 0
    %v6274 = vsel %vm4859, %v6227, 0
    %6276 = vmatprep.subr.mxu0 %v6249
    %6277 = vmatpush1.msra.mxu0 %v6248
    %6278 = vmatprep.subr.mxu0 %v6253
    %6279 = vmatpush1.msra.mxu0 %v6252
    %6280 = vmatprep.subr.mxu0 0.0
    %6281 = vmatpush1.msra.mxu0 0.0
    %6282 = vmatprep.subr.mxu0 0.0
    %6283 = vmatpush1.msra.mxu0 0.0
    %6284 = vmatprep.subr.mxu0 0.0
    %6285 = vmatpush1.msra.mxu0 0.0
    %6286 = vmatprep.subr.mxu0 0.0
    %6287 = vmatpush1.msra.mxu0 0.0
    %6288 = vmatprep.subr.mxu0 0.0
    %6289 = vmatpush1.msra.mxu0 0.0
    %6290 = vmatprep.subr.mxu0 0.0
    %6291 = vmatpush1.msra.mxu0 0.0
    %6292 = vmatprep.subr.mxu0 0.0
    %6293 = vmatpush1.msra.mxu0 0.0
    %6294 = vmatprep.subr.mxu0 0.0
    %6295 = vmatpush1.msra.mxu0 0.0
    %6296 = vmatprep.subr.mxu0 0.0
    %6297 = vmatpush1.msra.mxu0 0.0
    %6298 = vmatprep.subr.mxu0 0.0
    %6299 = vmatpush1.msra.mxu0 0.0
    %6300 = vmatprep.subr.mxu0 0.0
    %6301 = vmatpush1.msra.mxu0 0.0
    %6302 = vmatprep.subr.mxu0 0.0
    %6303 = vmatpush1.msra.mxu0 0.0
    %6304 = vmatprep.subr.mxu0 0.0
    %6305 = vmatpush1.msra.mxu0 0.0
    %6306 = vmatprep.subr.mxu0 0.0
    %6307 = vmatpush1.msra.mxu0 0.0
    %6308 = vmatprep.subr.mxu0 0.0
    %6309 = vmatpush1.msra.mxu0 0.0
    %6310 = vmatprep.subr.mxu0 0.0
    %6311 = vmatpush1.msra.mxu0 0.0
    %6312 = vmatprep.subr.mxu0 0.0
    %6313 = vmatpush1.msra.mxu0 0.0
    %6314 = vmatprep.subr.mxu0 0.0
    %6315 = vmatpush1.msra.mxu0 0.0
    %6316 = vmatprep.subr.mxu0 0.0
    %6317 = vmatpush1.msra.mxu0 0.0
    %6318 = vmatprep.subr.mxu0 0.0
    %6319 = vmatpush1.msra.mxu0 0.0
    %6320 = vmatprep.subr.mxu0 0.0
    %6321 = vmatpush1.msra.mxu0 0.0
    %6322 = vmatprep.subr.mxu0 0.0
    %6323 = vmatpush1.msra.mxu0 0.0
    %6324 = vmatprep.subr.mxu0 0.0
    %6325 = vmatpush1.msra.mxu0 0.0
    %6326 = vmatprep.subr.mxu0 0.0
    %6327 = vmatpush1.msra.mxu0 0.0
    %6328 = vmatprep.subr.mxu0 0.0
    %6329 = vmatpush1.msra.mxu0 0.0
    %6330 = vmatprep.subr.mxu0 0.0
    %6331 = vmatpush1.msra.mxu0 0.0
    %6332 = vmatprep.subr.mxu0 0.0
    %6333 = vmatpush1.msra.mxu0 0.0
    %6334 = vmatprep.subr.mxu0 0.0
    %6335 = vmatpush1.msra.mxu0 0.0
    %6336 = vmatprep.subr.mxu0 0.0
    %6337 = vmatpush1.msra.mxu0 0.0
    %6338 = vmatprep.subr.mxu0 0.0
    %6339 = vmatpush1.msra.mxu0 0.0
    %6340 = vmatprep.mubr.f32.mxu0 0.0
    %6341 = vmatmul.mubr.f32.gmra.mrb[0].mxu0 %v6265
    %v6342 = vpop.f32.mrb[0].mxu0
    %v6343 = vadd.f32 0.0, %v6342
    %v6344 = vpop.f32.mrb[0].mxu0
    %v6345 = vadd.f32 0.0, %v6344
    %6346 = vmatprep.mubr.f32.mxu0 0.0
    %6347 = vmatmul.mubr.f32.gmra.mrb[0].mxu0 %v6268
    %v6348 = vpop.f32.mrb[0].mxu0
    %v6349 = vadd.f32 0.0, %v6348
    %v6350 = vpop.f32.mrb[0].mxu0
    %v6351 = vadd.f32 0.0, %v6350
    %6352 = vmatprep.mubr.f32.mxu0 0.0
    %6353 = vmatmul.mubr.f32.gmra.mrb[0].mxu0 %v6271
    %v6354 = vpop.f32.mrb[0].mxu0
    %v6355 = vadd.f32 0.0, %v6354
    %v6356 = vpop.f32.mrb[0].mxu0
    %v6357 = vadd.f32 0.0, %v6356
    %6358 = vmatprep.mubr.f32.mxu0 0.0
    %6359 = vmatmul.mubr.f32.gmra.mrb[0].mxu0 %v6274
    %v6360 = vpop.f32.mrb[0].mxu0
    %v6361 = vadd.f32 0.0, %v6360
    %v6362 = vpop.f32.mrb[0].mxu0
    %v6363 = vadd.f32 0.0, %v6362
    %6364 = vdwg.mxu0
    %6365 = vmatprep.subr.mxu0 %v6251
    %6366 = vmatpush1.msra.mxu0 %v6250
    %6367 = vmatprep.subr.mxu0 %v6255
    %6368 = vmatpush1.msra.mxu0 %v6254
    %6369 = vmatprep.subr.mxu0 0.0
    %6370 = vmatpush1.msra.mxu0 0.0
    %6371 = vmatprep.subr.mxu0 0.0
    %6372 = vmatpush1.msra.mxu0 0.0
    %6373 = vmatprep.subr.mxu0 0.0
    %6374 = vmatpush1.msra.mxu0 0.0
    %6375 = vmatprep.subr.mxu0 0.0
    %6376 = vmatpush1.msra.mxu0 0.0
    %6377 = vmatprep.subr.mxu0 0.0
    %6378 = vmatpush1.msra.mxu0 0.0
    %6379 = vmatprep.subr.mxu0 0.0
    %6380 = vmatpush1.msra.mxu0 0.0
    %6381 = vmatprep.subr.mxu0 0.0
    %6382 = vmatpush1.msra.mxu0 0.0
    %6383 = vmatprep.subr.mxu0 0.0
    %6384 = vmatpush1.msra.mxu0 0.0
    %6385 = vmatprep.subr.mxu0 0.0
    %6386 = vmatpush1.msra.mxu0 0.0
    %6387 = vmatprep.subr.mxu0 0.0
    %6388 = vmatpush1.msra.mxu0 0.0
    %6389 = vmatprep.subr.mxu0 0.0
    %6390 = vmatpush1.msra.mxu0 0.0
    %6391 = vmatprep.subr.mxu0 0.0
    %6392 = vmatpush1.msra.mxu0 0.0
    %6393 = vmatprep.subr.mxu0 0.0
    %6394 = vmatpush1.msra.mxu0 0.0
    %6395 = vmatprep.subr.mxu0 0.0
    %6396 = vmatpush1.msra.mxu0 0.0
    %6397 = vmatprep.subr.mxu0 0.0
    %6398 = vmatpush1.msra.mxu0 0.0
    %6399 = vmatprep.subr.mxu0 0.0
    %6400 = vmatpush1.msra.mxu0 0.0
    %6401 = vmatprep.subr.mxu0 0.0
    %6402 = vmatpush1.msra.mxu0 0.0
    %6403 = vmatprep.subr.mxu0 0.0
    %6404 = vmatpush1.msra.mxu0 0.0
    %6405 = vmatprep.subr.mxu0 0.0
    %6406 = vmatpush1.msra.mxu0 0.0
    %6407 = vmatprep.subr.mxu0 0.0
    %6408 = vmatpush1.msra.mxu0 0.0
    %6409 = vmatprep.subr.mxu0 0.0
    %6410 = vmatpush1.msra.mxu0 0.0
    %6411 = vmatprep.subr.mxu0 0.0
    %6412 = vmatpush1.msra.mxu0 0.0
    %6413 = vmatprep.subr.mxu0 0.0
    %6414 = vmatpush1.msra.mxu0 0.0
    %6415 = vmatprep.subr.mxu0 0.0
    %6416 = vmatpush1.msra.mxu0 0.0
    %6417 = vmatprep.subr.mxu0 0.0
    %6418 = vmatpush1.msra.mxu0 0.0
    %6419 = vmatprep.subr.mxu0 0.0
    %6420 = vmatpush1.msra.mxu0 0.0
    %6421 = vmatprep.subr.mxu0 0.0
    %6422 = vmatpush1.msra.mxu0 0.0
    %6423 = vmatprep.subr.mxu0 0.0
    %6424 = vmatpush1.msra.mxu0 0.0
    %6425 = vmatprep.subr.mxu0 0.0
    %6426 = vmatpush1.msra.mxu0 0.0
    %6427 = vmatprep.subr.mxu0 0.0
    %6428 = vmatpush1.msra.mxu0 0.0
    %6429 = vmatprep.mubr.f32.mxu0 0.0
    %6430 = vmatmul.mubr.f32.gmra.mrb[0].mxu0 %v6265
    %v6431 = vpop.f32.mrb[0].mxu0
    %v6432 = vadd.f32 0.0, %v6431
    %v6433 = vpop.f32.mrb[0].mxu0
    %v6434 = vadd.f32 0.0, %v6433
    %6435 = vmatprep.mubr.f32.mxu0 0.0
    %6436 = vmatmul.mubr.f32.gmra.mrb[0].mxu0 %v6268
    %v6437 = vpop.f32.mrb[0].mxu0
    %v6438 = vadd.f32 0.0, %v6437
    %v6439 = vpop.f32.mrb[0].mxu0
    %v6440 = vadd.f32 0.0, %v6439
    %6441 = vmatprep.mubr.f32.mxu0 0.0
    %6442 = vmatmul.mubr.f32.gmra.mrb[0].mxu0 %v6271
    %v6443 = vpop.f32.mrb[0].mxu0
    %v6444 = vadd.f32 0.0, %v6443
    %v6445 = vpop.f32.mrb[0].mxu0
    %v6446 = vadd.f32 0.0, %v6445
    %6447 = vmatprep.mubr.f32.mxu0 0.0
    %6448 = vmatmul.mubr.f32.gmra.mrb[0].mxu0 %v6274
    %v6449 = vpop.f32.mrb[0].mxu0
    %v6450 = vadd.f32 0.0, %v6449
    %v6451 = vpop.f32.mrb[0].mxu0
    %v6452 = vadd.f32 0.0, %v6451
    %6453 = vdwg.mxu0
    %v6454 = vadd.f32 %v6208, %v6343
    %v6455 = vadd.f32 %v6209, %v6345
    %v6456 = vadd.f32 %v6210, %v6432
    %v6457 = vadd.f32 %v6211, %v6434
    %v6458 = vadd.f32 %v6212, %v6349
    %v6459 = vadd.f32 %v6213, %v6351
    %v6460 = vadd.f32 %v6214, %v6438
    %v6461 = vadd.f32 %v6215, %v6440
    %v6462 = vadd.f32 %v6216, %v6355
    %v6463 = vadd.f32 %v6217, %v6357
    %v6464 = vadd.f32 %v6218, %v6444
    %v6465 = vadd.f32 %v6219, %v6446
    %v6466 = vadd.f32 %v6220, %v6361
    %v6467 = vadd.f32 %v6221, %v6363
    %v6468 = vadd.f32 %v6222, %v6450
    %v6469 = vadd.f32 %v6223, %v6452
    %v6470 = vld [vmem:[%s5 + $0xe0] sm:$0xff]
    %v6471 = vld [vmem:[%s5 + $0xe8] sm:$0xff]
    %v6472 = vld [vmem:[%s5 + $0xf0] sm:$0xff]
    %v6473 = vld [vmem:[%s5 + $0xf8] sm:$0xff]
    %6474 = vrot.lane.b32.xlu0 %v4799, 95
    %v6475 = vpop.permute.xlu0 %6474
    %6476 = vrot.lane.b32.xlu0 %v4800, 95
    %v6477 = vpop.permute.xlu0 %6476
    %6478 = vrot.lane.b32.xlu0 %v4801, 95
    %v6479 = vpop.permute.xlu0 %6478
    %6480 = vrot.lane.b32.xlu0 %v4802, 95
    %v6481 = vpop.permute.xlu0 %6480
    %6482 = vrot.lane.b32.xlu0 %v4811, 95
    %v6483 = vpop.permute.xlu0 %6482
    %6484 = vrot.lane.b32.xlu0 %v4803, 95
    %v6485 = vpop.permute.xlu0 %6484
    %6486 = vrot.lane.b32.xlu0 %v4804, 95
    %v6487 = vpop.permute.xlu0 %6486
    %6488 = vrot.lane.b32.xlu0 %v4805, 95
    %v6489 = vpop.permute.xlu0 %6488
    %6490 = vrot.lane.b32.xlu0 %v4806, 95
    %v6491 = vpop.permute.xlu0 %6490
    %6492 = vrot.lane.b32.xlu0 %v4812, 95
    %v6493 = vpop.permute.xlu0 %6492
    %v6494 = vsel %vm1875, %v6475, %v6477
    %v6495 = vsel %vm1875, %v6477, %v6479
    %v6496 = vsel %vm1875, %v6479, %v6481
    %v6497 = vsel %vm1875, %v6481, %v6483
    %v6498 = vsel %vm1875, %v6485, %v6487
    %v6499 = vsel %vm1875, %v6487, %v6489
    %v6500 = vsel %vm1875, %v6489, %v6491
    %v6501 = vsel %vm1875, %v6491, %v6493
    %v6511 = vsel %vm4859, %v6470, 0
    %v6514 = vsel %vm4859, %v6471, 0
    %v6517 = vsel %vm4859, %v6472, 0
    %v6520 = vsel %vm4859, %v6473, 0
    %6522 = vmatprep.subr.mxu0 %v6495
    %6523 = vmatpush1.msra.mxu0 %v6494
    %6524 = vmatprep.subr.mxu0 %v6499
    %6525 = vmatpush1.msra.mxu0 %v6498
    %6526 = vmatprep.subr.mxu0 0.0
    %6527 = vmatpush1.msra.mxu0 0.0
    %6528 = vmatprep.subr.mxu0 0.0
    %6529 = vmatpush1.msra.mxu0 0.0
    %6530 = vmatprep.subr.mxu0 0.0
    %6531 = vmatpush1.msra.mxu0 0.0
    %6532 = vmatprep.subr.mxu0 0.0
    %6533 = vmatpush1.msra.mxu0 0.0
    %6534 = vmatprep.subr.mxu0 0.0
    %6535 = vmatpush1.msra.mxu0 0.0
    %6536 = vmatprep.subr.mxu0 0.0
    %6537 = vmatpush1.msra.mxu0 0.0
    %6538 = vmatprep.subr.mxu0 0.0
    %6539 = vmatpush1.msra.mxu0 0.0
    %6540 = vmatprep.subr.mxu0 0.0
    %6541 = vmatpush1.msra.mxu0 0.0
    %6542 = vmatprep.subr.mxu0 0.0
    %6543 = vmatpush1.msra.mxu0 0.0
    %6544 = vmatprep.subr.mxu0 0.0
    %6545 = vmatpush1.msra.mxu0 0.0
    %6546 = vmatprep.subr.mxu0 0.0
    %6547 = vmatpush1.msra.mxu0 0.0
    %6548 = vmatprep.subr.mxu0 0.0
    %6549 = vmatpush1.msra.mxu0 0.0
    %6550 = vmatprep.subr.mxu0 0.0
    %6551 = vmatpush1.msra.mxu0 0.0
    %6552 = vmatprep.subr.mxu0 0.0
    %6553 = vmatpush1.msra.mxu0 0.0
    %6554 = vmatprep.subr.mxu0 0.0
    %6555 = vmatpush1.msra.mxu0 0.0
    %6556 = vmatprep.subr.mxu0 0.0
    %6557 = vmatpush1.msra.mxu0 0.0
    %6558 = vmatprep.subr.mxu0 0.0
    %6559 = vmatpush1.msra.mxu0 0.0
    %6560 = vmatprep.subr.mxu0 0.0
    %6561 = vmatpush1.msra.mxu0 0.0
    %6562 = vmatprep.subr.mxu0 0.0
    %6563 = vmatpush1.msra.mxu0 0.0
    %6564 = vmatprep.subr.mxu0 0.0
    %6565 = vmatpush1.msra.mxu0 0.0
    %6566 = vmatprep.subr.mxu0 0.0
    %6567 = vmatpush1.msra.mxu0 0.0
    %6568 = vmatprep.subr.mxu0 0.0
    %6569 = vmatpush1.msra.mxu0 0.0
    %6570 = vmatprep.subr.mxu0 0.0
    %6571 = vmatpush1.msra.mxu0 0.0
    %6572 = vmatprep.subr.mxu0 0.0
    %6573 = vmatpush1.msra.mxu0 0.0
    %6574 = vmatprep.subr.mxu0 0.0
    %6575 = vmatpush1.msra.mxu0 0.0
    %6576 = vmatprep.subr.mxu0 0.0
    %6577 = vmatpush1.msra.mxu0 0.0
    %6578 = vmatprep.subr.mxu0 0.0
    %6579 = vmatpush1.msra.mxu0 0.0
    %6580 = vmatprep.subr.mxu0 0.0
    %6581 = vmatpush1.msra.mxu0 0.0
    %6582 = vmatprep.subr.mxu0 0.0
    %6583 = vmatpush1.msra.mxu0 0.0
    %6584 = vmatprep.subr.mxu0 0.0
    %6585 = vmatpush1.msra.mxu0 0.0
    %6586 = vmatprep.mubr.f32.mxu0 0.0
    %6587 = vmatmul.mubr.f32.gmra.mrb[0].mxu0 %v6511
    %v6588 = vpop.f32.mrb[0].mxu0
    %v6589 = vadd.f32 0.0, %v6588
    %v6590 = vpop.f32.mrb[0].mxu0
    %v6591 = vadd.f32 0.0, %v6590
    %6592 = vmatprep.mubr.f32.mxu0 0.0
    %6593 = vmatmul.mubr.f32.gmra.mrb[0].mxu0 %v6514
    %v6594 = vpop.f32.mrb[0].mxu0
    %v6595 = vadd.f32 0.0, %v6594
    %v6596 = vpop.f32.mrb[0].mxu0
    %v6597 = vadd.f32 0.0, %v6596
    %6598 = vmatprep.mubr.f32.mxu0 0.0
    %6599 = vmatmul.mubr.f32.gmra.mrb[0].mxu0 %v6517
    %v6600 = vpop.f32.mrb[0].mxu0
    %v6601 = vadd.f32 0.0, %v6600
    %v6602 = vpop.f32.mrb[0].mxu0
    %v6603 = vadd.f32 0.0, %v6602
    %6604 = vmatprep.mubr.f32.mxu0 0.0
    %6605 = vmatmul.mubr.f32.gmra.mrb[0].mxu0 %v6520
    %v6606 = vpop.f32.mrb[0].mxu0
    %v6607 = vadd.f32 0.0, %v6606
    %v6608 = vpop.f32.mrb[0].mxu0
    %v6609 = vadd.f32 0.0, %v6608
    %6610 = vdwg.mxu0
    %6611 = vmatprep.subr.mxu0 %v6497
    %6612 = vmatpush1.msra.mxu0 %v6496
    %6613 = vmatprep.subr.mxu0 %v6501
    %6614 = vmatpush1.msra.mxu0 %v6500
    %6615 = vmatprep.subr.mxu0 0.0
    %6616 = vmatpush1.msra.mxu0 0.0
    %6617 = vmatprep.subr.mxu0 0.0
    %6618 = vmatpush1.msra.mxu0 0.0
    %6619 = vmatprep.subr.mxu0 0.0
    %6620 = vmatpush1.msra.mxu0 0.0
    %6621 = vmatprep.subr.mxu0 0.0
    %6622 = vmatpush1.msra.mxu0 0.0
    %6623 = vmatprep.subr.mxu0 0.0
    %6624 = vmatpush1.msra.mxu0 0.0
    %6625 = vmatprep.subr.mxu0 0.0
    %6626 = vmatpush1.msra.mxu0 0.0
    %6627 = vmatprep.subr.mxu0 0.0
    %6628 = vmatpush1.msra.mxu0 0.0
    %6629 = vmatprep.subr.mxu0 0.0
    %6630 = vmatpush1.msra.mxu0 0.0
    %6631 = vmatprep.subr.mxu0 0.0
    %6632 = vmatpush1.msra.mxu0 0.0
    %6633 = vmatprep.subr.mxu0 0.0
    %6634 = vmatpush1.msra.mxu0 0.0
    %6635 = vmatprep.subr.mxu0 0.0
    %6636 = vmatpush1.msra.mxu0 0.0
    %6637 = vmatprep.subr.mxu0 0.0
    %6638 = vmatpush1.msra.mxu0 0.0
    %6639 = vmatprep.subr.mxu0 0.0
    %6640 = vmatpush1.msra.mxu0 0.0
    %6641 = vmatprep.subr.mxu0 0.0
    %6642 = vmatpush1.msra.mxu0 0.0
    %6643 = vmatprep.subr.mxu0 0.0
    %6644 = vmatpush1.msra.mxu0 0.0
    %6645 = vmatprep.subr.mxu0 0.0
    %6646 = vmatpush1.msra.mxu0 0.0
    %6647 = vmatprep.subr.mxu0 0.0
    %6648 = vmatpush1.msra.mxu0 0.0
    %6649 = vmatprep.subr.mxu0 0.0
    %6650 = vmatpush1.msra.mxu0 0.0
    %6651 = vmatprep.subr.mxu0 0.0
    %6652 = vmatpush1.msra.mxu0 0.0
    %6653 = vmatprep.subr.mxu0 0.0
    %6654 = vmatpush1.msra.mxu0 0.0
    %6655 = vmatprep.subr.mxu0 0.0
    %6656 = vmatpush1.msra.mxu0 0.0
    %6657 = vmatprep.subr.mxu0 0.0
    %6658 = vmatpush1.msra.mxu0 0.0
    %6659 = vmatprep.subr.mxu0 0.0
    %6660 = vmatpush1.msra.mxu0 0.0
    %6661 = vmatprep.subr.mxu0 0.0
    %6662 = vmatpush1.msra.mxu0 0.0
    %6663 = vmatprep.subr.mxu0 0.0
    %6664 = vmatpush1.msra.mxu0 0.0
    %6665 = vmatprep.subr.mxu0 0.0
    %6666 = vmatpush1.msra.mxu0 0.0
    %6667 = vmatprep.subr.mxu0 0.0
    %6668 = vmatpush1.msra.mxu0 0.0
    %6669 = vmatprep.subr.mxu0 0.0
    %6670 = vmatpush1.msra.mxu0 0.0
    %6671 = vmatprep.subr.mxu0 0.0
    %6672 = vmatpush1.msra.mxu0 0.0
    %6673 = vmatprep.subr.mxu0 0.0
    %6674 = vmatpush1.msra.mxu0 0.0
    %6675 = vmatprep.mubr.f32.mxu0 0.0
    %6676 = vmatmul.mubr.f32.gmra.mrb[0].mxu0 %v6511
    %v6677 = vpop.f32.mrb[0].mxu0
    %v6678 = vadd.f32 0.0, %v6677
    %v6679 = vpop.f32.mrb[0].mxu0
    %v6680 = vadd.f32 0.0, %v6679
    %6681 = vmatprep.mubr.f32.mxu0 0.0
    %6682 = vmatmul.mubr.f32.gmra.mrb[0].mxu0 %v6514
    %v6683 = vpop.f32.mrb[0].mxu0
    %v6684 = vadd.f32 0.0, %v6683
    %v6685 = vpop.f32.mrb[0].mxu0
    %v6686 = vadd.f32 0.0, %v6685
    %6687 = vmatprep.mubr.f32.mxu0 0.0
    %6688 = vmatmul.mubr.f32.gmra.mrb[0].mxu0 %v6517
    %v6689 = vpop.f32.mrb[0].mxu0
    %v6690 = vadd.f32 0.0, %v6689
    %v6691 = vpop.f32.mrb[0].mxu0
    %v6692 = vadd.f32 0.0, %v6691
    %6693 = vmatprep.mubr.f32.mxu0 0.0
    %6694 = vmatmul.mubr.f32.gmra.mrb[0].mxu0 %v6520
    %v6695 = vpop.f32.mrb[0].mxu0
    %v6696 = vadd.f32 0.0, %v6695
    %v6697 = vpop.f32.mrb[0].mxu0
    %v6698 = vadd.f32 0.0, %v6697
    %6699 = vdwg.mxu0
    %v6700 = vadd.f32 %v6454, %v6589
    %v6701 = vadd.f32 %v6455, %v6591
    %v6702 = vadd.f32 %v6456, %v6678
    %v6703 = vadd.f32 %v6457, %v6680
    %v6704 = vadd.f32 %v6458, %v6595
    %v6705 = vadd.f32 %v6459, %v6597
    %v6706 = vadd.f32 %v6460, %v6684
    %v6707 = vadd.f32 %v6461, %v6686
    %v6708 = vadd.f32 %v6462, %v6601
    %v6709 = vadd.f32 %v6463, %v6603
    %v6710 = vadd.f32 %v6464, %v6690
    %v6711 = vadd.f32 %v6465, %v6692
    %v6712 = vadd.f32 %v6466, %v6607
    %v6713 = vadd.f32 %v6467, %v6609
    %v6714 = vadd.f32 %v6468, %v6696
    %v6715 = vadd.f32 %v6469, %v6698
    %v6716 = vld [vmem:[%s5 + $0x100] sm:$0xff]
    %v6717 = vld [vmem:[%s5 + $0x108] sm:$0xff]
    %v6718 = vld [vmem:[%s5 + $0x110] sm:$0xff]
    %v6719 = vld [vmem:[%s5 + $0x118] sm:$0xff]
    %6720 = vrot.lane.b32.xlu0 %v4799, 94
    %v6721 = vpop.permute.xlu0 %6720
    %6722 = vrot.lane.b32.xlu0 %v4800, 94
    %v6723 = vpop.permute.xlu0 %6722
    %6724 = vrot.lane.b32.xlu0 %v4801, 94
    %v6725 = vpop.permute.xlu0 %6724
    %6726 = vrot.lane.b32.xlu0 %v4802, 94
    %v6727 = vpop.permute.xlu0 %6726
    %6728 = vrot.lane.b32.xlu0 %v4811, 94
    %v6729 = vpop.permute.xlu0 %6728
    %6730 = vrot.lane.b32.xlu0 %v4803, 94
    %v6731 = vpop.permute.xlu0 %6730
    %6732 = vrot.lane.b32.xlu0 %v4804, 94
    %v6733 = vpop.permute.xlu0 %6732
    %6734 = vrot.lane.b32.xlu0 %v4805, 94
    %v6735 = vpop.permute.xlu0 %6734
    %6736 = vrot.lane.b32.xlu0 %v4806, 94
    %v6737 = vpop.permute.xlu0 %6736
    %6738 = vrot.lane.b32.xlu0 %v4812, 94
    %v6739 = vpop.permute.xlu0 %6738
    %v6740 = vsel %vm2129, %v6721, %v6723
    %v6741 = vsel %vm2129, %v6723, %v6725
    %v6742 = vsel %vm2129, %v6725, %v6727
    %v6743 = vsel %vm2129, %v6727, %v6729
    %v6744 = vsel %vm2129, %v6731, %v6733
    %v6745 = vsel %vm2129, %v6733, %v6735
    %v6746 = vsel %vm2129, %v6735, %v6737
    %v6747 = vsel %vm2129, %v6737, %v6739
    %v6757 = vsel %vm4859, %v6716, 0
    %v6760 = vsel %vm4859, %v6717, 0
    %v6763 = vsel %vm4859, %v6718, 0
    %v6766 = vsel %vm4859, %v6719, 0
    %6768 = vmatprep.subr.mxu0 %v6741
    %6769 = vmatpush1.msra.mxu0 %v6740
    %6770 = vmatprep.subr.mxu0 %v6745
    %6771 = vmatpush1.msra.mxu0 %v6744
    %6772 = vmatprep.subr.mxu0 0.0
    %6773 = vmatpush1.msra.mxu0 0.0
    %6774 = vmatprep.subr.mxu0 0.0
    %6775 = vmatpush1.msra.mxu0 0.0
    %6776 = vmatprep.subr.mxu0 0.0
    %6777 = vmatpush1.msra.mxu0 0.0
    %6778 = vmatprep.subr.mxu0 0.0
    %6779 = vmatpush1.msra.mxu0 0.0
    %6780 = vmatprep.subr.mxu0 0.0
    %6781 = vmatpush1.msra.mxu0 0.0
    %6782 = vmatprep.subr.mxu0 0.0
    %6783 = vmatpush1.msra.mxu0 0.0
    %6784 = vmatprep.subr.mxu0 0.0
    %6785 = vmatpush1.msra.mxu0 0.0
    %6786 = vmatprep.subr.mxu0 0.0
    %6787 = vmatpush1.msra.mxu0 0.0
    %6788 = vmatprep.subr.mxu0 0.0
    %6789 = vmatpush1.msra.mxu0 0.0
    %6790 = vmatprep.subr.mxu0 0.0
    %6791 = vmatpush1.msra.mxu0 0.0
    %6792 = vmatprep.subr.mxu0 0.0
    %6793 = vmatpush1.msra.mxu0 0.0
    %6794 = vmatprep.subr.mxu0 0.0
    %6795 = vmatpush1.msra.mxu0 0.0
    %6796 = vmatprep.subr.mxu0 0.0
    %6797 = vmatpush1.msra.mxu0 0.0
    %6798 = vmatprep.subr.mxu0 0.0
    %6799 = vmatpush1.msra.mxu0 0.0
    %6800 = vmatprep.subr.mxu0 0.0
    %6801 = vmatpush1.msra.mxu0 0.0
    %6802 = vmatprep.subr.mxu0 0.0
    %6803 = vmatpush1.msra.mxu0 0.0
    %6804 = vmatprep.subr.mxu0 0.0
    %6805 = vmatpush1.msra.mxu0 0.0
    %6806 = vmatprep.subr.mxu0 0.0
    %6807 = vmatpush1.msra.mxu0 0.0
    %6808 = vmatprep.subr.mxu0 0.0
    %6809 = vmatpush1.msra.mxu0 0.0
    %6810 = vmatprep.subr.mxu0 0.0
    %6811 = vmatpush1.msra.mxu0 0.0
    %6812 = vmatprep.subr.mxu0 0.0
    %6813 = vmatpush1.msra.mxu0 0.0
    %6814 = vmatprep.subr.mxu0 0.0
    %6815 = vmatpush1.msra.mxu0 0.0
    %6816 = vmatprep.subr.mxu0 0.0
    %6817 = vmatpush1.msra.mxu0 0.0
    %6818 = vmatprep.subr.mxu0 0.0
    %6819 = vmatpush1.msra.mxu0 0.0
    %6820 = vmatprep.subr.mxu0 0.0
    %6821 = vmatpush1.msra.mxu0 0.0
    %6822 = vmatprep.subr.mxu0 0.0
    %6823 = vmatpush1.msra.mxu0 0.0
    %6824 = vmatprep.subr.mxu0 0.0
    %6825 = vmatpush1.msra.mxu0 0.0
    %6826 = vmatprep.subr.mxu0 0.0
    %6827 = vmatpush1.msra.mxu0 0.0
    %6828 = vmatprep.subr.mxu0 0.0
    %6829 = vmatpush1.msra.mxu0 0.0
    %6830 = vmatprep.subr.mxu0 0.0
    %6831 = vmatpush1.msra.mxu0 0.0
    %6832 = vmatprep.mubr.f32.mxu0 0.0
    %6833 = vmatmul.mubr.f32.gmra.mrb[0].mxu0 %v6757
    %v6834 = vpop.f32.mrb[0].mxu0
    %v6835 = vadd.f32 0.0, %v6834
    %v6836 = vpop.f32.mrb[0].mxu0
    %v6837 = vadd.f32 0.0, %v6836
    %6838 = vmatprep.mubr.f32.mxu0 0.0
    %6839 = vmatmul.mubr.f32.gmra.mrb[0].mxu0 %v6760
    %v6840 = vpop.f32.mrb[0].mxu0
    %v6841 = vadd.f32 0.0, %v6840
    %v6842 = vpop.f32.mrb[0].mxu0
    %v6843 = vadd.f32 0.0, %v6842
    %6844 = vmatprep.mubr.f32.mxu0 0.0
    %6845 = vmatmul.mubr.f32.gmra.mrb[0].mxu0 %v6763
    %v6846 = vpop.f32.mrb[0].mxu0
    %v6847 = vadd.f32 0.0, %v6846
    %v6848 = vpop.f32.mrb[0].mxu0
    %v6849 = vadd.f32 0.0, %v6848
    %6850 = vmatprep.mubr.f32.mxu0 0.0
    %6851 = vmatmul.mubr.f32.gmra.mrb[0].mxu0 %v6766
    %v6852 = vpop.f32.mrb[0].mxu0
    %v6853 = vadd.f32 0.0, %v6852
    %v6854 = vpop.f32.mrb[0].mxu0
    %v6855 = vadd.f32 0.0, %v6854
    %6856 = vdwg.mxu0
    %6857 = vmatprep.subr.mxu0 %v6743
    %6858 = vmatpush1.msra.mxu0 %v6742
    %6859 = vmatprep.subr.mxu0 %v6747
    %6860 = vmatpush1.msra.mxu0 %v6746
    %6861 = vmatprep.subr.mxu0 0.0
    %6862 = vmatpush1.msra.mxu0 0.0
    %6863 = vmatprep.subr.mxu0 0.0
    %6864 = vmatpush1.msra.mxu0 0.0
    %6865 = vmatprep.subr.mxu0 0.0
    %6866 = vmatpush1.msra.mxu0 0.0
    %6867 = vmatprep.subr.mxu0 0.0
    %6868 = vmatpush1.msra.mxu0 0.0
    %6869 = vmatprep.subr.mxu0 0.0
    %6870 = vmatpush1.msra.mxu0 0.0
    %6871 = vmatprep.subr.mxu0 0.0
    %6872 = vmatpush1.msra.mxu0 0.0
    %6873 = vmatprep.subr.mxu0 0.0
    %6874 = vmatpush1.msra.mxu0 0.0
    %6875 = vmatprep.subr.mxu0 0.0
    %6876 = vmatpush1.msra.mxu0 0.0
    %6877 = vmatprep.subr.mxu0 0.0
    %6878 = vmatpush1.msra.mxu0 0.0
    %6879 = vmatprep.subr.mxu0 0.0
    %6880 = vmatpush1.msra.mxu0 0.0
    %6881 = vmatprep.subr.mxu0 0.0
    %6882 = vmatpush1.msra.mxu0 0.0
    %6883 = vmatprep.subr.mxu0 0.0
    %6884 = vmatpush1.msra.mxu0 0.0
    %6885 = vmatprep.subr.mxu0 0.0
    %6886 = vmatpush1.msra.mxu0 0.0
    %6887 = vmatprep.subr.mxu0 0.0
    %6888 = vmatpush1.msra.mxu0 0.0
    %6889 = vmatprep.subr.mxu0 0.0
    %6890 = vmatpush1.msra.mxu0 0.0
    %6891 = vmatprep.subr.mxu0 0.0
    %6892 = vmatpush1.msra.mxu0 0.0
    %6893 = vmatprep.subr.mxu0 0.0
    %6894 = vmatpush1.msra.mxu0 0.0
    %6895 = vmatprep.subr.mxu0 0.0
    %6896 = vmatpush1.msra.mxu0 0.0
    %6897 = vmatprep.subr.mxu0 0.0
    %6898 = vmatpush1.msra.mxu0 0.0
    %6899 = vmatprep.subr.mxu0 0.0
    %6900 = vmatpush1.msra.mxu0 0.0
    %6901 = vmatprep.subr.mxu0 0.0
    %6902 = vmatpush1.msra.mxu0 0.0
    %6903 = vmatprep.subr.mxu0 0.0
    %6904 = vmatpush1.msra.mxu0 0.0
    %6905 = vmatprep.subr.mxu0 0.0
    %6906 = vmatpush1.msra.mxu0 0.0
    %6907 = vmatprep.subr.mxu0 0.0
    %6908 = vmatpush1.msra.mxu0 0.0
    %6909 = vmatprep.subr.mxu0 0.0
    %6910 = vmatpush1.msra.mxu0 0.0
    %6911 = vmatprep.subr.mxu0 0.0
    %6912 = vmatpush1.msra.mxu0 0.0
    %6913 = vmatprep.subr.mxu0 0.0
    %6914 = vmatpush1.msra.mxu0 0.0
    %6915 = vmatprep.subr.mxu0 0.0
    %6916 = vmatpush1.msra.mxu0 0.0
    %6917 = vmatprep.subr.mxu0 0.0
    %6918 = vmatpush1.msra.mxu0 0.0
    %6919 = vmatprep.subr.mxu0 0.0
    %6920 = vmatpush1.msra.mxu0 0.0
    %6921 = vmatprep.mubr.f32.mxu0 0.0
    %6922 = vmatmul.mubr.f32.gmra.mrb[0].mxu0 %v6757
    %v6923 = vpop.f32.mrb[0].mxu0
    %v6924 = vadd.f32 0.0, %v6923
    %v6925 = vpop.f32.mrb[0].mxu0
    %v6926 = vadd.f32 0.0, %v6925
    %6927 = vmatprep.mubr.f32.mxu0 0.0
    %6928 = vmatmul.mubr.f32.gmra.mrb[0].mxu0 %v6760
    %v6929 = vpop.f32.mrb[0].mxu0
    %v6930 = vadd.f32 0.0, %v6929
    %v6931 = vpop.f32.mrb[0].mxu0
    %v6932 = vadd.f32 0.0, %v6931
    %6933 = vmatprep.mubr.f32.mxu0 0.0
    %6934 = vmatmul.mubr.f32.gmra.mrb[0].mxu0 %v6763
    %v6935 = vpop.f32.mrb[0].mxu0
    %v6936 = vadd.f32 0.0, %v6935
    %v6937 = vpop.f32.mrb[0].mxu0
    %v6938 = vadd.f32 0.0, %v6937
    %6939 = vmatprep.mubr.f32.mxu0 0.0
    %6940 = vmatmul.mubr.f32.gmra.mrb[0].mxu0 %v6766
    %v6941 = vpop.f32.mrb[0].mxu0
    %v6942 = vadd.f32 0.0, %v6941
    %v6943 = vpop.f32.mrb[0].mxu0
    %v6944 = vadd.f32 0.0, %v6943
    %6945 = vdwg.mxu0
    %v6946 = vadd.f32 %v6700, %v6835
    %v6947 = vadd.f32 %v6701, %v6837
    %v6948 = vadd.f32 %v6702, %v6924
    %v6949 = vadd.f32 %v6703, %v6926
    %v6950 = vadd.f32 %v6704, %v6841
    %v6951 = vadd.f32 %v6705, %v6843
    %v6952 = vadd.f32 %v6706, %v6930
    %v6953 = vadd.f32 %v6707, %v6932
    %v6954 = vadd.f32 %v6708, %v6847
    %v6955 = vadd.f32 %v6709, %v6849
    %v6956 = vadd.f32 %v6710, %v6936
    %v6957 = vadd.f32 %v6711, %v6938
    %v6958 = vadd.f32 %v6712, %v6853
    %v6959 = vadd.f32 %v6713, %v6855
    %v6960 = vadd.f32 %v6714, %v6942
    %v6961 = vadd.f32 %v6715, %v6944
    %v6962 = vld [vmem:[%s6] sm:$0xff]
    %v6963 = vld [vmem:[%s6 + $0x8] sm:$0xff]
    %v6964 = vld [vmem:[%s6 + $0x10] sm:$0xff]
    %v6965 = vld [vmem:[%s6 + $0x18] sm:$0xff]
    %6967 = vset.pattern.permute.xlu0 0
    %6968 = vperm.xlu0 %6967, %v6962
    %v6969 = vpop.permute.xlu0 %6968
    %6972 = vset.pattern.permute.xlu0 0
    %6973 = vperm.xlu0 %6972, %v6963
    %v6974 = vpop.permute.xlu0 %6973
    %6977 = vset.pattern.permute.xlu0 0
    %6978 = vperm.xlu0 %6977, %v6964
    %v6979 = vpop.permute.xlu0 %6978
    %6982 = vset.pattern.permute.xlu0 0
    %6983 = vperm.xlu0 %6982, %v6965
    %v6984 = vpop.permute.xlu0 %6983
    %v6986 = vadd.f32 %v6946, %v6969
    %v6987 = vadd.f32 %v6947, %v6969
    %v6988 = vadd.f32 %v6948, %v6969
    %v6989 = vadd.f32 %v6949, %v6969
    %v6990 = vadd.f32 %v6950, %v6974
    %v6991 = vadd.f32 %v6951, %v6974
    %v6992 = vadd.f32 %v6952, %v6974
    %v6993 = vadd.f32 %v6953, %v6974
    %v6994 = vadd.f32 %v6954, %v6979
    %v6995 = vadd.f32 %v6955, %v6979
    %v6996 = vadd.f32 %v6956, %v6979
    %v6997 = vadd.f32 %v6957, %v6979
    %v6998 = vadd.f32 %v6958, %v6984
    %v6999 = vadd.f32 %v6959, %v6984
    %v7000 = vadd.f32 %v6960, %v6984
    %v7001 = vadd.f32 %v6961, %v6984
    %v7002 = vmax.f32 %v6986, 0.0
    %v7003 = vmax.f32 %v6987, 0.0
    %v7004 = vmax.f32 %v6988, 0.0
    %v7005 = vmax.f32 %v6989, 0.0
    %v7006 = vmax.f32 %v6990, 0.0
    %v7007 = vmax.f32 %v6991, 0.0
    %v7008 = vmax.f32 %v6992, 0.0
    %v7009 = vmax.f32 %v6993, 0.0
    %v7010 = vmax.f32 %v6994, 0.0
    %v7011 = vmax.f32 %v6995, 0.0
    %v7012 = vmax.f32 %v6996, 0.0
    %v7013 = vmax.f32 %v6997, 0.0
    %v7014 = vmax.f32 %v6998, 0.0
    %v7015 = vmax.f32 %v6999, 0.0
    %v7016 = vmax.f32 %v7000, 0.0
    %v7017 = vmax.f32 %v7001, 0.0
    %7018 = vst [vmem:[#allocation4] sm:$0xff] %v7002
    %7019 = vst [vmem:[#allocation4 + $0x8] sm:$0xff] %v7003
    %7020 = vst [vmem:[#allocation4 + $0x10] sm:$0xff] %v7004
    %7021 = vst [vmem:[#allocation4 + $0x18] sm:$0xff] %v7005
    %7022 = vst [vmem:[#allocation4 + $0x20] sm:$0xff] %v7006
    %7023 = vst [vmem:[#allocation4 + $0x28] sm:$0xff] %v7007
    %7024 = vst [vmem:[#allocation4 + $0x30] sm:$0xff] %v7008
    %7025 = vst [vmem:[#allocation4 + $0x38] sm:$0xff] %v7009
    %7026 = vst [vmem:[#allocation4 + $0x40] sm:$0xff] %v7010
    %7027 = vst [vmem:[#allocation4 + $0x48] sm:$0xff] %v7011
    %7028 = vst [vmem:[#allocation4 + $0x50] sm:$0xff] %v7012
    %7029 = vst [vmem:[#allocation4 + $0x58] sm:$0xff] %v7013
    %7030 = vst [vmem:[#allocation4 + $0x60] sm:$0xff] %v7014
    %7031 = vst [vmem:[#allocation4 + $0x68] sm:$0xff] %v7015
    %7032 = vst [vmem:[#allocation4 + $0x70] sm:$0xff] %v7016
    %7033 = vst [vmem:[#allocation4 + $0x78] sm:$0xff] %v7017
    %v7034 = vld [vmem:[#allocation4] ss:$8 sm:$0x3]
    %v7035 = vlaneseq
    %vm7036 = vcmp.ge.s32.totalorder %v7035, 0
    %vm7037 = vcmp.lt.s32.totalorder %v7035, 256
    %vm7038 = vmand %vm7036, %vm7037
    %7039 = vst.msk [vmem:[#allocation5] ss:$2 sm:$0x3] %vm7038, %v7034
    %s7040 = scalar_lea.vmem [#allocation4], 1
    %v7041 = vld [vmem:[%s7040] ss:$8 sm:$0x3]
    %s7042 = scalar_lea.vmem [#allocation5], 4
    %7043 = vst.msk [vmem:[%s7042] ss:$2 sm:$0x3] %vm7038, %v7041
    %s7044 = scalar_lea.vmem [#allocation4], 2
    %v7045 = vld [vmem:[%s7044] ss:$8 sm:$0x3]
    %s7046 = scalar_lea.vmem [#allocation5], 8
    %7047 = vst.msk [vmem:[%s7046] ss:$2 sm:$0x3] %vm7038, %v7045
    %s7048 = scalar_lea.vmem [#allocation4], 3
    %v7049 = vld [vmem:[%s7048] ss:$8 sm:$0x3]
    %s7050 = scalar_lea.vmem [#allocation5], 12
    %7051 = vst.msk [vmem:[%s7050] ss:$2 sm:$0x3] %vm7038, %v7049
    %s7052 = scalar_lea.vmem [#allocation4], 4
    %v7053 = vld [vmem:[%s7052] ss:$8 sm:$0x3]
    %s7054 = scalar_lea.vmem [#allocation5], 16
    %7055 = vst.msk [vmem:[%s7054] ss:$2 sm:$0x3] %vm7038, %v7053
    %s7056 = scalar_lea.vmem [#allocation4], 5
    %v7057 = vld [vmem:[%s7056] ss:$8 sm:$0x3]
    %s7058 = scalar_lea.vmem [#allocation5], 20
    %7059 = vst.msk [vmem:[%s7058] ss:$2 sm:$0x3] %vm7038, %v7057
    %s7060 = scalar_lea.vmem [#allocation4], 6
    %v7061 = vld [vmem:[%s7060] ss:$8 sm:$0x3]
    %s7062 = scalar_lea.vmem [#allocation5], 24
    %7063 = vst.msk [vmem:[%s7062] ss:$2 sm:$0x3] %vm7038, %v7061
    %s7064 = scalar_lea.vmem [#allocation4], 7
    %v7065 = vld [vmem:[%s7064] ss:$8 sm:$0x3]
    %s7066 = scalar_lea.vmem [#allocation5], 28
    %7067 = vst.msk [vmem:[%s7066] ss:$2 sm:$0x3] %vm7038, %v7065
    %s7068 = scalar_lea.vmem [#allocation4], 32
    %v7069 = vld [vmem:[%s7068] ss:$8 sm:$0x3]
    %s7070 = scalar_lea.vmem [#allocation5], 32
    %7071 = vst.msk [vmem:[%s7070] ss:$2 sm:$0x3] %vm7038, %v7069
    %s7072 = scalar_lea.vmem [#allocation4], 33
    %v7073 = vld [vmem:[%s7072] ss:$8 sm:$0x3]
    %s7074 = scalar_lea.vmem [#allocation5], 36
    %7075 = vst.msk [vmem:[%s7074] ss:$2 sm:$0x3] %vm7038, %v7073
    %s7076 = scalar_lea.vmem [#allocation4], 34
    %v7077 = vld [vmem:[%s7076] ss:$8 sm:$0x3]
    %s7078 = scalar_lea.vmem [#allocation5], 40
    %7079 = vst.msk [vmem:[%s7078] ss:$2 sm:$0x3] %vm7038, %v7077
    %s7080 = scalar_lea.vmem [#allocation4], 35
    %v7081 = vld [vmem:[%s7080] ss:$8 sm:$0x3]
    %s7082 = scalar_lea.vmem [#allocation5], 44
    %7083 = vst.msk [vmem:[%s7082] ss:$2 sm:$0x3] %vm7038, %v7081
    %s7084 = scalar_lea.vmem [#allocation4], 36
    %v7085 = vld [vmem:[%s7084] ss:$8 sm:$0x3]
    %s7086 = scalar_lea.vmem [#allocation5], 48
    %7087 = vst.msk [vmem:[%s7086] ss:$2 sm:$0x3] %vm7038, %v7085
    %s7088 = scalar_lea.vmem [#allocation4], 37
    %v7089 = vld [vmem:[%s7088] ss:$8 sm:$0x3]
    %s7090 = scalar_lea.vmem [#allocation5], 52
    %7091 = vst.msk [vmem:[%s7090] ss:$2 sm:$0x3] %vm7038, %v7089
    %s7092 = scalar_lea.vmem [#allocation4], 38
    %v7093 = vld [vmem:[%s7092] ss:$8 sm:$0x3]
    %s7094 = scalar_lea.vmem [#allocation5], 56
    %7095 = vst.msk [vmem:[%s7094] ss:$2 sm:$0x3] %vm7038, %v7093
    %s7096 = scalar_lea.vmem [#allocation4], 39
    %v7097 = vld [vmem:[%s7096] ss:$8 sm:$0x3]
    %s7098 = scalar_lea.vmem [#allocation5], 60
    %7099 = vst.msk [vmem:[%s7098] ss:$2 sm:$0x3] %vm7038, %v7097
    %s7100 = scalar_lea.vmem [#allocation4], 64
    %v7101 = vld [vmem:[%s7100] ss:$8 sm:$0x3]
    %s7102 = scalar_lea.vmem [#allocation5], 64
    %7103 = vst.msk [vmem:[%s7102] ss:$2 sm:$0x3] %vm7038, %v7101
    %s7104 = scalar_lea.vmem [#allocation4], 65
    %v7105 = vld [vmem:[%s7104] ss:$8 sm:$0x3]
    %s7106 = scalar_lea.vmem [#allocation5], 68
    %7107 = vst.msk [vmem:[%s7106] ss:$2 sm:$0x3] %vm7038, %v7105
    %s7108 = scalar_lea.vmem [#allocation4], 66
    %v7109 = vld [vmem:[%s7108] ss:$8 sm:$0x3]
    %s7110 = scalar_lea.vmem [#allocation5], 72
    %7111 = vst.msk [vmem:[%s7110] ss:$2 sm:$0x3] %vm7038, %v7109
    %s7112 = scalar_lea.vmem [#allocation4], 67
    %v7113 = vld [vmem:[%s7112] ss:$8 sm:$0x3]
    %s7114 = scalar_lea.vmem [#allocation5], 76
    %7115 = vst.msk [vmem:[%s7114] ss:$2 sm:$0x3] %vm7038, %v7113
    %s7116 = scalar_lea.vmem [#allocation4], 68
    %v7117 = vld [vmem:[%s7116] ss:$8 sm:$0x3]
    %s7118 = scalar_lea.vmem [#allocation5], 80
    %7119 = vst.msk [vmem:[%s7118] ss:$2 sm:$0x3] %vm7038, %v7117
    %s7120 = scalar_lea.vmem [#allocation4], 69
    %v7121 = vld [vmem:[%s7120] ss:$8 sm:$0x3]
    %s7122 = scalar_lea.vmem [#allocation5], 84
    %7123 = vst.msk [vmem:[%s7122] ss:$2 sm:$0x3] %vm7038, %v7121
    %s7124 = scalar_lea.vmem [#allocation4], 70
    %v7125 = vld [vmem:[%s7124] ss:$8 sm:$0x3]
    %s7126 = scalar_lea.vmem [#allocation5], 88
    %7127 = vst.msk [vmem:[%s7126] ss:$2 sm:$0x3] %vm7038, %v7125
    %s7128 = scalar_lea.vmem [#allocation4], 71
    %v7129 = vld [vmem:[%s7128] ss:$8 sm:$0x3]
    %s7130 = scalar_lea.vmem [#allocation5], 92
    %7131 = vst.msk [vmem:[%s7130] ss:$2 sm:$0x3] %vm7038, %v7129
    %s7132 = scalar_lea.vmem [#allocation4], 96
    %v7133 = vld [vmem:[%s7132] ss:$8 sm:$0x3]
    %s7134 = scalar_lea.vmem [#allocation5], 96
    %7135 = vst.msk [vmem:[%s7134] ss:$2 sm:$0x3] %vm7038, %v7133
    %s7136 = scalar_lea.vmem [#allocation4], 97
    %v7137 = vld [vmem:[%s7136] ss:$8 sm:$0x3]
    %s7138 = scalar_lea.vmem [#allocation5], 100
    %7139 = vst.msk [vmem:[%s7138] ss:$2 sm:$0x3] %vm7038, %v7137
    %s7140 = scalar_lea.vmem [#allocation4], 98
    %v7141 = vld [vmem:[%s7140] ss:$8 sm:$0x3]
    %s7142 = scalar_lea.vmem [#allocation5], 104
    %7143 = vst.msk [vmem:[%s7142] ss:$2 sm:$0x3] %vm7038, %v7141
    %s7144 = scalar_lea.vmem [#allocation4], 99
    %v7145 = vld [vmem:[%s7144] ss:$8 sm:$0x3]
    %s7146 = scalar_lea.vmem [#allocation5], 108
    %7147 = vst.msk [vmem:[%s7146] ss:$2 sm:$0x3] %vm7038, %v7145
    %s7148 = scalar_lea.vmem [#allocation4], 100
    %v7149 = vld [vmem:[%s7148] ss:$8 sm:$0x3]
    %s7150 = scalar_lea.vmem [#allocation5], 112
    %7151 = vst.msk [vmem:[%s7150] ss:$2 sm:$0x3] %vm7038, %v7149
    %s7152 = scalar_lea.vmem [#allocation4], 101
    %v7153 = vld [vmem:[%s7152] ss:$8 sm:$0x3]
    %s7154 = scalar_lea.vmem [#allocation5], 116
    %7155 = vst.msk [vmem:[%s7154] ss:$2 sm:$0x3] %vm7038, %v7153
    %s7156 = scalar_lea.vmem [#allocation4], 102
    %v7157 = vld [vmem:[%s7156] ss:$8 sm:$0x3]
    %s7158 = scalar_lea.vmem [#allocation5], 120
    %7159 = vst.msk [vmem:[%s7158] ss:$2 sm:$0x3] %vm7038, %v7157
    %s7160 = scalar_lea.vmem [#allocation4], 103
    %v7161 = vld [vmem:[%s7160] ss:$8 sm:$0x3]
    %s7162 = scalar_lea.vmem [#allocation5], 124
    %7163 = vst.msk [vmem:[%s7162] ss:$2 sm:$0x3] %vm7038, %v7161
    %s7164 = scalar_lea.vmem [#allocation4], 16
    %v7165 = vld [vmem:[%s7164] ss:$8 sm:$0x3]
    %s7166 = scalar_lea.vmem [#allocation5], 1
    %7167 = vst.msk [vmem:[%s7166] ss:$2 sm:$0x3] %vm7038, %v7165
    %s7168 = scalar_lea.vmem [#allocation4], 17
    %v7169 = vld [vmem:[%s7168] ss:$8 sm:$0x3]
    %s7170 = scalar_lea.vmem [#allocation5], 5
    %7171 = vst.msk [vmem:[%s7170] ss:$2 sm:$0x3] %vm7038, %v7169
    %s7172 = scalar_lea.vmem [#allocation4], 18
    %v7173 = vld [vmem:[%s7172] ss:$8 sm:$0x3]
    %s7174 = scalar_lea.vmem [#allocation5], 9
    %7175 = vst.msk [vmem:[%s7174] ss:$2 sm:$0x3] %vm7038, %v7173
    %s7176 = scalar_lea.vmem [#allocation4], 19
    %v7177 = vld [vmem:[%s7176] ss:$8 sm:$0x3]
    %s7178 = scalar_lea.vmem [#allocation5], 13
    %7179 = vst.msk [vmem:[%s7178] ss:$2 sm:$0x3] %vm7038, %v7177
    %s7180 = scalar_lea.vmem [#allocation4], 20
    %v7181 = vld [vmem:[%s7180] ss:$8 sm:$0x3]
    %s7182 = scalar_lea.vmem [#allocation5], 17
    %7183 = vst.msk [vmem:[%s7182] ss:$2 sm:$0x3] %vm7038, %v7181
    %s7184 = scalar_lea.vmem [#allocation4], 21
    %v7185 = vld [vmem:[%s7184] ss:$8 sm:$0x3]
    %s7186 = scalar_lea.vmem [#allocation5], 21
    %7187 = vst.msk [vmem:[%s7186] ss:$2 sm:$0x3] %vm7038, %v7185
    %s7188 = scalar_lea.vmem [#allocation4], 22
    %v7189 = vld [vmem:[%s7188] ss:$8 sm:$0x3]
    %s7190 = scalar_lea.vmem [#allocation5], 25
    %7191 = vst.msk [vmem:[%s7190] ss:$2 sm:$0x3] %vm7038, %v7189
    %s7192 = scalar_lea.vmem [#allocation4], 23
    %v7193 = vld [vmem:[%s7192] ss:$8 sm:$0x3]
    %s7194 = scalar_lea.vmem [#allocation5], 29
    %7195 = vst.msk [vmem:[%s7194] ss:$2 sm:$0x3] %vm7038, %v7193
    %s7196 = scalar_lea.vmem [#allocation4], 48
    %v7197 = vld [vmem:[%s7196] ss:$8 sm:$0x3]
    %s7198 = scalar_lea.vmem [#allocation5], 33
    %7199 = vst.msk [vmem:[%s7198] ss:$2 sm:$0x3] %vm7038, %v7197
    %s7200 = scalar_lea.vmem [#allocation4], 49
    %v7201 = vld [vmem:[%s7200] ss:$8 sm:$0x3]
    %s7202 = scalar_lea.vmem [#allocation5], 37
    %7203 = vst.msk [vmem:[%s7202] ss:$2 sm:$0x3] %vm7038, %v7201
    %s7204 = scalar_lea.vmem [#allocation4], 50
    %v7205 = vld [vmem:[%s7204] ss:$8 sm:$0x3]
    %s7206 = scalar_lea.vmem [#allocation5], 41
    %7207 = vst.msk [vmem:[%s7206] ss:$2 sm:$0x3] %vm7038, %v7205
    %s7208 = scalar_lea.vmem [#allocation4], 51
    %v7209 = vld [vmem:[%s7208] ss:$8 sm:$0x3]
    %s7210 = scalar_lea.vmem [#allocation5], 45
    %7211 = vst.msk [vmem:[%s7210] ss:$2 sm:$0x3] %vm7038, %v7209
    %s7212 = scalar_lea.vmem [#allocation4], 52
    %v7213 = vld [vmem:[%s7212] ss:$8 sm:$0x3]
    %s7214 = scalar_lea.vmem [#allocation5], 49
    %7215 = vst.msk [vmem:[%s7214] ss:$2 sm:$0x3] %vm7038, %v7213
    %s7216 = scalar_lea.vmem [#allocation4], 53
    %v7217 = vld [vmem:[%s7216] ss:$8 sm:$0x3]
    %s7218 = scalar_lea.vmem [#allocation5], 53
    %7219 = vst.msk [vmem:[%s7218] ss:$2 sm:$0x3] %vm7038, %v7217
    %s7220 = scalar_lea.vmem [#allocation4], 54
    %v7221 = vld [vmem:[%s7220] ss:$8 sm:$0x3]
    %s7222 = scalar_lea.vmem [#allocation5], 57
    %7223 = vst.msk [vmem:[%s7222] ss:$2 sm:$0x3] %vm7038, %v7221
    %s7224 = scalar_lea.vmem [#allocation4], 55
    %v7225 = vld [vmem:[%s7224] ss:$8 sm:$0x3]
    %s7226 = scalar_lea.vmem [#allocation5], 61
    %7227 = vst.msk [vmem:[%s7226] ss:$2 sm:$0x3] %vm7038, %v7225
    %s7228 = scalar_lea.vmem [#allocation4], 80
    %v7229 = vld [vmem:[%s7228] ss:$8 sm:$0x3]
    %s7230 = scalar_lea.vmem [#allocation5], 65
    %7231 = vst.msk [vmem:[%s7230] ss:$2 sm:$0x3] %vm7038, %v7229
    %s7232 = scalar_lea.vmem [#allocation4], 81
    %v7233 = vld [vmem:[%s7232] ss:$8 sm:$0x3]
    %s7234 = scalar_lea.vmem [#allocation5], 69
    %7235 = vst.msk [vmem:[%s7234] ss:$2 sm:$0x3] %vm7038, %v7233
    %s7236 = scalar_lea.vmem [#allocation4], 82
    %v7237 = vld [vmem:[%s7236] ss:$8 sm:$0x3]
    %s7238 = scalar_lea.vmem [#allocation5], 73
    %7239 = vst.msk [vmem:[%s7238] ss:$2 sm:$0x3] %vm7038, %v7237
    %s7240 = scalar_lea.vmem [#allocation4], 83
    %v7241 = vld [vmem:[%s7240] ss:$8 sm:$0x3]
    %s7242 = scalar_lea.vmem [#allocation5], 77
    %7243 = vst.msk [vmem:[%s7242] ss:$2 sm:$0x3] %vm7038, %v7241
    %s7244 = scalar_lea.vmem [#allocation4], 84
    %v7245 = vld [vmem:[%s7244] ss:$8 sm:$0x3]
    %s7246 = scalar_lea.vmem [#allocation5], 81
    %7247 = vst.msk [vmem:[%s7246] ss:$2 sm:$0x3] %vm7038, %v7245
    %s7248 = scalar_lea.vmem [#allocation4], 85
    %v7249 = vld [vmem:[%s7248] ss:$8 sm:$0x3]
    %s7250 = scalar_lea.vmem [#allocation5], 85
    %7251 = vst.msk [vmem:[%s7250] ss:$2 sm:$0x3] %vm7038, %v7249
    %s7252 = scalar_lea.vmem [#allocation4], 86
    %v7253 = vld [vmem:[%s7252] ss:$8 sm:$0x3]
    %s7254 = scalar_lea.vmem [#allocation5], 89
    %7255 = vst.msk [vmem:[%s7254] ss:$2 sm:$0x3] %vm7038, %v7253
    %s7256 = scalar_lea.vmem [#allocation4], 87
    %v7257 = vld [vmem:[%s7256] ss:$8 sm:$0x3]
    %s7258 = scalar_lea.vmem [#allocation5], 93
    %7259 = vst.msk [vmem:[%s7258] ss:$2 sm:$0x3] %vm7038, %v7257
    %s7260 = scalar_lea.vmem [#allocation4], 112
    %v7261 = vld [vmem:[%s7260] ss:$8 sm:$0x3]
    %s7262 = scalar_lea.vmem [#allocation5], 97
    %7263 = vst.msk [vmem:[%s7262] ss:$2 sm:$0x3] %vm7038, %v7261
    %s7264 = scalar_lea.vmem [#allocation4], 113
    %v7265 = vld [vmem:[%s7264] ss:$8 sm:$0x3]
    %s7266 = scalar_lea.vmem [#allocation5], 101
    %7267 = vst.msk [vmem:[%s7266] ss:$2 sm:$0x3] %vm7038, %v7265
    %s7268 = scalar_lea.vmem [#allocation4], 114
    %v7269 = vld [vmem:[%s7268] ss:$8 sm:$0x3]
    %s7270 = scalar_lea.vmem [#allocation5], 105
    %7271 = vst.msk [vmem:[%s7270] ss:$2 sm:$0x3] %vm7038, %v7269
    %s7272 = scalar_lea.vmem [#allocation4], 115
    %v7273 = vld [vmem:[%s7272] ss:$8 sm:$0x3]
    %s7274 = scalar_lea.vmem [#allocation5], 109
    %7275 = vst.msk [vmem:[%s7274] ss:$2 sm:$0x3] %vm7038, %v7273
    %s7276 = scalar_lea.vmem [#allocation4], 116
    %v7277 = vld [vmem:[%s7276] ss:$8 sm:$0x3]
    %s7278 = scalar_lea.vmem [#allocation5], 113
    %7279 = vst.msk [vmem:[%s7278] ss:$2 sm:$0x3] %vm7038, %v7277
    %s7280 = scalar_lea.vmem [#allocation4], 117
    %v7281 = vld [vmem:[%s7280] ss:$8 sm:$0x3]
    %s7282 = scalar_lea.vmem [#allocation5], 117
    %7283 = vst.msk [vmem:[%s7282] ss:$2 sm:$0x3] %vm7038, %v7281
    %s7284 = scalar_lea.vmem [#allocation4], 118
    %v7285 = vld [vmem:[%s7284] ss:$8 sm:$0x3]
    %s7286 = scalar_lea.vmem [#allocation5], 121
    %7287 = vst.msk [vmem:[%s7286] ss:$2 sm:$0x3] %vm7038, %v7285
    %s7288 = scalar_lea.vmem [#allocation4], 119
    %v7289 = vld [vmem:[%s7288] ss:$8 sm:$0x3]
    %s7290 = scalar_lea.vmem [#allocation5], 125
    %7291 = vst.msk [vmem:[%s7290] ss:$2 sm:$0x3] %vm7038, %v7289
    %s7292 = smul.u32 4, 1024
    %s7293 = smul.u32 %s7292, 2
    %s7294 = sshll.u32 %s7293, 4
    %7295 = dma.done [#allocation7], %s7294
    %v7296 = vld [vmem:[#allocation5] sm:$0xff]
    %v7297 = vld [vmem:[#allocation5 + $0x8] sm:$0xff]
    %v7298 = vld [vmem:[#allocation5 + $0x10] sm:$0xff]
    %v7299 = vld [vmem:[#allocation5 + $0x18] sm:$0xff]
    %v7300 = vld [vmem:[#allocation5 + $0x20] sm:$0xff]
    %v7301 = vld [vmem:[#allocation5 + $0x28] sm:$0xff]
    %v7302 = vld [vmem:[#allocation5 + $0x30] sm:$0xff]
    %v7303 = vld [vmem:[#allocation5 + $0x38] sm:$0xff]
    %v7304 = vld [vmem:[#allocation5 + $0x40] sm:$0xff]
    %v7305 = vld [vmem:[#allocation5 + $0x48] sm:$0xff]
    %v7306 = vld [vmem:[#allocation5 + $0x50] sm:$0xff]
    %v7307 = vld [vmem:[#allocation5 + $0x58] sm:$0xff]
    %v7308 = vld [vmem:[#allocation5 + $0x60] sm:$0xff]
    %v7309 = vld [vmem:[#allocation5 + $0x68] sm:$0xff]
    %v7310 = vld [vmem:[#allocation5 + $0x70] sm:$0xff]
    %v7311 = vld [vmem:[#allocation5 + $0x78] sm:$0xff]
    %v7328 = vcombine.high %v7296, %v7296
    %v7330 = vunpack.c.l.s4 1983009808
    %v7331 = vunpack.c.0.s8 %v7330
    %v7332 = vlaneseq
    %v7333 = vshrl.u32 %v7332, 7
    %v7334 = vsub.s32 %v7331, %v7333
    %v7335 = vrot.slane %v7296, %v7334
    %v7337 = vunpack.c.l.s4 1983009808
    %v7338 = vunpack.c.0.s8 %v7337
    %v7339 = vlaneseq
    %v7340 = vshrl.u32 %v7339, 7
    %v7341 = vsub.s32 %v7338, %v7340
    %v7342 = vrot.slane %v7328, %v7341
    %v7343 = vcombine.high %v7335, %v7335
    %v7344 = vcombine.high %v7342, %v7342
    %v7345 = vcombine.high %v7297, %v7297
    %v7347 = vunpack.c.l.s4 1983009808
    %v7348 = vunpack.c.0.s8 %v7347
    %v7349 = vlaneseq
    %v7350 = vshrl.u32 %v7349, 7
    %v7351 = vsub.s32 %v7348, %v7350
    %v7352 = vrot.slane %v7297, %v7351
    %v7354 = vunpack.c.l.s4 1983009808
    %v7355 = vunpack.c.0.s8 %v7354
    %v7356 = vlaneseq
    %v7357 = vshrl.u32 %v7356, 7
    %v7358 = vsub.s32 %v7355, %v7357
    %v7359 = vrot.slane %v7345, %v7358
    %v7360 = vcombine.high %v7352, %v7352
    %v7361 = vcombine.high %v7359, %v7359
    %v7362 = vcombine.high %v7298, %v7298
    %v7364 = vunpack.c.l.s4 1983009808
    %v7365 = vunpack.c.0.s8 %v7364
    %v7366 = vlaneseq
    %v7367 = vshrl.u32 %v7366, 7
    %v7368 = vsub.s32 %v7365, %v7367
    %v7369 = vrot.slane %v7298, %v7368
    %v7371 = vunpack.c.l.s4 1983009808
    %v7372 = vunpack.c.0.s8 %v7371
    %v7373 = vlaneseq
    %v7374 = vshrl.u32 %v7373, 7
    %v7375 = vsub.s32 %v7372, %v7374
    %v7376 = vrot.slane %v7362, %v7375
    %v7377 = vcombine.high %v7369, %v7369
    %v7378 = vcombine.high %v7376, %v7376
    %v7379 = vcombine.high %v7299, %v7299
    %v7381 = vunpack.c.l.s4 1983009808
    %v7382 = vunpack.c.0.s8 %v7381
    %v7383 = vlaneseq
    %v7384 = vshrl.u32 %v7383, 7
    %v7385 = vsub.s32 %v7382, %v7384
    %v7386 = vrot.slane %v7299, %v7385
    %v7388 = vunpack.c.l.s4 1983009808
    %v7389 = vunpack.c.0.s8 %v7388
    %v7390 = vlaneseq
    %v7391 = vshrl.u32 %v7390, 7
    %v7392 = vsub.s32 %v7389, %v7391
    %v7393 = vrot.slane %v7379, %v7392
    %v7394 = vcombine.high %v7386, %v7386
    %v7395 = vcombine.high %v7393, %v7393
    %v7396 = vcombine.high %v7300, %v7300
    %v7398 = vunpack.c.l.s4 1983009808
    %v7399 = vunpack.c.0.s8 %v7398
    %v7400 = vlaneseq
    %v7401 = vshrl.u32 %v7400, 7
    %v7402 = vsub.s32 %v7399, %v7401
    %v7403 = vrot.slane %v7300, %v7402
    %v7405 = vunpack.c.l.s4 1983009808
    %v7406 = vunpack.c.0.s8 %v7405
    %v7407 = vlaneseq
    %v7408 = vshrl.u32 %v7407, 7
    %v7409 = vsub.s32 %v7406, %v7408
    %v7410 = vrot.slane %v7396, %v7409
    %v7411 = vcombine.high %v7403, %v7403
    %v7412 = vcombine.high %v7410, %v7410
    %v7413 = vcombine.high %v7301, %v7301
    %v7415 = vunpack.c.l.s4 1983009808
    %v7416 = vunpack.c.0.s8 %v7415
    %v7417 = vlaneseq
    %v7418 = vshrl.u32 %v7417, 7
    %v7419 = vsub.s32 %v7416, %v7418
    %v7420 = vrot.slane %v7301, %v7419
    %v7422 = vunpack.c.l.s4 1983009808
    %v7423 = vunpack.c.0.s8 %v7422
    %v7424 = vlaneseq
    %v7425 = vshrl.u32 %v7424, 7
    %v7426 = vsub.s32 %v7423, %v7425
    %v7427 = vrot.slane %v7413, %v7426
    %v7428 = vcombine.high %v7420, %v7420
    %v7429 = vcombine.high %v7427, %v7427
    %v7430 = vcombine.high %v7302, %v7302
    %v7432 = vunpack.c.l.s4 1983009808
    %v7433 = vunpack.c.0.s8 %v7432
    %v7434 = vlaneseq
    %v7435 = vshrl.u32 %v7434, 7
    %v7436 = vsub.s32 %v7433, %v7435
    %v7437 = vrot.slane %v7302, %v7436
    %v7439 = vunpack.c.l.s4 1983009808
    %v7440 = vunpack.c.0.s8 %v7439
    %v7441 = vlaneseq
    %v7442 = vshrl.u32 %v7441, 7
    %v7443 = vsub.s32 %v7440, %v7442
    %v7444 = vrot.slane %v7430, %v7443
    %v7445 = vcombine.high %v7437, %v7437
    %v7446 = vcombine.high %v7444, %v7444
    %v7447 = vcombine.high %v7303, %v7303
    %v7449 = vunpack.c.l.s4 1983009808
    %v7450 = vunpack.c.0.s8 %v7449
    %v7451 = vlaneseq
    %v7452 = vshrl.u32 %v7451, 7
    %v7453 = vsub.s32 %v7450, %v7452
    %v7454 = vrot.slane %v7303, %v7453
    %v7456 = vunpack.c.l.s4 1983009808
    %v7457 = vunpack.c.0.s8 %v7456
    %v7458 = vlaneseq
    %v7459 = vshrl.u32 %v7458, 7
    %v7460 = vsub.s32 %v7457, %v7459
    %v7461 = vrot.slane %v7447, %v7460
    %v7462 = vcombine.high %v7454, %v7454
    %v7463 = vcombine.high %v7461, %v7461
    %v7464 = vcombine.high %v7304, %v7304
    %v7466 = vunpack.c.l.s4 1983009808
    %v7467 = vunpack.c.0.s8 %v7466
    %v7468 = vlaneseq
    %v7469 = vshrl.u32 %v7468, 7
    %v7470 = vsub.s32 %v7467, %v7469
    %v7471 = vrot.slane %v7304, %v7470
    %v7473 = vunpack.c.l.s4 1983009808
    %v7474 = vunpack.c.0.s8 %v7473
    %v7475 = vlaneseq
    %v7476 = vshrl.u32 %v7475, 7
    %v7477 = vsub.s32 %v7474, %v7476
    %v7478 = vrot.slane %v7464, %v7477
    %v7479 = vcombine.high %v7471, %v7471
    %v7480 = vcombine.high %v7478, %v7478
    %v7481 = vcombine.high %v7305, %v7305
    %v7483 = vunpack.c.l.s4 1983009808
    %v7484 = vunpack.c.0.s8 %v7483
    %v7485 = vlaneseq
    %v7486 = vshrl.u32 %v7485, 7
    %v7487 = vsub.s32 %v7484, %v7486
    %v7488 = vrot.slane %v7305, %v7487
    %v7490 = vunpack.c.l.s4 1983009808
    %v7491 = vunpack.c.0.s8 %v7490
    %v7492 = vlaneseq
    %v7493 = vshrl.u32 %v7492, 7
    %v7494 = vsub.s32 %v7491, %v7493
    %v7495 = vrot.slane %v7481, %v7494
    %v7496 = vcombine.high %v7488, %v7488
    %v7497 = vcombine.high %v7495, %v7495
    %v7498 = vcombine.high %v7306, %v7306
    %v7500 = vunpack.c.l.s4 1983009808
    %v7501 = vunpack.c.0.s8 %v7500
    %v7502 = vlaneseq
    %v7503 = vshrl.u32 %v7502, 7
    %v7504 = vsub.s32 %v7501, %v7503
    %v7505 = vrot.slane %v7306, %v7504
    %v7507 = vunpack.c.l.s4 1983009808
    %v7508 = vunpack.c.0.s8 %v7507
    %v7509 = vlaneseq
    %v7510 = vshrl.u32 %v7509, 7
    %v7511 = vsub.s32 %v7508, %v7510
    %v7512 = vrot.slane %v7498, %v7511
    %v7513 = vcombine.high %v7505, %v7505
    %v7514 = vcombine.high %v7512, %v7512
    %v7515 = vcombine.high %v7307, %v7307
    %v7517 = vunpack.c.l.s4 1983009808
    %v7518 = vunpack.c.0.s8 %v7517
    %v7519 = vlaneseq
    %v7520 = vshrl.u32 %v7519, 7
    %v7521 = vsub.s32 %v7518, %v7520
    %v7522 = vrot.slane %v7307, %v7521
    %v7524 = vunpack.c.l.s4 1983009808
    %v7525 = vunpack.c.0.s8 %v7524
    %v7526 = vlaneseq
    %v7527 = vshrl.u32 %v7526, 7
    %v7528 = vsub.s32 %v7525, %v7527
    %v7529 = vrot.slane %v7515, %v7528
    %v7530 = vcombine.high %v7522, %v7522
    %v7531 = vcombine.high %v7529, %v7529
    %v7532 = vcombine.high %v7308, %v7308
    %v7534 = vunpack.c.l.s4 1983009808
    %v7535 = vunpack.c.0.s8 %v7534
    %v7536 = vlaneseq
    %v7537 = vshrl.u32 %v7536, 7
    %v7538 = vsub.s32 %v7535, %v7537
    %v7539 = vrot.slane %v7308, %v7538
    %v7541 = vunpack.c.l.s4 1983009808
    %v7542 = vunpack.c.0.s8 %v7541
    %v7543 = vlaneseq
    %v7544 = vshrl.u32 %v7543, 7
    %v7545 = vsub.s32 %v7542, %v7544
    %v7546 = vrot.slane %v7532, %v7545
    %v7547 = vcombine.high %v7539, %v7539
    %v7548 = vcombine.high %v7546, %v7546
    %v7549 = vcombine.high %v7309, %v7309
    %v7551 = vunpack.c.l.s4 1983009808
    %v7552 = vunpack.c.0.s8 %v7551
    %v7553 = vlaneseq
    %v7554 = vshrl.u32 %v7553, 7
    %v7555 = vsub.s32 %v7552, %v7554
    %v7556 = vrot.slane %v7309, %v7555
    %v7558 = vunpack.c.l.s4 1983009808
    %v7559 = vunpack.c.0.s8 %v7558
    %v7560 = vlaneseq
    %v7561 = vshrl.u32 %v7560, 7
    %v7562 = vsub.s32 %v7559, %v7561
    %v7563 = vrot.slane %v7549, %v7562
    %v7564 = vcombine.high %v7556, %v7556
    %v7565 = vcombine.high %v7563, %v7563
    %v7566 = vcombine.high %v7310, %v7310
    %v7568 = vunpack.c.l.s4 1983009808
    %v7569 = vunpack.c.0.s8 %v7568
    %v7570 = vlaneseq
    %v7571 = vshrl.u32 %v7570, 7
    %v7572 = vsub.s32 %v7569, %v7571
    %v7573 = vrot.slane %v7310, %v7572
    %v7575 = vunpack.c.l.s4 1983009808
    %v7576 = vunpack.c.0.s8 %v7575
    %v7577 = vlaneseq
    %v7578 = vshrl.u32 %v7577, 7
    %v7579 = vsub.s32 %v7576, %v7578
    %v7580 = vrot.slane %v7566, %v7579
    %v7581 = vcombine.high %v7573, %v7573
    %v7582 = vcombine.high %v7580, %v7580
    %v7583 = vcombine.high %v7311, %v7311
    %v7585 = vunpack.c.l.s4 1983009808
    %v7586 = vunpack.c.0.s8 %v7585
    %v7587 = vlaneseq
    %v7588 = vshrl.u32 %v7587, 7
    %v7589 = vsub.s32 %v7586, %v7588
    %v7590 = vrot.slane %v7311, %v7589
    %v7592 = vunpack.c.l.s4 1983009808
    %v7593 = vunpack.c.0.s8 %v7592
    %v7594 = vlaneseq
    %v7595 = vshrl.u32 %v7594, 7
    %v7596 = vsub.s32 %v7593, %v7595
    %v7597 = vrot.slane %v7583, %v7596
    %v7598 = vcombine.high %v7590, %v7590
    %v7599 = vcombine.high %v7597, %v7597
    %v7664 = vpack.c.bf16 %v7335, %v7335
    %v7665 = vpack.c.bf16 %v7343, %v7343
    %v7666 = vpack.c.bf16 %v7342, %v7342
    %v7667 = vpack.c.bf16 %v7344, %v7344
    %v7668 = vpack.c.bf16 %v7352, %v7352
    %v7669 = vpack.c.bf16 %v7360, %v7360
    %v7670 = vpack.c.bf16 %v7359, %v7359
    %v7671 = vpack.c.bf16 %v7361, %v7361
    %v7672 = vpack.c.bf16 %v7369, %v7369
    %v7673 = vpack.c.bf16 %v7377, %v7377
    %v7674 = vpack.c.bf16 %v7376, %v7376
    %v7675 = vpack.c.bf16 %v7378, %v7378
    %v7676 = vpack.c.bf16 %v7386, %v7386
    %v7677 = vpack.c.bf16 %v7394, %v7394
    %v7678 = vpack.c.bf16 %v7393, %v7393
    %v7679 = vpack.c.bf16 %v7395, %v7395
    %v7680 = vpack.c.bf16 %v7403, %v7403
    %v7681 = vpack.c.bf16 %v7411, %v7411
    %v7682 = vpack.c.bf16 %v7410, %v7410
    %v7683 = vpack.c.bf16 %v7412, %v7412
    %v7684 = vpack.c.bf16 %v7420, %v7420
    %v7685 = vpack.c.bf16 %v7428, %v7428
    %v7686 = vpack.c.bf16 %v7427, %v7427
    %v7687 = vpack.c.bf16 %v7429, %v7429
    %v7688 = vpack.c.bf16 %v7437, %v7437
    %v7689 = vpack.c.bf16 %v7445, %v7445
    %v7690 = vpack.c.bf16 %v7444, %v7444
    %v7691 = vpack.c.bf16 %v7446, %v7446
    %v7692 = vpack.c.bf16 %v7454, %v7454
    %v7693 = vpack.c.bf16 %v7462, %v7462
    %v7694 = vpack.c.bf16 %v7461, %v7461
    %v7695 = vpack.c.bf16 %v7463, %v7463
    %v7696 = vpack.c.bf16 %v7471, %v7471
    %v7697 = vpack.c.bf16 %v7479, %v7479
    %v7698 = vpack.c.bf16 %v7478, %v7478
    %v7699 = vpack.c.bf16 %v7480, %v7480
    %v7700 = vpack.c.bf16 %v7488, %v7488
    %v7701 = vpack.c.bf16 %v7496, %v7496
    %v7702 = vpack.c.bf16 %v7495, %v7495
    %v7703 = vpack.c.bf16 %v7497, %v7497
    %v7704 = vpack.c.bf16 %v7505, %v7505
    %v7705 = vpack.c.bf16 %v7513, %v7513
    %v7706 = vpack.c.bf16 %v7512, %v7512
    %v7707 = vpack.c.bf16 %v7514, %v7514
    %v7708 = vpack.c.bf16 %v7522, %v7522
    %v7709 = vpack.c.bf16 %v7530, %v7530
    %v7710 = vpack.c.bf16 %v7529, %v7529
    %v7711 = vpack.c.bf16 %v7531, %v7531
    %v7712 = vpack.c.bf16 %v7539, %v7539
    %v7713 = vpack.c.bf16 %v7547, %v7547
    %v7714 = vpack.c.bf16 %v7546, %v7546
    %v7715 = vpack.c.bf16 %v7548, %v7548
    %v7716 = vpack.c.bf16 %v7556, %v7556
    %v7717 = vpack.c.bf16 %v7564, %v7564
    %v7718 = vpack.c.bf16 %v7563, %v7563
    %v7719 = vpack.c.bf16 %v7565, %v7565
    %v7720 = vpack.c.bf16 %v7573, %v7573
    %v7721 = vpack.c.bf16 %v7581, %v7581
    %v7722 = vpack.c.bf16 %v7580, %v7580
    %v7723 = vpack.c.bf16 %v7582, %v7582
    %v7724 = vpack.c.bf16 %v7590, %v7590
    %v7725 = vpack.c.bf16 %v7598, %v7598
    %v7726 = vpack.c.bf16 %v7597, %v7597
    %v7727 = vpack.c.bf16 %v7599, %v7599
    %v7728 = vld [vmem:[#allocation6] sm:$0xff]
    %v7729 = vld [vmem:[#allocation6 + $0x8] sm:$0xff]
    %v7730 = vld [vmem:[#allocation6 + $0x10] sm:$0xff]
    %v7731 = vld [vmem:[#allocation6 + $0x18] sm:$0xff]
    %v7732 = vld [vmem:[#allocation6 + $0x20] sm:$0xff]
    %v7733 = vld [vmem:[#allocation6 + $0x28] sm:$0xff]
    %v7734 = vld [vmem:[#allocation6 + $0x30] sm:$0xff]
    %v7735 = vld [vmem:[#allocation6 + $0x38] sm:$0xff]
    %v7736 = vld [vmem:[#allocation6 + $0x40] sm:$0xff]
    %v7737 = vld [vmem:[#allocation6 + $0x48] sm:$0xff]
    %v7738 = vld [vmem:[#allocation6 + $0x50] sm:$0xff]
    %v7739 = vld [vmem:[#allocation6 + $0x58] sm:$0xff]
    %v7740 = vld [vmem:[#allocation6 + $0x60] sm:$0xff]
    %v7741 = vld [vmem:[#allocation6 + $0x68] sm:$0xff]
    %v7742 = vld [vmem:[#allocation6 + $0x70] sm:$0xff]
    %v7743 = vld [vmem:[#allocation6 + $0x78] sm:$0xff]
    %v7744 = vld [vmem:[#allocation6 + $0x80] sm:$0xff]
    %v7745 = vld [vmem:[#allocation6 + $0x88] sm:$0xff]
    %v7746 = vld [vmem:[#allocation6 + $0x90] sm:$0xff]
    %v7747 = vld [vmem:[#allocation6 + $0x98] sm:$0xff]
    %v7748 = vld [vmem:[#allocation6 + $0xa0] sm:$0xff]
    %v7749 = vld [vmem:[#allocation6 + $0xa8] sm:$0xff]
    %v7750 = vld [vmem:[#allocation6 + $0xb0] sm:$0xff]
    %v7751 = vld [vmem:[#allocation6 + $0xb8] sm:$0xff]
    %v7752 = vld [vmem:[#allocation6 + $0xc0] sm:$0xff]
    %v7753 = vld [vmem:[#allocation6 + $0xc8] sm:$0xff]
    %v7754 = vld [vmem:[#allocation6 + $0xd0] sm:$0xff]
    %v7755 = vld [vmem:[#allocation6 + $0xd8] sm:$0xff]
    %v7756 = vld [vmem:[#allocation6 + $0xe0] sm:$0xff]
    %v7757 = vld [vmem:[#allocation6 + $0xe8] sm:$0xff]
    %v7758 = vld [vmem:[#allocation6 + $0xf0] sm:$0xff]
    %v7759 = vld [vmem:[#allocation6 + $0xf8] sm:$0xff]
    %v7760 = vld [vmem:[#allocation6 + $0x100] sm:$0xff]
    %v7761 = vld [vmem:[#allocation6 + $0x108] sm:$0xff]
    %v7762 = vld [vmem:[#allocation6 + $0x110] sm:$0xff]
    %v7763 = vld [vmem:[#allocation6 + $0x118] sm:$0xff]
    %v7764 = vld [vmem:[#allocation6 + $0x120] sm:$0xff]
    %v7765 = vld [vmem:[#allocation6 + $0x128] sm:$0xff]
    %v7766 = vld [vmem:[#allocation6 + $0x130] sm:$0xff]
    %v7767 = vld [vmem:[#allocation6 + $0x138] sm:$0xff]
    %v7768 = vld [vmem:[#allocation6 + $0x140] sm:$0xff]
    %v7769 = vld [vmem:[#allocation6 + $0x148] sm:$0xff]
    %v7770 = vld [vmem:[#allocation6 + $0x150] sm:$0xff]
    %v7771 = vld [vmem:[#allocation6 + $0x158] sm:$0xff]
    %v7772 = vld [vmem:[#allocation6 + $0x160] sm:$0xff]
    %v7773 = vld [vmem:[#allocation6 + $0x168] sm:$0xff]
    %v7774 = vld [vmem:[#allocation6 + $0x170] sm:$0xff]
    %v7775 = vld [vmem:[#allocation6 + $0x178] sm:$0xff]
    %v7776 = vld [vmem:[#allocation6 + $0x180] sm:$0xff]
    %v7777 = vld [vmem:[#allocation6 + $0x188] sm:$0xff]
    %v7778 = vld [vmem:[#allocation6 + $0x190] sm:$0xff]
    %v7779 = vld [vmem:[#allocation6 + $0x198] sm:$0xff]
    %v7780 = vld [vmem:[#allocation6 + $0x1a0] sm:$0xff]
    %v7781 = vld [vmem:[#allocation6 + $0x1a8] sm:$0xff]
    %v7782 = vld [vmem:[#allocation6 + $0x1b0] sm:$0xff]
    %v7783 = vld [vmem:[#allocation6 + $0x1b8] sm:$0xff]
    %v7784 = vld [vmem:[#allocation6 + $0x1c0] sm:$0xff]
    %v7785 = vld [vmem:[#allocation6 + $0x1c8] sm:$0xff]
    %v7786 = vld [vmem:[#allocation6 + $0x1d0] sm:$0xff]
    %v7787 = vld [vmem:[#allocation6 + $0x1d8] sm:$0xff]
    %v7788 = vld [vmem:[#allocation6 + $0x1e0] sm:$0xff]
    %v7789 = vld [vmem:[#allocation6 + $0x1e8] sm:$0xff]
    %v7790 = vld [vmem:[#allocation6 + $0x1f0] sm:$0xff]
    %v7791 = vld [vmem:[#allocation6 + $0x1f8] sm:$0xff]
    %v7792 = vld [vmem:[#allocation6 + $0x200] sm:$0xff]
    %v7793 = vld [vmem:[#allocation6 + $0x208] sm:$0xff]
    %v7794 = vld [vmem:[#allocation6 + $0x210] sm:$0xff]
    %v7795 = vld [vmem:[#allocation6 + $0x218] sm:$0xff]
    %v7796 = vld [vmem:[#allocation6 + $0x220] sm:$0xff]
    %v7797 = vld [vmem:[#allocation6 + $0x228] sm:$0xff]
    %v7798 = vld [vmem:[#allocation6 + $0x230] sm:$0xff]
    %v7799 = vld [vmem:[#allocation6 + $0x238] sm:$0xff]
    %v7800 = vld [vmem:[#allocation6 + $0x240] sm:$0xff]
    %v7801 = vld [vmem:[#allocation6 + $0x248] sm:$0xff]
    %v7802 = vld [vmem:[#allocation6 + $0x250] sm:$0xff]
    %v7803 = vld [vmem:[#allocation6 + $0x258] sm:$0xff]
    %v7804 = vld [vmem:[#allocation6 + $0x260] sm:$0xff]
    %v7805 = vld [vmem:[#allocation6 + $0x268] sm:$0xff]
    %v7806 = vld [vmem:[#allocation6 + $0x270] sm:$0xff]
    %v7807 = vld [vmem:[#allocation6 + $0x278] sm:$0xff]
    %v7808 = vld [vmem:[#allocation6 + $0x280] sm:$0xff]
    %v7809 = vld [vmem:[#allocation6 + $0x288] sm:$0xff]
    %v7810 = vld [vmem:[#allocation6 + $0x290] sm:$0xff]
    %v7811 = vld [vmem:[#allocation6 + $0x298] sm:$0xff]
    %v7812 = vld [vmem:[#allocation6 + $0x2a0] sm:$0xff]
    %v7813 = vld [vmem:[#allocation6 + $0x2a8] sm:$0xff]
    %v7814 = vld [vmem:[#allocation6 + $0x2b0] sm:$0xff]
    %v7815 = vld [vmem:[#allocation6 + $0x2b8] sm:$0xff]
    %v7816 = vld [vmem:[#allocation6 + $0x2c0] sm:$0xff]
    %v7817 = vld [vmem:[#allocation6 + $0x2c8] sm:$0xff]
    %v7818 = vld [vmem:[#allocation6 + $0x2d0] sm:$0xff]
    %v7819 = vld [vmem:[#allocation6 + $0x2d8] sm:$0xff]
    %v7820 = vld [vmem:[#allocation6 + $0x2e0] sm:$0xff]
    %v7821 = vld [vmem:[#allocation6 + $0x2e8] sm:$0xff]
    %v7822 = vld [vmem:[#allocation6 + $0x2f0] sm:$0xff]
    %v7823 = vld [vmem:[#allocation6 + $0x2f8] sm:$0xff]
    %v7824 = vld [vmem:[#allocation6 + $0x300] sm:$0xff]
    %v7825 = vld [vmem:[#allocation6 + $0x308] sm:$0xff]
    %v7826 = vld [vmem:[#allocation6 + $0x310] sm:$0xff]
    %v7827 = vld [vmem:[#allocation6 + $0x318] sm:$0xff]
    %v7828 = vld [vmem:[#allocation6 + $0x320] sm:$0xff]
    %v7829 = vld [vmem:[#allocation6 + $0x328] sm:$0xff]
    %v7830 = vld [vmem:[#allocation6 + $0x330] sm:$0xff]
    %v7831 = vld [vmem:[#allocation6 + $0x338] sm:$0xff]
    %v7832 = vld [vmem:[#allocation6 + $0x340] sm:$0xff]
    %v7833 = vld [vmem:[#allocation6 + $0x348] sm:$0xff]
    %v7834 = vld [vmem:[#allocation6 + $0x350] sm:$0xff]
    %v7835 = vld [vmem:[#allocation6 + $0x358] sm:$0xff]
    %v7836 = vld [vmem:[#allocation6 + $0x360] sm:$0xff]
    %v7837 = vld [vmem:[#allocation6 + $0x368] sm:$0xff]
    %v7838 = vld [vmem:[#allocation6 + $0x370] sm:$0xff]
    %v7839 = vld [vmem:[#allocation6 + $0x378] sm:$0xff]
    %v7840 = vld [vmem:[#allocation6 + $0x380] sm:$0xff]
    %v7841 = vld [vmem:[#allocation6 + $0x388] sm:$0xff]
    %v7842 = vld [vmem:[#allocation6 + $0x390] sm:$0xff]
    %v7843 = vld [vmem:[#allocation6 + $0x398] sm:$0xff]
    %v7844 = vld [vmem:[#allocation6 + $0x3a0] sm:$0xff]
    %v7845 = vld [vmem:[#allocation6 + $0x3a8] sm:$0xff]
    %v7846 = vld [vmem:[#allocation6 + $0x3b0] sm:$0xff]
    %v7847 = vld [vmem:[#allocation6 + $0x3b8] sm:$0xff]
    %v7848 = vld [vmem:[#allocation6 + $0x3c0] sm:$0xff]
    %v7849 = vld [vmem:[#allocation6 + $0x3c8] sm:$0xff]
    %v7850 = vld [vmem:[#allocation6 + $0x3d0] sm:$0xff]
    %v7851 = vld [vmem:[#allocation6 + $0x3d8] sm:$0xff]
    %v7852 = vld [vmem:[#allocation6 + $0x3e0] sm:$0xff]
    %v7853 = vld [vmem:[#allocation6 + $0x3e8] sm:$0xff]
    %v7854 = vld [vmem:[#allocation6 + $0x3f0] sm:$0xff]
    %v7855 = vld [vmem:[#allocation6 + $0x3f8] sm:$0xff]
    %v7856 = vld [vmem:[#allocation6 + $0x400] sm:$0xff]
    %v7857 = vld [vmem:[#allocation6 + $0x408] sm:$0xff]
    %v7858 = vld [vmem:[#allocation6 + $0x410] sm:$0xff]
    %v7859 = vld [vmem:[#allocation6 + $0x418] sm:$0xff]
    %v7860 = vld [vmem:[#allocation6 + $0x420] sm:$0xff]
    %v7861 = vld [vmem:[#allocation6 + $0x428] sm:$0xff]
    %v7862 = vld [vmem:[#allocation6 + $0x430] sm:$0xff]
    %v7863 = vld [vmem:[#allocation6 + $0x438] sm:$0xff]
    %v7864 = vld [vmem:[#allocation6 + $0x440] sm:$0xff]
    %v7865 = vld [vmem:[#allocation6 + $0x448] sm:$0xff]
    %v7866 = vld [vmem:[#allocation6 + $0x450] sm:$0xff]
    %v7867 = vld [vmem:[#allocation6 + $0x458] sm:$0xff]
    %v7868 = vld [vmem:[#allocation6 + $0x460] sm:$0xff]
    %v7869 = vld [vmem:[#allocation6 + $0x468] sm:$0xff]
    %v7870 = vld [vmem:[#allocation6 + $0x470] sm:$0xff]
    %v7871 = vld [vmem:[#allocation6 + $0x478] sm:$0xff]
    %v7872 = vld [vmem:[#allocation6 + $0x480] sm:$0xff]
    %v7873 = vld [vmem:[#allocation6 + $0x488] sm:$0xff]
    %v7874 = vld [vmem:[#allocation6 + $0x490] sm:$0xff]
    %v7875 = vld [vmem:[#allocation6 + $0x498] sm:$0xff]
    %v7876 = vld [vmem:[#allocation6 + $0x4a0] sm:$0xff]
    %v7877 = vld [vmem:[#allocation6 + $0x4a8] sm:$0xff]
    %v7878 = vld [vmem:[#allocation6 + $0x4b0] sm:$0xff]
    %v7879 = vld [vmem:[#allocation6 + $0x4b8] sm:$0xff]
    %v7880 = vld [vmem:[#allocation6 + $0x4c0] sm:$0xff]
    %v7881 = vld [vmem:[#allocation6 + $0x4c8] sm:$0xff]
    %v7882 = vld [vmem:[#allocation6 + $0x4d0] sm:$0xff]
    %v7883 = vld [vmem:[#allocation6 + $0x4d8] sm:$0xff]
    %v7884 = vld [vmem:[#allocation6 + $0x4e0] sm:$0xff]
    %v7885 = vld [vmem:[#allocation6 + $0x4e8] sm:$0xff]
    %v7886 = vld [vmem:[#allocation6 + $0x4f0] sm:$0xff]
    %v7887 = vld [vmem:[#allocation6 + $0x4f8] sm:$0xff]
    %v7888 = vld [vmem:[#allocation6 + $0x500] sm:$0xff]
    %v7889 = vld [vmem:[#allocation6 + $0x508] sm:$0xff]
    %v7890 = vld [vmem:[#allocation6 + $0x510] sm:$0xff]
    %v7891 = vld [vmem:[#allocation6 + $0x518] sm:$0xff]
    %v7892 = vld [vmem:[#allocation6 + $0x520] sm:$0xff]
    %v7893 = vld [vmem:[#allocation6 + $0x528] sm:$0xff]
    %v7894 = vld [vmem:[#allocation6 + $0x530] sm:$0xff]
    %v7895 = vld [vmem:[#allocation6 + $0x538] sm:$0xff]
    %v7896 = vld [vmem:[#allocation6 + $0x540] sm:$0xff]
    %v7897 = vld [vmem:[#allocation6 + $0x548] sm:$0xff]
    %v7898 = vld [vmem:[#allocation6 + $0x550] sm:$0xff]
    %v7899 = vld [vmem:[#allocation6 + $0x558] sm:$0xff]
    %v7900 = vld [vmem:[#allocation6 + $0x560] sm:$0xff]
    %v7901 = vld [vmem:[#allocation6 + $0x568] sm:$0xff]
    %v7902 = vld [vmem:[#allocation6 + $0x570] sm:$0xff]
    %v7903 = vld [vmem:[#allocation6 + $0x578] sm:$0xff]
    %v7904 = vld [vmem:[#allocation6 + $0x580] sm:$0xff]
    %v7905 = vld [vmem:[#allocation6 + $0x588] sm:$0xff]
    %v7906 = vld [vmem:[#allocation6 + $0x590] sm:$0xff]
    %v7907 = vld [vmem:[#allocation6 + $0x598] sm:$0xff]
    %v7908 = vld [vmem:[#allocation6 + $0x5a0] sm:$0xff]
    %v7909 = vld [vmem:[#allocation6 + $0x5a8] sm:$0xff]
    %v7910 = vld [vmem:[#allocation6 + $0x5b0] sm:$0xff]
    %v7911 = vld [vmem:[#allocation6 + $0x5b8] sm:$0xff]
    %v7912 = vld [vmem:[#allocation6 + $0x5c0] sm:$0xff]
    %v7913 = vld [vmem:[#allocation6 + $0x5c8] sm:$0xff]
    %v7914 = vld [vmem:[#allocation6 + $0x5d0] sm:$0xff]
    %v7915 = vld [vmem:[#allocation6 + $0x5d8] sm:$0xff]
    %v7916 = vld [vmem:[#allocation6 + $0x5e0] sm:$0xff]
    %v7917 = vld [vmem:[#allocation6 + $0x5e8] sm:$0xff]
    %v7918 = vld [vmem:[#allocation6 + $0x5f0] sm:$0xff]
    %v7919 = vld [vmem:[#allocation6 + $0x5f8] sm:$0xff]
    %v7920 = vld [vmem:[#allocation6 + $0x600] sm:$0xff]
    %v7921 = vld [vmem:[#allocation6 + $0x608] sm:$0xff]
    %v7922 = vld [vmem:[#allocation6 + $0x610] sm:$0xff]
    %v7923 = vld [vmem:[#allocation6 + $0x618] sm:$0xff]
    %v7924 = vld [vmem:[#allocation6 + $0x620] sm:$0xff]
    %v7925 = vld [vmem:[#allocation6 + $0x628] sm:$0xff]
    %v7926 = vld [vmem:[#allocation6 + $0x630] sm:$0xff]
    %v7927 = vld [vmem:[#allocation6 + $0x638] sm:$0xff]
    %v7928 = vld [vmem:[#allocation6 + $0x640] sm:$0xff]
    %v7929 = vld [vmem:[#allocation6 + $0x648] sm:$0xff]
    %v7930 = vld [vmem:[#allocation6 + $0x650] sm:$0xff]
    %v7931 = vld [vmem:[#allocation6 + $0x658] sm:$0xff]
    %v7932 = vld [vmem:[#allocation6 + $0x660] sm:$0xff]
    %v7933 = vld [vmem:[#allocation6 + $0x668] sm:$0xff]
    %v7934 = vld [vmem:[#allocation6 + $0x670] sm:$0xff]
    %v7935 = vld [vmem:[#allocation6 + $0x678] sm:$0xff]
    %v7936 = vld [vmem:[#allocation6 + $0x680] sm:$0xff]
    %v7937 = vld [vmem:[#allocation6 + $0x688] sm:$0xff]
    %v7938 = vld [vmem:[#allocation6 + $0x690] sm:$0xff]
    %v7939 = vld [vmem:[#allocation6 + $0x698] sm:$0xff]
    %v7940 = vld [vmem:[#allocation6 + $0x6a0] sm:$0xff]
    %v7941 = vld [vmem:[#allocation6 + $0x6a8] sm:$0xff]
    %v7942 = vld [vmem:[#allocation6 + $0x6b0] sm:$0xff]
    %v7943 = vld [vmem:[#allocation6 + $0x6b8] sm:$0xff]
    %v7944 = vld [vmem:[#allocation6 + $0x6c0] sm:$0xff]
    %v7945 = vld [vmem:[#allocation6 + $0x6c8] sm:$0xff]
    %v7946 = vld [vmem:[#allocation6 + $0x6d0] sm:$0xff]
    %v7947 = vld [vmem:[#allocation6 + $0x6d8] sm:$0xff]
    %v7948 = vld [vmem:[#allocation6 + $0x6e0] sm:$0xff]
    %v7949 = vld [vmem:[#allocation6 + $0x6e8] sm:$0xff]
    %v7950 = vld [vmem:[#allocation6 + $0x6f0] sm:$0xff]
    %v7951 = vld [vmem:[#allocation6 + $0x6f8] sm:$0xff]
    %v7952 = vld [vmem:[#allocation6 + $0x700] sm:$0xff]
    %v7953 = vld [vmem:[#allocation6 + $0x708] sm:$0xff]
    %v7954 = vld [vmem:[#allocation6 + $0x710] sm:$0xff]
    %v7955 = vld [vmem:[#allocation6 + $0x718] sm:$0xff]
    %v7956 = vld [vmem:[#allocation6 + $0x720] sm:$0xff]
    %v7957 = vld [vmem:[#allocation6 + $0x728] sm:$0xff]
    %v7958 = vld [vmem:[#allocation6 + $0x730] sm:$0xff]
    %v7959 = vld [vmem:[#allocation6 + $0x738] sm:$0xff]
    %v7960 = vld [vmem:[#allocation6 + $0x740] sm:$0xff]
    %v7961 = vld [vmem:[#allocation6 + $0x748] sm:$0xff]
    %v7962 = vld [vmem:[#allocation6 + $0x750] sm:$0xff]
    %v7963 = vld [vmem:[#allocation6 + $0x758] sm:$0xff]
    %v7964 = vld [vmem:[#allocation6 + $0x760] sm:$0xff]
    %v7965 = vld [vmem:[#allocation6 + $0x768] sm:$0xff]
    %v7966 = vld [vmem:[#allocation6 + $0x770] sm:$0xff]
    %v7967 = vld [vmem:[#allocation6 + $0x778] sm:$0xff]
    %v7968 = vld [vmem:[#allocation6 + $0x780] sm:$0xff]
    %v7969 = vld [vmem:[#allocation6 + $0x788] sm:$0xff]
    %v7970 = vld [vmem:[#allocation6 + $0x790] sm:$0xff]
    %v7971 = vld [vmem:[#allocation6 + $0x798] sm:$0xff]
    %v7972 = vld [vmem:[#allocation6 + $0x7a0] sm:$0xff]
    %v7973 = vld [vmem:[#allocation6 + $0x7a8] sm:$0xff]
    %v7974 = vld [vmem:[#allocation6 + $0x7b0] sm:$0xff]
    %v7975 = vld [vmem:[#allocation6 + $0x7b8] sm:$0xff]
    %v7976 = vld [vmem:[#allocation6 + $0x7c0] sm:$0xff]
    %v7977 = vld [vmem:[#allocation6 + $0x7c8] sm:$0xff]
    %v7978 = vld [vmem:[#allocation6 + $0x7d0] sm:$0xff]
    %v7979 = vld [vmem:[#allocation6 + $0x7d8] sm:$0xff]
    %v7980 = vld [vmem:[#allocation6 + $0x7e0] sm:$0xff]
    %v7981 = vld [vmem:[#allocation6 + $0x7e8] sm:$0xff]
    %v7982 = vld [vmem:[#allocation6 + $0x7f0] sm:$0xff]
    %v7983 = vld [vmem:[#allocation6 + $0x7f8] sm:$0xff]
    %v7984 = vld [vmem:[#allocation6 + $0x800] sm:$0xff]
    %v7985 = vld [vmem:[#allocation6 + $0x808] sm:$0xff]
    %v7986 = vld [vmem:[#allocation6 + $0x810] sm:$0xff]
    %v7987 = vld [vmem:[#allocation6 + $0x818] sm:$0xff]
    %v7988 = vld [vmem:[#allocation6 + $0x820] sm:$0xff]
    %v7989 = vld [vmem:[#allocation6 + $0x828] sm:$0xff]
    %v7990 = vld [vmem:[#allocation6 + $0x830] sm:$0xff]
    %v7991 = vld [vmem:[#allocation6 + $0x838] sm:$0xff]
    %v7992 = vld [vmem:[#allocation6 + $0x840] sm:$0xff]
    %v7993 = vld [vmem:[#allocation6 + $0x848] sm:$0xff]
    %v7994 = vld [vmem:[#allocation6 + $0x850] sm:$0xff]
    %v7995 = vld [vmem:[#allocation6 + $0x858] sm:$0xff]
    %v7996 = vld [vmem:[#allocation6 + $0x860] sm:$0xff]
    %v7997 = vld [vmem:[#allocation6 + $0x868] sm:$0xff]
    %v7998 = vld [vmem:[#allocation6 + $0x870] sm:$0xff]
    %v7999 = vld [vmem:[#allocation6 + $0x878] sm:$0xff]
    %v8000 = vld [vmem:[#allocation6 + $0x880] sm:$0xff]
    %v8001 = vld [vmem:[#allocation6 + $0x888] sm:$0xff]
    %v8002 = vld [vmem:[#allocation6 + $0x890] sm:$0xff]
    %v8003 = vld [vmem:[#allocation6 + $0x898] sm:$0xff]
    %v8004 = vld [vmem:[#allocation6 + $0x8a0] sm:$0xff]
    %v8005 = vld [vmem:[#allocation6 + $0x8a8] sm:$0xff]
    %v8006 = vld [vmem:[#allocation6 + $0x8b0] sm:$0xff]
    %v8007 = vld [vmem:[#allocation6 + $0x8b8] sm:$0xff]
    %v8008 = vld [vmem:[#allocation6 + $0x8c0] sm:$0xff]
    %v8009 = vld [vmem:[#allocation6 + $0x8c8] sm:$0xff]
    %v8010 = vld [vmem:[#allocation6 + $0x8d0] sm:$0xff]
    %v8011 = vld [vmem:[#allocation6 + $0x8d8] sm:$0xff]
    %v8012 = vld [vmem:[#allocation6 + $0x8e0] sm:$0xff]
    %v8013 = vld [vmem:[#allocation6 + $0x8e8] sm:$0xff]
    %v8014 = vld [vmem:[#allocation6 + $0x8f0] sm:$0xff]
    %v8015 = vld [vmem:[#allocation6 + $0x8f8] sm:$0xff]
    %v8016 = vld [vmem:[#allocation6 + $0x900] sm:$0xff]
    %v8017 = vld [vmem:[#allocation6 + $0x908] sm:$0xff]
    %v8018 = vld [vmem:[#allocation6 + $0x910] sm:$0xff]
    %v8019 = vld [vmem:[#allocation6 + $0x918] sm:$0xff]
    %v8020 = vld [vmem:[#allocation6 + $0x920] sm:$0xff]
    %v8021 = vld [vmem:[#allocation6 + $0x928] sm:$0xff]
    %v8022 = vld [vmem:[#allocation6 + $0x930] sm:$0xff]
    %v8023 = vld [vmem:[#allocation6 + $0x938] sm:$0xff]
    %v8024 = vld [vmem:[#allocation6 + $0x940] sm:$0xff]
    %v8025 = vld [vmem:[#allocation6 + $0x948] sm:$0xff]
    %v8026 = vld [vmem:[#allocation6 + $0x950] sm:$0xff]
    %v8027 = vld [vmem:[#allocation6 + $0x958] sm:$0xff]
    %v8028 = vld [vmem:[#allocation6 + $0x960] sm:$0xff]
    %v8029 = vld [vmem:[#allocation6 + $0x968] sm:$0xff]
    %v8030 = vld [vmem:[#allocation6 + $0x970] sm:$0xff]
    %v8031 = vld [vmem:[#allocation6 + $0x978] sm:$0xff]
    %v8032 = vld [vmem:[#allocation6 + $0x980] sm:$0xff]
    %v8033 = vld [vmem:[#allocation6 + $0x988] sm:$0xff]
    %v8034 = vld [vmem:[#allocation6 + $0x990] sm:$0xff]
    %v8035 = vld [vmem:[#allocation6 + $0x998] sm:$0xff]
    %v8036 = vld [vmem:[#allocation6 + $0x9a0] sm:$0xff]
    %v8037 = vld [vmem:[#allocation6 + $0x9a8] sm:$0xff]
    %v8038 = vld [vmem:[#allocation6 + $0x9b0] sm:$0xff]
    %v8039 = vld [vmem:[#allocation6 + $0x9b8] sm:$0xff]
    %v8040 = vld [vmem:[#allocation6 + $0x9c0] sm:$0xff]
    %v8041 = vld [vmem:[#allocation6 + $0x9c8] sm:$0xff]
    %v8042 = vld [vmem:[#allocation6 + $0x9d0] sm:$0xff]
    %v8043 = vld [vmem:[#allocation6 + $0x9d8] sm:$0xff]
    %v8044 = vld [vmem:[#allocation6 + $0x9e0] sm:$0xff]
    %v8045 = vld [vmem:[#allocation6 + $0x9e8] sm:$0xff]
    %v8046 = vld [vmem:[#allocation6 + $0x9f0] sm:$0xff]
    %v8047 = vld [vmem:[#allocation6 + $0x9f8] sm:$0xff]
    %v8048 = vld [vmem:[#allocation6 + $0xa00] sm:$0xff]
    %v8049 = vld [vmem:[#allocation6 + $0xa08] sm:$0xff]
    %v8050 = vld [vmem:[#allocation6 + $0xa10] sm:$0xff]
    %v8051 = vld [vmem:[#allocation6 + $0xa18] sm:$0xff]
    %v8052 = vld [vmem:[#allocation6 + $0xa20] sm:$0xff]
    %v8053 = vld [vmem:[#allocation6 + $0xa28] sm:$0xff]
    %v8054 = vld [vmem:[#allocation6 + $0xa30] sm:$0xff]
    %v8055 = vld [vmem:[#allocation6 + $0xa38] sm:$0xff]
    %v8056 = vld [vmem:[#allocation6 + $0xa40] sm:$0xff]
    %v8057 = vld [vmem:[#allocation6 + $0xa48] sm:$0xff]
    %v8058 = vld [vmem:[#allocation6 + $0xa50] sm:$0xff]
    %v8059 = vld [vmem:[#allocation6 + $0xa58] sm:$0xff]
    %v8060 = vld [vmem:[#allocation6 + $0xa60] sm:$0xff]
    %v8061 = vld [vmem:[#allocation6 + $0xa68] sm:$0xff]
    %v8062 = vld [vmem:[#allocation6 + $0xa70] sm:$0xff]
    %v8063 = vld [vmem:[#allocation6 + $0xa78] sm:$0xff]
    %v8064 = vld [vmem:[#allocation6 + $0xa80] sm:$0xff]
    %v8065 = vld [vmem:[#allocation6 + $0xa88] sm:$0xff]
    %v8066 = vld [vmem:[#allocation6 + $0xa90] sm:$0xff]
    %v8067 = vld [vmem:[#allocation6 + $0xa98] sm:$0xff]
    %v8068 = vld [vmem:[#allocation6 + $0xaa0] sm:$0xff]
    %v8069 = vld [vmem:[#allocation6 + $0xaa8] sm:$0xff]
    %v8070 = vld [vmem:[#allocation6 + $0xab0] sm:$0xff]
    %v8071 = vld [vmem:[#allocation6 + $0xab8] sm:$0xff]
    %v8072 = vld [vmem:[#allocation6 + $0xac0] sm:$0xff]
    %v8073 = vld [vmem:[#allocation6 + $0xac8] sm:$0xff]
    %v8074 = vld [vmem:[#allocation6 + $0xad0] sm:$0xff]
    %v8075 = vld [vmem:[#allocation6 + $0xad8] sm:$0xff]
    %v8076 = vld [vmem:[#allocation6 + $0xae0] sm:$0xff]
    %v8077 = vld [vmem:[#allocation6 + $0xae8] sm:$0xff]
    %v8078 = vld [vmem:[#allocation6 + $0xaf0] sm:$0xff]
    %v8079 = vld [vmem:[#allocation6 + $0xaf8] sm:$0xff]
    %v8080 = vld [vmem:[#allocation6 + $0xb00] sm:$0xff]
    %v8081 = vld [vmem:[#allocation6 + $0xb08] sm:$0xff]
    %v8082 = vld [vmem:[#allocation6 + $0xb10] sm:$0xff]
    %v8083 = vld [vmem:[#allocation6 + $0xb18] sm:$0xff]
    %v8084 = vld [vmem:[#allocation6 + $0xb20] sm:$0xff]
    %v8085 = vld [vmem:[#allocation6 + $0xb28] sm:$0xff]
    %v8086 = vld [vmem:[#allocation6 + $0xb30] sm:$0xff]
    %v8087 = vld [vmem:[#allocation6 + $0xb38] sm:$0xff]
    %v8088 = vld [vmem:[#allocation6 + $0xb40] sm:$0xff]
    %v8089 = vld [vmem:[#allocation6 + $0xb48] sm:$0xff]
    %v8090 = vld [vmem:[#allocation6 + $0xb50] sm:$0xff]
    %v8091 = vld [vmem:[#allocation6 + $0xb58] sm:$0xff]
    %v8092 = vld [vmem:[#allocation6 + $0xb60] sm:$0xff]
    %v8093 = vld [vmem:[#allocation6 + $0xb68] sm:$0xff]
    %v8094 = vld [vmem:[#allocation6 + $0xb70] sm:$0xff]
    %v8095 = vld [vmem:[#allocation6 + $0xb78] sm:$0xff]
    %v8096 = vld [vmem:[#allocation6 + $0xb80] sm:$0xff]
    %v8097 = vld [vmem:[#allocation6 + $0xb88] sm:$0xff]
    %v8098 = vld [vmem:[#allocation6 + $0xb90] sm:$0xff]
    %v8099 = vld [vmem:[#allocation6 + $0xb98] sm:$0xff]
    %v8100 = vld [vmem:[#allocation6 + $0xba0] sm:$0xff]
    %v8101 = vld [vmem:[#allocation6 + $0xba8] sm:$0xff]
    %v8102 = vld [vmem:[#allocation6 + $0xbb0] sm:$0xff]
    %v8103 = vld [vmem:[#allocation6 + $0xbb8] sm:$0xff]
    %v8104 = vld [vmem:[#allocation6 + $0xbc0] sm:$0xff]
    %v8105 = vld [vmem:[#allocation6 + $0xbc8] sm:$0xff]
    %v8106 = vld [vmem:[#allocation6 + $0xbd0] sm:$0xff]
    %v8107 = vld [vmem:[#allocation6 + $0xbd8] sm:$0xff]
    %v8108 = vld [vmem:[#allocation6 + $0xbe0] sm:$0xff]
    %v8109 = vld [vmem:[#allocation6 + $0xbe8] sm:$0xff]
    %v8110 = vld [vmem:[#allocation6 + $0xbf0] sm:$0xff]
    %v8111 = vld [vmem:[#allocation6 + $0xbf8] sm:$0xff]
    %v8112 = vld [vmem:[#allocation6 + $0xc00] sm:$0xff]
    %v8113 = vld [vmem:[#allocation6 + $0xc08] sm:$0xff]
    %v8114 = vld [vmem:[#allocation6 + $0xc10] sm:$0xff]
    %v8115 = vld [vmem:[#allocation6 + $0xc18] sm:$0xff]
    %v8116 = vld [vmem:[#allocation6 + $0xc20] sm:$0xff]
    %v8117 = vld [vmem:[#allocation6 + $0xc28] sm:$0xff]
    %v8118 = vld [vmem:[#allocation6 + $0xc30] sm:$0xff]
    %v8119 = vld [vmem:[#allocation6 + $0xc38] sm:$0xff]
    %v8120 = vld [vmem:[#allocation6 + $0xc40] sm:$0xff]
    %v8121 = vld [vmem:[#allocation6 + $0xc48] sm:$0xff]
    %v8122 = vld [vmem:[#allocation6 + $0xc50] sm:$0xff]
    %v8123 = vld [vmem:[#allocation6 + $0xc58] sm:$0xff]
    %v8124 = vld [vmem:[#allocation6 + $0xc60] sm:$0xff]
    %v8125 = vld [vmem:[#allocation6 + $0xc68] sm:$0xff]
    %v8126 = vld [vmem:[#allocation6 + $0xc70] sm:$0xff]
    %v8127 = vld [vmem:[#allocation6 + $0xc78] sm:$0xff]
    %v8128 = vld [vmem:[#allocation6 + $0xc80] sm:$0xff]
    %v8129 = vld [vmem:[#allocation6 + $0xc88] sm:$0xff]
    %v8130 = vld [vmem:[#allocation6 + $0xc90] sm:$0xff]
    %v8131 = vld [vmem:[#allocation6 + $0xc98] sm:$0xff]
    %v8132 = vld [vmem:[#allocation6 + $0xca0] sm:$0xff]
    %v8133 = vld [vmem:[#allocation6 + $0xca8] sm:$0xff]
    %v8134 = vld [vmem:[#allocation6 + $0xcb0] sm:$0xff]
    %v8135 = vld [vmem:[#allocation6 + $0xcb8] sm:$0xff]
    %v8136 = vld [vmem:[#allocation6 + $0xcc0] sm:$0xff]
    %v8137 = vld [vmem:[#allocation6 + $0xcc8] sm:$0xff]
    %v8138 = vld [vmem:[#allocation6 + $0xcd0] sm:$0xff]
    %v8139 = vld [vmem:[#allocation6 + $0xcd8] sm:$0xff]
    %v8140 = vld [vmem:[#allocation6 + $0xce0] sm:$0xff]
    %v8141 = vld [vmem:[#allocation6 + $0xce8] sm:$0xff]
    %v8142 = vld [vmem:[#allocation6 + $0xcf0] sm:$0xff]
    %v8143 = vld [vmem:[#allocation6 + $0xcf8] sm:$0xff]
    %v8144 = vld [vmem:[#allocation6 + $0xd00] sm:$0xff]
    %v8145 = vld [vmem:[#allocation6 + $0xd08] sm:$0xff]
    %v8146 = vld [vmem:[#allocation6 + $0xd10] sm:$0xff]
    %v8147 = vld [vmem:[#allocation6 + $0xd18] sm:$0xff]
    %v8148 = vld [vmem:[#allocation6 + $0xd20] sm:$0xff]
    %v8149 = vld [vmem:[#allocation6 + $0xd28] sm:$0xff]
    %v8150 = vld [vmem:[#allocation6 + $0xd30] sm:$0xff]
    %v8151 = vld [vmem:[#allocation6 + $0xd38] sm:$0xff]
    %v8152 = vld [vmem:[#allocation6 + $0xd40] sm:$0xff]
    %v8153 = vld [vmem:[#allocation6 + $0xd48] sm:$0xff]
    %v8154 = vld [vmem:[#allocation6 + $0xd50] sm:$0xff]
    %v8155 = vld [vmem:[#allocation6 + $0xd58] sm:$0xff]
    %v8156 = vld [vmem:[#allocation6 + $0xd60] sm:$0xff]
    %v8157 = vld [vmem:[#allocation6 + $0xd68] sm:$0xff]
    %v8158 = vld [vmem:[#allocation6 + $0xd70] sm:$0xff]
    %v8159 = vld [vmem:[#allocation6 + $0xd78] sm:$0xff]
    %v8160 = vld [vmem:[#allocation6 + $0xd80] sm:$0xff]
    %v8161 = vld [vmem:[#allocation6 + $0xd88] sm:$0xff]
    %v8162 = vld [vmem:[#allocation6 + $0xd90] sm:$0xff]
    %v8163 = vld [vmem:[#allocation6 + $0xd98] sm:$0xff]
    %v8164 = vld [vmem:[#allocation6 + $0xda0] sm:$0xff]
    %v8165 = vld [vmem:[#allocation6 + $0xda8] sm:$0xff]
    %v8166 = vld [vmem:[#allocation6 + $0xdb0] sm:$0xff]
    %v8167 = vld [vmem:[#allocation6 + $0xdb8] sm:$0xff]
    %v8168 = vld [vmem:[#allocation6 + $0xdc0] sm:$0xff]
    %v8169 = vld [vmem:[#allocation6 + $0xdc8] sm:$0xff]
    %v8170 = vld [vmem:[#allocation6 + $0xdd0] sm:$0xff]
    %v8171 = vld [vmem:[#allocation6 + $0xdd8] sm:$0xff]
    %v8172 = vld [vmem:[#allocation6 + $0xde0] sm:$0xff]
    %v8173 = vld [vmem:[#allocation6 + $0xde8] sm:$0xff]
    %v8174 = vld [vmem:[#allocation6 + $0xdf0] sm:$0xff]
    %v8175 = vld [vmem:[#allocation6 + $0xdf8] sm:$0xff]
    %v8176 = vld [vmem:[#allocation6 + $0xe00] sm:$0xff]
    %v8177 = vld [vmem:[#allocation6 + $0xe08] sm:$0xff]
    %v8178 = vld [vmem:[#allocation6 + $0xe10] sm:$0xff]
    %v8179 = vld [vmem:[#allocation6 + $0xe18] sm:$0xff]
    %v8180 = vld [vmem:[#allocation6 + $0xe20] sm:$0xff]
    %v8181 = vld [vmem:[#allocation6 + $0xe28] sm:$0xff]
    %v8182 = vld [vmem:[#allocation6 + $0xe30] sm:$0xff]
    %v8183 = vld [vmem:[#allocation6 + $0xe38] sm:$0xff]
    %v8184 = vld [vmem:[#allocation6 + $0xe40] sm:$0xff]
    %v8185 = vld [vmem:[#allocation6 + $0xe48] sm:$0xff]
    %v8186 = vld [vmem:[#allocation6 + $0xe50] sm:$0xff]
    %v8187 = vld [vmem:[#allocation6 + $0xe58] sm:$0xff]
    %v8188 = vld [vmem:[#allocation6 + $0xe60] sm:$0xff]
    %v8189 = vld [vmem:[#allocation6 + $0xe68] sm:$0xff]
    %v8190 = vld [vmem:[#allocation6 + $0xe70] sm:$0xff]
    %v8191 = vld [vmem:[#allocation6 + $0xe78] sm:$0xff]
    %v8192 = vld [vmem:[#allocation6 + $0xe80] sm:$0xff]
    %v8193 = vld [vmem:[#allocation6 + $0xe88] sm:$0xff]
    %v8194 = vld [vmem:[#allocation6 + $0xe90] sm:$0xff]
    %v8195 = vld [vmem:[#allocation6 + $0xe98] sm:$0xff]
    %v8196 = vld [vmem:[#allocation6 + $0xea0] sm:$0xff]
    %v8197 = vld [vmem:[#allocation6 + $0xea8] sm:$0xff]
    %v8198 = vld [vmem:[#allocation6 + $0xeb0] sm:$0xff]
    %v8199 = vld [vmem:[#allocation6 + $0xeb8] sm:$0xff]
    %v8200 = vld [vmem:[#allocation6 + $0xec0] sm:$0xff]
    %v8201 = vld [vmem:[#allocation6 + $0xec8] sm:$0xff]
    %v8202 = vld [vmem:[#allocation6 + $0xed0] sm:$0xff]
    %v8203 = vld [vmem:[#allocation6 + $0xed8] sm:$0xff]
    %v8204 = vld [vmem:[#allocation6 + $0xee0] sm:$0xff]
    %v8205 = vld [vmem:[#allocation6 + $0xee8] sm:$0xff]
    %v8206 = vld [vmem:[#allocation6 + $0xef0] sm:$0xff]
    %v8207 = vld [vmem:[#allocation6 + $0xef8] sm:$0xff]
    %v8208 = vld [vmem:[#allocation6 + $0xf00] sm:$0xff]
    %v8209 = vld [vmem:[#allocation6 + $0xf08] sm:$0xff]
    %v8210 = vld [vmem:[#allocation6 + $0xf10] sm:$0xff]
    %v8211 = vld [vmem:[#allocation6 + $0xf18] sm:$0xff]
    %v8212 = vld [vmem:[#allocation6 + $0xf20] sm:$0xff]
    %v8213 = vld [vmem:[#allocation6 + $0xf28] sm:$0xff]
    %v8214 = vld [vmem:[#allocation6 + $0xf30] sm:$0xff]
    %v8215 = vld [vmem:[#allocation6 + $0xf38] sm:$0xff]
    %v8216 = vld [vmem:[#allocation6 + $0xf40] sm:$0xff]
    %v8217 = vld [vmem:[#allocation6 + $0xf48] sm:$0xff]
    %v8218 = vld [vmem:[#allocation6 + $0xf50] sm:$0xff]
    %v8219 = vld [vmem:[#allocation6 + $0xf58] sm:$0xff]
    %v8220 = vld [vmem:[#allocation6 + $0xf60] sm:$0xff]
    %v8221 = vld [vmem:[#allocation6 + $0xf68] sm:$0xff]
    %v8222 = vld [vmem:[#allocation6 + $0xf70] sm:$0xff]
    %v8223 = vld [vmem:[#allocation6 + $0xf78] sm:$0xff]
    %v8224 = vld [vmem:[#allocation6 + $0xf80] sm:$0xff]
    %v8225 = vld [vmem:[#allocation6 + $0xf88] sm:$0xff]
    %v8226 = vld [vmem:[#allocation6 + $0xf90] sm:$0xff]
    %v8227 = vld [vmem:[#allocation6 + $0xf98] sm:$0xff]
    %v8228 = vld [vmem:[#allocation6 + $0xfa0] sm:$0xff]
    %v8229 = vld [vmem:[#allocation6 + $0xfa8] sm:$0xff]
    %v8230 = vld [vmem:[#allocation6 + $0xfb0] sm:$0xff]
    %v8231 = vld [vmem:[#allocation6 + $0xfb8] sm:$0xff]
    %v8232 = vld [vmem:[#allocation6 + $0xfc0] sm:$0xff]
    %v8233 = vld [vmem:[#allocation6 + $0xfc8] sm:$0xff]
    %v8234 = vld [vmem:[#allocation6 + $0xfd0] sm:$0xff]
    %v8235 = vld [vmem:[#allocation6 + $0xfd8] sm:$0xff]
    %v8236 = vld [vmem:[#allocation6 + $0xfe0] sm:$0xff]
    %v8237 = vld [vmem:[#allocation6 + $0xfe8] sm:$0xff]
    %v8238 = vld [vmem:[#allocation6 + $0xff0] sm:$0xff]
    %v8239 = vld [vmem:[#allocation6 + $0xff8] sm:$0xff]
    %v8240 = vld [vmem:[#allocation6 + $0x1000] sm:$0xff]
    %v8241 = vld [vmem:[#allocation6 + $0x1008] sm:$0xff]
    %v8242 = vld [vmem:[#allocation6 + $0x1010] sm:$0xff]
    %v8243 = vld [vmem:[#allocation6 + $0x1018] sm:$0xff]
    %v8244 = vld [vmem:[#allocation6 + $0x1020] sm:$0xff]
    %v8245 = vld [vmem:[#allocation6 + $0x1028] sm:$0xff]
    %v8246 = vld [vmem:[#allocation6 + $0x1030] sm:$0xff]
    %v8247 = vld [vmem:[#allocation6 + $0x1038] sm:$0xff]
    %v8248 = vld [vmem:[#allocation6 + $0x1040] sm:$0xff]
    %v8249 = vld [vmem:[#allocation6 + $0x1048] sm:$0xff]
    %v8250 = vld [vmem:[#allocation6 + $0x1050] sm:$0xff]
    %v8251 = vld [vmem:[#allocation6 + $0x1058] sm:$0xff]
    %v8252 = vld [vmem:[#allocation6 + $0x1060] sm:$0xff]
    %v8253 = vld [vmem:[#allocation6 + $0x1068] sm:$0xff]
    %v8254 = vld [vmem:[#allocation6 + $0x1070] sm:$0xff]
    %v8255 = vld [vmem:[#allocation6 + $0x1078] sm:$0xff]
    %v8256 = vld [vmem:[#allocation6 + $0x1080] sm:$0xff]
    %v8257 = vld [vmem:[#allocation6 + $0x1088] sm:$0xff]
    %v8258 = vld [vmem:[#allocation6 + $0x1090] sm:$0xff]
    %v8259 = vld [vmem:[#allocation6 + $0x1098] sm:$0xff]
    %v8260 = vld [vmem:[#allocation6 + $0x10a0] sm:$0xff]
    %v8261 = vld [vmem:[#allocation6 + $0x10a8] sm:$0xff]
    %v8262 = vld [vmem:[#allocation6 + $0x10b0] sm:$0xff]
    %v8263 = vld [vmem:[#allocation6 + $0x10b8] sm:$0xff]
    %v8264 = vld [vmem:[#allocation6 + $0x10c0] sm:$0xff]
    %v8265 = vld [vmem:[#allocation6 + $0x10c8] sm:$0xff]
    %v8266 = vld [vmem:[#allocation6 + $0x10d0] sm:$0xff]
    %v8267 = vld [vmem:[#allocation6 + $0x10d8] sm:$0xff]
    %v8268 = vld [vmem:[#allocation6 + $0x10e0] sm:$0xff]
    %v8269 = vld [vmem:[#allocation6 + $0x10e8] sm:$0xff]
    %v8270 = vld [vmem:[#allocation6 + $0x10f0] sm:$0xff]
    %v8271 = vld [vmem:[#allocation6 + $0x10f8] sm:$0xff]
    %v8272 = vld [vmem:[#allocation6 + $0x1100] sm:$0xff]
    %v8273 = vld [vmem:[#allocation6 + $0x1108] sm:$0xff]
    %v8274 = vld [vmem:[#allocation6 + $0x1110] sm:$0xff]
    %v8275 = vld [vmem:[#allocation6 + $0x1118] sm:$0xff]
    %v8276 = vld [vmem:[#allocation6 + $0x1120] sm:$0xff]
    %v8277 = vld [vmem:[#allocation6 + $0x1128] sm:$0xff]
    %v8278 = vld [vmem:[#allocation6 + $0x1130] sm:$0xff]
    %v8279 = vld [vmem:[#allocation6 + $0x1138] sm:$0xff]
    %v8280 = vld [vmem:[#allocation6 + $0x1140] sm:$0xff]
    %v8281 = vld [vmem:[#allocation6 + $0x1148] sm:$0xff]
    %v8282 = vld [vmem:[#allocation6 + $0x1150] sm:$0xff]
    %v8283 = vld [vmem:[#allocation6 + $0x1158] sm:$0xff]
    %v8284 = vld [vmem:[#allocation6 + $0x1160] sm:$0xff]
    %v8285 = vld [vmem:[#allocation6 + $0x1168] sm:$0xff]
    %v8286 = vld [vmem:[#allocation6 + $0x1170] sm:$0xff]
    %v8287 = vld [vmem:[#allocation6 + $0x1178] sm:$0xff]
    %v8288 = vld [vmem:[#allocation6 + $0x1180] sm:$0xff]
    %v8289 = vld [vmem:[#allocation6 + $0x1188] sm:$0xff]
    %v8290 = vld [vmem:[#allocation6 + $0x1190] sm:$0xff]
    %v8291 = vld [vmem:[#allocation6 + $0x1198] sm:$0xff]
    %v8292 = vld [vmem:[#allocation6 + $0x11a0] sm:$0xff]
    %v8293 = vld [vmem:[#allocation6 + $0x11a8] sm:$0xff]
    %v8294 = vld [vmem:[#allocation6 + $0x11b0] sm:$0xff]
    %v8295 = vld [vmem:[#allocation6 + $0x11b8] sm:$0xff]
    %v8296 = vld [vmem:[#allocation6 + $0x11c0] sm:$0xff]
    %v8297 = vld [vmem:[#allocation6 + $0x11c8] sm:$0xff]
    %v8298 = vld [vmem:[#allocation6 + $0x11d0] sm:$0xff]
    %v8299 = vld [vmem:[#allocation6 + $0x11d8] sm:$0xff]
    %v8300 = vld [vmem:[#allocation6 + $0x11e0] sm:$0xff]
    %v8301 = vld [vmem:[#allocation6 + $0x11e8] sm:$0xff]
    %v8302 = vld [vmem:[#allocation6 + $0x11f0] sm:$0xff]
    %v8303 = vld [vmem:[#allocation6 + $0x11f8] sm:$0xff]
    %v8304 = vld [vmem:[#allocation6 + $0x1200] sm:$0xff]
    %v8305 = vld [vmem:[#allocation6 + $0x1208] sm:$0xff]
    %v8306 = vld [vmem:[#allocation6 + $0x1210] sm:$0xff]
    %v8307 = vld [vmem:[#allocation6 + $0x1218] sm:$0xff]
    %v8308 = vld [vmem:[#allocation6 + $0x1220] sm:$0xff]
    %v8309 = vld [vmem:[#allocation6 + $0x1228] sm:$0xff]
    %v8310 = vld [vmem:[#allocation6 + $0x1230] sm:$0xff]
    %v8311 = vld [vmem:[#allocation6 + $0x1238] sm:$0xff]
    %v8312 = vld [vmem:[#allocation6 + $0x1240] sm:$0xff]
    %v8313 = vld [vmem:[#allocation6 + $0x1248] sm:$0xff]
    %v8314 = vld [vmem:[#allocation6 + $0x1250] sm:$0xff]
    %v8315 = vld [vmem:[#allocation6 + $0x1258] sm:$0xff]
    %v8316 = vld [vmem:[#allocation6 + $0x1260] sm:$0xff]
    %v8317 = vld [vmem:[#allocation6 + $0x1268] sm:$0xff]
    %v8318 = vld [vmem:[#allocation6 + $0x1270] sm:$0xff]
    %v8319 = vld [vmem:[#allocation6 + $0x1278] sm:$0xff]
    %v8320 = vld [vmem:[#allocation6 + $0x1280] sm:$0xff]
    %v8321 = vld [vmem:[#allocation6 + $0x1288] sm:$0xff]
    %v8322 = vld [vmem:[#allocation6 + $0x1290] sm:$0xff]
    %v8323 = vld [vmem:[#allocation6 + $0x1298] sm:$0xff]
    %v8324 = vld [vmem:[#allocation6 + $0x12a0] sm:$0xff]
    %v8325 = vld [vmem:[#allocation6 + $0x12a8] sm:$0xff]
    %v8326 = vld [vmem:[#allocation6 + $0x12b0] sm:$0xff]
    %v8327 = vld [vmem:[#allocation6 + $0x12b8] sm:$0xff]
    %v8328 = vld [vmem:[#allocation6 + $0x12c0] sm:$0xff]
    %v8329 = vld [vmem:[#allocation6 + $0x12c8] sm:$0xff]
    %v8330 = vld [vmem:[#allocation6 + $0x12d0] sm:$0xff]
    %v8331 = vld [vmem:[#allocation6 + $0x12d8] sm:$0xff]
    %v8332 = vld [vmem:[#allocation6 + $0x12e0] sm:$0xff]
    %v8333 = vld [vmem:[#allocation6 + $0x12e8] sm:$0xff]
    %v8334 = vld [vmem:[#allocation6 + $0x12f0] sm:$0xff]
    %v8335 = vld [vmem:[#allocation6 + $0x12f8] sm:$0xff]
    %v8336 = vld [vmem:[#allocation6 + $0x1300] sm:$0xff]
    %v8337 = vld [vmem:[#allocation6 + $0x1308] sm:$0xff]
    %v8338 = vld [vmem:[#allocation6 + $0x1310] sm:$0xff]
    %v8339 = vld [vmem:[#allocation6 + $0x1318] sm:$0xff]
    %v8340 = vld [vmem:[#allocation6 + $0x1320] sm:$0xff]
    %v8341 = vld [vmem:[#allocation6 + $0x1328] sm:$0xff]
    %v8342 = vld [vmem:[#allocation6 + $0x1330] sm:$0xff]
    %v8343 = vld [vmem:[#allocation6 + $0x1338] sm:$0xff]
    %v8344 = vld [vmem:[#allocation6 + $0x1340] sm:$0xff]
    %v8345 = vld [vmem:[#allocation6 + $0x1348] sm:$0xff]
    %v8346 = vld [vmem:[#allocation6 + $0x1350] sm:$0xff]
    %v8347 = vld [vmem:[#allocation6 + $0x1358] sm:$0xff]
    %v8348 = vld [vmem:[#allocation6 + $0x1360] sm:$0xff]
    %v8349 = vld [vmem:[#allocation6 + $0x1368] sm:$0xff]
    %v8350 = vld [vmem:[#allocation6 + $0x1370] sm:$0xff]
    %v8351 = vld [vmem:[#allocation6 + $0x1378] sm:$0xff]
    %v8352 = vld [vmem:[#allocation6 + $0x1380] sm:$0xff]
    %v8353 = vld [vmem:[#allocation6 + $0x1388] sm:$0xff]
    %v8354 = vld [vmem:[#allocation6 + $0x1390] sm:$0xff]
    %v8355 = vld [vmem:[#allocation6 + $0x1398] sm:$0xff]
    %v8356 = vld [vmem:[#allocation6 + $0x13a0] sm:$0xff]
    %v8357 = vld [vmem:[#allocation6 + $0x13a8] sm:$0xff]
    %v8358 = vld [vmem:[#allocation6 + $0x13b0] sm:$0xff]
    %v8359 = vld [vmem:[#allocation6 + $0x13b8] sm:$0xff]
    %v8360 = vld [vmem:[#allocation6 + $0x13c0] sm:$0xff]
    %v8361 = vld [vmem:[#allocation6 + $0x13c8] sm:$0xff]
    %v8362 = vld [vmem:[#allocation6 + $0x13d0] sm:$0xff]
    %v8363 = vld [vmem:[#allocation6 + $0x13d8] sm:$0xff]
    %v8364 = vld [vmem:[#allocation6 + $0x13e0] sm:$0xff]
    %v8365 = vld [vmem:[#allocation6 + $0x13e8] sm:$0xff]
    %v8366 = vld [vmem:[#allocation6 + $0x13f0] sm:$0xff]
    %v8367 = vld [vmem:[#allocation6 + $0x13f8] sm:$0xff]
    %v8368 = vld [vmem:[#allocation6 + $0x1400] sm:$0xff]
    %v8369 = vld [vmem:[#allocation6 + $0x1408] sm:$0xff]
    %v8370 = vld [vmem:[#allocation6 + $0x1410] sm:$0xff]
    %v8371 = vld [vmem:[#allocation6 + $0x1418] sm:$0xff]
    %v8372 = vld [vmem:[#allocation6 + $0x1420] sm:$0xff]
    %v8373 = vld [vmem:[#allocation6 + $0x1428] sm:$0xff]
    %v8374 = vld [vmem:[#allocation6 + $0x1430] sm:$0xff]
    %v8375 = vld [vmem:[#allocation6 + $0x1438] sm:$0xff]
    %v8376 = vld [vmem:[#allocation6 + $0x1440] sm:$0xff]
    %v8377 = vld [vmem:[#allocation6 + $0x1448] sm:$0xff]
    %v8378 = vld [vmem:[#allocation6 + $0x1450] sm:$0xff]
    %v8379 = vld [vmem:[#allocation6 + $0x1458] sm:$0xff]
    %v8380 = vld [vmem:[#allocation6 + $0x1460] sm:$0xff]
    %v8381 = vld [vmem:[#allocation6 + $0x1468] sm:$0xff]
    %v8382 = vld [vmem:[#allocation6 + $0x1470] sm:$0xff]
    %v8383 = vld [vmem:[#allocation6 + $0x1478] sm:$0xff]
    %v8384 = vld [vmem:[#allocation6 + $0x1480] sm:$0xff]
    %v8385 = vld [vmem:[#allocation6 + $0x1488] sm:$0xff]
    %v8386 = vld [vmem:[#allocation6 + $0x1490] sm:$0xff]
    %v8387 = vld [vmem:[#allocation6 + $0x1498] sm:$0xff]
    %v8388 = vld [vmem:[#allocation6 + $0x14a0] sm:$0xff]
    %v8389 = vld [vmem:[#allocation6 + $0x14a8] sm:$0xff]
    %v8390 = vld [vmem:[#allocation6 + $0x14b0] sm:$0xff]
    %v8391 = vld [vmem:[#allocation6 + $0x14b8] sm:$0xff]
    %v8392 = vld [vmem:[#allocation6 + $0x14c0] sm:$0xff]
    %v8393 = vld [vmem:[#allocation6 + $0x14c8] sm:$0xff]
    %v8394 = vld [vmem:[#allocation6 + $0x14d0] sm:$0xff]
    %v8395 = vld [vmem:[#allocation6 + $0x14d8] sm:$0xff]
    %v8396 = vld [vmem:[#allocation6 + $0x14e0] sm:$0xff]
    %v8397 = vld [vmem:[#allocation6 + $0x14e8] sm:$0xff]
    %v8398 = vld [vmem:[#allocation6 + $0x14f0] sm:$0xff]
    %v8399 = vld [vmem:[#allocation6 + $0x14f8] sm:$0xff]
    %v8400 = vld [vmem:[#allocation6 + $0x1500] sm:$0xff]
    %v8401 = vld [vmem:[#allocation6 + $0x1508] sm:$0xff]
    %v8402 = vld [vmem:[#allocation6 + $0x1510] sm:$0xff]
    %v8403 = vld [vmem:[#allocation6 + $0x1518] sm:$0xff]
    %v8404 = vld [vmem:[#allocation6 + $0x1520] sm:$0xff]
    %v8405 = vld [vmem:[#allocation6 + $0x1528] sm:$0xff]
    %v8406 = vld [vmem:[#allocation6 + $0x1530] sm:$0xff]
    %v8407 = vld [vmem:[#allocation6 + $0x1538] sm:$0xff]
    %v8408 = vld [vmem:[#allocation6 + $0x1540] sm:$0xff]
    %v8409 = vld [vmem:[#allocation6 + $0x1548] sm:$0xff]
    %v8410 = vld [vmem:[#allocation6 + $0x1550] sm:$0xff]
    %v8411 = vld [vmem:[#allocation6 + $0x1558] sm:$0xff]
    %v8412 = vld [vmem:[#allocation6 + $0x1560] sm:$0xff]
    %v8413 = vld [vmem:[#allocation6 + $0x1568] sm:$0xff]
    %v8414 = vld [vmem:[#allocation6 + $0x1570] sm:$0xff]
    %v8415 = vld [vmem:[#allocation6 + $0x1578] sm:$0xff]
    %v8416 = vld [vmem:[#allocation6 + $0x1580] sm:$0xff]
    %v8417 = vld [vmem:[#allocation6 + $0x1588] sm:$0xff]
    %v8418 = vld [vmem:[#allocation6 + $0x1590] sm:$0xff]
    %v8419 = vld [vmem:[#allocation6 + $0x1598] sm:$0xff]
    %v8420 = vld [vmem:[#allocation6 + $0x15a0] sm:$0xff]
    %v8421 = vld [vmem:[#allocation6 + $0x15a8] sm:$0xff]
    %v8422 = vld [vmem:[#allocation6 + $0x15b0] sm:$0xff]
    %v8423 = vld [vmem:[#allocation6 + $0x15b8] sm:$0xff]
    %v8424 = vld [vmem:[#allocation6 + $0x15c0] sm:$0xff]
    %v8425 = vld [vmem:[#allocation6 + $0x15c8] sm:$0xff]
    %v8426 = vld [vmem:[#allocation6 + $0x15d0] sm:$0xff]
    %v8427 = vld [vmem:[#allocation6 + $0x15d8] sm:$0xff]
    %v8428 = vld [vmem:[#allocation6 + $0x15e0] sm:$0xff]
    %v8429 = vld [vmem:[#allocation6 + $0x15e8] sm:$0xff]
    %v8430 = vld [vmem:[#allocation6 + $0x15f0] sm:$0xff]
    %v8431 = vld [vmem:[#allocation6 + $0x15f8] sm:$0xff]
    %v8432 = vld [vmem:[#allocation6 + $0x1600] sm:$0xff]
    %v8433 = vld [vmem:[#allocation6 + $0x1608] sm:$0xff]
    %v8434 = vld [vmem:[#allocation6 + $0x1610] sm:$0xff]
    %v8435 = vld [vmem:[#allocation6 + $0x1618] sm:$0xff]
    %v8436 = vld [vmem:[#allocation6 + $0x1620] sm:$0xff]
    %v8437 = vld [vmem:[#allocation6 + $0x1628] sm:$0xff]
    %v8438 = vld [vmem:[#allocation6 + $0x1630] sm:$0xff]
    %v8439 = vld [vmem:[#allocation6 + $0x1638] sm:$0xff]
    %v8440 = vld [vmem:[#allocation6 + $0x1640] sm:$0xff]
    %v8441 = vld [vmem:[#allocation6 + $0x1648] sm:$0xff]
    %v8442 = vld [vmem:[#allocation6 + $0x1650] sm:$0xff]
    %v8443 = vld [vmem:[#allocation6 + $0x1658] sm:$0xff]
    %v8444 = vld [vmem:[#allocation6 + $0x1660] sm:$0xff]
    %v8445 = vld [vmem:[#allocation6 + $0x1668] sm:$0xff]
    %v8446 = vld [vmem:[#allocation6 + $0x1670] sm:$0xff]
    %v8447 = vld [vmem:[#allocation6 + $0x1678] sm:$0xff]
    %v8448 = vld [vmem:[#allocation6 + $0x1680] sm:$0xff]
    %v8449 = vld [vmem:[#allocation6 + $0x1688] sm:$0xff]
    %v8450 = vld [vmem:[#allocation6 + $0x1690] sm:$0xff]
    %v8451 = vld [vmem:[#allocation6 + $0x1698] sm:$0xff]
    %v8452 = vld [vmem:[#allocation6 + $0x16a0] sm:$0xff]
    %v8453 = vld [vmem:[#allocation6 + $0x16a8] sm:$0xff]
    %v8454 = vld [vmem:[#allocation6 + $0x16b0] sm:$0xff]
    %v8455 = vld [vmem:[#allocation6 + $0x16b8] sm:$0xff]
    %v8456 = vld [vmem:[#allocation6 + $0x16c0] sm:$0xff]
    %v8457 = vld [vmem:[#allocation6 + $0x16c8] sm:$0xff]
    %v8458 = vld [vmem:[#allocation6 + $0x16d0] sm:$0xff]
    %v8459 = vld [vmem:[#allocation6 + $0x16d8] sm:$0xff]
    %v8460 = vld [vmem:[#allocation6 + $0x16e0] sm:$0xff]
    %v8461 = vld [vmem:[#allocation6 + $0x16e8] sm:$0xff]
    %v8462 = vld [vmem:[#allocation6 + $0x16f0] sm:$0xff]
    %v8463 = vld [vmem:[#allocation6 + $0x16f8] sm:$0xff]
    %v8464 = vld [vmem:[#allocation6 + $0x1700] sm:$0xff]
    %v8465 = vld [vmem:[#allocation6 + $0x1708] sm:$0xff]
    %v8466 = vld [vmem:[#allocation6 + $0x1710] sm:$0xff]
    %v8467 = vld [vmem:[#allocation6 + $0x1718] sm:$0xff]
    %v8468 = vld [vmem:[#allocation6 + $0x1720] sm:$0xff]
    %v8469 = vld [vmem:[#allocation6 + $0x1728] sm:$0xff]
    %v8470 = vld [vmem:[#allocation6 + $0x1730] sm:$0xff]
    %v8471 = vld [vmem:[#allocation6 + $0x1738] sm:$0xff]
    %v8472 = vld [vmem:[#allocation6 + $0x1740] sm:$0xff]
    %v8473 = vld [vmem:[#allocation6 + $0x1748] sm:$0xff]
    %v8474 = vld [vmem:[#allocation6 + $0x1750] sm:$0xff]
    %v8475 = vld [vmem:[#allocation6 + $0x1758] sm:$0xff]
    %v8476 = vld [vmem:[#allocation6 + $0x1760] sm:$0xff]
    %v8477 = vld [vmem:[#allocation6 + $0x1768] sm:$0xff]
    %v8478 = vld [vmem:[#allocation6 + $0x1770] sm:$0xff]
    %v8479 = vld [vmem:[#allocation6 + $0x1778] sm:$0xff]
    %v8480 = vld [vmem:[#allocation6 + $0x1780] sm:$0xff]
    %v8481 = vld [vmem:[#allocation6 + $0x1788] sm:$0xff]
    %v8482 = vld [vmem:[#allocation6 + $0x1790] sm:$0xff]
    %v8483 = vld [vmem:[#allocation6 + $0x1798] sm:$0xff]
    %v8484 = vld [vmem:[#allocation6 + $0x17a0] sm:$0xff]
    %v8485 = vld [vmem:[#allocation6 + $0x17a8] sm:$0xff]
    %v8486 = vld [vmem:[#allocation6 + $0x17b0] sm:$0xff]
    %v8487 = vld [vmem:[#allocation6 + $0x17b8] sm:$0xff]
    %v8488 = vld [vmem:[#allocation6 + $0x17c0] sm:$0xff]
    %v8489 = vld [vmem:[#allocation6 + $0x17c8] sm:$0xff]
    %v8490 = vld [vmem:[#allocation6 + $0x17d0] sm:$0xff]
    %v8491 = vld [vmem:[#allocation6 + $0x17d8] sm:$0xff]
    %v8492 = vld [vmem:[#allocation6 + $0x17e0] sm:$0xff]
    %v8493 = vld [vmem:[#allocation6 + $0x17e8] sm:$0xff]
    %v8494 = vld [vmem:[#allocation6 + $0x17f0] sm:$0xff]
    %v8495 = vld [vmem:[#allocation6 + $0x17f8] sm:$0xff]
    %v8496 = vld [vmem:[#allocation6 + $0x1800] sm:$0xff]
    %v8497 = vld [vmem:[#allocation6 + $0x1808] sm:$0xff]
    %v8498 = vld [vmem:[#allocation6 + $0x1810] sm:$0xff]
    %v8499 = vld [vmem:[#allocation6 + $0x1818] sm:$0xff]
    %v8500 = vld [vmem:[#allocation6 + $0x1820] sm:$0xff]
    %v8501 = vld [vmem:[#allocation6 + $0x1828] sm:$0xff]
    %v8502 = vld [vmem:[#allocation6 + $0x1830] sm:$0xff]
    %v8503 = vld [vmem:[#allocation6 + $0x1838] sm:$0xff]
    %v8504 = vld [vmem:[#allocation6 + $0x1840] sm:$0xff]
    %v8505 = vld [vmem:[#allocation6 + $0x1848] sm:$0xff]
    %v8506 = vld [vmem:[#allocation6 + $0x1850] sm:$0xff]
    %v8507 = vld [vmem:[#allocation6 + $0x1858] sm:$0xff]
    %v8508 = vld [vmem:[#allocation6 + $0x1860] sm:$0xff]
    %v8509 = vld [vmem:[#allocation6 + $0x1868] sm:$0xff]
    %v8510 = vld [vmem:[#allocation6 + $0x1870] sm:$0xff]
    %v8511 = vld [vmem:[#allocation6 + $0x1878] sm:$0xff]
    %v8512 = vld [vmem:[#allocation6 + $0x1880] sm:$0xff]
    %v8513 = vld [vmem:[#allocation6 + $0x1888] sm:$0xff]
    %v8514 = vld [vmem:[#allocation6 + $0x1890] sm:$0xff]
    %v8515 = vld [vmem:[#allocation6 + $0x1898] sm:$0xff]
    %v8516 = vld [vmem:[#allocation6 + $0x18a0] sm:$0xff]
    %v8517 = vld [vmem:[#allocation6 + $0x18a8] sm:$0xff]
    %v8518 = vld [vmem:[#allocation6 + $0x18b0] sm:$0xff]
    %v8519 = vld [vmem:[#allocation6 + $0x18b8] sm:$0xff]
    %v8520 = vld [vmem:[#allocation6 + $0x18c0] sm:$0xff]
    %v8521 = vld [vmem:[#allocation6 + $0x18c8] sm:$0xff]
    %v8522 = vld [vmem:[#allocation6 + $0x18d0] sm:$0xff]
    %v8523 = vld [vmem:[#allocation6 + $0x18d8] sm:$0xff]
    %v8524 = vld [vmem:[#allocation6 + $0x18e0] sm:$0xff]
    %v8525 = vld [vmem:[#allocation6 + $0x18e8] sm:$0xff]
    %v8526 = vld [vmem:[#allocation6 + $0x18f0] sm:$0xff]
    %v8527 = vld [vmem:[#allocation6 + $0x18f8] sm:$0xff]
    %v8528 = vld [vmem:[#allocation6 + $0x1900] sm:$0xff]
    %v8529 = vld [vmem:[#allocation6 + $0x1908] sm:$0xff]
    %v8530 = vld [vmem:[#allocation6 + $0x1910] sm:$0xff]
    %v8531 = vld [vmem:[#allocation6 + $0x1918] sm:$0xff]
    %v8532 = vld [vmem:[#allocation6 + $0x1920] sm:$0xff]
    %v8533 = vld [vmem:[#allocation6 + $0x1928] sm:$0xff]
    %v8534 = vld [vmem:[#allocation6 + $0x1930] sm:$0xff]
    %v8535 = vld [vmem:[#allocation6 + $0x1938] sm:$0xff]
    %v8536 = vld [vmem:[#allocation6 + $0x1940] sm:$0xff]
    %v8537 = vld [vmem:[#allocation6 + $0x1948] sm:$0xff]
    %v8538 = vld [vmem:[#allocation6 + $0x1950] sm:$0xff]
    %v8539 = vld [vmem:[#allocation6 + $0x1958] sm:$0xff]
    %v8540 = vld [vmem:[#allocation6 + $0x1960] sm:$0xff]
    %v8541 = vld [vmem:[#allocation6 + $0x1968] sm:$0xff]
    %v8542 = vld [vmem:[#allocation6 + $0x1970] sm:$0xff]
    %v8543 = vld [vmem:[#allocation6 + $0x1978] sm:$0xff]
    %v8544 = vld [vmem:[#allocation6 + $0x1980] sm:$0xff]
    %v8545 = vld [vmem:[#allocation6 + $0x1988] sm:$0xff]
    %v8546 = vld [vmem:[#allocation6 + $0x1990] sm:$0xff]
    %v8547 = vld [vmem:[#allocation6 + $0x1998] sm:$0xff]
    %v8548 = vld [vmem:[#allocation6 + $0x19a0] sm:$0xff]
    %v8549 = vld [vmem:[#allocation6 + $0x19a8] sm:$0xff]
    %v8550 = vld [vmem:[#allocation6 + $0x19b0] sm:$0xff]
    %v8551 = vld [vmem:[#allocation6 + $0x19b8] sm:$0xff]
    %v8552 = vld [vmem:[#allocation6 + $0x19c0] sm:$0xff]
    %v8553 = vld [vmem:[#allocation6 + $0x19c8] sm:$0xff]
    %v8554 = vld [vmem:[#allocation6 + $0x19d0] sm:$0xff]
    %v8555 = vld [vmem:[#allocation6 + $0x19d8] sm:$0xff]
    %v8556 = vld [vmem:[#allocation6 + $0x19e0] sm:$0xff]
    %v8557 = vld [vmem:[#allocation6 + $0x19e8] sm:$0xff]
    %v8558 = vld [vmem:[#allocation6 + $0x19f0] sm:$0xff]
    %v8559 = vld [vmem:[#allocation6 + $0x19f8] sm:$0xff]
    %v8560 = vld [vmem:[#allocation6 + $0x1a00] sm:$0xff]
    %v8561 = vld [vmem:[#allocation6 + $0x1a08] sm:$0xff]
    %v8562 = vld [vmem:[#allocation6 + $0x1a10] sm:$0xff]
    %v8563 = vld [vmem:[#allocation6 + $0x1a18] sm:$0xff]
    %v8564 = vld [vmem:[#allocation6 + $0x1a20] sm:$0xff]
    %v8565 = vld [vmem:[#allocation6 + $0x1a28] sm:$0xff]
    %v8566 = vld [vmem:[#allocation6 + $0x1a30] sm:$0xff]
    %v8567 = vld [vmem:[#allocation6 + $0x1a38] sm:$0xff]
    %v8568 = vld [vmem:[#allocation6 + $0x1a40] sm:$0xff]
    %v8569 = vld [vmem:[#allocation6 + $0x1a48] sm:$0xff]
    %v8570 = vld [vmem:[#allocation6 + $0x1a50] sm:$0xff]
    %v8571 = vld [vmem:[#allocation6 + $0x1a58] sm:$0xff]
    %v8572 = vld [vmem:[#allocation6 + $0x1a60] sm:$0xff]
    %v8573 = vld [vmem:[#allocation6 + $0x1a68] sm:$0xff]
    %v8574 = vld [vmem:[#allocation6 + $0x1a70] sm:$0xff]
    %v8575 = vld [vmem:[#allocation6 + $0x1a78] sm:$0xff]
    %v8576 = vld [vmem:[#allocation6 + $0x1a80] sm:$0xff]
    %v8577 = vld [vmem:[#allocation6 + $0x1a88] sm:$0xff]
    %v8578 = vld [vmem:[#allocation6 + $0x1a90] sm:$0xff]
    %v8579 = vld [vmem:[#allocation6 + $0x1a98] sm:$0xff]
    %v8580 = vld [vmem:[#allocation6 + $0x1aa0] sm:$0xff]
    %v8581 = vld [vmem:[#allocation6 + $0x1aa8] sm:$0xff]
    %v8582 = vld [vmem:[#allocation6 + $0x1ab0] sm:$0xff]
    %v8583 = vld [vmem:[#allocation6 + $0x1ab8] sm:$0xff]
    %v8584 = vld [vmem:[#allocation6 + $0x1ac0] sm:$0xff]
    %v8585 = vld [vmem:[#allocation6 + $0x1ac8] sm:$0xff]
    %v8586 = vld [vmem:[#allocation6 + $0x1ad0] sm:$0xff]
    %v8587 = vld [vmem:[#allocation6 + $0x1ad8] sm:$0xff]
    %v8588 = vld [vmem:[#allocation6 + $0x1ae0] sm:$0xff]
    %v8589 = vld [vmem:[#allocation6 + $0x1ae8] sm:$0xff]
    %v8590 = vld [vmem:[#allocation6 + $0x1af0] sm:$0xff]
    %v8591 = vld [vmem:[#allocation6 + $0x1af8] sm:$0xff]
    %v8592 = vld [vmem:[#allocation6 + $0x1b00] sm:$0xff]
    %v8593 = vld [vmem:[#allocation6 + $0x1b08] sm:$0xff]
    %v8594 = vld [vmem:[#allocation6 + $0x1b10] sm:$0xff]
    %v8595 = vld [vmem:[#allocation6 + $0x1b18] sm:$0xff]
    %v8596 = vld [vmem:[#allocation6 + $0x1b20] sm:$0xff]
    %v8597 = vld [vmem:[#allocation6 + $0x1b28] sm:$0xff]
    %v8598 = vld [vmem:[#allocation6 + $0x1b30] sm:$0xff]
    %v8599 = vld [vmem:[#allocation6 + $0x1b38] sm:$0xff]
    %v8600 = vld [vmem:[#allocation6 + $0x1b40] sm:$0xff]
    %v8601 = vld [vmem:[#allocation6 + $0x1b48] sm:$0xff]
    %v8602 = vld [vmem:[#allocation6 + $0x1b50] sm:$0xff]
    %v8603 = vld [vmem:[#allocation6 + $0x1b58] sm:$0xff]
    %v8604 = vld [vmem:[#allocation6 + $0x1b60] sm:$0xff]
    %v8605 = vld [vmem:[#allocation6 + $0x1b68] sm:$0xff]
    %v8606 = vld [vmem:[#allocation6 + $0x1b70] sm:$0xff]
    %v8607 = vld [vmem:[#allocation6 + $0x1b78] sm:$0xff]
    %v8608 = vld [vmem:[#allocation6 + $0x1b80] sm:$0xff]
    %v8609 = vld [vmem:[#allocation6 + $0x1b88] sm:$0xff]
    %v8610 = vld [vmem:[#allocation6 + $0x1b90] sm:$0xff]
    %v8611 = vld [vmem:[#allocation6 + $0x1b98] sm:$0xff]
    %v8612 = vld [vmem:[#allocation6 + $0x1ba0] sm:$0xff]
    %v8613 = vld [vmem:[#allocation6 + $0x1ba8] sm:$0xff]
    %v8614 = vld [vmem:[#allocation6 + $0x1bb0] sm:$0xff]
    %v8615 = vld [vmem:[#allocation6 + $0x1bb8] sm:$0xff]
    %v8616 = vld [vmem:[#allocation6 + $0x1bc0] sm:$0xff]
    %v8617 = vld [vmem:[#allocation6 + $0x1bc8] sm:$0xff]
    %v8618 = vld [vmem:[#allocation6 + $0x1bd0] sm:$0xff]
    %v8619 = vld [vmem:[#allocation6 + $0x1bd8] sm:$0xff]
    %v8620 = vld [vmem:[#allocation6 + $0x1be0] sm:$0xff]
    %v8621 = vld [vmem:[#allocation6 + $0x1be8] sm:$0xff]
    %v8622 = vld [vmem:[#allocation6 + $0x1bf0] sm:$0xff]
    %v8623 = vld [vmem:[#allocation6 + $0x1bf8] sm:$0xff]
    %v8624 = vld [vmem:[#allocation6 + $0x1c00] sm:$0xff]
    %v8625 = vld [vmem:[#allocation6 + $0x1c08] sm:$0xff]
    %v8626 = vld [vmem:[#allocation6 + $0x1c10] sm:$0xff]
    %v8627 = vld [vmem:[#allocation6 + $0x1c18] sm:$0xff]
    %v8628 = vld [vmem:[#allocation6 + $0x1c20] sm:$0xff]
    %v8629 = vld [vmem:[#allocation6 + $0x1c28] sm:$0xff]
    %v8630 = vld [vmem:[#allocation6 + $0x1c30] sm:$0xff]
    %v8631 = vld [vmem:[#allocation6 + $0x1c38] sm:$0xff]
    %v8632 = vld [vmem:[#allocation6 + $0x1c40] sm:$0xff]
    %v8633 = vld [vmem:[#allocation6 + $0x1c48] sm:$0xff]
    %v8634 = vld [vmem:[#allocation6 + $0x1c50] sm:$0xff]
    %v8635 = vld [vmem:[#allocation6 + $0x1c58] sm:$0xff]
    %v8636 = vld [vmem:[#allocation6 + $0x1c60] sm:$0xff]
    %v8637 = vld [vmem:[#allocation6 + $0x1c68] sm:$0xff]
    %v8638 = vld [vmem:[#allocation6 + $0x1c70] sm:$0xff]
    %v8639 = vld [vmem:[#allocation6 + $0x1c78] sm:$0xff]
    %v8640 = vld [vmem:[#allocation6 + $0x1c80] sm:$0xff]
    %v8641 = vld [vmem:[#allocation6 + $0x1c88] sm:$0xff]
    %v8642 = vld [vmem:[#allocation6 + $0x1c90] sm:$0xff]
    %v8643 = vld [vmem:[#allocation6 + $0x1c98] sm:$0xff]
    %v8644 = vld [vmem:[#allocation6 + $0x1ca0] sm:$0xff]
    %v8645 = vld [vmem:[#allocation6 + $0x1ca8] sm:$0xff]
    %v8646 = vld [vmem:[#allocation6 + $0x1cb0] sm:$0xff]
    %v8647 = vld [vmem:[#allocation6 + $0x1cb8] sm:$0xff]
    %v8648 = vld [vmem:[#allocation6 + $0x1cc0] sm:$0xff]
    %v8649 = vld [vmem:[#allocation6 + $0x1cc8] sm:$0xff]
    %v8650 = vld [vmem:[#allocation6 + $0x1cd0] sm:$0xff]
    %v8651 = vld [vmem:[#allocation6 + $0x1cd8] sm:$0xff]
    %v8652 = vld [vmem:[#allocation6 + $0x1ce0] sm:$0xff]
    %v8653 = vld [vmem:[#allocation6 + $0x1ce8] sm:$0xff]
    %v8654 = vld [vmem:[#allocation6 + $0x1cf0] sm:$0xff]
    %v8655 = vld [vmem:[#allocation6 + $0x1cf8] sm:$0xff]
    %v8656 = vld [vmem:[#allocation6 + $0x1d00] sm:$0xff]
    %v8657 = vld [vmem:[#allocation6 + $0x1d08] sm:$0xff]
    %v8658 = vld [vmem:[#allocation6 + $0x1d10] sm:$0xff]
    %v8659 = vld [vmem:[#allocation6 + $0x1d18] sm:$0xff]
    %v8660 = vld [vmem:[#allocation6 + $0x1d20] sm:$0xff]
    %v8661 = vld [vmem:[#allocation6 + $0x1d28] sm:$0xff]
    %v8662 = vld [vmem:[#allocation6 + $0x1d30] sm:$0xff]
    %v8663 = vld [vmem:[#allocation6 + $0x1d38] sm:$0xff]
    %v8664 = vld [vmem:[#allocation6 + $0x1d40] sm:$0xff]
    %v8665 = vld [vmem:[#allocation6 + $0x1d48] sm:$0xff]
    %v8666 = vld [vmem:[#allocation6 + $0x1d50] sm:$0xff]
    %v8667 = vld [vmem:[#allocation6 + $0x1d58] sm:$0xff]
    %v8668 = vld [vmem:[#allocation6 + $0x1d60] sm:$0xff]
    %v8669 = vld [vmem:[#allocation6 + $0x1d68] sm:$0xff]
    %v8670 = vld [vmem:[#allocation6 + $0x1d70] sm:$0xff]
    %v8671 = vld [vmem:[#allocation6 + $0x1d78] sm:$0xff]
    %v8672 = vld [vmem:[#allocation6 + $0x1d80] sm:$0xff]
    %v8673 = vld [vmem:[#allocation6 + $0x1d88] sm:$0xff]
    %v8674 = vld [vmem:[#allocation6 + $0x1d90] sm:$0xff]
    %v8675 = vld [vmem:[#allocation6 + $0x1d98] sm:$0xff]
    %v8676 = vld [vmem:[#allocation6 + $0x1da0] sm:$0xff]
    %v8677 = vld [vmem:[#allocation6 + $0x1da8] sm:$0xff]
    %v8678 = vld [vmem:[#allocation6 + $0x1db0] sm:$0xff]
    %v8679 = vld [vmem:[#allocation6 + $0x1db8] sm:$0xff]
    %v8680 = vld [vmem:[#allocation6 + $0x1dc0] sm:$0xff]
    %v8681 = vld [vmem:[#allocation6 + $0x1dc8] sm:$0xff]
    %v8682 = vld [vmem:[#allocation6 + $0x1dd0] sm:$0xff]
    %v8683 = vld [vmem:[#allocation6 + $0x1dd8] sm:$0xff]
    %v8684 = vld [vmem:[#allocation6 + $0x1de0] sm:$0xff]
    %v8685 = vld [vmem:[#allocation6 + $0x1de8] sm:$0xff]
    %v8686 = vld [vmem:[#allocation6 + $0x1df0] sm:$0xff]
    %v8687 = vld [vmem:[#allocation6 + $0x1df8] sm:$0xff]
    %v8688 = vld [vmem:[#allocation6 + $0x1e00] sm:$0xff]
    %v8689 = vld [vmem:[#allocation6 + $0x1e08] sm:$0xff]
    %v8690 = vld [vmem:[#allocation6 + $0x1e10] sm:$0xff]
    %v8691 = vld [vmem:[#allocation6 + $0x1e18] sm:$0xff]
    %v8692 = vld [vmem:[#allocation6 + $0x1e20] sm:$0xff]
    %v8693 = vld [vmem:[#allocation6 + $0x1e28] sm:$0xff]
    %v8694 = vld [vmem:[#allocation6 + $0x1e30] sm:$0xff]
    %v8695 = vld [vmem:[#allocation6 + $0x1e38] sm:$0xff]
    %v8696 = vld [vmem:[#allocation6 + $0x1e40] sm:$0xff]
    %v8697 = vld [vmem:[#allocation6 + $0x1e48] sm:$0xff]
    %v8698 = vld [vmem:[#allocation6 + $0x1e50] sm:$0xff]
    %v8699 = vld [vmem:[#allocation6 + $0x1e58] sm:$0xff]
    %v8700 = vld [vmem:[#allocation6 + $0x1e60] sm:$0xff]
    %v8701 = vld [vmem:[#allocation6 + $0x1e68] sm:$0xff]
    %v8702 = vld [vmem:[#allocation6 + $0x1e70] sm:$0xff]
    %v8703 = vld [vmem:[#allocation6 + $0x1e78] sm:$0xff]
    %v8704 = vld [vmem:[#allocation6 + $0x1e80] sm:$0xff]
    %v8705 = vld [vmem:[#allocation6 + $0x1e88] sm:$0xff]
    %v8706 = vld [vmem:[#allocation6 + $0x1e90] sm:$0xff]
    %v8707 = vld [vmem:[#allocation6 + $0x1e98] sm:$0xff]
    %v8708 = vld [vmem:[#allocation6 + $0x1ea0] sm:$0xff]
    %v8709 = vld [vmem:[#allocation6 + $0x1ea8] sm:$0xff]
    %v8710 = vld [vmem:[#allocation6 + $0x1eb0] sm:$0xff]
    %v8711 = vld [vmem:[#allocation6 + $0x1eb8] sm:$0xff]
    %v8712 = vld [vmem:[#allocation6 + $0x1ec0] sm:$0xff]
    %v8713 = vld [vmem:[#allocation6 + $0x1ec8] sm:$0xff]
    %v8714 = vld [vmem:[#allocation6 + $0x1ed0] sm:$0xff]
    %v8715 = vld [vmem:[#allocation6 + $0x1ed8] sm:$0xff]
    %v8716 = vld [vmem:[#allocation6 + $0x1ee0] sm:$0xff]
    %v8717 = vld [vmem:[#allocation6 + $0x1ee8] sm:$0xff]
    %v8718 = vld [vmem:[#allocation6 + $0x1ef0] sm:$0xff]
    %v8719 = vld [vmem:[#allocation6 + $0x1ef8] sm:$0xff]
    %v8720 = vld [vmem:[#allocation6 + $0x1f00] sm:$0xff]
    %v8721 = vld [vmem:[#allocation6 + $0x1f08] sm:$0xff]
    %v8722 = vld [vmem:[#allocation6 + $0x1f10] sm:$0xff]
    %v8723 = vld [vmem:[#allocation6 + $0x1f18] sm:$0xff]
    %v8724 = vld [vmem:[#allocation6 + $0x1f20] sm:$0xff]
    %v8725 = vld [vmem:[#allocation6 + $0x1f28] sm:$0xff]
    %v8726 = vld [vmem:[#allocation6 + $0x1f30] sm:$0xff]
    %v8727 = vld [vmem:[#allocation6 + $0x1f38] sm:$0xff]
    %v8728 = vld [vmem:[#allocation6 + $0x1f40] sm:$0xff]
    %v8729 = vld [vmem:[#allocation6 + $0x1f48] sm:$0xff]
    %v8730 = vld [vmem:[#allocation6 + $0x1f50] sm:$0xff]
    %v8731 = vld [vmem:[#allocation6 + $0x1f58] sm:$0xff]
    %v8732 = vld [vmem:[#allocation6 + $0x1f60] sm:$0xff]
    %v8733 = vld [vmem:[#allocation6 + $0x1f68] sm:$0xff]
    %v8734 = vld [vmem:[#allocation6 + $0x1f70] sm:$0xff]
    %v8735 = vld [vmem:[#allocation6 + $0x1f78] sm:$0xff]
    %v8736 = vld [vmem:[#allocation6 + $0x1f80] sm:$0xff]
    %v8737 = vld [vmem:[#allocation6 + $0x1f88] sm:$0xff]
    %v8738 = vld [vmem:[#allocation6 + $0x1f90] sm:$0xff]
    %v8739 = vld [vmem:[#allocation6 + $0x1f98] sm:$0xff]
    %v8740 = vld [vmem:[#allocation6 + $0x1fa0] sm:$0xff]
    %v8741 = vld [vmem:[#allocation6 + $0x1fa8] sm:$0xff]
    %v8742 = vld [vmem:[#allocation6 + $0x1fb0] sm:$0xff]
    %v8743 = vld [vmem:[#allocation6 + $0x1fb8] sm:$0xff]
    %v8744 = vld [vmem:[#allocation6 + $0x1fc0] sm:$0xff]
    %v8745 = vld [vmem:[#allocation6 + $0x1fc8] sm:$0xff]
    %v8746 = vld [vmem:[#allocation6 + $0x1fd0] sm:$0xff]
    %v8747 = vld [vmem:[#allocation6 + $0x1fd8] sm:$0xff]
    %v8748 = vld [vmem:[#allocation6 + $0x1fe0] sm:$0xff]
    %v8749 = vld [vmem:[#allocation6 + $0x1fe8] sm:$0xff]
    %v8750 = vld [vmem:[#allocation6 + $0x1ff0] sm:$0xff]
    %v8751 = vld [vmem:[#allocation6 + $0x1ff8] sm:$0xff]
    %v8752 = vld [vmem:[#allocation8] sm:$0x3]
    %v8754 = vlaneseq
    %v8755 = vshrl.u32 %v8754, 7
    %v8756 = vsub.s32 0, %v8755
    %v8757 = vrot.slane %v8752, %v8756
    %v8758 = vlaneseq
    %v8759 = vshrl.u32 %v8758, 7
    %v8760 = vsub.s32 1, %v8759
    %v8761 = vrot.slane %v8752, %v8760
    %8764 = vmatprep.subr.bf16.mxu0 %v7729
    %8765 = vmatpush1.bf16.msra.mxu0 %v7728
    %8766 = vmatprep.subr.bf16.mxu0 %v7731
    %8767 = vmatpush1.bf16.msra.mxu0 %v7730
    %8768 = vmatprep.subr.bf16.mxu0 %v7733
    %8769 = vmatpush1.bf16.msra.mxu0 %v7732
    %8770 = vmatprep.subr.bf16.mxu0 %v7735
    %8771 = vmatpush1.bf16.msra.mxu0 %v7734
    %8772 = vmatprep.subr.bf16.mxu0 %v7737
    %8773 = vmatpush1.bf16.msra.mxu0 %v7736
    %8774 = vmatprep.subr.bf16.mxu0 %v7739
    %8775 = vmatpush1.bf16.msra.mxu0 %v7738
    %8776 = vmatprep.subr.bf16.mxu0 %v7741
    %8777 = vmatpush1.bf16.msra.mxu0 %v7740
    %8778 = vmatprep.subr.bf16.mxu0 %v7743
    %8779 = vmatpush1.bf16.msra.mxu0 %v7742
    %8780 = vmatprep.subr.bf16.mxu0 %v7745
    %8781 = vmatpush1.bf16.msra.mxu0 %v7744
    %8782 = vmatprep.subr.bf16.mxu0 %v7747
    %8783 = vmatpush1.bf16.msra.mxu0 %v7746
    %8784 = vmatprep.subr.bf16.mxu0 %v7749
    %8785 = vmatpush1.bf16.msra.mxu0 %v7748
    %8786 = vmatprep.subr.bf16.mxu0 %v7751
    %8787 = vmatpush1.bf16.msra.mxu0 %v7750
    %8788 = vmatprep.subr.bf16.mxu0 %v7753
    %8789 = vmatpush1.bf16.msra.mxu0 %v7752
    %8790 = vmatprep.subr.bf16.mxu0 %v7755
    %8791 = vmatpush1.bf16.msra.mxu0 %v7754
    %8792 = vmatprep.subr.bf16.mxu0 %v7757
    %8793 = vmatpush1.bf16.msra.mxu0 %v7756
    %8794 = vmatprep.subr.bf16.mxu0 %v7759
    %8795 = vmatpush1.bf16.msra.mxu0 %v7758
    %8796 = vmatprep.mubr.bf16.mxu0 %v7665
    %8797 = vmatmul.mubr.bf16.gmra.mrb[0].mxu0 %v7664
    %v8798 = vpop.f32.mrb[0].mxu0
    %v8799 = vadd.f32 %v8757, %v8798
    %v8800 = vpop.f32.mrb[0].mxu0
    %v8801 = vadd.f32 %v8761, %v8800
    %v8802 = vpop.f32.mrb[0].mxu0
    %v8803 = vpop.f32.mrb[0].mxu0
    %8804 = vdwg.mxu0
    %8805 = vmatprep.subr.bf16.mxu0 %v7761
    %8806 = vmatpush1.bf16.msra.mxu0 %v7760
    %8807 = vmatprep.subr.bf16.mxu0 %v7763
    %8808 = vmatpush1.bf16.msra.mxu0 %v7762
    %8809 = vmatprep.subr.bf16.mxu0 %v7765
    %8810 = vmatpush1.bf16.msra.mxu0 %v7764
    %8811 = vmatprep.subr.bf16.mxu0 %v7767
    %8812 = vmatpush1.bf16.msra.mxu0 %v7766
    %8813 = vmatprep.subr.bf16.mxu0 %v7769
    %8814 = vmatpush1.bf16.msra.mxu0 %v7768
    %8815 = vmatprep.subr.bf16.mxu0 %v7771
    %8816 = vmatpush1.bf16.msra.mxu0 %v7770
    %8817 = vmatprep.subr.bf16.mxu0 %v7773
    %8818 = vmatpush1.bf16.msra.mxu0 %v7772
    %8819 = vmatprep.subr.bf16.mxu0 %v7775
    %8820 = vmatpush1.bf16.msra.mxu0 %v7774
    %8821 = vmatprep.subr.bf16.mxu0 %v7777
    %8822 = vmatpush1.bf16.msra.mxu0 %v7776
    %8823 = vmatprep.subr.bf16.mxu0 %v7779
    %8824 = vmatpush1.bf16.msra.mxu0 %v7778
    %8825 = vmatprep.subr.bf16.mxu0 %v7781
    %8826 = vmatpush1.bf16.msra.mxu0 %v7780
    %8827 = vmatprep.subr.bf16.mxu0 %v7783
    %8828 = vmatpush1.bf16.msra.mxu0 %v7782
    %8829 = vmatprep.subr.bf16.mxu0 %v7785
    %8830 = vmatpush1.bf16.msra.mxu0 %v7784
    %8831 = vmatprep.subr.bf16.mxu0 %v7787
    %8832 = vmatpush1.bf16.msra.mxu0 %v7786
    %8833 = vmatprep.subr.bf16.mxu0 %v7789
    %8834 = vmatpush1.bf16.msra.mxu0 %v7788
    %8835 = vmatprep.subr.bf16.mxu0 %v7791
    %8836 = vmatpush1.bf16.msra.mxu0 %v7790
    %8837 = vmatprep.mubr.bf16.mxu0 %v7667
    %8838 = vmatmul.mubr.bf16.gmra.mrb[0].mxu0 %v7666
    %v8839 = vpop.f32.mrb[0].mxu0
    %v8840 = vadd.f32 %v8799, %v8839
    %v8841 = vpop.f32.mrb[0].mxu0
    %v8842 = vadd.f32 %v8801, %v8841
    %v8843 = vpop.f32.mrb[0].mxu0
    %v8844 = vpop.f32.mrb[0].mxu0
    %8845 = vdwg.mxu0
    %8846 = vmatprep.subr.bf16.mxu0 %v7793
    %8847 = vmatpush1.bf16.msra.mxu0 %v7792
    %8848 = vmatprep.subr.bf16.mxu0 %v7795
    %8849 = vmatpush1.bf16.msra.mxu0 %v7794
    %8850 = vmatprep.subr.bf16.mxu0 %v7797
    %8851 = vmatpush1.bf16.msra.mxu0 %v7796
    %8852 = vmatprep.subr.bf16.mxu0 %v7799
    %8853 = vmatpush1.bf16.msra.mxu0 %v7798
    %8854 = vmatprep.subr.bf16.mxu0 %v7801
    %8855 = vmatpush1.bf16.msra.mxu0 %v7800
    %8856 = vmatprep.subr.bf16.mxu0 %v7803
    %8857 = vmatpush1.bf16.msra.mxu0 %v7802
    %8858 = vmatprep.subr.bf16.mxu0 %v7805
    %8859 = vmatpush1.bf16.msra.mxu0 %v7804
    %8860 = vmatprep.subr.bf16.mxu0 %v7807
    %8861 = vmatpush1.bf16.msra.mxu0 %v7806
    %8862 = vmatprep.subr.bf16.mxu0 %v7809
    %8863 = vmatpush1.bf16.msra.mxu0 %v7808
    %8864 = vmatprep.subr.bf16.mxu0 %v7811
    %8865 = vmatpush1.bf16.msra.mxu0 %v7810
    %8866 = vmatprep.subr.bf16.mxu0 %v7813
    %8867 = vmatpush1.bf16.msra.mxu0 %v7812
    %8868 = vmatprep.subr.bf16.mxu0 %v7815
    %8869 = vmatpush1.bf16.msra.mxu0 %v7814
    %8870 = vmatprep.subr.bf16.mxu0 %v7817
    %8871 = vmatpush1.bf16.msra.mxu0 %v7816
    %8872 = vmatprep.subr.bf16.mxu0 %v7819
    %8873 = vmatpush1.bf16.msra.mxu0 %v7818
    %8874 = vmatprep.subr.bf16.mxu0 %v7821
    %8875 = vmatpush1.bf16.msra.mxu0 %v7820
    %8876 = vmatprep.subr.bf16.mxu0 %v7823
    %8877 = vmatpush1.bf16.msra.mxu0 %v7822
    %8878 = vmatprep.mubr.bf16.mxu0 %v7669
    %8879 = vmatmul.mubr.bf16.gmra.mrb[0].mxu0 %v7668
    %v8880 = vpop.f32.mrb[0].mxu0
    %v8881 = vadd.f32 %v8840, %v8880
    %v8882 = vpop.f32.mrb[0].mxu0
    %v8883 = vadd.f32 %v8842, %v8882
    %v8884 = vpop.f32.mrb[0].mxu0
    %v8885 = vpop.f32.mrb[0].mxu0
    %8886 = vdwg.mxu0
    %8887 = vmatprep.subr.bf16.mxu0 %v7825
    %8888 = vmatpush1.bf16.msra.mxu0 %v7824
    %8889 = vmatprep.subr.bf16.mxu0 %v7827
    %8890 = vmatpush1.bf16.msra.mxu0 %v7826
    %8891 = vmatprep.subr.bf16.mxu0 %v7829
    %8892 = vmatpush1.bf16.msra.mxu0 %v7828
    %8893 = vmatprep.subr.bf16.mxu0 %v7831
    %8894 = vmatpush1.bf16.msra.mxu0 %v7830
    %8895 = vmatprep.subr.bf16.mxu0 %v7833
    %8896 = vmatpush1.bf16.msra.mxu0 %v7832
    %8897 = vmatprep.subr.bf16.mxu0 %v7835
    %8898 = vmatpush1.bf16.msra.mxu0 %v7834
    %8899 = vmatprep.subr.bf16.mxu0 %v7837
    %8900 = vmatpush1.bf16.msra.mxu0 %v7836
    %8901 = vmatprep.subr.bf16.mxu0 %v7839
    %8902 = vmatpush1.bf16.msra.mxu0 %v7838
    %8903 = vmatprep.subr.bf16.mxu0 %v7841
    %8904 = vmatpush1.bf16.msra.mxu0 %v7840
    %8905 = vmatprep.subr.bf16.mxu0 %v7843
    %8906 = vmatpush1.bf16.msra.mxu0 %v7842
    %8907 = vmatprep.subr.bf16.mxu0 %v7845
    %8908 = vmatpush1.bf16.msra.mxu0 %v7844
    %8909 = vmatprep.subr.bf16.mxu0 %v7847
    %8910 = vmatpush1.bf16.msra.mxu0 %v7846
    %8911 = vmatprep.subr.bf16.mxu0 %v7849
    %8912 = vmatpush1.bf16.msra.mxu0 %v7848
    %8913 = vmatprep.subr.bf16.mxu0 %v7851
    %8914 = vmatpush1.bf16.msra.mxu0 %v7850
    %8915 = vmatprep.subr.bf16.mxu0 %v7853
    %8916 = vmatpush1.bf16.msra.mxu0 %v7852
    %8917 = vmatprep.subr.bf16.mxu0 %v7855
    %8918 = vmatpush1.bf16.msra.mxu0 %v7854
    %8919 = vmatprep.mubr.bf16.mxu0 %v7671
    %8920 = vmatmul.mubr.bf16.gmra.mrb[0].mxu0 %v7670
    %v8921 = vpop.f32.mrb[0].mxu0
    %v8922 = vadd.f32 %v8881, %v8921
    %v8923 = vpop.f32.mrb[0].mxu0
    %v8924 = vadd.f32 %v8883, %v8923
    %v8925 = vpop.f32.mrb[0].mxu0
    %v8926 = vpop.f32.mrb[0].mxu0
    %8927 = vdwg.mxu0
    %8928 = vmatprep.subr.bf16.mxu0 %v7857
    %8929 = vmatpush1.bf16.msra.mxu0 %v7856
    %8930 = vmatprep.subr.bf16.mxu0 %v7859
    %8931 = vmatpush1.bf16.msra.mxu0 %v7858
    %8932 = vmatprep.subr.bf16.mxu0 %v7861
    %8933 = vmatpush1.bf16.msra.mxu0 %v7860
    %8934 = vmatprep.subr.bf16.mxu0 %v7863
    %8935 = vmatpush1.bf16.msra.mxu0 %v7862
    %8936 = vmatprep.subr.bf16.mxu0 %v7865
    %8937 = vmatpush1.bf16.msra.mxu0 %v7864
    %8938 = vmatprep.subr.bf16.mxu0 %v7867
    %8939 = vmatpush1.bf16.msra.mxu0 %v7866
    %8940 = vmatprep.subr.bf16.mxu0 %v7869
    %8941 = vmatpush1.bf16.msra.mxu0 %v7868
    %8942 = vmatprep.subr.bf16.mxu0 %v7871
    %8943 = vmatpush1.bf16.msra.mxu0 %v7870
    %8944 = vmatprep.subr.bf16.mxu0 %v7873
    %8945 = vmatpush1.bf16.msra.mxu0 %v7872
    %8946 = vmatprep.subr.bf16.mxu0 %v7875
    %8947 = vmatpush1.bf16.msra.mxu0 %v7874
    %8948 = vmatprep.subr.bf16.mxu0 %v7877
    %8949 = vmatpush1.bf16.msra.mxu0 %v7876
    %8950 = vmatprep.subr.bf16.mxu0 %v7879
    %8951 = vmatpush1.bf16.msra.mxu0 %v7878
    %8952 = vmatprep.subr.bf16.mxu0 %v7881
    %8953 = vmatpush1.bf16.msra.mxu0 %v7880
    %8954 = vmatprep.subr.bf16.mxu0 %v7883
    %8955 = vmatpush1.bf16.msra.mxu0 %v7882
    %8956 = vmatprep.subr.bf16.mxu0 %v7885
    %8957 = vmatpush1.bf16.msra.mxu0 %v7884
    %8958 = vmatprep.subr.bf16.mxu0 %v7887
    %8959 = vmatpush1.bf16.msra.mxu0 %v7886
    %8960 = vmatprep.mubr.bf16.mxu0 %v7673
    %8961 = vmatmul.mubr.bf16.gmra.mrb[0].mxu0 %v7672
    %v8962 = vpop.f32.mrb[0].mxu0
    %v8963 = vadd.f32 %v8922, %v8962
    %v8964 = vpop.f32.mrb[0].mxu0
    %v8965 = vadd.f32 %v8924, %v8964
    %v8966 = vpop.f32.mrb[0].mxu0
    %v8967 = vpop.f32.mrb[0].mxu0
    %8968 = vdwg.mxu0
    %8969 = vmatprep.subr.bf16.mxu0 %v7889
    %8970 = vmatpush1.bf16.msra.mxu0 %v7888
    %8971 = vmatprep.subr.bf16.mxu0 %v7891
    %8972 = vmatpush1.bf16.msra.mxu0 %v7890
    %8973 = vmatprep.subr.bf16.mxu0 %v7893
    %8974 = vmatpush1.bf16.msra.mxu0 %v7892
    %8975 = vmatprep.subr.bf16.mxu0 %v7895
    %8976 = vmatpush1.bf16.msra.mxu0 %v7894
    %8977 = vmatprep.subr.bf16.mxu0 %v7897
    %8978 = vmatpush1.bf16.msra.mxu0 %v7896
    %8979 = vmatprep.subr.bf16.mxu0 %v7899
    %8980 = vmatpush1.bf16.msra.mxu0 %v7898
    %8981 = vmatprep.subr.bf16.mxu0 %v7901
    %8982 = vmatpush1.bf16.msra.mxu0 %v7900
    %8983 = vmatprep.subr.bf16.mxu0 %v7903
    %8984 = vmatpush1.bf16.msra.mxu0 %v7902
    %8985 = vmatprep.subr.bf16.mxu0 %v7905
    %8986 = vmatpush1.bf16.msra.mxu0 %v7904
    %8987 = vmatprep.subr.bf16.mxu0 %v7907
    %8988 = vmatpush1.bf16.msra.mxu0 %v7906
    %8989 = vmatprep.subr.bf16.mxu0 %v7909
    %8990 = vmatpush1.bf16.msra.mxu0 %v7908
    %8991 = vmatprep.subr.bf16.mxu0 %v7911
    %8992 = vmatpush1.bf16.msra.mxu0 %v7910
    %8993 = vmatprep.subr.bf16.mxu0 %v7913
    %8994 = vmatpush1.bf16.msra.mxu0 %v7912
    %8995 = vmatprep.subr.bf16.mxu0 %v7915
    %8996 = vmatpush1.bf16.msra.mxu0 %v7914
    %8997 = vmatprep.subr.bf16.mxu0 %v7917
    %8998 = vmatpush1.bf16.msra.mxu0 %v7916
    %8999 = vmatprep.subr.bf16.mxu0 %v7919
    %9000 = vmatpush1.bf16.msra.mxu0 %v7918
    %9001 = vmatprep.mubr.bf16.mxu0 %v7675
    %9002 = vmatmul.mubr.bf16.gmra.mrb[0].mxu0 %v7674
    %v9003 = vpop.f32.mrb[0].mxu0
    %v9004 = vadd.f32 %v8963, %v9003
    %v9005 = vpop.f32.mrb[0].mxu0
    %v9006 = vadd.f32 %v8965, %v9005
    %v9007 = vpop.f32.mrb[0].mxu0
    %v9008 = vpop.f32.mrb[0].mxu0
    %9009 = vdwg.mxu0
    %9010 = vmatprep.subr.bf16.mxu0 %v7921
    %9011 = vmatpush1.bf16.msra.mxu0 %v7920
    %9012 = vmatprep.subr.bf16.mxu0 %v7923
    %9013 = vmatpush1.bf16.msra.mxu0 %v7922
    %9014 = vmatprep.subr.bf16.mxu0 %v7925
    %9015 = vmatpush1.bf16.msra.mxu0 %v7924
    %9016 = vmatprep.subr.bf16.mxu0 %v7927
    %9017 = vmatpush1.bf16.msra.mxu0 %v7926
    %9018 = vmatprep.subr.bf16.mxu0 %v7929
    %9019 = vmatpush1.bf16.msra.mxu0 %v7928
    %9020 = vmatprep.subr.bf16.mxu0 %v7931
    %9021 = vmatpush1.bf16.msra.mxu0 %v7930
    %9022 = vmatprep.subr.bf16.mxu0 %v7933
    %9023 = vmatpush1.bf16.msra.mxu0 %v7932
    %9024 = vmatprep.subr.bf16.mxu0 %v7935
    %9025 = vmatpush1.bf16.msra.mxu0 %v7934
    %9026 = vmatprep.subr.bf16.mxu0 %v7937
    %9027 = vmatpush1.bf16.msra.mxu0 %v7936
    %9028 = vmatprep.subr.bf16.mxu0 %v7939
    %9029 = vmatpush1.bf16.msra.mxu0 %v7938
    %9030 = vmatprep.subr.bf16.mxu0 %v7941
    %9031 = vmatpush1.bf16.msra.mxu0 %v7940
    %9032 = vmatprep.subr.bf16.mxu0 %v7943
    %9033 = vmatpush1.bf16.msra.mxu0 %v7942
    %9034 = vmatprep.subr.bf16.mxu0 %v7945
    %9035 = vmatpush1.bf16.msra.mxu0 %v7944
    %9036 = vmatprep.subr.bf16.mxu0 %v7947
    %9037 = vmatpush1.bf16.msra.mxu0 %v7946
    %9038 = vmatprep.subr.bf16.mxu0 %v7949
    %9039 = vmatpush1.bf16.msra.mxu0 %v7948
    %9040 = vmatprep.subr.bf16.mxu0 %v7951
    %9041 = vmatpush1.bf16.msra.mxu0 %v7950
    %9042 = vmatprep.mubr.bf16.mxu0 %v7677
    %9043 = vmatmul.mubr.bf16.gmra.mrb[0].mxu0 %v7676
    %v9044 = vpop.f32.mrb[0].mxu0
    %v9045 = vadd.f32 %v9004, %v9044
    %v9046 = vpop.f32.mrb[0].mxu0
    %v9047 = vadd.f32 %v9006, %v9046
    %v9048 = vpop.f32.mrb[0].mxu0
    %v9049 = vpop.f32.mrb[0].mxu0
    %9050 = vdwg.mxu0
    %9051 = vmatprep.subr.bf16.mxu0 %v7953
    %9052 = vmatpush1.bf16.msra.mxu0 %v7952
    %9053 = vmatprep.subr.bf16.mxu0 %v7955
    %9054 = vmatpush1.bf16.msra.mxu0 %v7954
    %9055 = vmatprep.subr.bf16.mxu0 %v7957
    %9056 = vmatpush1.bf16.msra.mxu0 %v7956
    %9057 = vmatprep.subr.bf16.mxu0 %v7959
    %9058 = vmatpush1.bf16.msra.mxu0 %v7958
    %9059 = vmatprep.subr.bf16.mxu0 %v7961
    %9060 = vmatpush1.bf16.msra.mxu0 %v7960
    %9061 = vmatprep.subr.bf16.mxu0 %v7963
    %9062 = vmatpush1.bf16.msra.mxu0 %v7962
    %9063 = vmatprep.subr.bf16.mxu0 %v7965
    %9064 = vmatpush1.bf16.msra.mxu0 %v7964
    %9065 = vmatprep.subr.bf16.mxu0 %v7967
    %9066 = vmatpush1.bf16.msra.mxu0 %v7966
    %9067 = vmatprep.subr.bf16.mxu0 %v7969
    %9068 = vmatpush1.bf16.msra.mxu0 %v7968
    %9069 = vmatprep.subr.bf16.mxu0 %v7971
    %9070 = vmatpush1.bf16.msra.mxu0 %v7970
    %9071 = vmatprep.subr.bf16.mxu0 %v7973
    %9072 = vmatpush1.bf16.msra.mxu0 %v7972
    %9073 = vmatprep.subr.bf16.mxu0 %v7975
    %9074 = vmatpush1.bf16.msra.mxu0 %v7974
    %9075 = vmatprep.subr.bf16.mxu0 %v7977
    %9076 = vmatpush1.bf16.msra.mxu0 %v7976
    %9077 = vmatprep.subr.bf16.mxu0 %v7979
    %9078 = vmatpush1.bf16.msra.mxu0 %v7978
    %9079 = vmatprep.subr.bf16.mxu0 %v7981
    %9080 = vmatpush1.bf16.msra.mxu0 %v7980
    %9081 = vmatprep.subr.bf16.mxu0 %v7983
    %9082 = vmatpush1.bf16.msra.mxu0 %v7982
    %9083 = vmatprep.mubr.bf16.mxu0 %v7679
    %9084 = vmatmul.mubr.bf16.gmra.mrb[0].mxu0 %v7678
    %v9085 = vpop.f32.mrb[0].mxu0
    %v9086 = vadd.f32 %v9045, %v9085
    %v9087 = vpop.f32.mrb[0].mxu0
    %v9088 = vadd.f32 %v9047, %v9087
    %v9089 = vpop.f32.mrb[0].mxu0
    %v9090 = vpop.f32.mrb[0].mxu0
    %9091 = vdwg.mxu0
    %9092 = vmatprep.subr.bf16.mxu0 %v7985
    %9093 = vmatpush1.bf16.msra.mxu0 %v7984
    %9094 = vmatprep.subr.bf16.mxu0 %v7987
    %9095 = vmatpush1.bf16.msra.mxu0 %v7986
    %9096 = vmatprep.subr.bf16.mxu0 %v7989
    %9097 = vmatpush1.bf16.msra.mxu0 %v7988
    %9098 = vmatprep.subr.bf16.mxu0 %v7991
    %9099 = vmatpush1.bf16.msra.mxu0 %v7990
    %9100 = vmatprep.subr.bf16.mxu0 %v7993
    %9101 = vmatpush1.bf16.msra.mxu0 %v7992
    %9102 = vmatprep.subr.bf16.mxu0 %v7995
    %9103 = vmatpush1.bf16.msra.mxu0 %v7994
    %9104 = vmatprep.subr.bf16.mxu0 %v7997
    %9105 = vmatpush1.bf16.msra.mxu0 %v7996
    %9106 = vmatprep.subr.bf16.mxu0 %v7999
    %9107 = vmatpush1.bf16.msra.mxu0 %v7998
    %9108 = vmatprep.subr.bf16.mxu0 %v8001
    %9109 = vmatpush1.bf16.msra.mxu0 %v8000
    %9110 = vmatprep.subr.bf16.mxu0 %v8003
    %9111 = vmatpush1.bf16.msra.mxu0 %v8002
    %9112 = vmatprep.subr.bf16.mxu0 %v8005
    %9113 = vmatpush1.bf16.msra.mxu0 %v8004
    %9114 = vmatprep.subr.bf16.mxu0 %v8007
    %9115 = vmatpush1.bf16.msra.mxu0 %v8006
    %9116 = vmatprep.subr.bf16.mxu0 %v8009
    %9117 = vmatpush1.bf16.msra.mxu0 %v8008
    %9118 = vmatprep.subr.bf16.mxu0 %v8011
    %9119 = vmatpush1.bf16.msra.mxu0 %v8010
    %9120 = vmatprep.subr.bf16.mxu0 %v8013
    %9121 = vmatpush1.bf16.msra.mxu0 %v8012
    %9122 = vmatprep.subr.bf16.mxu0 %v8015
    %9123 = vmatpush1.bf16.msra.mxu0 %v8014
    %9124 = vmatprep.mubr.bf16.mxu0 %v7681
    %9125 = vmatmul.mubr.bf16.gmra.mrb[0].mxu0 %v7680
    %v9126 = vpop.f32.mrb[0].mxu0
    %v9127 = vadd.f32 %v9086, %v9126
    %v9128 = vpop.f32.mrb[0].mxu0
    %v9129 = vadd.f32 %v9088, %v9128
    %v9130 = vpop.f32.mrb[0].mxu0
    %v9131 = vpop.f32.mrb[0].mxu0
    %9132 = vdwg.mxu0
    %9133 = vmatprep.subr.bf16.mxu0 %v8017
    %9134 = vmatpush1.bf16.msra.mxu0 %v8016
    %9135 = vmatprep.subr.bf16.mxu0 %v8019
    %9136 = vmatpush1.bf16.msra.mxu0 %v8018
    %9137 = vmatprep.subr.bf16.mxu0 %v8021
    %9138 = vmatpush1.bf16.msra.mxu0 %v8020
    %9139 = vmatprep.subr.bf16.mxu0 %v8023
    %9140 = vmatpush1.bf16.msra.mxu0 %v8022
    %9141 = vmatprep.subr.bf16.mxu0 %v8025
    %9142 = vmatpush1.bf16.msra.mxu0 %v8024
    %9143 = vmatprep.subr.bf16.mxu0 %v8027
    %9144 = vmatpush1.bf16.msra.mxu0 %v8026
    %9145 = vmatprep.subr.bf16.mxu0 %v8029
    %9146 = vmatpush1.bf16.msra.mxu0 %v8028
    %9147 = vmatprep.subr.bf16.mxu0 %v8031
    %9148 = vmatpush1.bf16.msra.mxu0 %v8030
    %9149 = vmatprep.subr.bf16.mxu0 %v8033
    %9150 = vmatpush1.bf16.msra.mxu0 %v8032
    %9151 = vmatprep.subr.bf16.mxu0 %v8035
    %9152 = vmatpush1.bf16.msra.mxu0 %v8034
    %9153 = vmatprep.subr.bf16.mxu0 %v8037
    %9154 = vmatpush1.bf16.msra.mxu0 %v8036
    %9155 = vmatprep.subr.bf16.mxu0 %v8039
    %9156 = vmatpush1.bf16.msra.mxu0 %v8038
    %9157 = vmatprep.subr.bf16.mxu0 %v8041
    %9158 = vmatpush1.bf16.msra.mxu0 %v8040
    %9159 = vmatprep.subr.bf16.mxu0 %v8043
    %9160 = vmatpush1.bf16.msra.mxu0 %v8042
    %9161 = vmatprep.subr.bf16.mxu0 %v8045
    %9162 = vmatpush1.bf16.msra.mxu0 %v8044
    %9163 = vmatprep.subr.bf16.mxu0 %v8047
    %9164 = vmatpush1.bf16.msra.mxu0 %v8046
    %9165 = vmatprep.mubr.bf16.mxu0 %v7683
    %9166 = vmatmul.mubr.bf16.gmra.mrb[0].mxu0 %v7682
    %v9167 = vpop.f32.mrb[0].mxu0
    %v9168 = vadd.f32 %v9127, %v9167
    %v9169 = vpop.f32.mrb[0].mxu0
    %v9170 = vadd.f32 %v9129, %v9169
    %v9171 = vpop.f32.mrb[0].mxu0
    %v9172 = vpop.f32.mrb[0].mxu0
    %9173 = vdwg.mxu0
    %9174 = vmatprep.subr.bf16.mxu0 %v8049
    %9175 = vmatpush1.bf16.msra.mxu0 %v8048
    %9176 = vmatprep.subr.bf16.mxu0 %v8051
    %9177 = vmatpush1.bf16.msra.mxu0 %v8050
    %9178 = vmatprep.subr.bf16.mxu0 %v8053
    %9179 = vmatpush1.bf16.msra.mxu0 %v8052
    %9180 = vmatprep.subr.bf16.mxu0 %v8055
    %9181 = vmatpush1.bf16.msra.mxu0 %v8054
    %9182 = vmatprep.subr.bf16.mxu0 %v8057
    %9183 = vmatpush1.bf16.msra.mxu0 %v8056
    %9184 = vmatprep.subr.bf16.mxu0 %v8059
    %9185 = vmatpush1.bf16.msra.mxu0 %v8058
    %9186 = vmatprep.subr.bf16.mxu0 %v8061
    %9187 = vmatpush1.bf16.msra.mxu0 %v8060
    %9188 = vmatprep.subr.bf16.mxu0 %v8063
    %9189 = vmatpush1.bf16.msra.mxu0 %v8062
    %9190 = vmatprep.subr.bf16.mxu0 %v8065
    %9191 = vmatpush1.bf16.msra.mxu0 %v8064
    %9192 = vmatprep.subr.bf16.mxu0 %v8067
    %9193 = vmatpush1.bf16.msra.mxu0 %v8066
    %9194 = vmatprep.subr.bf16.mxu0 %v8069
    %9195 = vmatpush1.bf16.msra.mxu0 %v8068
    %9196 = vmatprep.subr.bf16.mxu0 %v8071
    %9197 = vmatpush1.bf16.msra.mxu0 %v8070
    %9198 = vmatprep.subr.bf16.mxu0 %v8073
    %9199 = vmatpush1.bf16.msra.mxu0 %v8072
    %9200 = vmatprep.subr.bf16.mxu0 %v8075
    %9201 = vmatpush1.bf16.msra.mxu0 %v8074
    %9202 = vmatprep.subr.bf16.mxu0 %v8077
    %9203 = vmatpush1.bf16.msra.mxu0 %v8076
    %9204 = vmatprep.subr.bf16.mxu0 %v8079
    %9205 = vmatpush1.bf16.msra.mxu0 %v8078
    %9206 = vmatprep.mubr.bf16.mxu0 %v7685
    %9207 = vmatmul.mubr.bf16.gmra.mrb[0].mxu0 %v7684
    %v9208 = vpop.f32.mrb[0].mxu0
    %v9209 = vadd.f32 %v9168, %v9208
    %v9210 = vpop.f32.mrb[0].mxu0
    %v9211 = vadd.f32 %v9170, %v9210
    %v9212 = vpop.f32.mrb[0].mxu0
    %v9213 = vpop.f32.mrb[0].mxu0
    %9214 = vdwg.mxu0
    %9215 = vmatprep.subr.bf16.mxu0 %v8081
    %9216 = vmatpush1.bf16.msra.mxu0 %v8080
    %9217 = vmatprep.subr.bf16.mxu0 %v8083
    %9218 = vmatpush1.bf16.msra.mxu0 %v8082
    %9219 = vmatprep.subr.bf16.mxu0 %v8085
    %9220 = vmatpush1.bf16.msra.mxu0 %v8084
    %9221 = vmatprep.subr.bf16.mxu0 %v8087
    %9222 = vmatpush1.bf16.msra.mxu0 %v8086
    %9223 = vmatprep.subr.bf16.mxu0 %v8089
    %9224 = vmatpush1.bf16.msra.mxu0 %v8088
    %9225 = vmatprep.subr.bf16.mxu0 %v8091
    %9226 = vmatpush1.bf16.msra.mxu0 %v8090
    %9227 = vmatprep.subr.bf16.mxu0 %v8093
    %9228 = vmatpush1.bf16.msra.mxu0 %v8092
    %9229 = vmatprep.subr.bf16.mxu0 %v8095
    %9230 = vmatpush1.bf16.msra.mxu0 %v8094
    %9231 = vmatprep.subr.bf16.mxu0 %v8097
    %9232 = vmatpush1.bf16.msra.mxu0 %v8096
    %9233 = vmatprep.subr.bf16.mxu0 %v8099
    %9234 = vmatpush1.bf16.msra.mxu0 %v8098
    %9235 = vmatprep.subr.bf16.mxu0 %v8101
    %9236 = vmatpush1.bf16.msra.mxu0 %v8100
    %9237 = vmatprep.subr.bf16.mxu0 %v8103
    %9238 = vmatpush1.bf16.msra.mxu0 %v8102
    %9239 = vmatprep.subr.bf16.mxu0 %v8105
    %9240 = vmatpush1.bf16.msra.mxu0 %v8104
    %9241 = vmatprep.subr.bf16.mxu0 %v8107
    %9242 = vmatpush1.bf16.msra.mxu0 %v8106
    %9243 = vmatprep.subr.bf16.mxu0 %v8109
    %9244 = vmatpush1.bf16.msra.mxu0 %v8108
    %9245 = vmatprep.subr.bf16.mxu0 %v8111
    %9246 = vmatpush1.bf16.msra.mxu0 %v8110
    %9247 = vmatprep.mubr.bf16.mxu0 %v7687
    %9248 = vmatmul.mubr.bf16.gmra.mrb[0].mxu0 %v7686
    %v9249 = vpop.f32.mrb[0].mxu0
    %v9250 = vadd.f32 %v9209, %v9249
    %v9251 = vpop.f32.mrb[0].mxu0
    %v9252 = vadd.f32 %v9211, %v9251
    %v9253 = vpop.f32.mrb[0].mxu0
    %v9254 = vpop.f32.mrb[0].mxu0
    %9255 = vdwg.mxu0
    %9256 = vmatprep.subr.bf16.mxu0 %v8113
    %9257 = vmatpush1.bf16.msra.mxu0 %v8112
    %9258 = vmatprep.subr.bf16.mxu0 %v8115
    %9259 = vmatpush1.bf16.msra.mxu0 %v8114
    %9260 = vmatprep.subr.bf16.mxu0 %v8117
    %9261 = vmatpush1.bf16.msra.mxu0 %v8116
    %9262 = vmatprep.subr.bf16.mxu0 %v8119
    %9263 = vmatpush1.bf16.msra.mxu0 %v8118
    %9264 = vmatprep.subr.bf16.mxu0 %v8121
    %9265 = vmatpush1.bf16.msra.mxu0 %v8120
    %9266 = vmatprep.subr.bf16.mxu0 %v8123
    %9267 = vmatpush1.bf16.msra.mxu0 %v8122
    %9268 = vmatprep.subr.bf16.mxu0 %v8125
    %9269 = vmatpush1.bf16.msra.mxu0 %v8124
    %9270 = vmatprep.subr.bf16.mxu0 %v8127
    %9271 = vmatpush1.bf16.msra.mxu0 %v8126
    %9272 = vmatprep.subr.bf16.mxu0 %v8129
    %9273 = vmatpush1.bf16.msra.mxu0 %v8128
    %9274 = vmatprep.subr.bf16.mxu0 %v8131
    %9275 = vmatpush1.bf16.msra.mxu0 %v8130
    %9276 = vmatprep.subr.bf16.mxu0 %v8133
    %9277 = vmatpush1.bf16.msra.mxu0 %v8132
    %9278 = vmatprep.subr.bf16.mxu0 %v8135
    %9279 = vmatpush1.bf16.msra.mxu0 %v8134
    %9280 = vmatprep.subr.bf16.mxu0 %v8137
    %9281 = vmatpush1.bf16.msra.mxu0 %v8136
    %9282 = vmatprep.subr.bf16.mxu0 %v8139
    %9283 = vmatpush1.bf16.msra.mxu0 %v8138
    %9284 = vmatprep.subr.bf16.mxu0 %v8141
    %9285 = vmatpush1.bf16.msra.mxu0 %v8140
    %9286 = vmatprep.subr.bf16.mxu0 %v8143
    %9287 = vmatpush1.bf16.msra.mxu0 %v8142
    %9288 = vmatprep.mubr.bf16.mxu0 %v7689
    %9289 = vmatmul.mubr.bf16.gmra.mrb[0].mxu0 %v7688
    %v9290 = vpop.f32.mrb[0].mxu0
    %v9291 = vadd.f32 %v9250, %v9290
    %v9292 = vpop.f32.mrb[0].mxu0
    %v9293 = vadd.f32 %v9252, %v9292
    %v9294 = vpop.f32.mrb[0].mxu0
    %v9295 = vpop.f32.mrb[0].mxu0
    %9296 = vdwg.mxu0
    %9297 = vmatprep.subr.bf16.mxu0 %v8145
    %9298 = vmatpush1.bf16.msra.mxu0 %v8144
    %9299 = vmatprep.subr.bf16.mxu0 %v8147
    %9300 = vmatpush1.bf16.msra.mxu0 %v8146
    %9301 = vmatprep.subr.bf16.mxu0 %v8149
    %9302 = vmatpush1.bf16.msra.mxu0 %v8148
    %9303 = vmatprep.subr.bf16.mxu0 %v8151
    %9304 = vmatpush1.bf16.msra.mxu0 %v8150
    %9305 = vmatprep.subr.bf16.mxu0 %v8153
    %9306 = vmatpush1.bf16.msra.mxu0 %v8152
    %9307 = vmatprep.subr.bf16.mxu0 %v8155
    %9308 = vmatpush1.bf16.msra.mxu0 %v8154
    %9309 = vmatprep.subr.bf16.mxu0 %v8157
    %9310 = vmatpush1.bf16.msra.mxu0 %v8156
    %9311 = vmatprep.subr.bf16.mxu0 %v8159
    %9312 = vmatpush1.bf16.msra.mxu0 %v8158
    %9313 = vmatprep.subr.bf16.mxu0 %v8161
    %9314 = vmatpush1.bf16.msra.mxu0 %v8160
    %9315 = vmatprep.subr.bf16.mxu0 %v8163
    %9316 = vmatpush1.bf16.msra.mxu0 %v8162
    %9317 = vmatprep.subr.bf16.mxu0 %v8165
    %9318 = vmatpush1.bf16.msra.mxu0 %v8164
    %9319 = vmatprep.subr.bf16.mxu0 %v8167
    %9320 = vmatpush1.bf16.msra.mxu0 %v8166
    %9321 = vmatprep.subr.bf16.mxu0 %v8169
    %9322 = vmatpush1.bf16.msra.mxu0 %v8168
    %9323 = vmatprep.subr.bf16.mxu0 %v8171
    %9324 = vmatpush1.bf16.msra.mxu0 %v8170
    %9325 = vmatprep.subr.bf16.mxu0 %v8173
    %9326 = vmatpush1.bf16.msra.mxu0 %v8172
    %9327 = vmatprep.subr.bf16.mxu0 %v8175
    %9328 = vmatpush1.bf16.msra.mxu0 %v8174
    %9329 = vmatprep.mubr.bf16.mxu0 %v7691
    %9330 = vmatmul.mubr.bf16.gmra.mrb[0].mxu0 %v7690
    %v9331 = vpop.f32.mrb[0].mxu0
    %v9332 = vadd.f32 %v9291, %v9331
    %v9333 = vpop.f32.mrb[0].mxu0
    %v9334 = vadd.f32 %v9293, %v9333
    %v9335 = vpop.f32.mrb[0].mxu0
    %v9336 = vpop.f32.mrb[0].mxu0
    %9337 = vdwg.mxu0
    %9338 = vmatprep.subr.bf16.mxu0 %v8177
    %9339 = vmatpush1.bf16.msra.mxu0 %v8176
    %9340 = vmatprep.subr.bf16.mxu0 %v8179
    %9341 = vmatpush1.bf16.msra.mxu0 %v8178
    %9342 = vmatprep.subr.bf16.mxu0 %v8181
    %9343 = vmatpush1.bf16.msra.mxu0 %v8180
    %9344 = vmatprep.subr.bf16.mxu0 %v8183
    %9345 = vmatpush1.bf16.msra.mxu0 %v8182
    %9346 = vmatprep.subr.bf16.mxu0 %v8185
    %9347 = vmatpush1.bf16.msra.mxu0 %v8184
    %9348 = vmatprep.subr.bf16.mxu0 %v8187
    %9349 = vmatpush1.bf16.msra.mxu0 %v8186
    %9350 = vmatprep.subr.bf16.mxu0 %v8189
    %9351 = vmatpush1.bf16.msra.mxu0 %v8188
    %9352 = vmatprep.subr.bf16.mxu0 %v8191
    %9353 = vmatpush1.bf16.msra.mxu0 %v8190
    %9354 = vmatprep.subr.bf16.mxu0 %v8193
    %9355 = vmatpush1.bf16.msra.mxu0 %v8192
    %9356 = vmatprep.subr.bf16.mxu0 %v8195
    %9357 = vmatpush1.bf16.msra.mxu0 %v8194
    %9358 = vmatprep.subr.bf16.mxu0 %v8197
    %9359 = vmatpush1.bf16.msra.mxu0 %v8196
    %9360 = vmatprep.subr.bf16.mxu0 %v8199
    %9361 = vmatpush1.bf16.msra.mxu0 %v8198
    %9362 = vmatprep.subr.bf16.mxu0 %v8201
    %9363 = vmatpush1.bf16.msra.mxu0 %v8200
    %9364 = vmatprep.subr.bf16.mxu0 %v8203
    %9365 = vmatpush1.bf16.msra.mxu0 %v8202
    %9366 = vmatprep.subr.bf16.mxu0 %v8205
    %9367 = vmatpush1.bf16.msra.mxu0 %v8204
    %9368 = vmatprep.subr.bf16.mxu0 %v8207
    %9369 = vmatpush1.bf16.msra.mxu0 %v8206
    %9370 = vmatprep.mubr.bf16.mxu0 %v7693
    %9371 = vmatmul.mubr.bf16.gmra.mrb[0].mxu0 %v7692
    %v9372 = vpop.f32.mrb[0].mxu0
    %v9373 = vadd.f32 %v9332, %v9372
    %v9374 = vpop.f32.mrb[0].mxu0
    %v9375 = vadd.f32 %v9334, %v9374
    %v9376 = vpop.f32.mrb[0].mxu0
    %v9377 = vpop.f32.mrb[0].mxu0
    %9378 = vdwg.mxu0
    %9379 = vmatprep.subr.bf16.mxu0 %v8209
    %9380 = vmatpush1.bf16.msra.mxu0 %v8208
    %9381 = vmatprep.subr.bf16.mxu0 %v8211
    %9382 = vmatpush1.bf16.msra.mxu0 %v8210
    %9383 = vmatprep.subr.bf16.mxu0 %v8213
    %9384 = vmatpush1.bf16.msra.mxu0 %v8212
    %9385 = vmatprep.subr.bf16.mxu0 %v8215
    %9386 = vmatpush1.bf16.msra.mxu0 %v8214
    %9387 = vmatprep.subr.bf16.mxu0 %v8217
    %9388 = vmatpush1.bf16.msra.mxu0 %v8216
    %9389 = vmatprep.subr.bf16.mxu0 %v8219
    %9390 = vmatpush1.bf16.msra.mxu0 %v8218
    %9391 = vmatprep.subr.bf16.mxu0 %v8221
    %9392 = vmatpush1.bf16.msra.mxu0 %v8220
    %9393 = vmatprep.subr.bf16.mxu0 %v8223
    %9394 = vmatpush1.bf16.msra.mxu0 %v8222
    %9395 = vmatprep.subr.bf16.mxu0 %v8225
    %9396 = vmatpush1.bf16.msra.mxu0 %v8224
    %9397 = vmatprep.subr.bf16.mxu0 %v8227
    %9398 = vmatpush1.bf16.msra.mxu0 %v8226
    %9399 = vmatprep.subr.bf16.mxu0 %v8229
    %9400 = vmatpush1.bf16.msra.mxu0 %v8228
    %9401 = vmatprep.subr.bf16.mxu0 %v8231
    %9402 = vmatpush1.bf16.msra.mxu0 %v8230
    %9403 = vmatprep.subr.bf16.mxu0 %v8233
    %9404 = vmatpush1.bf16.msra.mxu0 %v8232
    %9405 = vmatprep.subr.bf16.mxu0 %v8235
    %9406 = vmatpush1.bf16.msra.mxu0 %v8234
    %9407 = vmatprep.subr.bf16.mxu0 %v8237
    %9408 = vmatpush1.bf16.msra.mxu0 %v8236
    %9409 = vmatprep.subr.bf16.mxu0 %v8239
    %9410 = vmatpush1.bf16.msra.mxu0 %v8238
    %9411 = vmatprep.mubr.bf16.mxu0 %v7695
    %9412 = vmatmul.mubr.bf16.gmra.mrb[0].mxu0 %v7694
    %v9413 = vpop.f32.mrb[0].mxu0
    %v9414 = vadd.f32 %v9373, %v9413
    %v9415 = vpop.f32.mrb[0].mxu0
    %v9416 = vadd.f32 %v9375, %v9415
    %v9417 = vpop.f32.mrb[0].mxu0
    %v9418 = vpop.f32.mrb[0].mxu0
    %9419 = vdwg.mxu0
    %9420 = vmatprep.subr.bf16.mxu0 %v8241
    %9421 = vmatpush1.bf16.msra.mxu0 %v8240
    %9422 = vmatprep.subr.bf16.mxu0 %v8243
    %9423 = vmatpush1.bf16.msra.mxu0 %v8242
    %9424 = vmatprep.subr.bf16.mxu0 %v8245
    %9425 = vmatpush1.bf16.msra.mxu0 %v8244
    %9426 = vmatprep.subr.bf16.mxu0 %v8247
    %9427 = vmatpush1.bf16.msra.mxu0 %v8246
    %9428 = vmatprep.subr.bf16.mxu0 %v8249
    %9429 = vmatpush1.bf16.msra.mxu0 %v8248
    %9430 = vmatprep.subr.bf16.mxu0 %v8251
    %9431 = vmatpush1.bf16.msra.mxu0 %v8250
    %9432 = vmatprep.subr.bf16.mxu0 %v8253
    %9433 = vmatpush1.bf16.msra.mxu0 %v8252
    %9434 = vmatprep.subr.bf16.mxu0 %v8255
    %9435 = vmatpush1.bf16.msra.mxu0 %v8254
    %9436 = vmatprep.subr.bf16.mxu0 %v8257
    %9437 = vmatpush1.bf16.msra.mxu0 %v8256
    %9438 = vmatprep.subr.bf16.mxu0 %v8259
    %9439 = vmatpush1.bf16.msra.mxu0 %v8258
    %9440 = vmatprep.subr.bf16.mxu0 %v8261
    %9441 = vmatpush1.bf16.msra.mxu0 %v8260
    %9442 = vmatprep.subr.bf16.mxu0 %v8263
    %9443 = vmatpush1.bf16.msra.mxu0 %v8262
    %9444 = vmatprep.subr.bf16.mxu0 %v8265
    %9445 = vmatpush1.bf16.msra.mxu0 %v8264
    %9446 = vmatprep.subr.bf16.mxu0 %v8267
    %9447 = vmatpush1.bf16.msra.mxu0 %v8266
    %9448 = vmatprep.subr.bf16.mxu0 %v8269
    %9449 = vmatpush1.bf16.msra.mxu0 %v8268
    %9450 = vmatprep.subr.bf16.mxu0 %v8271
    %9451 = vmatpush1.bf16.msra.mxu0 %v8270
    %9452 = vmatprep.mubr.bf16.mxu0 %v7697
    %9453 = vmatmul.mubr.bf16.gmra.mrb[0].mxu0 %v7696
    %v9454 = vpop.f32.mrb[0].mxu0
    %v9455 = vadd.f32 %v9414, %v9454
    %v9456 = vpop.f32.mrb[0].mxu0
    %v9457 = vadd.f32 %v9416, %v9456
    %v9458 = vpop.f32.mrb[0].mxu0
    %v9459 = vpop.f32.mrb[0].mxu0
    %9460 = vdwg.mxu0
    %9461 = vmatprep.subr.bf16.mxu0 %v8273
    %9462 = vmatpush1.bf16.msra.mxu0 %v8272
    %9463 = vmatprep.subr.bf16.mxu0 %v8275
    %9464 = vmatpush1.bf16.msra.mxu0 %v8274
    %9465 = vmatprep.subr.bf16.mxu0 %v8277
    %9466 = vmatpush1.bf16.msra.mxu0 %v8276
    %9467 = vmatprep.subr.bf16.mxu0 %v8279
    %9468 = vmatpush1.bf16.msra.mxu0 %v8278
    %9469 = vmatprep.subr.bf16.mxu0 %v8281
    %9470 = vmatpush1.bf16.msra.mxu0 %v8280
    %9471 = vmatprep.subr.bf16.mxu0 %v8283
    %9472 = vmatpush1.bf16.msra.mxu0 %v8282
    %9473 = vmatprep.subr.bf16.mxu0 %v8285
    %9474 = vmatpush1.bf16.msra.mxu0 %v8284
    %9475 = vmatprep.subr.bf16.mxu0 %v8287
    %9476 = vmatpush1.bf16.msra.mxu0 %v8286
    %9477 = vmatprep.subr.bf16.mxu0 %v8289
    %9478 = vmatpush1.bf16.msra.mxu0 %v8288
    %9479 = vmatprep.subr.bf16.mxu0 %v8291
    %9480 = vmatpush1.bf16.msra.mxu0 %v8290
    %9481 = vmatprep.subr.bf16.mxu0 %v8293
    %9482 = vmatpush1.bf16.msra.mxu0 %v8292
    %9483 = vmatprep.subr.bf16.mxu0 %v8295
    %9484 = vmatpush1.bf16.msra.mxu0 %v8294
    %9485 = vmatprep.subr.bf16.mxu0 %v8297
    %9486 = vmatpush1.bf16.msra.mxu0 %v8296
    %9487 = vmatprep.subr.bf16.mxu0 %v8299
    %9488 = vmatpush1.bf16.msra.mxu0 %v8298
    %9489 = vmatprep.subr.bf16.mxu0 %v8301
    %9490 = vmatpush1.bf16.msra.mxu0 %v8300
    %9491 = vmatprep.subr.bf16.mxu0 %v8303
    %9492 = vmatpush1.bf16.msra.mxu0 %v8302
    %9493 = vmatprep.mubr.bf16.mxu0 %v7699
    %9494 = vmatmul.mubr.bf16.gmra.mrb[0].mxu0 %v7698
    %v9495 = vpop.f32.mrb[0].mxu0
    %v9496 = vadd.f32 %v9455, %v9495
    %v9497 = vpop.f32.mrb[0].mxu0
    %v9498 = vadd.f32 %v9457, %v9497
    %v9499 = vpop.f32.mrb[0].mxu0
    %v9500 = vpop.f32.mrb[0].mxu0
    %9501 = vdwg.mxu0
    %9502 = vmatprep.subr.bf16.mxu0 %v8305
    %9503 = vmatpush1.bf16.msra.mxu0 %v8304
    %9504 = vmatprep.subr.bf16.mxu0 %v8307
    %9505 = vmatpush1.bf16.msra.mxu0 %v8306
    %9506 = vmatprep.subr.bf16.mxu0 %v8309
    %9507 = vmatpush1.bf16.msra.mxu0 %v8308
    %9508 = vmatprep.subr.bf16.mxu0 %v8311
    %9509 = vmatpush1.bf16.msra.mxu0 %v8310
    %9510 = vmatprep.subr.bf16.mxu0 %v8313
    %9511 = vmatpush1.bf16.msra.mxu0 %v8312
    %9512 = vmatprep.subr.bf16.mxu0 %v8315
    %9513 = vmatpush1.bf16.msra.mxu0 %v8314
    %9514 = vmatprep.subr.bf16.mxu0 %v8317
    %9515 = vmatpush1.bf16.msra.mxu0 %v8316
    %9516 = vmatprep.subr.bf16.mxu0 %v8319
    %9517 = vmatpush1.bf16.msra.mxu0 %v8318
    %9518 = vmatprep.subr.bf16.mxu0 %v8321
    %9519 = vmatpush1.bf16.msra.mxu0 %v8320
    %9520 = vmatprep.subr.bf16.mxu0 %v8323
    %9521 = vmatpush1.bf16.msra.mxu0 %v8322
    %9522 = vmatprep.subr.bf16.mxu0 %v8325
    %9523 = vmatpush1.bf16.msra.mxu0 %v8324
    %9524 = vmatprep.subr.bf16.mxu0 %v8327
    %9525 = vmatpush1.bf16.msra.mxu0 %v8326
    %9526 = vmatprep.subr.bf16.mxu0 %v8329
    %9527 = vmatpush1.bf16.msra.mxu0 %v8328
    %9528 = vmatprep.subr.bf16.mxu0 %v8331
    %9529 = vmatpush1.bf16.msra.mxu0 %v8330
    %9530 = vmatprep.subr.bf16.mxu0 %v8333
    %9531 = vmatpush1.bf16.msra.mxu0 %v8332
    %9532 = vmatprep.subr.bf16.mxu0 %v8335
    %9533 = vmatpush1.bf16.msra.mxu0 %v8334
    %9534 = vmatprep.mubr.bf16.mxu0 %v7701
    %9535 = vmatmul.mubr.bf16.gmra.mrb[0].mxu0 %v7700
    %v9536 = vpop.f32.mrb[0].mxu0
    %v9537 = vadd.f32 %v9496, %v9536
    %v9538 = vpop.f32.mrb[0].mxu0
    %v9539 = vadd.f32 %v9498, %v9538
    %v9540 = vpop.f32.mrb[0].mxu0
    %v9541 = vpop.f32.mrb[0].mxu0
    %9542 = vdwg.mxu0
    %9543 = vmatprep.subr.bf16.mxu0 %v8337
    %9544 = vmatpush1.bf16.msra.mxu0 %v8336
    %9545 = vmatprep.subr.bf16.mxu0 %v8339
    %9546 = vmatpush1.bf16.msra.mxu0 %v8338
    %9547 = vmatprep.subr.bf16.mxu0 %v8341
    %9548 = vmatpush1.bf16.msra.mxu0 %v8340
    %9549 = vmatprep.subr.bf16.mxu0 %v8343
    %9550 = vmatpush1.bf16.msra.mxu0 %v8342
    %9551 = vmatprep.subr.bf16.mxu0 %v8345
    %9552 = vmatpush1.bf16.msra.mxu0 %v8344
    %9553 = vmatprep.subr.bf16.mxu0 %v8347
    %9554 = vmatpush1.bf16.msra.mxu0 %v8346
    %9555 = vmatprep.subr.bf16.mxu0 %v8349
    %9556 = vmatpush1.bf16.msra.mxu0 %v8348
    %9557 = vmatprep.subr.bf16.mxu0 %v8351
    %9558 = vmatpush1.bf16.msra.mxu0 %v8350
    %9559 = vmatprep.subr.bf16.mxu0 %v8353
    %9560 = vmatpush1.bf16.msra.mxu0 %v8352
    %9561 = vmatprep.subr.bf16.mxu0 %v8355
    %9562 = vmatpush1.bf16.msra.mxu0 %v8354
    %9563 = vmatprep.subr.bf16.mxu0 %v8357
    %9564 = vmatpush1.bf16.msra.mxu0 %v8356
    %9565 = vmatprep.subr.bf16.mxu0 %v8359
    %9566 = vmatpush1.bf16.msra.mxu0 %v8358
    %9567 = vmatprep.subr.bf16.mxu0 %v8361
    %9568 = vmatpush1.bf16.msra.mxu0 %v8360
    %9569 = vmatprep.subr.bf16.mxu0 %v8363
    %9570 = vmatpush1.bf16.msra.mxu0 %v8362
    %9571 = vmatprep.subr.bf16.mxu0 %v8365
    %9572 = vmatpush1.bf16.msra.mxu0 %v8364
    %9573 = vmatprep.subr.bf16.mxu0 %v8367
    %9574 = vmatpush1.bf16.msra.mxu0 %v8366
    %9575 = vmatprep.mubr.bf16.mxu0 %v7703
    %9576 = vmatmul.mubr.bf16.gmra.mrb[0].mxu0 %v7702
    %v9577 = vpop.f32.mrb[0].mxu0
    %v9578 = vadd.f32 %v9537, %v9577
    %v9579 = vpop.f32.mrb[0].mxu0
    %v9580 = vadd.f32 %v9539, %v9579
    %v9581 = vpop.f32.mrb[0].mxu0
    %v9582 = vpop.f32.mrb[0].mxu0
    %9583 = vdwg.mxu0
    %9584 = vmatprep.subr.bf16.mxu0 %v8369
    %9585 = vmatpush1.bf16.msra.mxu0 %v8368
    %9586 = vmatprep.subr.bf16.mxu0 %v8371
    %9587 = vmatpush1.bf16.msra.mxu0 %v8370
    %9588 = vmatprep.subr.bf16.mxu0 %v8373
    %9589 = vmatpush1.bf16.msra.mxu0 %v8372
    %9590 = vmatprep.subr.bf16.mxu0 %v8375
    %9591 = vmatpush1.bf16.msra.mxu0 %v8374
    %9592 = vmatprep.subr.bf16.mxu0 %v8377
    %9593 = vmatpush1.bf16.msra.mxu0 %v8376
    %9594 = vmatprep.subr.bf16.mxu0 %v8379
    %9595 = vmatpush1.bf16.msra.mxu0 %v8378
    %9596 = vmatprep.subr.bf16.mxu0 %v8381
    %9597 = vmatpush1.bf16.msra.mxu0 %v8380
    %9598 = vmatprep.subr.bf16.mxu0 %v8383
    %9599 = vmatpush1.bf16.msra.mxu0 %v8382
    %9600 = vmatprep.subr.bf16.mxu0 %v8385
    %9601 = vmatpush1.bf16.msra.mxu0 %v8384
    %9602 = vmatprep.subr.bf16.mxu0 %v8387
    %9603 = vmatpush1.bf16.msra.mxu0 %v8386
    %9604 = vmatprep.subr.bf16.mxu0 %v8389
    %9605 = vmatpush1.bf16.msra.mxu0 %v8388
    %9606 = vmatprep.subr.bf16.mxu0 %v8391
    %9607 = vmatpush1.bf16.msra.mxu0 %v8390
    %9608 = vmatprep.subr.bf16.mxu0 %v8393
    %9609 = vmatpush1.bf16.msra.mxu0 %v8392
    %9610 = vmatprep.subr.bf16.mxu0 %v8395
    %9611 = vmatpush1.bf16.msra.mxu0 %v8394
    %9612 = vmatprep.subr.bf16.mxu0 %v8397
    %9613 = vmatpush1.bf16.msra.mxu0 %v8396
    %9614 = vmatprep.subr.bf16.mxu0 %v8399
    %9615 = vmatpush1.bf16.msra.mxu0 %v8398
    %9616 = vmatprep.mubr.bf16.mxu0 %v7705
    %9617 = vmatmul.mubr.bf16.gmra.mrb[0].mxu0 %v7704
    %v9618 = vpop.f32.mrb[0].mxu0
    %v9619 = vadd.f32 %v9578, %v9618
    %v9620 = vpop.f32.mrb[0].mxu0
    %v9621 = vadd.f32 %v9580, %v9620
    %v9622 = vpop.f32.mrb[0].mxu0
    %v9623 = vpop.f32.mrb[0].mxu0
    %9624 = vdwg.mxu0
    %9625 = vmatprep.subr.bf16.mxu0 %v8401
    %9626 = vmatpush1.bf16.msra.mxu0 %v8400
    %9627 = vmatprep.subr.bf16.mxu0 %v8403
    %9628 = vmatpush1.bf16.msra.mxu0 %v8402
    %9629 = vmatprep.subr.bf16.mxu0 %v8405
    %9630 = vmatpush1.bf16.msra.mxu0 %v8404
    %9631 = vmatprep.subr.bf16.mxu0 %v8407
    %9632 = vmatpush1.bf16.msra.mxu0 %v8406
    %9633 = vmatprep.subr.bf16.mxu0 %v8409
    %9634 = vmatpush1.bf16.msra.mxu0 %v8408
    %9635 = vmatprep.subr.bf16.mxu0 %v8411
    %9636 = vmatpush1.bf16.msra.mxu0 %v8410
    %9637 = vmatprep.subr.bf16.mxu0 %v8413
    %9638 = vmatpush1.bf16.msra.mxu0 %v8412
    %9639 = vmatprep.subr.bf16.mxu0 %v8415
    %9640 = vmatpush1.bf16.msra.mxu0 %v8414
    %9641 = vmatprep.subr.bf16.mxu0 %v8417
    %9642 = vmatpush1.bf16.msra.mxu0 %v8416
    %9643 = vmatprep.subr.bf16.mxu0 %v8419
    %9644 = vmatpush1.bf16.msra.mxu0 %v8418
    %9645 = vmatprep.subr.bf16.mxu0 %v8421
    %9646 = vmatpush1.bf16.msra.mxu0 %v8420
    %9647 = vmatprep.subr.bf16.mxu0 %v8423
    %9648 = vmatpush1.bf16.msra.mxu0 %v8422
    %9649 = vmatprep.subr.bf16.mxu0 %v8425
    %9650 = vmatpush1.bf16.msra.mxu0 %v8424
    %9651 = vmatprep.subr.bf16.mxu0 %v8427
    %9652 = vmatpush1.bf16.msra.mxu0 %v8426
    %9653 = vmatprep.subr.bf16.mxu0 %v8429
    %9654 = vmatpush1.bf16.msra.mxu0 %v8428
    %9655 = vmatprep.subr.bf16.mxu0 %v8431
    %9656 = vmatpush1.bf16.msra.mxu0 %v8430
    %9657 = vmatprep.mubr.bf16.mxu0 %v7707
    %9658 = vmatmul.mubr.bf16.gmra.mrb[0].mxu0 %v7706
    %v9659 = vpop.f32.mrb[0].mxu0
    %v9660 = vadd.f32 %v9619, %v9659
    %v9661 = vpop.f32.mrb[0].mxu0
    %v9662 = vadd.f32 %v9621, %v9661
    %v9663 = vpop.f32.mrb[0].mxu0
    %v9664 = vpop.f32.mrb[0].mxu0
    %9665 = vdwg.mxu0
    %9666 = vmatprep.subr.bf16.mxu0 %v8433
    %9667 = vmatpush1.bf16.msra.mxu0 %v8432
    %9668 = vmatprep.subr.bf16.mxu0 %v8435
    %9669 = vmatpush1.bf16.msra.mxu0 %v8434
    %9670 = vmatprep.subr.bf16.mxu0 %v8437
    %9671 = vmatpush1.bf16.msra.mxu0 %v8436
    %9672 = vmatprep.subr.bf16.mxu0 %v8439
    %9673 = vmatpush1.bf16.msra.mxu0 %v8438
    %9674 = vmatprep.subr.bf16.mxu0 %v8441
    %9675 = vmatpush1.bf16.msra.mxu0 %v8440
    %9676 = vmatprep.subr.bf16.mxu0 %v8443
    %9677 = vmatpush1.bf16.msra.mxu0 %v8442
    %9678 = vmatprep.subr.bf16.mxu0 %v8445
    %9679 = vmatpush1.bf16.msra.mxu0 %v8444
    %9680 = vmatprep.subr.bf16.mxu0 %v8447
    %9681 = vmatpush1.bf16.msra.mxu0 %v8446
    %9682 = vmatprep.subr.bf16.mxu0 %v8449
    %9683 = vmatpush1.bf16.msra.mxu0 %v8448
    %9684 = vmatprep.subr.bf16.mxu0 %v8451
    %9685 = vmatpush1.bf16.msra.mxu0 %v8450
    %9686 = vmatprep.subr.bf16.mxu0 %v8453
    %9687 = vmatpush1.bf16.msra.mxu0 %v8452
    %9688 = vmatprep.subr.bf16.mxu0 %v8455
    %9689 = vmatpush1.bf16.msra.mxu0 %v8454
    %9690 = vmatprep.subr.bf16.mxu0 %v8457
    %9691 = vmatpush1.bf16.msra.mxu0 %v8456
    %9692 = vmatprep.subr.bf16.mxu0 %v8459
    %9693 = vmatpush1.bf16.msra.mxu0 %v8458
    %9694 = vmatprep.subr.bf16.mxu0 %v8461
    %9695 = vmatpush1.bf16.msra.mxu0 %v8460
    %9696 = vmatprep.subr.bf16.mxu0 %v8463
    %9697 = vmatpush1.bf16.msra.mxu0 %v8462
    %9698 = vmatprep.mubr.bf16.mxu0 %v7709
    %9699 = vmatmul.mubr.bf16.gmra.mrb[0].mxu0 %v7708
    %v9700 = vpop.f32.mrb[0].mxu0
    %v9701 = vadd.f32 %v9660, %v9700
    %v9702 = vpop.f32.mrb[0].mxu0
    %v9703 = vadd.f32 %v9662, %v9702
    %v9704 = vpop.f32.mrb[0].mxu0
    %v9705 = vpop.f32.mrb[0].mxu0
    %9706 = vdwg.mxu0
    %9707 = vmatprep.subr.bf16.mxu0 %v8465
    %9708 = vmatpush1.bf16.msra.mxu0 %v8464
    %9709 = vmatprep.subr.bf16.mxu0 %v8467
    %9710 = vmatpush1.bf16.msra.mxu0 %v8466
    %9711 = vmatprep.subr.bf16.mxu0 %v8469
    %9712 = vmatpush1.bf16.msra.mxu0 %v8468
    %9713 = vmatprep.subr.bf16.mxu0 %v8471
    %9714 = vmatpush1.bf16.msra.mxu0 %v8470
    %9715 = vmatprep.subr.bf16.mxu0 %v8473
    %9716 = vmatpush1.bf16.msra.mxu0 %v8472
    %9717 = vmatprep.subr.bf16.mxu0 %v8475
    %9718 = vmatpush1.bf16.msra.mxu0 %v8474
    %9719 = vmatprep.subr.bf16.mxu0 %v8477
    %9720 = vmatpush1.bf16.msra.mxu0 %v8476
    %9721 = vmatprep.subr.bf16.mxu0 %v8479
    %9722 = vmatpush1.bf16.msra.mxu0 %v8478
    %9723 = vmatprep.subr.bf16.mxu0 %v8481
    %9724 = vmatpush1.bf16.msra.mxu0 %v8480
    %9725 = vmatprep.subr.bf16.mxu0 %v8483
    %9726 = vmatpush1.bf16.msra.mxu0 %v8482
    %9727 = vmatprep.subr.bf16.mxu0 %v8485
    %9728 = vmatpush1.bf16.msra.mxu0 %v8484
    %9729 = vmatprep.subr.bf16.mxu0 %v8487
    %9730 = vmatpush1.bf16.msra.mxu0 %v8486
    %9731 = vmatprep.subr.bf16.mxu0 %v8489
    %9732 = vmatpush1.bf16.msra.mxu0 %v8488
    %9733 = vmatprep.subr.bf16.mxu0 %v8491
    %9734 = vmatpush1.bf16.msra.mxu0 %v8490
    %9735 = vmatprep.subr.bf16.mxu0 %v8493
    %9736 = vmatpush1.bf16.msra.mxu0 %v8492
    %9737 = vmatprep.subr.bf16.mxu0 %v8495
    %9738 = vmatpush1.bf16.msra.mxu0 %v8494
    %9739 = vmatprep.mubr.bf16.mxu0 %v7711
    %9740 = vmatmul.mubr.bf16.gmra.mrb[0].mxu0 %v7710
    %v9741 = vpop.f32.mrb[0].mxu0
    %v9742 = vadd.f32 %v9701, %v9741
    %v9743 = vpop.f32.mrb[0].mxu0
    %v9744 = vadd.f32 %v9703, %v9743
    %v9745 = vpop.f32.mrb[0].mxu0
    %v9746 = vpop.f32.mrb[0].mxu0
    %9747 = vdwg.mxu0
    %9748 = vmatprep.subr.bf16.mxu0 %v8497
    %9749 = vmatpush1.bf16.msra.mxu0 %v8496
    %9750 = vmatprep.subr.bf16.mxu0 %v8499
    %9751 = vmatpush1.bf16.msra.mxu0 %v8498
    %9752 = vmatprep.subr.bf16.mxu0 %v8501
    %9753 = vmatpush1.bf16.msra.mxu0 %v8500
    %9754 = vmatprep.subr.bf16.mxu0 %v8503
    %9755 = vmatpush1.bf16.msra.mxu0 %v8502
    %9756 = vmatprep.subr.bf16.mxu0 %v8505
    %9757 = vmatpush1.bf16.msra.mxu0 %v8504
    %9758 = vmatprep.subr.bf16.mxu0 %v8507
    %9759 = vmatpush1.bf16.msra.mxu0 %v8506
    %9760 = vmatprep.subr.bf16.mxu0 %v8509
    %9761 = vmatpush1.bf16.msra.mxu0 %v8508
    %9762 = vmatprep.subr.bf16.mxu0 %v8511
    %9763 = vmatpush1.bf16.msra.mxu0 %v8510
    %9764 = vmatprep.subr.bf16.mxu0 %v8513
    %9765 = vmatpush1.bf16.msra.mxu0 %v8512
    %9766 = vmatprep.subr.bf16.mxu0 %v8515
    %9767 = vmatpush1.bf16.msra.mxu0 %v8514
    %9768 = vmatprep.subr.bf16.mxu0 %v8517
    %9769 = vmatpush1.bf16.msra.mxu0 %v8516
    %9770 = vmatprep.subr.bf16.mxu0 %v8519
    %9771 = vmatpush1.bf16.msra.mxu0 %v8518
    %9772 = vmatprep.subr.bf16.mxu0 %v8521
    %9773 = vmatpush1.bf16.msra.mxu0 %v8520
    %9774 = vmatprep.subr.bf16.mxu0 %v8523
    %9775 = vmatpush1.bf16.msra.mxu0 %v8522
    %9776 = vmatprep.subr.bf16.mxu0 %v8525
    %9777 = vmatpush1.bf16.msra.mxu0 %v8524
    %9778 = vmatprep.subr.bf16.mxu0 %v8527
    %9779 = vmatpush1.bf16.msra.mxu0 %v8526
    %9780 = vmatprep.mubr.bf16.mxu0 %v7713
    %9781 = vmatmul.mubr.bf16.gmra.mrb[0].mxu0 %v7712
    %v9782 = vpop.f32.mrb[0].mxu0
    %v9783 = vadd.f32 %v9742, %v9782
    %v9784 = vpop.f32.mrb[0].mxu0
    %v9785 = vadd.f32 %v9744, %v9784
    %v9786 = vpop.f32.mrb[0].mxu0
    %v9787 = vpop.f32.mrb[0].mxu0
    %9788 = vdwg.mxu0
    %9789 = vmatprep.subr.bf16.mxu0 %v8529
    %9790 = vmatpush1.bf16.msra.mxu0 %v8528
    %9791 = vmatprep.subr.bf16.mxu0 %v8531
    %9792 = vmatpush1.bf16.msra.mxu0 %v8530
    %9793 = vmatprep.subr.bf16.mxu0 %v8533
    %9794 = vmatpush1.bf16.msra.mxu0 %v8532
    %9795 = vmatprep.subr.bf16.mxu0 %v8535
    %9796 = vmatpush1.bf16.msra.mxu0 %v8534
    %9797 = vmatprep.subr.bf16.mxu0 %v8537
    %9798 = vmatpush1.bf16.msra.mxu0 %v8536
    %9799 = vmatprep.subr.bf16.mxu0 %v8539
    %9800 = vmatpush1.bf16.msra.mxu0 %v8538
    %9801 = vmatprep.subr.bf16.mxu0 %v8541
    %9802 = vmatpush1.bf16.msra.mxu0 %v8540
    %9803 = vmatprep.subr.bf16.mxu0 %v8543
    %9804 = vmatpush1.bf16.msra.mxu0 %v8542
    %9805 = vmatprep.subr.bf16.mxu0 %v8545
    %9806 = vmatpush1.bf16.msra.mxu0 %v8544
    %9807 = vmatprep.subr.bf16.mxu0 %v8547
    %9808 = vmatpush1.bf16.msra.mxu0 %v8546
    %9809 = vmatprep.subr.bf16.mxu0 %v8549
    %9810 = vmatpush1.bf16.msra.mxu0 %v8548
    %9811 = vmatprep.subr.bf16.mxu0 %v8551
    %9812 = vmatpush1.bf16.msra.mxu0 %v8550
    %9813 = vmatprep.subr.bf16.mxu0 %v8553
    %9814 = vmatpush1.bf16.msra.mxu0 %v8552
    %9815 = vmatprep.subr.bf16.mxu0 %v8555
    %9816 = vmatpush1.bf16.msra.mxu0 %v8554
    %9817 = vmatprep.subr.bf16.mxu0 %v8557
    %9818 = vmatpush1.bf16.msra.mxu0 %v8556
    %9819 = vmatprep.subr.bf16.mxu0 %v8559
    %9820 = vmatpush1.bf16.msra.mxu0 %v8558
    %9821 = vmatprep.mubr.bf16.mxu0 %v7715
    %9822 = vmatmul.mubr.bf16.gmra.mrb[0].mxu0 %v7714
    %v9823 = vpop.f32.mrb[0].mxu0
    %v9824 = vadd.f32 %v9783, %v9823
    %v9825 = vpop.f32.mrb[0].mxu0
    %v9826 = vadd.f32 %v9785, %v9825
    %v9827 = vpop.f32.mrb[0].mxu0
    %v9828 = vpop.f32.mrb[0].mxu0
    %9829 = vdwg.mxu0
    %9830 = vmatprep.subr.bf16.mxu0 %v8561
    %9831 = vmatpush1.bf16.msra.mxu0 %v8560
    %9832 = vmatprep.subr.bf16.mxu0 %v8563
    %9833 = vmatpush1.bf16.msra.mxu0 %v8562
    %9834 = vmatprep.subr.bf16.mxu0 %v8565
    %9835 = vmatpush1.bf16.msra.mxu0 %v8564
    %9836 = vmatprep.subr.bf16.mxu0 %v8567
    %9837 = vmatpush1.bf16.msra.mxu0 %v8566
    %9838 = vmatprep.subr.bf16.mxu0 %v8569
    %9839 = vmatpush1.bf16.msra.mxu0 %v8568
    %9840 = vmatprep.subr.bf16.mxu0 %v8571
    %9841 = vmatpush1.bf16.msra.mxu0 %v8570
    %9842 = vmatprep.subr.bf16.mxu0 %v8573
    %9843 = vmatpush1.bf16.msra.mxu0 %v8572
    %9844 = vmatprep.subr.bf16.mxu0 %v8575
    %9845 = vmatpush1.bf16.msra.mxu0 %v8574
    %9846 = vmatprep.subr.bf16.mxu0 %v8577
    %9847 = vmatpush1.bf16.msra.mxu0 %v8576
    %9848 = vmatprep.subr.bf16.mxu0 %v8579
    %9849 = vmatpush1.bf16.msra.mxu0 %v8578
    %9850 = vmatprep.subr.bf16.mxu0 %v8581
    %9851 = vmatpush1.bf16.msra.mxu0 %v8580
    %9852 = vmatprep.subr.bf16.mxu0 %v8583
    %9853 = vmatpush1.bf16.msra.mxu0 %v8582
    %9854 = vmatprep.subr.bf16.mxu0 %v8585
    %9855 = vmatpush1.bf16.msra.mxu0 %v8584
    %9856 = vmatprep.subr.bf16.mxu0 %v8587
    %9857 = vmatpush1.bf16.msra.mxu0 %v8586
    %9858 = vmatprep.subr.bf16.mxu0 %v8589
    %9859 = vmatpush1.bf16.msra.mxu0 %v8588
    %9860 = vmatprep.subr.bf16.mxu0 %v8591
    %9861 = vmatpush1.bf16.msra.mxu0 %v8590
    %9862 = vmatprep.mubr.bf16.mxu0 %v7717
    %9863 = vmatmul.mubr.bf16.gmra.mrb[0].mxu0 %v7716
    %v9864 = vpop.f32.mrb[0].mxu0
    %v9865 = vadd.f32 %v9824, %v9864
    %v9866 = vpop.f32.mrb[0].mxu0
    %v9867 = vadd.f32 %v9826, %v9866
    %v9868 = vpop.f32.mrb[0].mxu0
    %v9869 = vpop.f32.mrb[0].mxu0
    %9870 = vdwg.mxu0
    %9871 = vmatprep.subr.bf16.mxu0 %v8593
    %9872 = vmatpush1.bf16.msra.mxu0 %v8592
    %9873 = vmatprep.subr.bf16.mxu0 %v8595
    %9874 = vmatpush1.bf16.msra.mxu0 %v8594
    %9875 = vmatprep.subr.bf16.mxu0 %v8597
    %9876 = vmatpush1.bf16.msra.mxu0 %v8596
    %9877 = vmatprep.subr.bf16.mxu0 %v8599
    %9878 = vmatpush1.bf16.msra.mxu0 %v8598
    %9879 = vmatprep.subr.bf16.mxu0 %v8601
    %9880 = vmatpush1.bf16.msra.mxu0 %v8600
    %9881 = vmatprep.subr.bf16.mxu0 %v8603
    %9882 = vmatpush1.bf16.msra.mxu0 %v8602
    %9883 = vmatprep.subr.bf16.mxu0 %v8605
    %9884 = vmatpush1.bf16.msra.mxu0 %v8604
    %9885 = vmatprep.subr.bf16.mxu0 %v8607
    %9886 = vmatpush1.bf16.msra.mxu0 %v8606
    %9887 = vmatprep.subr.bf16.mxu0 %v8609
    %9888 = vmatpush1.bf16.msra.mxu0 %v8608
    %9889 = vmatprep.subr.bf16.mxu0 %v8611
    %9890 = vmatpush1.bf16.msra.mxu0 %v8610
    %9891 = vmatprep.subr.bf16.mxu0 %v8613
    %9892 = vmatpush1.bf16.msra.mxu0 %v8612
    %9893 = vmatprep.subr.bf16.mxu0 %v8615
    %9894 = vmatpush1.bf16.msra.mxu0 %v8614
    %9895 = vmatprep.subr.bf16.mxu0 %v8617
    %9896 = vmatpush1.bf16.msra.mxu0 %v8616
    %9897 = vmatprep.subr.bf16.mxu0 %v8619
    %9898 = vmatpush1.bf16.msra.mxu0 %v8618
    %9899 = vmatprep.subr.bf16.mxu0 %v8621
    %9900 = vmatpush1.bf16.msra.mxu0 %v8620
    %9901 = vmatprep.subr.bf16.mxu0 %v8623
    %9902 = vmatpush1.bf16.msra.mxu0 %v8622
    %9903 = vmatprep.mubr.bf16.mxu0 %v7719
    %9904 = vmatmul.mubr.bf16.gmra.mrb[0].mxu0 %v7718
    %v9905 = vpop.f32.mrb[0].mxu0
    %v9906 = vadd.f32 %v9865, %v9905
    %v9907 = vpop.f32.mrb[0].mxu0
    %v9908 = vadd.f32 %v9867, %v9907
    %v9909 = vpop.f32.mrb[0].mxu0
    %v9910 = vpop.f32.mrb[0].mxu0
    %9911 = vdwg.mxu0
    %9912 = vmatprep.subr.bf16.mxu0 %v8625
    %9913 = vmatpush1.bf16.msra.mxu0 %v8624
    %9914 = vmatprep.subr.bf16.mxu0 %v8627
    %9915 = vmatpush1.bf16.msra.mxu0 %v8626
    %9916 = vmatprep.subr.bf16.mxu0 %v8629
    %9917 = vmatpush1.bf16.msra.mxu0 %v8628
    %9918 = vmatprep.subr.bf16.mxu0 %v8631
    %9919 = vmatpush1.bf16.msra.mxu0 %v8630
    %9920 = vmatprep.subr.bf16.mxu0 %v8633
    %9921 = vmatpush1.bf16.msra.mxu0 %v8632
    %9922 = vmatprep.subr.bf16.mxu0 %v8635
    %9923 = vmatpush1.bf16.msra.mxu0 %v8634
    %9924 = vmatprep.subr.bf16.mxu0 %v8637
    %9925 = vmatpush1.bf16.msra.mxu0 %v8636
    %9926 = vmatprep.subr.bf16.mxu0 %v8639
    %9927 = vmatpush1.bf16.msra.mxu0 %v8638
    %9928 = vmatprep.subr.bf16.mxu0 %v8641
    %9929 = vmatpush1.bf16.msra.mxu0 %v8640
    %9930 = vmatprep.subr.bf16.mxu0 %v8643
    %9931 = vmatpush1.bf16.msra.mxu0 %v8642
    %9932 = vmatprep.subr.bf16.mxu0 %v8645
    %9933 = vmatpush1.bf16.msra.mxu0 %v8644
    %9934 = vmatprep.subr.bf16.mxu0 %v8647
    %9935 = vmatpush1.bf16.msra.mxu0 %v8646
    %9936 = vmatprep.subr.bf16.mxu0 %v8649
    %9937 = vmatpush1.bf16.msra.mxu0 %v8648
    %9938 = vmatprep.subr.bf16.mxu0 %v8651
    %9939 = vmatpush1.bf16.msra.mxu0 %v8650
    %9940 = vmatprep.subr.bf16.mxu0 %v8653
    %9941 = vmatpush1.bf16.msra.mxu0 %v8652
    %9942 = vmatprep.subr.bf16.mxu0 %v8655
    %9943 = vmatpush1.bf16.msra.mxu0 %v8654
    %9944 = vmatprep.mubr.bf16.mxu0 %v7721
    %9945 = vmatmul.mubr.bf16.gmra.mrb[0].mxu0 %v7720
    %v9946 = vpop.f32.mrb[0].mxu0
    %v9947 = vadd.f32 %v9906, %v9946
    %v9948 = vpop.f32.mrb[0].mxu0
    %v9949 = vadd.f32 %v9908, %v9948
    %v9950 = vpop.f32.mrb[0].mxu0
    %v9951 = vpop.f32.mrb[0].mxu0
    %9952 = vdwg.mxu0
    %9953 = vmatprep.subr.bf16.mxu0 %v8657
    %9954 = vmatpush1.bf16.msra.mxu0 %v8656
    %9955 = vmatprep.subr.bf16.mxu0 %v8659
    %9956 = vmatpush1.bf16.msra.mxu0 %v8658
    %9957 = vmatprep.subr.bf16.mxu0 %v8661
    %9958 = vmatpush1.bf16.msra.mxu0 %v8660
    %9959 = vmatprep.subr.bf16.mxu0 %v8663
    %9960 = vmatpush1.bf16.msra.mxu0 %v8662
    %9961 = vmatprep.subr.bf16.mxu0 %v8665
    %9962 = vmatpush1.bf16.msra.mxu0 %v8664
    %9963 = vmatprep.subr.bf16.mxu0 %v8667
    %9964 = vmatpush1.bf16.msra.mxu0 %v8666
    %9965 = vmatprep.subr.bf16.mxu0 %v8669
    %9966 = vmatpush1.bf16.msra.mxu0 %v8668
    %9967 = vmatprep.subr.bf16.mxu0 %v8671
    %9968 = vmatpush1.bf16.msra.mxu0 %v8670
    %9969 = vmatprep.subr.bf16.mxu0 %v8673
    %9970 = vmatpush1.bf16.msra.mxu0 %v8672
    %9971 = vmatprep.subr.bf16.mxu0 %v8675
    %9972 = vmatpush1.bf16.msra.mxu0 %v8674
    %9973 = vmatprep.subr.bf16.mxu0 %v8677
    %9974 = vmatpush1.bf16.msra.mxu0 %v8676
    %9975 = vmatprep.subr.bf16.mxu0 %v8679
    %9976 = vmatpush1.bf16.msra.mxu0 %v8678
    %9977 = vmatprep.subr.bf16.mxu0 %v8681
    %9978 = vmatpush1.bf16.msra.mxu0 %v8680
    %9979 = vmatprep.subr.bf16.mxu0 %v8683
    %9980 = vmatpush1.bf16.msra.mxu0 %v8682
    %9981 = vmatprep.subr.bf16.mxu0 %v8685
    %9982 = vmatpush1.bf16.msra.mxu0 %v8684
    %9983 = vmatprep.subr.bf16.mxu0 %v8687
    %9984 = vmatpush1.bf16.msra.mxu0 %v8686
    %9985 = vmatprep.mubr.bf16.mxu0 %v7723
    %9986 = vmatmul.mubr.bf16.gmra.mrb[0].mxu0 %v7722
    %v9987 = vpop.f32.mrb[0].mxu0
    %v9988 = vadd.f32 %v9947, %v9987
    %v9989 = vpop.f32.mrb[0].mxu0
    %v9990 = vadd.f32 %v9949, %v9989
    %v9991 = vpop.f32.mrb[0].mxu0
    %v9992 = vpop.f32.mrb[0].mxu0
    %9993 = vdwg.mxu0
    %9994 = vmatprep.subr.bf16.mxu0 %v8689
    %9995 = vmatpush1.bf16.msra.mxu0 %v8688
    %9996 = vmatprep.subr.bf16.mxu0 %v8691
    %9997 = vmatpush1.bf16.msra.mxu0 %v8690
    %9998 = vmatprep.subr.bf16.mxu0 %v8693
    %9999 = vmatpush1.bf16.msra.mxu0 %v8692
    %10000 = vmatprep.subr.bf16.mxu0 %v8695
    %10001 = vmatpush1.bf16.msra.mxu0 %v8694
    %10002 = vmatprep.subr.bf16.mxu0 %v8697
    %10003 = vmatpush1.bf16.msra.mxu0 %v8696
    %10004 = vmatprep.subr.bf16.mxu0 %v8699
    %10005 = vmatpush1.bf16.msra.mxu0 %v8698
    %10006 = vmatprep.subr.bf16.mxu0 %v8701
    %10007 = vmatpush1.bf16.msra.mxu0 %v8700
    %10008 = vmatprep.subr.bf16.mxu0 %v8703
    %10009 = vmatpush1.bf16.msra.mxu0 %v8702
    %10010 = vmatprep.subr.bf16.mxu0 %v8705
    %10011 = vmatpush1.bf16.msra.mxu0 %v8704
    %10012 = vmatprep.subr.bf16.mxu0 %v8707
    %10013 = vmatpush1.bf16.msra.mxu0 %v8706
    %10014 = vmatprep.subr.bf16.mxu0 %v8709
    %10015 = vmatpush1.bf16.msra.mxu0 %v8708
    %10016 = vmatprep.subr.bf16.mxu0 %v8711
    %10017 = vmatpush1.bf16.msra.mxu0 %v8710
    %10018 = vmatprep.subr.bf16.mxu0 %v8713
    %10019 = vmatpush1.bf16.msra.mxu0 %v8712
    %10020 = vmatprep.subr.bf16.mxu0 %v8715
    %10021 = vmatpush1.bf16.msra.mxu0 %v8714
    %10022 = vmatprep.subr.bf16.mxu0 %v8717
    %10023 = vmatpush1.bf16.msra.mxu0 %v8716
    %10024 = vmatprep.subr.bf16.mxu0 %v8719
    %10025 = vmatpush1.bf16.msra.mxu0 %v8718
    %10026 = vmatprep.mubr.bf16.mxu0 %v7725
    %10027 = vmatmul.mubr.bf16.gmra.mrb[0].mxu0 %v7724
    %v10028 = vpop.f32.mrb[0].mxu0
    %v10029 = vadd.f32 %v9988, %v10028
    %v10030 = vpop.f32.mrb[0].mxu0
    %v10031 = vadd.f32 %v9990, %v10030
    %v10032 = vpop.f32.mrb[0].mxu0
    %v10033 = vpop.f32.mrb[0].mxu0
    %10034 = vdwg.mxu0
    %10035 = vmatprep.subr.bf16.mxu0 %v8721
    %10036 = vmatpush1.bf16.msra.mxu0 %v8720
    %10037 = vmatprep.subr.bf16.mxu0 %v8723
    %10038 = vmatpush1.bf16.msra.mxu0 %v8722
    %10039 = vmatprep.subr.bf16.mxu0 %v8725
    %10040 = vmatpush1.bf16.msra.mxu0 %v8724
    %10041 = vmatprep.subr.bf16.mxu0 %v8727
    %10042 = vmatpush1.bf16.msra.mxu0 %v8726
    %10043 = vmatprep.subr.bf16.mxu0 %v8729
    %10044 = vmatpush1.bf16.msra.mxu0 %v8728
    %10045 = vmatprep.subr.bf16.mxu0 %v8731
    %10046 = vmatpush1.bf16.msra.mxu0 %v8730
    %10047 = vmatprep.subr.bf16.mxu0 %v8733
    %10048 = vmatpush1.bf16.msra.mxu0 %v8732
    %10049 = vmatprep.subr.bf16.mxu0 %v8735
    %10050 = vmatpush1.bf16.msra.mxu0 %v8734
    %10051 = vmatprep.subr.bf16.mxu0 %v8737
    %10052 = vmatpush1.bf16.msra.mxu0 %v8736
    %10053 = vmatprep.subr.bf16.mxu0 %v8739
    %10054 = vmatpush1.bf16.msra.mxu0 %v8738
    %10055 = vmatprep.subr.bf16.mxu0 %v8741
    %10056 = vmatpush1.bf16.msra.mxu0 %v8740
    %10057 = vmatprep.subr.bf16.mxu0 %v8743
    %10058 = vmatpush1.bf16.msra.mxu0 %v8742
    %10059 = vmatprep.subr.bf16.mxu0 %v8745
    %10060 = vmatpush1.bf16.msra.mxu0 %v8744
    %10061 = vmatprep.subr.bf16.mxu0 %v8747
    %10062 = vmatpush1.bf16.msra.mxu0 %v8746
    %10063 = vmatprep.subr.bf16.mxu0 %v8749
    %10064 = vmatpush1.bf16.msra.mxu0 %v8748
    %10065 = vmatprep.subr.bf16.mxu0 %v8751
    %10066 = vmatpush1.bf16.msra.mxu0 %v8750
    %10067 = vmatprep.mubr.bf16.mxu0 %v7727
    %10068 = vmatmul.mubr.bf16.gmra.mrb[0].mxu0 %v7726
    %v10069 = vpop.f32.mrb[0].mxu0
    %v10070 = vadd.f32 %v10029, %v10069
    %v10071 = vpop.f32.mrb[0].mxu0
    %v10072 = vadd.f32 %v10031, %v10071
    %v10073 = vpop.f32.mrb[0].mxu0
    %v10074 = vpop.f32.mrb[0].mxu0
    %10075 = vdwg.mxu0
    %v10076 = vmax.f32 %v10070, 0.0
    %v10077 = vmax.f32 %v10072, 0.0
    %v10078 = vld [vmem:[#allocation11] sm:$0xff]
    %v10079 = vld [vmem:[#allocation11 + $0x8] sm:$0xff]
    %v10080 = vld [vmem:[#allocation11 + $0x10] sm:$0xff]
    %v10081 = vld [vmem:[#allocation11 + $0x18] sm:$0xff]
    %v10082 = vld [vmem:[#allocation11 + $0x20] sm:$0xff]
    %v10083 = vld [vmem:[#allocation11 + $0x28] sm:$0xff]
    %v10084 = vld [vmem:[#allocation11 + $0x30] sm:$0xff]
    %v10085 = vld [vmem:[#allocation11 + $0x38] sm:$0xff]
    %v10086 = vld [vmem:[#allocation11 + $0x40] sm:$0xff]
    %v10087 = vld [vmem:[#allocation11 + $0x48] sm:$0xff]
    %v10088 = vld [vmem:[#allocation11 + $0x50] sm:$0xff]
    %v10089 = vld [vmem:[#allocation11 + $0x58] sm:$0xff]
    %v10090 = vld [vmem:[#allocation11 + $0x60] sm:$0xff]
    %v10091 = vld [vmem:[#allocation11 + $0x68] sm:$0xff]
    %v10092 = vld [vmem:[#allocation11 + $0x70] sm:$0xff]
    %v10093 = vld [vmem:[#allocation11 + $0x78] sm:$0xff]
    %v10094 = vld [vmem:[#allocation11 + $0x80] sm:$0xff]
    %v10095 = vld [vmem:[#allocation11 + $0x88] sm:$0xff]
    %v10096 = vld [vmem:[#allocation11 + $0x90] sm:$0xff]
    %v10097 = vld [vmem:[#allocation11 + $0x98] sm:$0xff]
    %v10098 = vld [vmem:[#allocation11 + $0xa0] sm:$0xff]
    %v10099 = vld [vmem:[#allocation11 + $0xa8] sm:$0xff]
    %v10100 = vld [vmem:[#allocation11 + $0xb0] sm:$0xff]
    %v10101 = vld [vmem:[#allocation11 + $0xb8] sm:$0xff]
    %v10102 = vld [vmem:[#allocation11 + $0xc0] sm:$0xff]
    %v10103 = vld [vmem:[#allocation11 + $0xc8] sm:$0xff]
    %v10104 = vld [vmem:[#allocation11 + $0xd0] sm:$0xff]
    %v10105 = vld [vmem:[#allocation11 + $0xd8] sm:$0xff]
    %v10106 = vld [vmem:[#allocation11 + $0xe0] sm:$0xff]
    %v10107 = vld [vmem:[#allocation11 + $0xe8] sm:$0xff]
    %v10108 = vld [vmem:[#allocation11 + $0xf0] sm:$0xff]
    %v10109 = vld [vmem:[#allocation11 + $0xf8] sm:$0xff]
    %v10110 = vld [vmem:[#allocation13] sm:$0x1]
    %v10112 = vlaneseq
    %v10113 = vshrl.u32 %v10112, 7
    %v10114 = vsub.s32 0, %v10113
    %v10115 = vrot.slane %v10110, %v10114
    %10117 = vmatprep.subr.mxu0 0.0
    %10118 = vmatpush1.msra.mxu0 %v10078
    %10119 = vmatprep.subr.mxu0 0.0
    %10120 = vmatpush1.msra.mxu0 %v10079
    %10121 = vmatprep.subr.mxu0 0.0
    %10122 = vmatpush1.msra.mxu0 %v10080
    %10123 = vmatprep.subr.mxu0 0.0
    %10124 = vmatpush1.msra.mxu0 %v10081
    %10125 = vmatprep.subr.mxu0 0.0
    %10126 = vmatpush1.msra.mxu0 %v10082
    %10127 = vmatprep.subr.mxu0 0.0
    %10128 = vmatpush1.msra.mxu0 %v10083
    %10129 = vmatprep.subr.mxu0 0.0
    %10130 = vmatpush1.msra.mxu0 %v10084
    %10131 = vmatprep.subr.mxu0 0.0
    %10132 = vmatpush1.msra.mxu0 %v10085
    %10133 = vmatprep.subr.mxu0 0.0
    %10134 = vmatpush1.msra.mxu0 %v10086
    %10135 = vmatprep.subr.mxu0 0.0
    %10136 = vmatpush1.msra.mxu0 %v10087
    %10137 = vmatprep.subr.mxu0 0.0
    %10138 = vmatpush1.msra.mxu0 %v10088
    %10139 = vmatprep.subr.mxu0 0.0
    %10140 = vmatpush1.msra.mxu0 %v10089
    %10141 = vmatprep.subr.mxu0 0.0
    %10142 = vmatpush1.msra.mxu0 %v10090
    %10143 = vmatprep.subr.mxu0 0.0
    %10144 = vmatpush1.msra.mxu0 %v10091
    %10145 = vmatprep.subr.mxu0 0.0
    %10146 = vmatpush1.msra.mxu0 %v10092
    %10147 = vmatprep.subr.mxu0 0.0
    %10148 = vmatpush1.msra.mxu0 %v10093
    %10149 = vmatprep.subr.mxu0 0.0
    %10150 = vmatpush1.msra.mxu0 %v10094
    %10151 = vmatprep.subr.mxu0 0.0
    %10152 = vmatpush1.msra.mxu0 %v10095
    %10153 = vmatprep.subr.mxu0 0.0
    %10154 = vmatpush1.msra.mxu0 %v10096
    %10155 = vmatprep.subr.mxu0 0.0
    %10156 = vmatpush1.msra.mxu0 %v10097
    %10157 = vmatprep.subr.mxu0 0.0
    %10158 = vmatpush1.msra.mxu0 %v10098
    %10159 = vmatprep.subr.mxu0 0.0
    %10160 = vmatpush1.msra.mxu0 %v10099
    %10161 = vmatprep.subr.mxu0 0.0
    %10162 = vmatpush1.msra.mxu0 %v10100
    %10163 = vmatprep.subr.mxu0 0.0
    %10164 = vmatpush1.msra.mxu0 %v10101
    %10165 = vmatprep.subr.mxu0 0.0
    %10166 = vmatpush1.msra.mxu0 %v10102
    %10167 = vmatprep.subr.mxu0 0.0
    %10168 = vmatpush1.msra.mxu0 %v10103
    %10169 = vmatprep.subr.mxu0 0.0
    %10170 = vmatpush1.msra.mxu0 %v10104
    %10171 = vmatprep.subr.mxu0 0.0
    %10172 = vmatpush1.msra.mxu0 %v10105
    %10173 = vmatprep.subr.mxu0 0.0
    %10174 = vmatpush1.msra.mxu0 %v10106
    %10175 = vmatprep.subr.mxu0 0.0
    %10176 = vmatpush1.msra.mxu0 %v10107
    %10177 = vmatprep.subr.mxu0 0.0
    %10178 = vmatpush1.msra.mxu0 %v10108
    %10179 = vmatprep.subr.mxu0 0.0
    %10180 = vmatpush1.msra.mxu0 %v10109
    %10181 = vmatprep.mubr.f32.mxu0 %v10077
    %10182 = vmatmul.mubr.f32.gmra.mrb[0].mxu0 %v10076
    %v10183 = vpop.f32.mrb[0].mxu0
    %v10184 = vadd.f32 %v10115, %v10183
    %v10185 = vpop.f32.mrb[0].mxu0
    %10186 = vdwg.mxu0
    %10187 = vst [vmem:[#allocation14] sm:$0x3] %v10184
    // Predicated region
    $region54: #{forward.1} parent=1 // pred_check
      _
    $region55: #{forward.1} parent=1 // pred_check_branch
      %10189 = sbr.rel (0) target = $region57
    $region56: #{forward.1} parent=1 // pred_region
      %s10191 = ssub.s32 32, 32
      %10192 = vsyncadd [#allocation10], %s10191
      %s10194 = sshll.u32 [#allocation14], 4
      %s10195 = int_to_ptr.vmem [resolvable:$true] %s10194
      %10197 = dma.vmem_to_hbm [thread:$0]  %s10195, 32, %s11, [#allocation10]
    $region57: #{forward.1} parent=1 // pred_fallthru
      _
    // Predicated region
    $region58: #{forward.1} parent=1 // pred_check
      _
    $region59: #{forward.1} parent=1 // pred_check_branch
      %10199 = sbr.rel (0) target = $region61
    $region60: #{forward.1} parent=1 // pred_region
      %10200 = dma.done [#allocation10], 32
    $region61: #{forward.1} parent=1 // pred_fallthru
      _
    %10201 = vsyncpa [#allocation9], 1
    %10202 = vsyncpa [#allocation12], 1
    %10203 = vsyncpa [#allocation10], 1
  %10204 = vsyncmov [#allocation7]
  %s10205 = vpop.sfrf %10204
  %p10206 = scmp.eq.s32.totalorder %s10205, 0
  %p10207 = pneg %p10206
  %10209 = shalt.err (%p10207)

</llo_original>
